<compile_context>
chip_gen: v5e
topology: v5e:2x2
jax: 0.10.0
libtpu: 0.0.40
codegen_flags: <defaults>
</compile_context>

<pallas_src>
import functools
import math

import numpy as np
import jax
import jax.numpy as jnp
from jax import lax
from jax.experimental import pallas as pl
from jax.experimental.pallas import tpu as pltpu


# ---------------------------------------------------------------------------
# Kernel
# ---------------------------------------------------------------------------
def _gcn_kernel(x_ref, pt_ref, wt_ref, b_ref, o_ref, *, order, c_in):
    """One (batch, L-tile) block of the GCN.

    x_ref : (1, TL, N, c_in)                 input features (B, L, N, C) layout
    pt_ref: (S, N, N)                        transposed adjacencies (A_s^T)
    wt_ref: ((order*S + 1) * c_in, c_out)    1x1-conv weight, transposed
    b_ref : (1, c_out)                       bias
    o_ref : (1, TL, N, c_out)
    """
    x = x_ref[0].astype(jnp.float32)            # (TL, N, Cin)
    tl_, n, _ = x.shape
    c_out = o_ref.shape[3]
    s_count = pt_ref.shape[0]

    def mix(feat, blk):
        # channel mixing: one 2-D MXU matmul (TL*N, Cin) @ (Cin, Cout)
        w_blk = wt_ref[pl.ds(blk * c_in, c_in), :]          # (Cin, Cout)
        return jnp.dot(feat.reshape(tl_ * n, c_in), w_blk,
                       preferred_element_type=jnp.float32,
                       precision=lax.Precision.HIGHEST)     # (TL*N, Cout)

    # identity block of the concat + bias (bias added exactly once)
    acc = mix(x, 0) + b_ref[...]                            # (TL*N, Cout)

    blk = 1
    for s in range(s_count):                                # static, tiny
        pt = pt_ref[s]                                      # (N, N) = A_s^T
        pt_b = jnp.broadcast_to(pt[None, :, :], (tl_, n, n))
        cur = x
        for _ in range(order):                              # static, tiny
            # cur[l] <- A_s^T @ cur[l]   (batched over the L tile)
            cur = lax.dot_general(
                pt_b, cur,
                dimension_numbers=(((2,), (1,)), ((0,), (0,))),
                preferred_element_type=jnp.float32,
                precision=lax.Precision.HIGHEST)            # (TL, N, Cin)
            acc = acc + mix(cur, blk)
            blk += 1

    # TODO(synk): F.dropout is identity in eval mode; training-mode dropout not implemented.
    o_ref[0] = acc.reshape(tl_, n, c_out).astype(o_ref.dtype)


# ---------------------------------------------------------------------------
# Wrappers
# ---------------------------------------------------------------------------
def gcn_pallas(x, supports_t, w_t, bias2, *, order=2, tile_l=None):
    """x: (B, L, N, c_in) -> (B, L, N, c_out)."""
    B, L, N, c_in = x.shape
    S = supports_t.shape[0]
    c_total, c_out = w_t.shape
    assert supports_t.shape[1:] == (N, N)
    assert c_total == (order * S + 1) * c_in

    if tile_l is None:  # largest divisor of L that is <= 128 (VMEM-bounded blocks)
        tile_l = next(t for t in range(min(L, 128), 0, -1) if L % t == 0)
    assert L % tile_l == 0

    kernel = functools.partial(_gcn_kernel, order=order, c_in=c_in)

    return pl.pallas_call(
        kernel,
        out_shape=jax.ShapeDtypeStruct((B, L, N, c_out), jnp.float32),
        grid_spec=pltpu.PrefetchScalarGridSpec(
            num_scalar_prefetch=0,
            grid=(B, L // tile_l),
            in_specs=[
                pl.BlockSpec((1, tile_l, N, c_in), lambda b, lt: (b, lt, 0, 0)),
                pl.BlockSpec((S, N, N), lambda b, lt: (0, 0, 0)),
                pl.BlockSpec((c_total, c_out), lambda b, lt: (0, 0)),
                pl.BlockSpec((1, c_out), lambda b, lt: (0, 0)),
            ],
            out_specs=pl.BlockSpec((1, tile_l, N, c_out),
                                   lambda b, lt: (b, lt, 0, 0)),
        ),
        compiler_params=pltpu.CompilerParams(
            dimension_semantics=("parallel", "parallel")),
    )(x, supports_t, w_t, bias2)


def hierarchical_gcn(X_list, new_adp, weight, bias, *, order=2, tile_l=None):
    """Pallas forward of HierarchicalGCN (eval mode).

    X_list : list of (B, L, N, c_in) arrays
    new_adp: list of (N, N) support/adjacency matrices
    weight : (c_out, (order*len(new_adp)+1)*c_in)  -- Conv2d 1x1 weight squeezed
    bias   : (c_out,)
    Returns a list of (B, L, N, c_out) arrays.
    """
    supports_t = jnp.stack([jnp.asarray(a, jnp.float32).T for a in new_adp], axis=0)
    w_t = jnp.asarray(weight, jnp.float32).T                 # (c_total, c_out)
    b2 = jnp.asarray(bias, jnp.float32).reshape(1, -1)       # (1, c_out)
    return [gcn_pallas(jnp.asarray(x, jnp.float32), supports_t, w_t, b2,
                       order=order, tile_l=tile_l) for x in X_list]


# ---------------------------------------------------------------------------
# Pure-numpy reference (mirrors the PyTorch module exactly, eval mode)
# ---------------------------------------------------------------------------
def _reference(X_list, new_adp, weight, bias, order=2):
    outs = []
    W = np.asarray(weight, np.float32)
    b = np.asarray(bias, np.float32)
    for x in X_list:
        xp = np.transpose(np.asarray(x, np.float32), (0, 3, 2, 1))   # (B, C, N, L)
        feats = [xp]
        for A in new_adp:
            A = np.asarray(A, np.float32)
            x1 = np.einsum('ncvl,vw->ncwl', xp, A)
            feats.append(x1)
            for _ in range(2, order + 1):
                x2 = np.einsum('ncvl,vw->ncwl', x1, A)
                feats.append(x2)
                x1 = x2
        h = np.concatenate(feats, axis=1)                             # (B, Ctot, N, L)
        out = np.einsum('oc,ncvl->novl', W, h) + b[None, :, None, None]
        outs.append(np.transpose(out, (0, 3, 2, 1)))                  # (B, L, N, Cout)
    return outs


if __name__ == "__main__":
    key = jax.random.PRNGKey(0)
    B, L, N = 2, 16, 16
    c_in, c_out = 32, 32
    support_len, order = 2, 2
    c_total = (order * support_len + 1) * c_in

    keys = jax.random.split(key, 6)
    X = [jax.random.normal(keys[0], (B, L, N, c_in), jnp.float32),
         jax.random.normal(keys[1], (B, L, N, c_in), jnp.float32)]
    # adaptive adjacencies (row-softmax, as typically built for new_adp)
    new_adp = [jax.nn.softmax(jax.random.normal(keys[2], (N, N), jnp.float32), axis=-1),
               jax.nn.softmax(jax.random.normal(keys[3], (N, N), jnp.float32), axis=-1)]
    weight = 0.1 * jax.random.normal(keys[4], (c_out, c_total), jnp.float32)
    bias = jax.random.normal(keys[5], (c_out,), jnp.float32)

    outs = hierarchical_gcn(X, new_adp, weight, bias, order=order, tile_l=8)
    outs = [jax.block_until_ready(o) for o in outs]

    refs = _reference([np.asarray(x) for x in X],
                      [np.asarray(a) for a in new_adp],
                      np.asarray(weight), np.asarray(bias), order=order)

    for o, r in zip(outs, refs):
        assert o.shape == r.shape, (o.shape, r.shape)
        np.testing.assert_allclose(np.asarray(o), r, atol=5e-3, rtol=5e-3)

    print("KERNEL_OK")
</pallas_src>

<mosaic_0001>
module attributes {stable_mosaic.version = 11 : i64} {
  func.func @_gcn_kernel(%arg0: i32, %arg1: i32, %arg2: memref<1x8x16x32xf32, #tpu.memory_space<vmem>>, %arg3: memref<2x16x16xf32, #tpu.memory_space<vmem>>, %arg4: memref<160x32xf32, #tpu.memory_space<vmem>>, %arg5: memref<1x32xf32, #tpu.memory_space<vmem>>, %arg6: memref<1x8x16x32xf32, #tpu.memory_space<vmem>>) attributes {dimension_semantics = [#tpu.dimension_semantics<parallel>, #tpu.dimension_semantics<parallel>], iteration_bounds = array<i64: 2, 2>, scalar_prefetch = 0 : i64, scratch_operands = 0 : i64, tpu.core_type = #tpu.core_type<tc>, window_params = [{transform_indices = @transform_0, window_bounds = array<i64: 1, 8, 16, 32>}, {pipeline_mode = #tpu.pipeline_mode<synchronous>, transform_indices = @transform_1, window_bounds = array<i64: 2, 16, 16>}, {pipeline_mode = #tpu.pipeline_mode<synchronous>, transform_indices = @transform_2, window_bounds = array<i64: 160, 32>}, {pipeline_mode = #tpu.pipeline_mode<synchronous>, transform_indices = @transform_3, window_bounds = array<i64: 1, 32>}, {transform_indices = @transform_4, window_bounds = array<i64: 1, 8, 16, 32>}]} {
    %c0 = arith.constant 0 : index
    %c0_0 = arith.constant 0 : index
    %c0_1 = arith.constant 0 : index
    %c0_2 = arith.constant 0 : index
    %0 = vector.load %arg2[%c0, %c0_0, %c0_1, %c0_2] : memref<1x8x16x32xf32, #tpu.memory_space<vmem>>, vector<1x8x16x32xf32>
    %1 = vector.shape_cast %0 : vector<1x8x16x32xf32> to vector<8x16x32xf32>
    %c0_3 = arith.constant 0 : index
    %c0_4 = arith.constant 0 : index
    %2 = vector.load %arg4[%c0_3, %c0_4] : memref<160x32xf32, #tpu.memory_space<vmem>>, vector<32x32xf32>
    %3 = vector.shape_cast %1 : vector<8x16x32xf32> to vector<128x32xf32>
    %cst = arith.constant dense<0.000000e+00> : vector<128x32xf32>
    %4 = tpu.matmul %3, %2, %cst {dimension_numbers = #tpu.dot_dimension_numbers<[1], [0], [0], [1], [0, 0, 1, 1], [], []>, precision = #tpu.contract_precision<fp32>} : vector<128x32xf32>, vector<32x32xf32>, vector<128x32xf32> -> vector<128x32xf32>
    %c0_5 = arith.constant 0 : index
    %c0_6 = arith.constant 0 : index
    %5 = vector.load %arg5[%c0_5, %c0_6] : memref<1x32xf32, #tpu.memory_space<vmem>>, vector<1x32xf32>
    %6 = vector.broadcast %5 : vector<1x32xf32> to vector<128x32xf32>
    %7 = arith.addf %4, %6 : vector<128x32xf32>
    %c0_7 = arith.constant 0 : index
    %c0_8 = arith.constant 0 : index
    %c0_9 = arith.constant 0 : index
    %8 = vector.load %arg3[%c0_7, %c0_8, %c0_9] : memref<2x16x16xf32, #tpu.memory_space<vmem>>, vector<1x16x16xf32>
    %9 = vector.shape_cast %8 : vector<1x16x16xf32> to vector<16x16xf32>
    %10 = vector.shape_cast %9 : vector<16x16xf32> to vector<1x16x16xf32>
    %11 = vector.shape_cast %10 : vector<1x16x16xf32> to vector<1x16x16xf32>
    %12 = vector.broadcast %11 : vector<1x16x16xf32> to vector<8x16x16xf32>
    %cst_10 = arith.constant dense<0.000000e+00> : vector<8x16x32xf32>
    %13 = tpu.matmul %12, %1, %cst_10 {dimension_numbers = #tpu.dot_dimension_numbers<[2], [1], [1], [2], [0, 0, 0, 1, 1, 2], [0], [0]>, precision = #tpu.contract_precision<fp32>} : vector<8x16x16xf32>, vector<8x16x32xf32>, vector<8x16x32xf32> -> vector<8x16x32xf32>
    %c32 = arith.constant 32 : index
    %c0_11 = arith.constant 0 : index
    %14 = vector.load %arg4[%c32, %c0_11] : memref<160x32xf32, #tpu.memory_space<vmem>>, vector<32x32xf32>
    %15 = vector.shape_cast %13 : vector<8x16x32xf32> to vector<128x32xf32>
    %cst_12 = arith.constant dense<0.000000e+00> : vector<128x32xf32>
    %16 = tpu.matmul %15, %14, %cst_12 {dimension_numbers = #tpu.dot_dimension_numbers<[1], [0], [0], [1], [0, 0, 1, 1], [], []>, precision = #tpu.contract_precision<fp32>} : vector<128x32xf32>, vector<32x32xf32>, vector<128x32xf32> -> vector<128x32xf32>
    %17 = arith.addf %7, %16 : vector<128x32xf32>
    %cst_13 = arith.constant dense<0.000000e+00> : vector<8x16x32xf32>
    %18 = tpu.matmul %12, %13, %cst_13 {dimension_numbers = #tpu.dot_dimension_numbers<[2], [1], [1], [2], [0, 0, 0, 1, 1, 2], [0], [0]>, precision = #tpu.contract_precision<fp32>} : vector<8x16x16xf32>, vector<8x16x32xf32>, vector<8x16x32xf32> -> vector<8x16x32xf32>
    %c64 = arith.constant 64 : index
    %c0_14 = arith.constant 0 : index
    %19 = vector.load %arg4[%c64, %c0_14] : memref<160x32xf32, #tpu.memory_space<vmem>>, vector<32x32xf32>
    %20 = vector.shape_cast %18 : vector<8x16x32xf32> to vector<128x32xf32>
    %cst_15 = arith.constant dense<0.000000e+00> : vector<128x32xf32>
    %21 = tpu.matmul %20, %19, %cst_15 {dimension_numbers = #tpu.dot_dimension_numbers<[1], [0], [0], [1], [0, 0, 1, 1], [], []>, precision = #tpu.contract_precision<fp32>} : vector<128x32xf32>, vector<32x32xf32>, vector<128x32xf32> -> vector<128x32xf32>
    %22 = arith.addf %17, %21 : vector<128x32xf32>
    %c1 = arith.constant 1 : index
    %c0_16 = arith.constant 0 : index
    %c0_17 = arith.constant 0 : index
    %23 = vector.load %arg3[%c1, %c0_16, %c0_17] : memref<2x16x16xf32, #tpu.memory_space<vmem>>, vector<1x16x16xf32>
    %24 = vector.shape_cast %23 : vector<1x16x16xf32> to vector<16x16xf32>
    %25 = vector.shape_cast %24 : vector<16x16xf32> to vector<1x16x16xf32>
    %26 = vector.shape_cast %25 : vector<1x16x16xf32> to vector<1x16x16xf32>
    %27 = vector.broadcast %26 : vector<1x16x16xf32> to vector<8x16x16xf32>
    %cst_18 = arith.constant dense<0.000000e+00> : vector<8x16x32xf32>
    %28 = tpu.matmul %27, %1, %cst_18 {dimension_numbers = #tpu.dot_dimension_numbers<[2], [1], [1], [2], [0, 0, 0, 1, 1, 2], [0], [0]>, precision = #tpu.contract_precision<fp32>} : vector<8x16x16xf32>, vector<8x16x32xf32>, vector<8x16x32xf32> -> vector<8x16x32xf32>
    %c96 = arith.constant 96 : index
    %c0_19 = arith.constant 0 : index
    %29 = vector.load %arg4[%c96, %c0_19] : memref<160x32xf32, #tpu.memory_space<vmem>>, vector<32x32xf32>
    %30 = vector.shape_cast %28 : vector<8x16x32xf32> to vector<128x32xf32>
    %cst_20 = arith.constant dense<0.000000e+00> : vector<128x32xf32>
    %31 = tpu.matmul %30, %29, %cst_20 {dimension_numbers = #tpu.dot_dimension_numbers<[1], [0], [0], [1], [0, 0, 1, 1], [], []>, precision = #tpu.contract_precision<fp32>} : vector<128x32xf32>, vector<32x32xf32>, vector<128x32xf32> -> vector<128x32xf32>
    %32 = arith.addf %22, %31 : vector<128x32xf32>
    %cst_21 = arith.constant dense<0.000000e+00> : vector<8x16x32xf32>
    %33 = tpu.matmul %27, %28, %cst_21 {dimension_numbers = #tpu.dot_dimension_numbers<[2], [1], [1], [2], [0, 0, 0, 1, 1, 2], [0], [0]>, precision = #tpu.contract_precision<fp32>} : vector<8x16x16xf32>, vector<8x16x32xf32>, vector<8x16x32xf32> -> vector<8x16x32xf32>
    %c128 = arith.constant 128 : index
    %c0_22 = arith.constant 0 : index
    %34 = vector.load %arg4[%c128, %c0_22] : memref<160x32xf32, #tpu.memory_space<vmem>>, vector<32x32xf32>
    %35 = vector.shape_cast %33 : vector<8x16x32xf32> to vector<128x32xf32>
    %cst_23 = arith.constant dense<0.000000e+00> : vector<128x32xf32>
    %36 = tpu.matmul %35, %34, %cst_23 {dimension_numbers = #tpu.dot_dimension_numbers<[1], [0], [0], [1], [0, 0, 1, 1], [], []>, precision = #tpu.contract_precision<fp32>} : vector<128x32xf32>, vector<32x32xf32>, vector<128x32xf32> -> vector<128x32xf32>
    %37 = arith.addf %32, %36 : vector<128x32xf32>
    %38 = vector.shape_cast %37 : vector<128x32xf32> to vector<8x16x32xf32>
    %c0_24 = arith.constant 0 : index
    %c0_25 = arith.constant 0 : index
    %c0_26 = arith.constant 0 : index
    %c0_27 = arith.constant 0 : index
    %39 = vector.load %arg6[%c0_24, %c0_25, %c0_26, %c0_27] : memref<1x8x16x32xf32, #tpu.memory_space<vmem>>, vector<1x8x16x32xf32>
    %40 = vector.shape_cast %39 : vector<1x8x16x32xf32> to vector<8x16x32xf32>
    %41 = vector.shape_cast %38 : vector<8x16x32xf32> to vector<1x8x16x32xf32>
    tpu.vector_store %arg6[%c0_24, %c0_25, %c0_26, %c0_27], %41 {strides = array<i32>} : memref<1x8x16x32xf32, #tpu.memory_space<vmem>>, vector<1x8x16x32xf32>,
    return
  }
  func.func @transform_0(%arg0: i32, %arg1: i32) -> (i32, i32, i32, i32) {
    %c0_i32 = arith.constant 0 : i32
    %c0_i32_0 = arith.constant 0 : i32
    %c0_i32_1 = arith.constant 0 : i32
    return %arg0, %arg1, %c0_i32, %c0_i32_0 : i32, i32, i32, i32
  }
  func.func @transform_1(%arg0: i32, %arg1: i32) -> (i32, i32, i32) {
    %c0_i32 = arith.constant 0 : i32
    %c0_i32_0 = arith.constant 0 : i32
    %c0_i32_1 = arith.constant 0 : i32
    %c0_i32_2 = arith.constant 0 : i32
    return %c0_i32, %c0_i32_0, %c0_i32_1 : i32, i32, i32
  }
  func.func @transform_2(%arg0: i32, %arg1: i32) -> (i32, i32) {
    %c0_i32 = arith.constant 0 : i32
    %c0_i32_0 = arith.constant 0 : i32
    %c0_i32_1 = arith.constant 0 : i32
    return %c0_i32, %c0_i32_0 : i32, i32
  }
  func.func @transform_3(%arg0: i32, %arg1: i32) -> (i32, i32) {
    %c0_i32 = arith.constant 0 : i32
    %c0_i32_0 = arith.constant 0 : i32
    %c0_i32_1 = arith.constant 0 : i32
    return %c0_i32, %c0_i32_0 : i32, i32
  }
  func.func @transform_4(%arg0: i32, %arg1: i32) -> (i32, i32, i32, i32) {
    %c0_i32 = arith.constant 0 : i32
    %c0_i32_0 = arith.constant 0 : i32
    %c0_i32_1 = arith.constant 0 : i32
    return %arg0, %arg1, %c0_i32, %c0_i32_0 : i32, i32, i32, i32
  }
}

</mosaic_0001>

<llo_original>
// kernel: tpu_custom_call.1
$region0: #{tpu_custom_call.1}
  #allocation0 [shape = 'u32[]', space=smem, size = 0x4, offset = 0x4, fixed_abs, tag = 'smem constant byte address 0x4 - core index']
  #allocation1 [shape = 'u32[72,128]{1,0:T(1,128)}', space=vmem, size = 0x9000, scoped, tag = 'internal scratch']
  %s0 = inlined_call_operand.hbm [shape: f32[2,16,16,32], index: 0, kind: input, shape index: {}]
  %s1 = inlined_call_operand.vmem [shape: f32[2,16,16], index: 1, kind: input, shape index: {}]
  %s2 = inlined_call_operand.vmem [shape: f32[160,32], index: 2, kind: input, shape index: {}]
  %s3 = inlined_call_operand.vmem [shape: f32[1,32], index: 3, kind: input, shape index: {}]
  %s4 = inlined_call_operand.hbm [shape: f32[2,16,16,32], index: 4, kind: output, shape index: {}]
  %s5 = sld [smem:[#allocation0]]
  $region53: #{tpu_custom_call.1} parent=0
    _
  %s7 = ssub.s32 1, %s5
  %s8 = scalar_select 0, %s7, %s5
  $region1: #{tpu_custom_call.1} parent=0
    #allocation2 [shape = 'u8[131072]{0}', space=vmem, size = 0x20000, scoped, tag = 'input window, operand 0']
    #allocation3 [shape = 's32[2]{0}', space=sflag, size = 0x8, scoped, tag = 'scoped memory for tpu_custom_call.1']
    #allocation4 [shape = 's32[2]{0}', space=sflag, size = 0x8, scoped, tag = 'scoped memory for tpu_custom_call.1']
    #allocation5 [shape = 'u8[131072]{0}', space=vmem, size = 0x20000, scoped, tag = 'output window, operand 0']
    %9 = vsyncpa [#allocation3], 0
    %s10 = scalar_lea.sflag [#allocation3], 1
    %11 = vsyncpa %s10, 0
    %12 = vsyncpa [#allocation4], 0
    %s13 = scalar_lea.sflag [#allocation4], 1
    %14 = vsyncpa %s13, 0
    loop: start=0, step=1, limit=6
    $region2: #{tpu_custom_call.1} parent=1 // loop_pre_header
      _
    $region3: #{tpu_custom_call.1} parent=1 // loop_header
      %s16 = sphi 0, %s20
      %p17 = scmp.ge.s32.totalorder %s16, 6
      %s23 = sphi 0, %s35
      %s24 = sphi 0, %s31
      %s25 = sphi 0, %s23
      %s26 = sphi 0, %s24
      %s27 = sphi 0, %s25
      %s28 = sphi 0, %s26
      %s40 = sphi 0, %s42
      %s43 = sphi 0, %s40
      %s44 = sphi 0, %s43
      %s60 = sphi 0, %s44
      %s64 = sphi 0, %s64
      %s66 = sphi 0, %s64
      %s67 = sphi 0, %s66
      %s81 = sphi 0, %s67
      %s85 = sphi 0, %s85
      %s87 = sphi 0, %s85
      %s88 = sphi 0, %s87
      %s102 = sphi 0, %s88
      %s106 = sphi 0, %s106
      %s108 = sphi 0, %s106
      %s109 = sphi 0, %s108
      %s123 = sphi 0, %s109
      %s131 = sphi 0, %s133
      %s134 = sphi 0, %s131
      %s135 = sphi 0, %s134
      %s151 = sphi 0, %s135
    $region4: #{tpu_custom_call.1} parent=1 // loop_header_branch
      %19 = sbr.rel (%p17) target = $region8
    $region5: #{tpu_custom_call.1} parent=1 // loop_body
      %s21 = ssub.s32 %s16, 1
      %s22 = ssub.s32 %s16, 2
      %s29 = sadd.s32 1, %s24
      %p30 = scmp.ge.s32.totalorder %s29, 2
      %s31 = scalar_select %p30, 0, %s29
      %s32 = sadd.s32 1, %s23
      %s33 = scalar_select %p30, %s32, %s23
      %p34 = scmp.ge.s32.totalorder %s33, 2
      %s35 = scalar_select %p34, 0, %s33
      %s36 = ssub.s32 %s23, %s35
      %s37 = ssub.s32 %s24, %s31
      %s38 = sor.u32 %s36, %s37
      %p39 = scmp.eq.s32.totalorder %s38, 0
      %s41 = sadd.s32 %s40, 1
      %s42 = scalar_select %p39, %s40, %s41
      %p45 = pneg %p39
      %p46 = scmp.eq.s32.totalorder %s16, 3
      %p47 = por %p45, %p46
      %p48 = scmp.ne.s32.totalorder %s40, %s43
      %p49 = scmp.eq.s32.totalorder %s16, 0
      %p50 = por %p48, %p49
      %p51 = scmp.ne.s32.totalorder %s40, %s43
      %p52 = scmp.eq.s32.totalorder %s21, 3
      %p53 = por %p51, %p52
      %p54 = scmp.ne.s32.totalorder %s43, %s44
      %p55 = scmp.eq.s32.totalorder %s21, 0
      %p56 = por %p54, %p55
      %p57 = scmp.ne.s32.totalorder %s43, %s44
      %p58 = scmp.eq.s32.totalorder %s22, 3
      %p59 = por %p57, %p58
      %p61 = scmp.ne.s32.totalorder %s44, %s60
      %p62 = scmp.eq.s32.totalorder %s22, 0
      %p63 = por %p61, %p62
      %s65 = sadd.s32 %s64, 1
      %p68 = scmp.eq.s32.totalorder %s16, 3
      %p69 = scmp.ne.s32.totalorder %s64, %s66
      %p70 = scmp.eq.s32.totalorder %s16, 0
      %p71 = por %p69, %p70
      %p72 = scmp.ne.s32.totalorder %s64, %s66
      %p73 = scmp.eq.s32.totalorder %s21, 3
      %p74 = por %p72, %p73
      %p75 = scmp.ne.s32.totalorder %s66, %s67
      %p76 = scmp.eq.s32.totalorder %s21, 0
      %p77 = por %p75, %p76
      %p78 = scmp.ne.s32.totalorder %s66, %s67
      %p79 = scmp.eq.s32.totalorder %s22, 3
      %p80 = por %p78, %p79
      %p82 = scmp.ne.s32.totalorder %s67, %s81
      %p83 = scmp.eq.s32.totalorder %s22, 0
      %p84 = por %p82, %p83
      %s86 = sadd.s32 %s85, 1
      %p89 = scmp.eq.s32.totalorder %s16, 3
      %p90 = scmp.ne.s32.totalorder %s85, %s87
      %p91 = scmp.eq.s32.totalorder %s16, 0
      %p92 = por %p90, %p91
      %p93 = scmp.ne.s32.totalorder %s85, %s87
      %p94 = scmp.eq.s32.totalorder %s21, 3
      %p95 = por %p93, %p94
      %p96 = scmp.ne.s32.totalorder %s87, %s88
      %p97 = scmp.eq.s32.totalorder %s21, 0
      %p98 = por %p96, %p97
      %p99 = scmp.ne.s32.totalorder %s87, %s88
      %p100 = scmp.eq.s32.totalorder %s22, 3
      %p101 = por %p99, %p100
      %p103 = scmp.ne.s32.totalorder %s88, %s102
      %p104 = scmp.eq.s32.totalorder %s22, 0
      %p105 = por %p103, %p104
      %s107 = sadd.s32 %s106, 1
      %p110 = scmp.eq.s32.totalorder %s16, 3
      %p111 = scmp.ne.s32.totalorder %s106, %s108
      %p112 = scmp.eq.s32.totalorder %s16, 0
      %p113 = por %p111, %p112
      %p114 = scmp.ne.s32.totalorder %s106, %s108
      %p115 = scmp.eq.s32.totalorder %s21, 3
      %p116 = por %p114, %p115
      %p117 = scmp.ne.s32.totalorder %s108, %s109
      %p118 = scmp.eq.s32.totalorder %s21, 0
      %p119 = por %p117, %p118
      %p120 = scmp.ne.s32.totalorder %s108, %s109
      %p121 = scmp.eq.s32.totalorder %s22, 3
      %p122 = por %p120, %p121
      %p124 = scmp.ne.s32.totalorder %s109, %s123
      %p125 = scmp.eq.s32.totalorder %s22, 0
      %p126 = por %p124, %p125
      %s127 = ssub.s32 %s23, %s35
      %s128 = ssub.s32 %s24, %s31
      %s129 = sor.u32 %s127, %s128
      %p130 = scmp.eq.s32.totalorder %s129, 0
      %s132 = sadd.s32 %s131, 1
      %s133 = scalar_select %p130, %s131, %s132
      %p136 = pneg %p130
      %p137 = scmp.eq.s32.totalorder %s16, 3
      %p138 = por %p136, %p137
      %p139 = scmp.ne.s32.totalorder %s131, %s134
      %p140 = scmp.eq.s32.totalorder %s16, 0
      %p141 = por %p139, %p140
      %p142 = scmp.ne.s32.totalorder %s131, %s134
      %p143 = scmp.eq.s32.totalorder %s21, 3
      %p144 = por %p142, %p143
      %p145 = scmp.ne.s32.totalorder %s134, %s135
      %p146 = scmp.eq.s32.totalorder %s21, 0
      %p147 = por %p145, %p146
      %p148 = scmp.ne.s32.totalorder %s134, %s135
      %p149 = scmp.eq.s32.totalorder %s22, 3
      %p150 = por %p148, %p149
      %p152 = scmp.ne.s32.totalorder %s135, %s151
      %p153 = scmp.eq.s32.totalorder %s22, 0
      %p154 = por %p152, %p153
      %p155 = scmp.le.s32.totalorder 1, %s16
      %p156 = scmp.lt.s32.totalorder %s16, 5
      %p157 = pnand %p155, %p156
      %p158 = pneg %p157
      // Predicated region
      $region9: #{tpu_custom_call.1} parent=5 // pred_check
        _
      $region10: #{tpu_custom_call.1} parent=5 // pred_check_branch
        %160 = sbr.rel (%p157) target = $region12
      $region11: #{tpu_custom_call.1} parent=5 // pred_region
        %s161 = ssub.s32 %s16, 1
        // Predicated region
        $region13: #{tpu_custom_call.1} parent=11 // pred_check
          %p162 = pneg %p77
        $region14: #{tpu_custom_call.1} parent=11 // pred_check_branch
          %164 = sbr.rel (%p162) target = $region16
        $region15: #{tpu_custom_call.1} parent=11 // pred_region
          _
        $region16: #{tpu_custom_call.1} parent=11 // pred_fallthru
          _
        // Predicated region
        $region17: #{tpu_custom_call.1} parent=11 // pred_check
          %p165 = pneg %p98
        $region18: #{tpu_custom_call.1} parent=11 // pred_check_branch
          %167 = sbr.rel (%p165) target = $region20
        $region19: #{tpu_custom_call.1} parent=11 // pred_region
          _
        $region20: #{tpu_custom_call.1} parent=11 // pred_fallthru
          _
        // Predicated region
        $region21: #{tpu_custom_call.1} parent=11 // pred_check
          %p168 = pneg %p119
        $region22: #{tpu_custom_call.1} parent=11 // pred_check_branch
          %170 = sbr.rel (%p168) target = $region24
        $region23: #{tpu_custom_call.1} parent=11 // pred_region
          _
        $region24: #{tpu_custom_call.1} parent=11 // pred_fallthru
          _
      $region12: #{tpu_custom_call.1} parent=5 // pred_fallthru
        _
      %p171 = scmp.lt.s32.totalorder %s16, 4
      // Predicated region
      $region25: #{tpu_custom_call.1} parent=5 // pred_check
        %p172 = pneg %p171
      $region26: #{tpu_custom_call.1} parent=5 // pred_check_branch
        %174 = sbr.rel (%p172) target = $region28
      $region27: #{tpu_custom_call.1} parent=5 // pred_region
        // Predicated region
        $region29: #{tpu_custom_call.1} parent=27 // pred_check
          %p175 = pneg %p50
        $region30: #{tpu_custom_call.1} parent=27 // pred_check_branch
          %177 = sbr.rel (%p175) target = $region32
        $region31: #{tpu_custom_call.1} parent=27 // pred_region
          %s178 = sand.u32 %s40, 1
          %s179 = scalar_lea.sflag [#allocation3], %s178
          %s180 = sand.u32 %s40, 1
          %s181 = smul.addr %s180, 128
          %s182 = scalar_lea.vmem [#allocation2], %s181
          %s183 = smul.u32 8, %s24
          %185 = vsyncadd %s179, 0
          %s186 = smul.addr %s183, 2
          %s187 = smul.addr %s23, 32
          %s188 = sadd.s32 %s186, %s187
          %s189 = smul.addr %s188, 8
          %s190 = scalar_lea.hbm %s0, %s189
          %s191 = sshll.u32 %s190, 4
          %s192 = int_to_ptr.hbm [resolvable:$true] %s191
          %s193 = sshll.u32 %s182, 4
          %s194 = int_to_ptr.vmem [resolvable:$true] %s193
          %199 = dma.hbm_to_vmem [thread:$0]  %s192, 2048, %s194, %s179, 128, 128, 8
        $region32: #{tpu_custom_call.1} parent=27 // pred_fallthru
          _
      $region28: #{tpu_custom_call.1} parent=5 // pred_fallthru
        _
      %p200 = scmp.le.s32.totalorder 1, %s16
      %p201 = scmp.lt.s32.totalorder %s16, 5
      %p202 = pnand %p200, %p201
      %p203 = pneg %p202
      // Predicated region
      $region33: #{tpu_custom_call.1} parent=5 // pred_check
        _
      $region34: #{tpu_custom_call.1} parent=5 // pred_check_branch
        %205 = sbr.rel (%p202) target = $region36
      $region35: #{tpu_custom_call.1} parent=5 // pred_region
        %s206 = ssub.s32 %s16, 1
        %s207 = sand.u32 %s43, 1
        %s208 = scalar_lea.sflag [#allocation3], %s207
        %s209 = sand.u32 %s43, 1
        %s210 = smul.addr %s209, 128
        %s211 = scalar_lea.vmem [#allocation2], %s210
        // Predicated region
        $region37: #{tpu_custom_call.1} parent=35 // pred_check
          %p212 = pneg %p56
        $region38: #{tpu_custom_call.1} parent=35 // pred_check_branch
          %214 = sbr.rel (%p212) target = $region40
        $region39: #{tpu_custom_call.1} parent=35 // pred_region
          %216 = dma.done %s208, 2048
        $region40: #{tpu_custom_call.1} parent=35 // pred_fallthru
          _
        %s217 = sand.u32 %s43, 1
        %s218 = scalar_lea.sflag [#allocation3], %s217
        %s219 = sand.u32 %s43, 1
        %s220 = smul.addr %s219, 128
        %s221 = scalar_lea.vmem [#allocation2], %s220
        %p222 = pneg %p56
        %p223 = pneg %p53
        %p224 = pneg %p77
        %p225 = pneg %p74
        %p226 = pneg %p98
        %p227 = pneg %p95
        %p228 = pneg %p119
        %p229 = pneg %p116
        %p230 = pneg %p147
        %p231 = pneg %p144
        %s232 = sand.u32 %s134, 1
        %s233 = scalar_lea.sflag [#allocation4], %s232
        %s234 = sand.u32 %s134, 1
        %s235 = smul.addr %s234, 128
        %s236 = scalar_lea.vmem [#allocation5], %s235
        %s237 = smul.u32 8, %s26
        %s238 = smul.u32 8, %s26
        %v239 = vld [vmem:[%s211] sm:$0xff]
        %v240 = vld [vmem:[%s211 + $0x8] sm:$0xff]
        %v241 = vld [vmem:[%s211 + $0x10] sm:$0xff]
        %v242 = vld [vmem:[%s211 + $0x18] sm:$0xff]
        %v243 = vld [vmem:[%s211 + $0x20] sm:$0xff]
        %v244 = vld [vmem:[%s211 + $0x28] sm:$0xff]
        %v245 = vld [vmem:[%s211 + $0x30] sm:$0xff]
        %v246 = vld [vmem:[%s211 + $0x38] sm:$0xff]
        %v247 = vld [vmem:[%s211 + $0x40] sm:$0xff]
        %v248 = vld [vmem:[%s211 + $0x48] sm:$0xff]
        %v249 = vld [vmem:[%s211 + $0x50] sm:$0xff]
        %v250 = vld [vmem:[%s211 + $0x58] sm:$0xff]
        %v251 = vld [vmem:[%s211 + $0x60] sm:$0xff]
        %v252 = vld [vmem:[%s211 + $0x68] sm:$0xff]
        %v253 = vld [vmem:[%s211 + $0x70] sm:$0xff]
        %v254 = vld [vmem:[%s211 + $0x78] sm:$0xff]
        %v255 = vld [vmem:[%s2] sm:$0xff]
        %v256 = vld [vmem:[%s2 + $0x8] sm:$0xff]
        %v257 = vld [vmem:[%s2 + $0x10] sm:$0xff]
        %v258 = vld [vmem:[%s2 + $0x18] sm:$0xff]
        %v259 = vld [vmem:[%s3] sm:$0x1]
        %v261 = vperm.slane %v259, 0
        %vm263 = vcmask 261120
        %v265 = vsel %vm263, %v239, 0
        %v268 = vsel %vm263, %v240, 0
        %v271 = vsel %vm263, %v241, 0
        %v274 = vsel %vm263, %v242, 0
        %v277 = vsel %vm263, %v243, 0
        %v280 = vsel %vm263, %v244, 0
        %v283 = vsel %vm263, %v245, 0
        %v286 = vsel %vm263, %v246, 0
        %v289 = vsel %vm263, %v247, 0
        %v292 = vsel %vm263, %v248, 0
        %v295 = vsel %vm263, %v249, 0
        %v298 = vsel %vm263, %v250, 0
        %v301 = vsel %vm263, %v251, 0
        %v304 = vsel %vm263, %v252, 0
        %v307 = vsel %vm263, %v253, 0
        %v310 = vsel %vm263, %v254, 0
        %312 = vmatpush.msra.mxu0 0.0
        %313 = vmatpush.msra.mxu0 0.0
        %314 = vmatpush.msra.mxu0 0.0
        %315 = vmatpush.msra.mxu0 0.0
        %316 = vmatpush.msra.mxu0 0.0
        %317 = vmatpush.msra.mxu0 0.0
        %318 = vmatpush.msra.mxu0 0.0
        %319 = vmatpush.msra.mxu0 0.0
        %320 = vmatpush.msra.mxu0 0.0
        %321 = vmatpush.msra.mxu0 0.0
        %322 = vmatpush.msra.mxu0 0.0
        %323 = vmatpush.msra.mxu0 0.0
        %v324 = vand.u32 %v258, 4294901760
        %325 = vmatpush.msra.mxu0 %v324
        %v326 = vand.u32 %v257, 4294901760
        %327 = vmatpush.msra.mxu0 %v326
        %v328 = vand.u32 %v256, 4294901760
        %329 = vmatpush.msra.mxu0 %v328
        %v330 = vand.u32 %v255, 4294901760
        %331 = vmatpush.msra.mxu0 %v330
        %v332 = vand.u32 %v265, 4294901760
        %v333 = vsub.f32 %v265, %v332
        %v334 = vand.u32 %v333, 4294901760
        %v335 = vsub.f32 %v333, %v334
        %v336 = vand.u32 %v335, 4294901760
        %337 = vmatmul.f32.gmra.mxu0 %v336
        %v338 = vpop.f32.mrf.mxu0
        %v339 = vadd.f32 %v261, %v338
        %v340 = vand.u32 %v268, 4294901760
        %v341 = vsub.f32 %v268, %v340
        %v342 = vand.u32 %v341, 4294901760
        %v343 = vsub.f32 %v341, %v342
        %v344 = vand.u32 %v343, 4294901760
        %345 = vmatmul.f32.gmra.mxu0 %v344
        %v346 = vpop.f32.mrf.mxu0
        %v347 = vadd.f32 %v261, %v346
        %v348 = vand.u32 %v271, 4294901760
        %v349 = vsub.f32 %v271, %v348
        %v350 = vand.u32 %v349, 4294901760
        %v351 = vsub.f32 %v349, %v350
        %v352 = vand.u32 %v351, 4294901760
        %353 = vmatmul.f32.gmra.mxu0 %v352
        %v354 = vpop.f32.mrf.mxu0
        %v355 = vadd.f32 %v261, %v354
        %v356 = vand.u32 %v274, 4294901760
        %v357 = vsub.f32 %v274, %v356
        %v358 = vand.u32 %v357, 4294901760
        %v359 = vsub.f32 %v357, %v358
        %v360 = vand.u32 %v359, 4294901760
        %361 = vmatmul.f32.gmra.mxu0 %v360
        %v362 = vpop.f32.mrf.mxu0
        %v363 = vadd.f32 %v261, %v362
        %v364 = vand.u32 %v277, 4294901760
        %v365 = vsub.f32 %v277, %v364
        %v366 = vand.u32 %v365, 4294901760
        %v367 = vsub.f32 %v365, %v366
        %v368 = vand.u32 %v367, 4294901760
        %369 = vmatmul.f32.gmra.mxu0 %v368
        %v370 = vpop.f32.mrf.mxu0
        %v371 = vadd.f32 %v261, %v370
        %v372 = vand.u32 %v280, 4294901760
        %v373 = vsub.f32 %v280, %v372
        %v374 = vand.u32 %v373, 4294901760
        %v375 = vsub.f32 %v373, %v374
        %v376 = vand.u32 %v375, 4294901760
        %377 = vmatmul.f32.gmra.mxu0 %v376
        %v378 = vpop.f32.mrf.mxu0
        %v379 = vadd.f32 %v261, %v378
        %v380 = vand.u32 %v283, 4294901760
        %v381 = vsub.f32 %v283, %v380
        %v382 = vand.u32 %v381, 4294901760
        %v383 = vsub.f32 %v381, %v382
        %v384 = vand.u32 %v383, 4294901760
        %385 = vmatmul.f32.gmra.mxu0 %v384
        %v386 = vpop.f32.mrf.mxu0
        %v387 = vadd.f32 %v261, %v386
        %v388 = vand.u32 %v286, 4294901760
        %v389 = vsub.f32 %v286, %v388
        %v390 = vand.u32 %v389, 4294901760
        %v391 = vsub.f32 %v389, %v390
        %v392 = vand.u32 %v391, 4294901760
        %393 = vmatmul.f32.gmra.mxu0 %v392
        %v394 = vpop.f32.mrf.mxu0
        %v395 = vadd.f32 %v261, %v394
        %v396 = vand.u32 %v289, 4294901760
        %v397 = vsub.f32 %v289, %v396
        %v398 = vand.u32 %v397, 4294901760
        %v399 = vsub.f32 %v397, %v398
        %v400 = vand.u32 %v399, 4294901760
        %401 = vmatmul.f32.gmra.mxu0 %v400
        %v402 = vpop.f32.mrf.mxu0
        %v403 = vadd.f32 %v261, %v402
        %v404 = vand.u32 %v292, 4294901760
        %v405 = vsub.f32 %v292, %v404
        %v406 = vand.u32 %v405, 4294901760
        %v407 = vsub.f32 %v405, %v406
        %v408 = vand.u32 %v407, 4294901760
        %409 = vmatmul.f32.gmra.mxu0 %v408
        %v410 = vpop.f32.mrf.mxu0
        %v411 = vadd.f32 %v261, %v410
        %v412 = vand.u32 %v295, 4294901760
        %v413 = vsub.f32 %v295, %v412
        %v414 = vand.u32 %v413, 4294901760
        %v415 = vsub.f32 %v413, %v414
        %v416 = vand.u32 %v415, 4294901760
        %417 = vmatmul.f32.gmra.mxu0 %v416
        %v418 = vpop.f32.mrf.mxu0
        %v419 = vadd.f32 %v261, %v418
        %v420 = vand.u32 %v298, 4294901760
        %v421 = vsub.f32 %v298, %v420
        %v422 = vand.u32 %v421, 4294901760
        %v423 = vsub.f32 %v421, %v422
        %v424 = vand.u32 %v423, 4294901760
        %425 = vmatmul.f32.gmra.mxu0 %v424
        %v426 = vpop.f32.mrf.mxu0
        %v427 = vadd.f32 %v261, %v426
        %v428 = vand.u32 %v301, 4294901760
        %v429 = vsub.f32 %v301, %v428
        %v430 = vand.u32 %v429, 4294901760
        %v431 = vsub.f32 %v429, %v430
        %v432 = vand.u32 %v431, 4294901760
        %433 = vmatmul.f32.gmra.mxu0 %v432
        %v434 = vpop.f32.mrf.mxu0
        %v435 = vadd.f32 %v261, %v434
        %v436 = vand.u32 %v304, 4294901760
        %v437 = vsub.f32 %v304, %v436
        %v438 = vand.u32 %v437, 4294901760
        %v439 = vsub.f32 %v437, %v438
        %v440 = vand.u32 %v439, 4294901760
        %441 = vmatmul.f32.gmra.mxu0 %v440
        %v442 = vpop.f32.mrf.mxu0
        %v443 = vadd.f32 %v261, %v442
        %v444 = vand.u32 %v307, 4294901760
        %v445 = vsub.f32 %v307, %v444
        %v446 = vand.u32 %v445, 4294901760
        %v447 = vsub.f32 %v445, %v446
        %v448 = vand.u32 %v447, 4294901760
        %449 = vmatmul.f32.gmra.mxu0 %v448
        %v450 = vpop.f32.mrf.mxu0
        %v451 = vadd.f32 %v261, %v450
        %v452 = vand.u32 %v310, 4294901760
        %v453 = vsub.f32 %v310, %v452
        %v454 = vand.u32 %v453, 4294901760
        %v455 = vsub.f32 %v453, %v454
        %v456 = vand.u32 %v455, 4294901760
        %457 = vmatmul.f32.gmra.mxu0 %v456
        %v458 = vpop.f32.mrf.mxu0
        %v459 = vadd.f32 %v261, %v458
        %460 = vdwg.mxu0
        %461 = vmatpush.msra.mxu0 0.0
        %462 = vmatpush.msra.mxu0 0.0
        %463 = vmatpush.msra.mxu0 0.0
        %464 = vmatpush.msra.mxu0 0.0
        %465 = vmatpush.msra.mxu0 0.0
        %466 = vmatpush.msra.mxu0 0.0
        %467 = vmatpush.msra.mxu0 0.0
        %468 = vmatpush.msra.mxu0 0.0
        %469 = vmatpush.msra.mxu0 0.0
        %470 = vmatpush.msra.mxu0 0.0
        %471 = vmatpush.msra.mxu0 0.0
        %472 = vmatpush.msra.mxu0 0.0
        %v473 = vand.u32 %v258, 4294901760
        %v474 = vsub.f32 %v258, %v473
        %v475 = vand.u32 %v474, 4294901760
        %v476 = vsub.f32 %v474, %v475
        %v477 = vand.u32 %v476, 4294901760
        %478 = vmatpush.msra.mxu0 %v477
        %v479 = vand.u32 %v257, 4294901760
        %v480 = vsub.f32 %v257, %v479
        %v481 = vand.u32 %v480, 4294901760
        %v482 = vsub.f32 %v480, %v481
        %v483 = vand.u32 %v482, 4294901760
        %484 = vmatpush.msra.mxu0 %v483
        %v485 = vand.u32 %v256, 4294901760
        %v486 = vsub.f32 %v256, %v485
        %v487 = vand.u32 %v486, 4294901760
        %v488 = vsub.f32 %v486, %v487
        %v489 = vand.u32 %v488, 4294901760
        %490 = vmatpush.msra.mxu0 %v489
        %v491 = vand.u32 %v255, 4294901760
        %v492 = vsub.f32 %v255, %v491
        %v493 = vand.u32 %v492, 4294901760
        %v494 = vsub.f32 %v492, %v493
        %v495 = vand.u32 %v494, 4294901760
        %496 = vmatpush.msra.mxu0 %v495
        %v497 = vand.u32 %v265, 4294901760
        %498 = vmatmul.f32.gmra.mxu0 %v497
        %v499 = vpop.f32.mrf.mxu0
        %v500 = vadd.f32 %v339, %v499
        %v501 = vand.u32 %v268, 4294901760
        %502 = vmatmul.f32.gmra.mxu0 %v501
        %v503 = vpop.f32.mrf.mxu0
        %v504 = vadd.f32 %v347, %v503
        %v505 = vand.u32 %v271, 4294901760
        %506 = vmatmul.f32.gmra.mxu0 %v505
        %v507 = vpop.f32.mrf.mxu0
        %v508 = vadd.f32 %v355, %v507
        %v509 = vand.u32 %v274, 4294901760
        %510 = vmatmul.f32.gmra.mxu0 %v509
        %v511 = vpop.f32.mrf.mxu0
        %v512 = vadd.f32 %v363, %v511
        %v513 = vand.u32 %v277, 4294901760
        %514 = vmatmul.f32.gmra.mxu0 %v513
        %v515 = vpop.f32.mrf.mxu0
        %v516 = vadd.f32 %v371, %v515
        %v517 = vand.u32 %v280, 4294901760
        %518 = vmatmul.f32.gmra.mxu0 %v517
        %v519 = vpop.f32.mrf.mxu0
        %v520 = vadd.f32 %v379, %v519
        %v521 = vand.u32 %v283, 4294901760
        %522 = vmatmul.f32.gmra.mxu0 %v521
        %v523 = vpop.f32.mrf.mxu0
        %v524 = vadd.f32 %v387, %v523
        %v525 = vand.u32 %v286, 4294901760
        %526 = vmatmul.f32.gmra.mxu0 %v525
        %v527 = vpop.f32.mrf.mxu0
        %v528 = vadd.f32 %v395, %v527
        %v529 = vand.u32 %v289, 4294901760
        %530 = vmatmul.f32.gmra.mxu0 %v529
        %v531 = vpop.f32.mrf.mxu0
        %v532 = vadd.f32 %v403, %v531
        %v533 = vand.u32 %v292, 4294901760
        %534 = vmatmul.f32.gmra.mxu0 %v533
        %v535 = vpop.f32.mrf.mxu0
        %v536 = vadd.f32 %v411, %v535
        %v537 = vand.u32 %v295, 4294901760
        %538 = vmatmul.f32.gmra.mxu0 %v537
        %v539 = vpop.f32.mrf.mxu0
        %v540 = vadd.f32 %v419, %v539
        %v541 = vand.u32 %v298, 4294901760
        %542 = vmatmul.f32.gmra.mxu0 %v541
        %v543 = vpop.f32.mrf.mxu0
        %v544 = vadd.f32 %v427, %v543
        %v545 = vand.u32 %v301, 4294901760
        %546 = vmatmul.f32.gmra.mxu0 %v545
        %v547 = vpop.f32.mrf.mxu0
        %v548 = vadd.f32 %v435, %v547
        %v549 = vand.u32 %v304, 4294901760
        %550 = vmatmul.f32.gmra.mxu0 %v549
        %v551 = vpop.f32.mrf.mxu0
        %v552 = vadd.f32 %v443, %v551
        %v553 = vand.u32 %v307, 4294901760
        %554 = vmatmul.f32.gmra.mxu0 %v553
        %v555 = vpop.f32.mrf.mxu0
        %v556 = vadd.f32 %v451, %v555
        %v557 = vand.u32 %v310, 4294901760
        %558 = vmatmul.f32.gmra.mxu0 %v557
        %v559 = vpop.f32.mrf.mxu0
        %v560 = vadd.f32 %v459, %v559
        %561 = vdwg.mxu0
        %562 = vmatpush.msra.mxu0 0.0
        %563 = vmatpush.msra.mxu0 0.0
        %564 = vmatpush.msra.mxu0 0.0
        %565 = vmatpush.msra.mxu0 0.0
        %566 = vmatpush.msra.mxu0 0.0
        %567 = vmatpush.msra.mxu0 0.0
        %568 = vmatpush.msra.mxu0 0.0
        %569 = vmatpush.msra.mxu0 0.0
        %570 = vmatpush.msra.mxu0 0.0
        %571 = vmatpush.msra.mxu0 0.0
        %572 = vmatpush.msra.mxu0 0.0
        %573 = vmatpush.msra.mxu0 0.0
        %v574 = vand.u32 %v258, 4294901760
        %v575 = vsub.f32 %v258, %v574
        %576 = vmatpush.msra.mxu0 %v575
        %v577 = vand.u32 %v257, 4294901760
        %v578 = vsub.f32 %v257, %v577
        %579 = vmatpush.msra.mxu0 %v578
        %v580 = vand.u32 %v256, 4294901760
        %v581 = vsub.f32 %v256, %v580
        %582 = vmatpush.msra.mxu0 %v581
        %v583 = vand.u32 %v255, 4294901760
        %v584 = vsub.f32 %v255, %v583
        %585 = vmatpush.msra.mxu0 %v584
        %v586 = vand.u32 %v265, 4294901760
        %v587 = vsub.f32 %v265, %v586
        %588 = vmatmul.f32.gmra.mxu0 %v587
        %v589 = vpop.f32.mrf.mxu0
        %v590 = vadd.f32 %v500, %v589
        %v591 = vand.u32 %v268, 4294901760
        %v592 = vsub.f32 %v268, %v591
        %593 = vmatmul.f32.gmra.mxu0 %v592
        %v594 = vpop.f32.mrf.mxu0
        %v595 = vadd.f32 %v504, %v594
        %v596 = vand.u32 %v271, 4294901760
        %v597 = vsub.f32 %v271, %v596
        %598 = vmatmul.f32.gmra.mxu0 %v597
        %v599 = vpop.f32.mrf.mxu0
        %v600 = vadd.f32 %v508, %v599
        %v601 = vand.u32 %v274, 4294901760
        %v602 = vsub.f32 %v274, %v601
        %603 = vmatmul.f32.gmra.mxu0 %v602
        %v604 = vpop.f32.mrf.mxu0
        %v605 = vadd.f32 %v512, %v604
        %v606 = vand.u32 %v277, 4294901760
        %v607 = vsub.f32 %v277, %v606
        %608 = vmatmul.f32.gmra.mxu0 %v607
        %v609 = vpop.f32.mrf.mxu0
        %v610 = vadd.f32 %v516, %v609
        %v611 = vand.u32 %v280, 4294901760
        %v612 = vsub.f32 %v280, %v611
        %613 = vmatmul.f32.gmra.mxu0 %v612
        %v614 = vpop.f32.mrf.mxu0
        %v615 = vadd.f32 %v520, %v614
        %v616 = vand.u32 %v283, 4294901760
        %v617 = vsub.f32 %v283, %v616
        %618 = vmatmul.f32.gmra.mxu0 %v617
        %v619 = vpop.f32.mrf.mxu0
        %v620 = vadd.f32 %v524, %v619
        %v621 = vand.u32 %v286, 4294901760
        %v622 = vsub.f32 %v286, %v621
        %623 = vmatmul.f32.gmra.mxu0 %v622
        %v624 = vpop.f32.mrf.mxu0
        %v625 = vadd.f32 %v528, %v624
        %v626 = vand.u32 %v289, 4294901760
        %v627 = vsub.f32 %v289, %v626
        %628 = vmatmul.f32.gmra.mxu0 %v627
        %v629 = vpop.f32.mrf.mxu0
        %v630 = vadd.f32 %v532, %v629
        %v631 = vand.u32 %v292, 4294901760
        %v632 = vsub.f32 %v292, %v631
        %633 = vmatmul.f32.gmra.mxu0 %v632
        %v634 = vpop.f32.mrf.mxu0
        %v635 = vadd.f32 %v536, %v634
        %v636 = vand.u32 %v295, 4294901760
        %v637 = vsub.f32 %v295, %v636
        %638 = vmatmul.f32.gmra.mxu0 %v637
        %v639 = vpop.f32.mrf.mxu0
        %v640 = vadd.f32 %v540, %v639
        %v641 = vand.u32 %v298, 4294901760
        %v642 = vsub.f32 %v298, %v641
        %643 = vmatmul.f32.gmra.mxu0 %v642
        %v644 = vpop.f32.mrf.mxu0
        %v645 = vadd.f32 %v544, %v644
        %v646 = vand.u32 %v301, 4294901760
        %v647 = vsub.f32 %v301, %v646
        %648 = vmatmul.f32.gmra.mxu0 %v647
        %v649 = vpop.f32.mrf.mxu0
        %v650 = vadd.f32 %v548, %v649
        %v651 = vand.u32 %v304, 4294901760
        %v652 = vsub.f32 %v304, %v651
        %653 = vmatmul.f32.gmra.mxu0 %v652
        %v654 = vpop.f32.mrf.mxu0
        %v655 = vadd.f32 %v552, %v654
        %v656 = vand.u32 %v307, 4294901760
        %v657 = vsub.f32 %v307, %v656
        %658 = vmatmul.f32.gmra.mxu0 %v657
        %v659 = vpop.f32.mrf.mxu0
        %v660 = vadd.f32 %v556, %v659
        %v661 = vand.u32 %v310, 4294901760
        %v662 = vsub.f32 %v310, %v661
        %663 = vmatmul.f32.gmra.mxu0 %v662
        %v664 = vpop.f32.mrf.mxu0
        %v665 = vadd.f32 %v560, %v664
        %666 = vdwg.mxu0
        %667 = vmatpush.msra.mxu0 0.0
        %668 = vmatpush.msra.mxu0 0.0
        %669 = vmatpush.msra.mxu0 0.0
        %670 = vmatpush.msra.mxu0 0.0
        %671 = vmatpush.msra.mxu0 0.0
        %672 = vmatpush.msra.mxu0 0.0
        %673 = vmatpush.msra.mxu0 0.0
        %674 = vmatpush.msra.mxu0 0.0
        %675 = vmatpush.msra.mxu0 0.0
        %676 = vmatpush.msra.mxu0 0.0
        %677 = vmatpush.msra.mxu0 0.0
        %678 = vmatpush.msra.mxu0 0.0
        %v679 = vand.u32 %v258, 4294901760
        %680 = vmatpush.msra.mxu0 %v679
        %v681 = vand.u32 %v257, 4294901760
        %682 = vmatpush.msra.mxu0 %v681
        %v683 = vand.u32 %v256, 4294901760
        %684 = vmatpush.msra.mxu0 %v683
        %v685 = vand.u32 %v255, 4294901760
        %686 = vmatpush.msra.mxu0 %v685
        %v687 = vand.u32 %v265, 4294901760
        %v688 = vsub.f32 %v265, %v687
        %v689 = vand.u32 %v688, 4294901760
        %690 = vmatmul.f32.gmra.mxu0 %v689
        %v691 = vpop.f32.mrf.mxu0
        %v692 = vadd.f32 %v590, %v691
        %v693 = vand.u32 %v268, 4294901760
        %v694 = vsub.f32 %v268, %v693
        %v695 = vand.u32 %v694, 4294901760
        %696 = vmatmul.f32.gmra.mxu0 %v695
        %v697 = vpop.f32.mrf.mxu0
        %v698 = vadd.f32 %v595, %v697
        %v699 = vand.u32 %v271, 4294901760
        %v700 = vsub.f32 %v271, %v699
        %v701 = vand.u32 %v700, 4294901760
        %702 = vmatmul.f32.gmra.mxu0 %v701
        %v703 = vpop.f32.mrf.mxu0
        %v704 = vadd.f32 %v600, %v703
        %v705 = vand.u32 %v274, 4294901760
        %v706 = vsub.f32 %v274, %v705
        %v707 = vand.u32 %v706, 4294901760
        %708 = vmatmul.f32.gmra.mxu0 %v707
        %v709 = vpop.f32.mrf.mxu0
        %v710 = vadd.f32 %v605, %v709
        %v711 = vand.u32 %v277, 4294901760
        %v712 = vsub.f32 %v277, %v711
        %v713 = vand.u32 %v712, 4294901760
        %714 = vmatmul.f32.gmra.mxu0 %v713
        %v715 = vpop.f32.mrf.mxu0
        %v716 = vadd.f32 %v610, %v715
        %v717 = vand.u32 %v280, 4294901760
        %v718 = vsub.f32 %v280, %v717
        %v719 = vand.u32 %v718, 4294901760
        %720 = vmatmul.f32.gmra.mxu0 %v719
        %v721 = vpop.f32.mrf.mxu0
        %v722 = vadd.f32 %v615, %v721
        %v723 = vand.u32 %v283, 4294901760
        %v724 = vsub.f32 %v283, %v723
        %v725 = vand.u32 %v724, 4294901760
        %726 = vmatmul.f32.gmra.mxu0 %v725
        %v727 = vpop.f32.mrf.mxu0
        %v728 = vadd.f32 %v620, %v727
        %v729 = vand.u32 %v286, 4294901760
        %v730 = vsub.f32 %v286, %v729
        %v731 = vand.u32 %v730, 4294901760
        %732 = vmatmul.f32.gmra.mxu0 %v731
        %v733 = vpop.f32.mrf.mxu0
        %v734 = vadd.f32 %v625, %v733
        %v735 = vand.u32 %v289, 4294901760
        %v736 = vsub.f32 %v289, %v735
        %v737 = vand.u32 %v736, 4294901760
        %738 = vmatmul.f32.gmra.mxu0 %v737
        %v739 = vpop.f32.mrf.mxu0
        %v740 = vadd.f32 %v630, %v739
        %v741 = vand.u32 %v292, 4294901760
        %v742 = vsub.f32 %v292, %v741
        %v743 = vand.u32 %v742, 4294901760
        %744 = vmatmul.f32.gmra.mxu0 %v743
        %v745 = vpop.f32.mrf.mxu0
        %v746 = vadd.f32 %v635, %v745
        %v747 = vand.u32 %v295, 4294901760
        %v748 = vsub.f32 %v295, %v747
        %v749 = vand.u32 %v748, 4294901760
        %750 = vmatmul.f32.gmra.mxu0 %v749
        %v751 = vpop.f32.mrf.mxu0
        %v752 = vadd.f32 %v640, %v751
        %v753 = vand.u32 %v298, 4294901760
        %v754 = vsub.f32 %v298, %v753
        %v755 = vand.u32 %v754, 4294901760
        %756 = vmatmul.f32.gmra.mxu0 %v755
        %v757 = vpop.f32.mrf.mxu0
        %v758 = vadd.f32 %v645, %v757
        %v759 = vand.u32 %v301, 4294901760
        %v760 = vsub.f32 %v301, %v759
        %v761 = vand.u32 %v760, 4294901760
        %762 = vmatmul.f32.gmra.mxu0 %v761
        %v763 = vpop.f32.mrf.mxu0
        %v764 = vadd.f32 %v650, %v763
        %v765 = vand.u32 %v304, 4294901760
        %v766 = vsub.f32 %v304, %v765
        %v767 = vand.u32 %v766, 4294901760
        %768 = vmatmul.f32.gmra.mxu0 %v767
        %v769 = vpop.f32.mrf.mxu0
        %v770 = vadd.f32 %v655, %v769
        %v771 = vand.u32 %v307, 4294901760
        %v772 = vsub.f32 %v307, %v771
        %v773 = vand.u32 %v772, 4294901760
        %774 = vmatmul.f32.gmra.mxu0 %v773
        %v775 = vpop.f32.mrf.mxu0
        %v776 = vadd.f32 %v660, %v775
        %v777 = vand.u32 %v310, 4294901760
        %v778 = vsub.f32 %v310, %v777
        %v779 = vand.u32 %v778, 4294901760
        %780 = vmatmul.f32.gmra.mxu0 %v779
        %v781 = vpop.f32.mrf.mxu0
        %v782 = vadd.f32 %v665, %v781
        %783 = vdwg.mxu0
        %784 = vmatpush.msra.mxu0 0.0
        %785 = vmatpush.msra.mxu0 0.0
        %786 = vmatpush.msra.mxu0 0.0
        %787 = vmatpush.msra.mxu0 0.0
        %788 = vmatpush.msra.mxu0 0.0
        %789 = vmatpush.msra.mxu0 0.0
        %790 = vmatpush.msra.mxu0 0.0
        %791 = vmatpush.msra.mxu0 0.0
        %792 = vmatpush.msra.mxu0 0.0
        %793 = vmatpush.msra.mxu0 0.0
        %794 = vmatpush.msra.mxu0 0.0
        %795 = vmatpush.msra.mxu0 0.0
        %v796 = vand.u32 %v258, 4294901760
        %v797 = vsub.f32 %v258, %v796
        %v798 = vand.u32 %v797, 4294901760
        %799 = vmatpush.msra.mxu0 %v798
        %v800 = vand.u32 %v257, 4294901760
        %v801 = vsub.f32 %v257, %v800
        %v802 = vand.u32 %v801, 4294901760
        %803 = vmatpush.msra.mxu0 %v802
        %v804 = vand.u32 %v256, 4294901760
        %v805 = vsub.f32 %v256, %v804
        %v806 = vand.u32 %v805, 4294901760
        %807 = vmatpush.msra.mxu0 %v806
        %v808 = vand.u32 %v255, 4294901760
        %v809 = vsub.f32 %v255, %v808
        %v810 = vand.u32 %v809, 4294901760
        %811 = vmatpush.msra.mxu0 %v810
        %v812 = vand.u32 %v265, 4294901760
        %813 = vmatmul.f32.gmra.mxu0 %v812
        %v814 = vpop.f32.mrf.mxu0
        %v815 = vadd.f32 %v692, %v814
        %v816 = vand.u32 %v268, 4294901760
        %817 = vmatmul.f32.gmra.mxu0 %v816
        %v818 = vpop.f32.mrf.mxu0
        %v819 = vadd.f32 %v698, %v818
        %v820 = vand.u32 %v271, 4294901760
        %821 = vmatmul.f32.gmra.mxu0 %v820
        %v822 = vpop.f32.mrf.mxu0
        %v823 = vadd.f32 %v704, %v822
        %v824 = vand.u32 %v274, 4294901760
        %825 = vmatmul.f32.gmra.mxu0 %v824
        %v826 = vpop.f32.mrf.mxu0
        %v827 = vadd.f32 %v710, %v826
        %v828 = vand.u32 %v277, 4294901760
        %829 = vmatmul.f32.gmra.mxu0 %v828
        %v830 = vpop.f32.mrf.mxu0
        %v831 = vadd.f32 %v716, %v830
        %v832 = vand.u32 %v280, 4294901760
        %833 = vmatmul.f32.gmra.mxu0 %v832
        %v834 = vpop.f32.mrf.mxu0
        %v835 = vadd.f32 %v722, %v834
        %v836 = vand.u32 %v283, 4294901760
        %837 = vmatmul.f32.gmra.mxu0 %v836
        %v838 = vpop.f32.mrf.mxu0
        %v839 = vadd.f32 %v728, %v838
        %v840 = vand.u32 %v286, 4294901760
        %841 = vmatmul.f32.gmra.mxu0 %v840
        %v842 = vpop.f32.mrf.mxu0
        %v843 = vadd.f32 %v734, %v842
        %v844 = vand.u32 %v289, 4294901760
        %845 = vmatmul.f32.gmra.mxu0 %v844
        %v846 = vpop.f32.mrf.mxu0
        %v847 = vadd.f32 %v740, %v846
        %v848 = vand.u32 %v292, 4294901760
        %849 = vmatmul.f32.gmra.mxu0 %v848
        %v850 = vpop.f32.mrf.mxu0
        %v851 = vadd.f32 %v746, %v850
        %v852 = vand.u32 %v295, 4294901760
        %853 = vmatmul.f32.gmra.mxu0 %v852
        %v854 = vpop.f32.mrf.mxu0
        %v855 = vadd.f32 %v752, %v854
        %v856 = vand.u32 %v298, 4294901760
        %857 = vmatmul.f32.gmra.mxu0 %v856
        %v858 = vpop.f32.mrf.mxu0
        %v859 = vadd.f32 %v758, %v858
        %v860 = vand.u32 %v301, 4294901760
        %861 = vmatmul.f32.gmra.mxu0 %v860
        %v862 = vpop.f32.mrf.mxu0
        %v863 = vadd.f32 %v764, %v862
        %v864 = vand.u32 %v304, 4294901760
        %865 = vmatmul.f32.gmra.mxu0 %v864
        %v866 = vpop.f32.mrf.mxu0
        %v867 = vadd.f32 %v770, %v866
        %v868 = vand.u32 %v307, 4294901760
        %869 = vmatmul.f32.gmra.mxu0 %v868
        %v870 = vpop.f32.mrf.mxu0
        %v871 = vadd.f32 %v776, %v870
        %v872 = vand.u32 %v310, 4294901760
        %873 = vmatmul.f32.gmra.mxu0 %v872
        %v874 = vpop.f32.mrf.mxu0
        %v875 = vadd.f32 %v782, %v874
        %876 = vdwg.mxu0
        %877 = vmatpush.msra.mxu0 0.0
        %878 = vmatpush.msra.mxu0 0.0
        %879 = vmatpush.msra.mxu0 0.0
        %880 = vmatpush.msra.mxu0 0.0
        %881 = vmatpush.msra.mxu0 0.0
        %882 = vmatpush.msra.mxu0 0.0
        %883 = vmatpush.msra.mxu0 0.0
        %884 = vmatpush.msra.mxu0 0.0
        %885 = vmatpush.msra.mxu0 0.0
        %886 = vmatpush.msra.mxu0 0.0
        %887 = vmatpush.msra.mxu0 0.0
        %888 = vmatpush.msra.mxu0 0.0
        %v889 = vand.u32 %v258, 4294901760
        %890 = vmatpush.msra.mxu0 %v889
        %v891 = vand.u32 %v257, 4294901760
        %892 = vmatpush.msra.mxu0 %v891
        %v893 = vand.u32 %v256, 4294901760
        %894 = vmatpush.msra.mxu0 %v893
        %v895 = vand.u32 %v255, 4294901760
        %896 = vmatpush.msra.mxu0 %v895
        %v897 = vand.u32 %v265, 4294901760
        %898 = vmatmul.f32.gmra.mxu0 %v897
        %v899 = vpop.f32.mrf.mxu0
        %v900 = vadd.f32 %v815, %v899
        %v901 = vand.u32 %v268, 4294901760
        %902 = vmatmul.f32.gmra.mxu0 %v901
        %v903 = vpop.f32.mrf.mxu0
        %v904 = vadd.f32 %v819, %v903
        %v905 = vand.u32 %v271, 4294901760
        %906 = vmatmul.f32.gmra.mxu0 %v905
        %v907 = vpop.f32.mrf.mxu0
        %v908 = vadd.f32 %v823, %v907
        %v909 = vand.u32 %v274, 4294901760
        %910 = vmatmul.f32.gmra.mxu0 %v909
        %v911 = vpop.f32.mrf.mxu0
        %v912 = vadd.f32 %v827, %v911
        %v913 = vand.u32 %v277, 4294901760
        %914 = vmatmul.f32.gmra.mxu0 %v913
        %v915 = vpop.f32.mrf.mxu0
        %v916 = vadd.f32 %v831, %v915
        %v917 = vand.u32 %v280, 4294901760
        %918 = vmatmul.f32.gmra.mxu0 %v917
        %v919 = vpop.f32.mrf.mxu0
        %v920 = vadd.f32 %v835, %v919
        %v921 = vand.u32 %v283, 4294901760
        %922 = vmatmul.f32.gmra.mxu0 %v921
        %v923 = vpop.f32.mrf.mxu0
        %v924 = vadd.f32 %v839, %v923
        %v925 = vand.u32 %v286, 4294901760
        %926 = vmatmul.f32.gmra.mxu0 %v925
        %v927 = vpop.f32.mrf.mxu0
        %v928 = vadd.f32 %v843, %v927
        %v929 = vand.u32 %v289, 4294901760
        %930 = vmatmul.f32.gmra.mxu0 %v929
        %v931 = vpop.f32.mrf.mxu0
        %v932 = vadd.f32 %v847, %v931
        %v933 = vand.u32 %v292, 4294901760
        %934 = vmatmul.f32.gmra.mxu0 %v933
        %v935 = vpop.f32.mrf.mxu0
        %v936 = vadd.f32 %v851, %v935
        %v937 = vand.u32 %v295, 4294901760
        %938 = vmatmul.f32.gmra.mxu0 %v937
        %v939 = vpop.f32.mrf.mxu0
        %v940 = vadd.f32 %v855, %v939
        %v941 = vand.u32 %v298, 4294901760
        %942 = vmatmul.f32.gmra.mxu0 %v941
        %v943 = vpop.f32.mrf.mxu0
        %v944 = vadd.f32 %v859, %v943
        %v945 = vand.u32 %v301, 4294901760
        %946 = vmatmul.f32.gmra.mxu0 %v945
        %v947 = vpop.f32.mrf.mxu0
        %v948 = vadd.f32 %v863, %v947
        %v949 = vand.u32 %v304, 4294901760
        %950 = vmatmul.f32.gmra.mxu0 %v949
        %v951 = vpop.f32.mrf.mxu0
        %v952 = vadd.f32 %v867, %v951
        %v953 = vand.u32 %v307, 4294901760
        %954 = vmatmul.f32.gmra.mxu0 %v953
        %v955 = vpop.f32.mrf.mxu0
        %v956 = vadd.f32 %v871, %v955
        %v957 = vand.u32 %v310, 4294901760
        %958 = vmatmul.f32.gmra.mxu0 %v957
        %v959 = vpop.f32.mrf.mxu0
        %v960 = vadd.f32 %v875, %v959
        %961 = vdwg.mxu0
        %v962 = vld [vmem:[%s1] sm:$0xff]
        %v963 = vld [vmem:[%s1 + $0x8] sm:$0xff]
        %vm964 = vcmask 130048
        %v966 = vsel %vm964, %v962, 0
        %v969 = vsel %vm964, %v963, 0
        %971 = vmatpush.msra.mxu0 0.0
        %972 = vmatpush.msra.mxu0 0.0
        %973 = vmatpush.msra.mxu0 0.0
        %974 = vmatpush.msra.mxu0 0.0
        %975 = vmatpush.msra.mxu0 0.0
        %976 = vmatpush.msra.mxu0 0.0
        %977 = vmatpush.msra.mxu0 0.0
        %978 = vmatpush.msra.mxu0 0.0
        %979 = vmatpush.msra.mxu0 0.0
        %980 = vmatpush.msra.mxu0 0.0
        %981 = vmatpush.msra.mxu0 0.0
        %982 = vmatpush.msra.mxu0 0.0
        %983 = vmatpush.msra.mxu0 0.0
        %984 = vmatpush.msra.mxu0 0.0
        %v985 = vand.u32 %v240, 4294901760
        %986 = vmatpush.msra.mxu0 %v985
        %v987 = vand.u32 %v239, 4294901760
        %988 = vmatpush.msra.mxu0 %v987
        %v989 = vand.u32 %v966, 4294901760
        %v990 = vsub.f32 %v966, %v989
        %v991 = vand.u32 %v990, 4294901760
        %v992 = vsub.f32 %v990, %v991
        %v993 = vand.u32 %v992, 4294901760
        %994 = vmatmul.f32.gmra.mxu0 %v993
        %v995 = vpop.f32.mrf.mxu0
        %v996 = vadd.f32 0.0, %v995
        %v997 = vand.u32 %v969, 4294901760
        %v998 = vsub.f32 %v969, %v997
        %v999 = vand.u32 %v998, 4294901760
        %v1000 = vsub.f32 %v998, %v999
        %v1001 = vand.u32 %v1000, 4294901760
        %1002 = vmatmul.f32.gmra.mxu0 %v1001
        %v1003 = vpop.f32.mrf.mxu0
        %v1004 = vadd.f32 0.0, %v1003
        %1005 = vdwg.mxu0
        %1006 = vmatpush.msra.mxu0 0.0
        %1007 = vmatpush.msra.mxu0 0.0
        %1008 = vmatpush.msra.mxu0 0.0
        %1009 = vmatpush.msra.mxu0 0.0
        %1010 = vmatpush.msra.mxu0 0.0
        %1011 = vmatpush.msra.mxu0 0.0
        %1012 = vmatpush.msra.mxu0 0.0
        %1013 = vmatpush.msra.mxu0 0.0
        %1014 = vmatpush.msra.mxu0 0.0
        %1015 = vmatpush.msra.mxu0 0.0
        %1016 = vmatpush.msra.mxu0 0.0
        %1017 = vmatpush.msra.mxu0 0.0
        %1018 = vmatpush.msra.mxu0 0.0
        %1019 = vmatpush.msra.mxu0 0.0
        %v1020 = vand.u32 %v240, 4294901760
        %v1021 = vsub.f32 %v240, %v1020
        %v1022 = vand.u32 %v1021, 4294901760
        %v1023 = vsub.f32 %v1021, %v1022
        %v1024 = vand.u32 %v1023, 4294901760
        %1025 = vmatpush.msra.mxu0 %v1024
        %v1026 = vand.u32 %v239, 4294901760
        %v1027 = vsub.f32 %v239, %v1026
        %v1028 = vand.u32 %v1027, 4294901760
        %v1029 = vsub.f32 %v1027, %v1028
        %v1030 = vand.u32 %v1029, 4294901760
        %1031 = vmatpush.msra.mxu0 %v1030
        %v1032 = vand.u32 %v966, 4294901760
        %1033 = vmatmul.f32.gmra.mxu0 %v1032
        %v1034 = vpop.f32.mrf.mxu0
        %v1035 = vadd.f32 %v996, %v1034
        %v1036 = vand.u32 %v969, 4294901760
        %1037 = vmatmul.f32.gmra.mxu0 %v1036
        %v1038 = vpop.f32.mrf.mxu0
        %v1039 = vadd.f32 %v1004, %v1038
        %1040 = vdwg.mxu0
        %1041 = vmatpush.msra.mxu0 0.0
        %1042 = vmatpush.msra.mxu0 0.0
        %1043 = vmatpush.msra.mxu0 0.0
        %1044 = vmatpush.msra.mxu0 0.0
        %1045 = vmatpush.msra.mxu0 0.0
        %1046 = vmatpush.msra.mxu0 0.0
        %1047 = vmatpush.msra.mxu0 0.0
        %1048 = vmatpush.msra.mxu0 0.0
        %1049 = vmatpush.msra.mxu0 0.0
        %1050 = vmatpush.msra.mxu0 0.0
        %1051 = vmatpush.msra.mxu0 0.0
        %1052 = vmatpush.msra.mxu0 0.0
        %1053 = vmatpush.msra.mxu0 0.0
        %1054 = vmatpush.msra.mxu0 0.0
        %v1055 = vand.u32 %v240, 4294901760
        %v1056 = vsub.f32 %v240, %v1055
        %1057 = vmatpush.msra.mxu0 %v1056
        %v1058 = vand.u32 %v239, 4294901760
        %v1059 = vsub.f32 %v239, %v1058
        %1060 = vmatpush.msra.mxu0 %v1059
        %v1061 = vand.u32 %v966, 4294901760
        %v1062 = vsub.f32 %v966, %v1061
        %1063 = vmatmul.f32.gmra.mxu0 %v1062
        %v1064 = vpop.f32.mrf.mxu0
        %v1065 = vadd.f32 %v1035, %v1064
        %v1066 = vand.u32 %v969, 4294901760
        %v1067 = vsub.f32 %v969, %v1066
        %1068 = vmatmul.f32.gmra.mxu0 %v1067
        %v1069 = vpop.f32.mrf.mxu0
        %v1070 = vadd.f32 %v1039, %v1069
        %1071 = vdwg.mxu0
        %1072 = vmatpush.msra.mxu0 0.0
        %1073 = vmatpush.msra.mxu0 0.0
        %1074 = vmatpush.msra.mxu0 0.0
        %1075 = vmatpush.msra.mxu0 0.0
        %1076 = vmatpush.msra.mxu0 0.0
        %1077 = vmatpush.msra.mxu0 0.0
        %1078 = vmatpush.msra.mxu0 0.0
        %1079 = vmatpush.msra.mxu0 0.0
        %1080 = vmatpush.msra.mxu0 0.0
        %1081 = vmatpush.msra.mxu0 0.0
        %1082 = vmatpush.msra.mxu0 0.0
        %1083 = vmatpush.msra.mxu0 0.0
        %1084 = vmatpush.msra.mxu0 0.0
        %1085 = vmatpush.msra.mxu0 0.0
        %v1086 = vand.u32 %v240, 4294901760
        %1087 = vmatpush.msra.mxu0 %v1086
        %v1088 = vand.u32 %v239, 4294901760
        %1089 = vmatpush.msra.mxu0 %v1088
        %v1090 = vand.u32 %v966, 4294901760
        %v1091 = vsub.f32 %v966, %v1090
        %v1092 = vand.u32 %v1091, 4294901760
        %1093 = vmatmul.f32.gmra.mxu0 %v1092
        %v1094 = vpop.f32.mrf.mxu0
        %v1095 = vadd.f32 %v1065, %v1094
        %v1096 = vand.u32 %v969, 4294901760
        %v1097 = vsub.f32 %v969, %v1096
        %v1098 = vand.u32 %v1097, 4294901760
        %1099 = vmatmul.f32.gmra.mxu0 %v1098
        %v1100 = vpop.f32.mrf.mxu0
        %v1101 = vadd.f32 %v1070, %v1100
        %1102 = vdwg.mxu0
        %1103 = vmatpush.msra.mxu0 0.0
        %1104 = vmatpush.msra.mxu0 0.0
        %1105 = vmatpush.msra.mxu0 0.0
        %1106 = vmatpush.msra.mxu0 0.0
        %1107 = vmatpush.msra.mxu0 0.0
        %1108 = vmatpush.msra.mxu0 0.0
        %1109 = vmatpush.msra.mxu0 0.0
        %1110 = vmatpush.msra.mxu0 0.0
        %1111 = vmatpush.msra.mxu0 0.0
        %1112 = vmatpush.msra.mxu0 0.0
        %1113 = vmatpush.msra.mxu0 0.0
        %1114 = vmatpush.msra.mxu0 0.0
        %1115 = vmatpush.msra.mxu0 0.0
        %1116 = vmatpush.msra.mxu0 0.0
        %v1117 = vand.u32 %v240, 4294901760
        %v1118 = vsub.f32 %v240, %v1117
        %v1119 = vand.u32 %v1118, 4294901760
        %1120 = vmatpush.msra.mxu0 %v1119
        %v1121 = vand.u32 %v239, 4294901760
        %v1122 = vsub.f32 %v239, %v1121
        %v1123 = vand.u32 %v1122, 4294901760
        %1124 = vmatpush.msra.mxu0 %v1123
        %v1125 = vand.u32 %v966, 4294901760
        %1126 = vmatmul.f32.gmra.mxu0 %v1125
        %v1127 = vpop.f32.mrf.mxu0
        %v1128 = vadd.f32 %v1095, %v1127
        %v1129 = vand.u32 %v969, 4294901760
        %1130 = vmatmul.f32.gmra.mxu0 %v1129
        %v1131 = vpop.f32.mrf.mxu0
        %v1132 = vadd.f32 %v1101, %v1131
        %1133 = vdwg.mxu0
        %1134 = vmatpush.msra.mxu0 0.0
        %1135 = vmatpush.msra.mxu0 0.0
        %1136 = vmatpush.msra.mxu0 0.0
        %1137 = vmatpush.msra.mxu0 0.0
        %1138 = vmatpush.msra.mxu0 0.0
        %1139 = vmatpush.msra.mxu0 0.0
        %1140 = vmatpush.msra.mxu0 0.0
        %1141 = vmatpush.msra.mxu0 0.0
        %1142 = vmatpush.msra.mxu0 0.0
        %1143 = vmatpush.msra.mxu0 0.0
        %1144 = vmatpush.msra.mxu0 0.0
        %1145 = vmatpush.msra.mxu0 0.0
        %1146 = vmatpush.msra.mxu0 0.0
        %1147 = vmatpush.msra.mxu0 0.0
        %v1148 = vand.u32 %v240, 4294901760
        %1149 = vmatpush.msra.mxu0 %v1148
        %v1150 = vand.u32 %v239, 4294901760
        %1151 = vmatpush.msra.mxu0 %v1150
        %v1152 = vand.u32 %v966, 4294901760
        %1153 = vmatmul.f32.gmra.mxu0 %v1152
        %v1154 = vpop.f32.mrf.mxu0
        %v1155 = vadd.f32 %v1128, %v1154
        %v1156 = vand.u32 %v969, 4294901760
        %1157 = vmatmul.f32.gmra.mxu0 %v1156
        %v1158 = vpop.f32.mrf.mxu0
        %v1159 = vadd.f32 %v1132, %v1158
        %1160 = vdwg.mxu0
        %1161 = vmatpush.msra.mxu0 0.0
        %1162 = vmatpush.msra.mxu0 0.0
        %1163 = vmatpush.msra.mxu0 0.0
        %1164 = vmatpush.msra.mxu0 0.0
        %1165 = vmatpush.msra.mxu0 0.0
        %1166 = vmatpush.msra.mxu0 0.0
        %1167 = vmatpush.msra.mxu0 0.0
        %1168 = vmatpush.msra.mxu0 0.0
        %1169 = vmatpush.msra.mxu0 0.0
        %1170 = vmatpush.msra.mxu0 0.0
        %1171 = vmatpush.msra.mxu0 0.0
        %1172 = vmatpush.msra.mxu0 0.0
        %1173 = vmatpush.msra.mxu0 0.0
        %1174 = vmatpush.msra.mxu0 0.0
        %v1175 = vand.u32 %v242, 4294901760
        %1176 = vmatpush.msra.mxu0 %v1175
        %v1177 = vand.u32 %v241, 4294901760
        %1178 = vmatpush.msra.mxu0 %v1177
        %v1179 = vand.u32 %v966, 4294901760
        %v1180 = vsub.f32 %v966, %v1179
        %v1181 = vand.u32 %v1180, 4294901760
        %v1182 = vsub.f32 %v1180, %v1181
        %v1183 = vand.u32 %v1182, 4294901760
        %1184 = vmatmul.f32.gmra.mxu0 %v1183
        %v1185 = vpop.f32.mrf.mxu0
        %v1186 = vadd.f32 0.0, %v1185
        %v1187 = vand.u32 %v969, 4294901760
        %v1188 = vsub.f32 %v969, %v1187
        %v1189 = vand.u32 %v1188, 4294901760
        %v1190 = vsub.f32 %v1188, %v1189
        %v1191 = vand.u32 %v1190, 4294901760
        %1192 = vmatmul.f32.gmra.mxu0 %v1191
        %v1193 = vpop.f32.mrf.mxu0
        %v1194 = vadd.f32 0.0, %v1193
        %1195 = vdwg.mxu0
        %1196 = vmatpush.msra.mxu0 0.0
        %1197 = vmatpush.msra.mxu0 0.0
        %1198 = vmatpush.msra.mxu0 0.0
        %1199 = vmatpush.msra.mxu0 0.0
        %1200 = vmatpush.msra.mxu0 0.0
        %1201 = vmatpush.msra.mxu0 0.0
        %1202 = vmatpush.msra.mxu0 0.0
        %1203 = vmatpush.msra.mxu0 0.0
        %1204 = vmatpush.msra.mxu0 0.0
        %1205 = vmatpush.msra.mxu0 0.0
        %1206 = vmatpush.msra.mxu0 0.0
        %1207 = vmatpush.msra.mxu0 0.0
        %1208 = vmatpush.msra.mxu0 0.0
        %1209 = vmatpush.msra.mxu0 0.0
        %v1210 = vand.u32 %v242, 4294901760
        %v1211 = vsub.f32 %v242, %v1210
        %v1212 = vand.u32 %v1211, 4294901760
        %v1213 = vsub.f32 %v1211, %v1212
        %v1214 = vand.u32 %v1213, 4294901760
        %1215 = vmatpush.msra.mxu0 %v1214
        %v1216 = vand.u32 %v241, 4294901760
        %v1217 = vsub.f32 %v241, %v1216
        %v1218 = vand.u32 %v1217, 4294901760
        %v1219 = vsub.f32 %v1217, %v1218
        %v1220 = vand.u32 %v1219, 4294901760
        %1221 = vmatpush.msra.mxu0 %v1220
        %v1222 = vand.u32 %v966, 4294901760
        %1223 = vmatmul.f32.gmra.mxu0 %v1222
        %v1224 = vpop.f32.mrf.mxu0
        %v1225 = vadd.f32 %v1186, %v1224
        %v1226 = vand.u32 %v969, 4294901760
        %1227 = vmatmul.f32.gmra.mxu0 %v1226
        %v1228 = vpop.f32.mrf.mxu0
        %v1229 = vadd.f32 %v1194, %v1228
        %1230 = vdwg.mxu0
        %1231 = vmatpush.msra.mxu0 0.0
        %1232 = vmatpush.msra.mxu0 0.0
        %1233 = vmatpush.msra.mxu0 0.0
        %1234 = vmatpush.msra.mxu0 0.0
        %1235 = vmatpush.msra.mxu0 0.0
        %1236 = vmatpush.msra.mxu0 0.0
        %1237 = vmatpush.msra.mxu0 0.0
        %1238 = vmatpush.msra.mxu0 0.0
        %1239 = vmatpush.msra.mxu0 0.0
        %1240 = vmatpush.msra.mxu0 0.0
        %1241 = vmatpush.msra.mxu0 0.0
        %1242 = vmatpush.msra.mxu0 0.0
        %1243 = vmatpush.msra.mxu0 0.0
        %1244 = vmatpush.msra.mxu0 0.0
        %v1245 = vand.u32 %v242, 4294901760
        %v1246 = vsub.f32 %v242, %v1245
        %1247 = vmatpush.msra.mxu0 %v1246
        %v1248 = vand.u32 %v241, 4294901760
        %v1249 = vsub.f32 %v241, %v1248
        %1250 = vmatpush.msra.mxu0 %v1249
        %v1251 = vand.u32 %v966, 4294901760
        %v1252 = vsub.f32 %v966, %v1251
        %1253 = vmatmul.f32.gmra.mxu0 %v1252
        %v1254 = vpop.f32.mrf.mxu0
        %v1255 = vadd.f32 %v1225, %v1254
        %v1256 = vand.u32 %v969, 4294901760
        %v1257 = vsub.f32 %v969, %v1256
        %1258 = vmatmul.f32.gmra.mxu0 %v1257
        %v1259 = vpop.f32.mrf.mxu0
        %v1260 = vadd.f32 %v1229, %v1259
        %1261 = vdwg.mxu0
        %1262 = vmatpush.msra.mxu0 0.0
        %1263 = vmatpush.msra.mxu0 0.0
        %1264 = vmatpush.msra.mxu0 0.0
        %1265 = vmatpush.msra.mxu0 0.0
        %1266 = vmatpush.msra.mxu0 0.0
        %1267 = vmatpush.msra.mxu0 0.0
        %1268 = vmatpush.msra.mxu0 0.0
        %1269 = vmatpush.msra.mxu0 0.0
        %1270 = vmatpush.msra.mxu0 0.0
        %1271 = vmatpush.msra.mxu0 0.0
        %1272 = vmatpush.msra.mxu0 0.0
        %1273 = vmatpush.msra.mxu0 0.0
        %1274 = vmatpush.msra.mxu0 0.0
        %1275 = vmatpush.msra.mxu0 0.0
        %v1276 = vand.u32 %v242, 4294901760
        %1277 = vmatpush.msra.mxu0 %v1276
        %v1278 = vand.u32 %v241, 4294901760
        %1279 = vmatpush.msra.mxu0 %v1278
        %v1280 = vand.u32 %v966, 4294901760
        %v1281 = vsub.f32 %v966, %v1280
        %v1282 = vand.u32 %v1281, 4294901760
        %1283 = vmatmul.f32.gmra.mxu0 %v1282
        %v1284 = vpop.f32.mrf.mxu0
        %v1285 = vadd.f32 %v1255, %v1284
        %v1286 = vand.u32 %v969, 4294901760
        %v1287 = vsub.f32 %v969, %v1286
        %v1288 = vand.u32 %v1287, 4294901760
        %1289 = vmatmul.f32.gmra.mxu0 %v1288
        %v1290 = vpop.f32.mrf.mxu0
        %v1291 = vadd.f32 %v1260, %v1290
        %1292 = vdwg.mxu0
        %1293 = vmatpush.msra.mxu0 0.0
        %1294 = vmatpush.msra.mxu0 0.0
        %1295 = vmatpush.msra.mxu0 0.0
        %1296 = vmatpush.msra.mxu0 0.0
        %1297 = vmatpush.msra.mxu0 0.0
        %1298 = vmatpush.msra.mxu0 0.0
        %1299 = vmatpush.msra.mxu0 0.0
        %1300 = vmatpush.msra.mxu0 0.0
        %1301 = vmatpush.msra.mxu0 0.0
        %1302 = vmatpush.msra.mxu0 0.0
        %1303 = vmatpush.msra.mxu0 0.0
        %1304 = vmatpush.msra.mxu0 0.0
        %1305 = vmatpush.msra.mxu0 0.0
        %1306 = vmatpush.msra.mxu0 0.0
        %v1307 = vand.u32 %v242, 4294901760
        %v1308 = vsub.f32 %v242, %v1307
        %v1309 = vand.u32 %v1308, 4294901760
        %1310 = vmatpush.msra.mxu0 %v1309
        %v1311 = vand.u32 %v241, 4294901760
        %v1312 = vsub.f32 %v241, %v1311
        %v1313 = vand.u32 %v1312, 4294901760
        %1314 = vmatpush.msra.mxu0 %v1313
        %v1315 = vand.u32 %v966, 4294901760
        %1316 = vmatmul.f32.gmra.mxu0 %v1315
        %v1317 = vpop.f32.mrf.mxu0
        %v1318 = vadd.f32 %v1285, %v1317
        %v1319 = vand.u32 %v969, 4294901760
        %1320 = vmatmul.f32.gmra.mxu0 %v1319
        %v1321 = vpop.f32.mrf.mxu0
        %v1322 = vadd.f32 %v1291, %v1321
        %1323 = vdwg.mxu0
        %1324 = vmatpush.msra.mxu0 0.0
        %1325 = vmatpush.msra.mxu0 0.0
        %1326 = vmatpush.msra.mxu0 0.0
        %1327 = vmatpush.msra.mxu0 0.0
        %1328 = vmatpush.msra.mxu0 0.0
        %1329 = vmatpush.msra.mxu0 0.0
        %1330 = vmatpush.msra.mxu0 0.0
        %1331 = vmatpush.msra.mxu0 0.0
        %1332 = vmatpush.msra.mxu0 0.0
        %1333 = vmatpush.msra.mxu0 0.0
        %1334 = vmatpush.msra.mxu0 0.0
        %1335 = vmatpush.msra.mxu0 0.0
        %1336 = vmatpush.msra.mxu0 0.0
        %1337 = vmatpush.msra.mxu0 0.0
        %v1338 = vand.u32 %v242, 4294901760
        %1339 = vmatpush.msra.mxu0 %v1338
        %v1340 = vand.u32 %v241, 4294901760
        %1341 = vmatpush.msra.mxu0 %v1340
        %v1342 = vand.u32 %v966, 4294901760
        %1343 = vmatmul.f32.gmra.mxu0 %v1342
        %v1344 = vpop.f32.mrf.mxu0
        %v1345 = vadd.f32 %v1318, %v1344
        %v1346 = vand.u32 %v969, 4294901760
        %1347 = vmatmul.f32.gmra.mxu0 %v1346
        %v1348 = vpop.f32.mrf.mxu0
        %v1349 = vadd.f32 %v1322, %v1348
        %1350 = vdwg.mxu0
        %1351 = vmatpush.msra.mxu0 0.0
        %1352 = vmatpush.msra.mxu0 0.0
        %1353 = vmatpush.msra.mxu0 0.0
        %1354 = vmatpush.msra.mxu0 0.0
        %1355 = vmatpush.msra.mxu0 0.0
        %1356 = vmatpush.msra.mxu0 0.0
        %1357 = vmatpush.msra.mxu0 0.0
        %1358 = vmatpush.msra.mxu0 0.0
        %1359 = vmatpush.msra.mxu0 0.0
        %1360 = vmatpush.msra.mxu0 0.0
        %1361 = vmatpush.msra.mxu0 0.0
        %1362 = vmatpush.msra.mxu0 0.0
        %1363 = vmatpush.msra.mxu0 0.0
        %1364 = vmatpush.msra.mxu0 0.0
        %v1365 = vand.u32 %v244, 4294901760
        %1366 = vmatpush.msra.mxu0 %v1365
        %v1367 = vand.u32 %v243, 4294901760
        %1368 = vmatpush.msra.mxu0 %v1367
        %v1369 = vand.u32 %v966, 4294901760
        %v1370 = vsub.f32 %v966, %v1369
        %v1371 = vand.u32 %v1370, 4294901760
        %v1372 = vsub.f32 %v1370, %v1371
        %v1373 = vand.u32 %v1372, 4294901760
        %1374 = vmatmul.f32.gmra.mxu0 %v1373
        %v1375 = vpop.f32.mrf.mxu0
        %v1376 = vadd.f32 0.0, %v1375
        %v1377 = vand.u32 %v969, 4294901760
        %v1378 = vsub.f32 %v969, %v1377
        %v1379 = vand.u32 %v1378, 4294901760
        %v1380 = vsub.f32 %v1378, %v1379
        %v1381 = vand.u32 %v1380, 4294901760
        %1382 = vmatmul.f32.gmra.mxu0 %v1381
        %v1383 = vpop.f32.mrf.mxu0
        %v1384 = vadd.f32 0.0, %v1383
        %1385 = vdwg.mxu0
        %1386 = vmatpush.msra.mxu0 0.0
        %1387 = vmatpush.msra.mxu0 0.0
        %1388 = vmatpush.msra.mxu0 0.0
        %1389 = vmatpush.msra.mxu0 0.0
        %1390 = vmatpush.msra.mxu0 0.0
        %1391 = vmatpush.msra.mxu0 0.0
        %1392 = vmatpush.msra.mxu0 0.0
        %1393 = vmatpush.msra.mxu0 0.0
        %1394 = vmatpush.msra.mxu0 0.0
        %1395 = vmatpush.msra.mxu0 0.0
        %1396 = vmatpush.msra.mxu0 0.0
        %1397 = vmatpush.msra.mxu0 0.0
        %1398 = vmatpush.msra.mxu0 0.0
        %1399 = vmatpush.msra.mxu0 0.0
        %v1400 = vand.u32 %v244, 4294901760
        %v1401 = vsub.f32 %v244, %v1400
        %v1402 = vand.u32 %v1401, 4294901760
        %v1403 = vsub.f32 %v1401, %v1402
        %v1404 = vand.u32 %v1403, 4294901760
        %1405 = vmatpush.msra.mxu0 %v1404
        %v1406 = vand.u32 %v243, 4294901760
        %v1407 = vsub.f32 %v243, %v1406
        %v1408 = vand.u32 %v1407, 4294901760
        %v1409 = vsub.f32 %v1407, %v1408
        %v1410 = vand.u32 %v1409, 4294901760
        %1411 = vmatpush.msra.mxu0 %v1410
        %v1412 = vand.u32 %v966, 4294901760
        %1413 = vmatmul.f32.gmra.mxu0 %v1412
        %v1414 = vpop.f32.mrf.mxu0
        %v1415 = vadd.f32 %v1376, %v1414
        %v1416 = vand.u32 %v969, 4294901760
        %1417 = vmatmul.f32.gmra.mxu0 %v1416
        %v1418 = vpop.f32.mrf.mxu0
        %v1419 = vadd.f32 %v1384, %v1418
        %1420 = vdwg.mxu0
        %1421 = vmatpush.msra.mxu0 0.0
        %1422 = vmatpush.msra.mxu0 0.0
        %1423 = vmatpush.msra.mxu0 0.0
        %1424 = vmatpush.msra.mxu0 0.0
        %1425 = vmatpush.msra.mxu0 0.0
        %1426 = vmatpush.msra.mxu0 0.0
        %1427 = vmatpush.msra.mxu0 0.0
        %1428 = vmatpush.msra.mxu0 0.0
        %1429 = vmatpush.msra.mxu0 0.0
        %1430 = vmatpush.msra.mxu0 0.0
        %1431 = vmatpush.msra.mxu0 0.0
        %1432 = vmatpush.msra.mxu0 0.0
        %1433 = vmatpush.msra.mxu0 0.0
        %1434 = vmatpush.msra.mxu0 0.0
        %v1435 = vand.u32 %v244, 4294901760
        %v1436 = vsub.f32 %v244, %v1435
        %1437 = vmatpush.msra.mxu0 %v1436
        %v1438 = vand.u32 %v243, 4294901760
        %v1439 = vsub.f32 %v243, %v1438
        %1440 = vmatpush.msra.mxu0 %v1439
        %v1441 = vand.u32 %v966, 4294901760
        %v1442 = vsub.f32 %v966, %v1441
        %1443 = vmatmul.f32.gmra.mxu0 %v1442
        %v1444 = vpop.f32.mrf.mxu0
        %v1445 = vadd.f32 %v1415, %v1444
        %v1446 = vand.u32 %v969, 4294901760
        %v1447 = vsub.f32 %v969, %v1446
        %1448 = vmatmul.f32.gmra.mxu0 %v1447
        %v1449 = vpop.f32.mrf.mxu0
        %v1450 = vadd.f32 %v1419, %v1449
        %1451 = vdwg.mxu0
        %1452 = vmatpush.msra.mxu0 0.0
        %1453 = vmatpush.msra.mxu0 0.0
        %1454 = vmatpush.msra.mxu0 0.0
        %1455 = vmatpush.msra.mxu0 0.0
        %1456 = vmatpush.msra.mxu0 0.0
        %1457 = vmatpush.msra.mxu0 0.0
        %1458 = vmatpush.msra.mxu0 0.0
        %1459 = vmatpush.msra.mxu0 0.0
        %1460 = vmatpush.msra.mxu0 0.0
        %1461 = vmatpush.msra.mxu0 0.0
        %1462 = vmatpush.msra.mxu0 0.0
        %1463 = vmatpush.msra.mxu0 0.0
        %1464 = vmatpush.msra.mxu0 0.0
        %1465 = vmatpush.msra.mxu0 0.0
        %v1466 = vand.u32 %v244, 4294901760
        %1467 = vmatpush.msra.mxu0 %v1466
        %v1468 = vand.u32 %v243, 4294901760
        %1469 = vmatpush.msra.mxu0 %v1468
        %v1470 = vand.u32 %v966, 4294901760
        %v1471 = vsub.f32 %v966, %v1470
        %v1472 = vand.u32 %v1471, 4294901760
        %1473 = vmatmul.f32.gmra.mxu0 %v1472
        %v1474 = vpop.f32.mrf.mxu0
        %v1475 = vadd.f32 %v1445, %v1474
        %v1476 = vand.u32 %v969, 4294901760
        %v1477 = vsub.f32 %v969, %v1476
        %v1478 = vand.u32 %v1477, 4294901760
        %1479 = vmatmul.f32.gmra.mxu0 %v1478
        %v1480 = vpop.f32.mrf.mxu0
        %v1481 = vadd.f32 %v1450, %v1480
        %1482 = vdwg.mxu0
        %1483 = vmatpush.msra.mxu0 0.0
        %1484 = vmatpush.msra.mxu0 0.0
        %1485 = vmatpush.msra.mxu0 0.0
        %1486 = vmatpush.msra.mxu0 0.0
        %1487 = vmatpush.msra.mxu0 0.0
        %1488 = vmatpush.msra.mxu0 0.0
        %1489 = vmatpush.msra.mxu0 0.0
        %1490 = vmatpush.msra.mxu0 0.0
        %1491 = vmatpush.msra.mxu0 0.0
        %1492 = vmatpush.msra.mxu0 0.0
        %1493 = vmatpush.msra.mxu0 0.0
        %1494 = vmatpush.msra.mxu0 0.0
        %1495 = vmatpush.msra.mxu0 0.0
        %1496 = vmatpush.msra.mxu0 0.0
        %v1497 = vand.u32 %v244, 4294901760
        %v1498 = vsub.f32 %v244, %v1497
        %v1499 = vand.u32 %v1498, 4294901760
        %1500 = vmatpush.msra.mxu0 %v1499
        %v1501 = vand.u32 %v243, 4294901760
        %v1502 = vsub.f32 %v243, %v1501
        %v1503 = vand.u32 %v1502, 4294901760
        %1504 = vmatpush.msra.mxu0 %v1503
        %v1505 = vand.u32 %v966, 4294901760
        %1506 = vmatmul.f32.gmra.mxu0 %v1505
        %v1507 = vpop.f32.mrf.mxu0
        %v1508 = vadd.f32 %v1475, %v1507
        %v1509 = vand.u32 %v969, 4294901760
        %1510 = vmatmul.f32.gmra.mxu0 %v1509
        %v1511 = vpop.f32.mrf.mxu0
        %v1512 = vadd.f32 %v1481, %v1511
        %1513 = vdwg.mxu0
        %1514 = vmatpush.msra.mxu0 0.0
        %1515 = vmatpush.msra.mxu0 0.0
        %1516 = vmatpush.msra.mxu0 0.0
        %1517 = vmatpush.msra.mxu0 0.0
        %1518 = vmatpush.msra.mxu0 0.0
        %1519 = vmatpush.msra.mxu0 0.0
        %1520 = vmatpush.msra.mxu0 0.0
        %1521 = vmatpush.msra.mxu0 0.0
        %1522 = vmatpush.msra.mxu0 0.0
        %1523 = vmatpush.msra.mxu0 0.0
        %1524 = vmatpush.msra.mxu0 0.0
        %1525 = vmatpush.msra.mxu0 0.0
        %1526 = vmatpush.msra.mxu0 0.0
        %1527 = vmatpush.msra.mxu0 0.0
        %v1528 = vand.u32 %v244, 4294901760
        %1529 = vmatpush.msra.mxu0 %v1528
        %v1530 = vand.u32 %v243, 4294901760
        %1531 = vmatpush.msra.mxu0 %v1530
        %v1532 = vand.u32 %v966, 4294901760
        %1533 = vmatmul.f32.gmra.mxu0 %v1532
        %v1534 = vpop.f32.mrf.mxu0
        %v1535 = vadd.f32 %v1508, %v1534
        %v1536 = vand.u32 %v969, 4294901760
        %1537 = vmatmul.f32.gmra.mxu0 %v1536
        %v1538 = vpop.f32.mrf.mxu0
        %v1539 = vadd.f32 %v1512, %v1538
        %1540 = vdwg.mxu0
        %1541 = vmatpush.msra.mxu0 0.0
        %1542 = vmatpush.msra.mxu0 0.0
        %1543 = vmatpush.msra.mxu0 0.0
        %1544 = vmatpush.msra.mxu0 0.0
        %1545 = vmatpush.msra.mxu0 0.0
        %1546 = vmatpush.msra.mxu0 0.0
        %1547 = vmatpush.msra.mxu0 0.0
        %1548 = vmatpush.msra.mxu0 0.0
        %1549 = vmatpush.msra.mxu0 0.0
        %1550 = vmatpush.msra.mxu0 0.0
        %1551 = vmatpush.msra.mxu0 0.0
        %1552 = vmatpush.msra.mxu0 0.0
        %1553 = vmatpush.msra.mxu0 0.0
        %1554 = vmatpush.msra.mxu0 0.0
        %v1555 = vand.u32 %v246, 4294901760
        %1556 = vmatpush.msra.mxu0 %v1555
        %v1557 = vand.u32 %v245, 4294901760
        %1558 = vmatpush.msra.mxu0 %v1557
        %v1559 = vand.u32 %v966, 4294901760
        %v1560 = vsub.f32 %v966, %v1559
        %v1561 = vand.u32 %v1560, 4294901760
        %v1562 = vsub.f32 %v1560, %v1561
        %v1563 = vand.u32 %v1562, 4294901760
        %1564 = vmatmul.f32.gmra.mxu0 %v1563
        %v1565 = vpop.f32.mrf.mxu0
        %v1566 = vadd.f32 0.0, %v1565
        %v1567 = vand.u32 %v969, 4294901760
        %v1568 = vsub.f32 %v969, %v1567
        %v1569 = vand.u32 %v1568, 4294901760
        %v1570 = vsub.f32 %v1568, %v1569
        %v1571 = vand.u32 %v1570, 4294901760
        %1572 = vmatmul.f32.gmra.mxu0 %v1571
        %v1573 = vpop.f32.mrf.mxu0
        %v1574 = vadd.f32 0.0, %v1573
        %1575 = vdwg.mxu0
        %1576 = vmatpush.msra.mxu0 0.0
        %1577 = vmatpush.msra.mxu0 0.0
        %1578 = vmatpush.msra.mxu0 0.0
        %1579 = vmatpush.msra.mxu0 0.0
        %1580 = vmatpush.msra.mxu0 0.0
        %1581 = vmatpush.msra.mxu0 0.0
        %1582 = vmatpush.msra.mxu0 0.0
        %1583 = vmatpush.msra.mxu0 0.0
        %1584 = vmatpush.msra.mxu0 0.0
        %1585 = vmatpush.msra.mxu0 0.0
        %1586 = vmatpush.msra.mxu0 0.0
        %1587 = vmatpush.msra.mxu0 0.0
        %1588 = vmatpush.msra.mxu0 0.0
        %1589 = vmatpush.msra.mxu0 0.0
        %v1590 = vand.u32 %v246, 4294901760
        %v1591 = vsub.f32 %v246, %v1590
        %v1592 = vand.u32 %v1591, 4294901760
        %v1593 = vsub.f32 %v1591, %v1592
        %v1594 = vand.u32 %v1593, 4294901760
        %1595 = vmatpush.msra.mxu0 %v1594
        %v1596 = vand.u32 %v245, 4294901760
        %v1597 = vsub.f32 %v245, %v1596
        %v1598 = vand.u32 %v1597, 4294901760
        %v1599 = vsub.f32 %v1597, %v1598
        %v1600 = vand.u32 %v1599, 4294901760
        %1601 = vmatpush.msra.mxu0 %v1600
        %v1602 = vand.u32 %v966, 4294901760
        %1603 = vmatmul.f32.gmra.mxu0 %v1602
        %v1604 = vpop.f32.mrf.mxu0
        %v1605 = vadd.f32 %v1566, %v1604
        %v1606 = vand.u32 %v969, 4294901760
        %1607 = vmatmul.f32.gmra.mxu0 %v1606
        %v1608 = vpop.f32.mrf.mxu0
        %v1609 = vadd.f32 %v1574, %v1608
        %1610 = vdwg.mxu0
        %1611 = vmatpush.msra.mxu0 0.0
        %1612 = vmatpush.msra.mxu0 0.0
        %1613 = vmatpush.msra.mxu0 0.0
        %1614 = vmatpush.msra.mxu0 0.0
        %1615 = vmatpush.msra.mxu0 0.0
        %1616 = vmatpush.msra.mxu0 0.0
        %1617 = vmatpush.msra.mxu0 0.0
        %1618 = vmatpush.msra.mxu0 0.0
        %1619 = vmatpush.msra.mxu0 0.0
        %1620 = vmatpush.msra.mxu0 0.0
        %1621 = vmatpush.msra.mxu0 0.0
        %1622 = vmatpush.msra.mxu0 0.0
        %1623 = vmatpush.msra.mxu0 0.0
        %1624 = vmatpush.msra.mxu0 0.0
        %v1625 = vand.u32 %v246, 4294901760
        %v1626 = vsub.f32 %v246, %v1625
        %1627 = vmatpush.msra.mxu0 %v1626
        %v1628 = vand.u32 %v245, 4294901760
        %v1629 = vsub.f32 %v245, %v1628
        %1630 = vmatpush.msra.mxu0 %v1629
        %v1631 = vand.u32 %v966, 4294901760
        %v1632 = vsub.f32 %v966, %v1631
        %1633 = vmatmul.f32.gmra.mxu0 %v1632
        %v1634 = vpop.f32.mrf.mxu0
        %v1635 = vadd.f32 %v1605, %v1634
        %v1636 = vand.u32 %v969, 4294901760
        %v1637 = vsub.f32 %v969, %v1636
        %1638 = vmatmul.f32.gmra.mxu0 %v1637
        %v1639 = vpop.f32.mrf.mxu0
        %v1640 = vadd.f32 %v1609, %v1639
        %1641 = vdwg.mxu0
        %1642 = vmatpush.msra.mxu0 0.0
        %1643 = vmatpush.msra.mxu0 0.0
        %1644 = vmatpush.msra.mxu0 0.0
        %1645 = vmatpush.msra.mxu0 0.0
        %1646 = vmatpush.msra.mxu0 0.0
        %1647 = vmatpush.msra.mxu0 0.0
        %1648 = vmatpush.msra.mxu0 0.0
        %1649 = vmatpush.msra.mxu0 0.0
        %1650 = vmatpush.msra.mxu0 0.0
        %1651 = vmatpush.msra.mxu0 0.0
        %1652 = vmatpush.msra.mxu0 0.0
        %1653 = vmatpush.msra.mxu0 0.0
        %1654 = vmatpush.msra.mxu0 0.0
        %1655 = vmatpush.msra.mxu0 0.0
        %v1656 = vand.u32 %v246, 4294901760
        %1657 = vmatpush.msra.mxu0 %v1656
        %v1658 = vand.u32 %v245, 4294901760
        %1659 = vmatpush.msra.mxu0 %v1658
        %v1660 = vand.u32 %v966, 4294901760
        %v1661 = vsub.f32 %v966, %v1660
        %v1662 = vand.u32 %v1661, 4294901760
        %1663 = vmatmul.f32.gmra.mxu0 %v1662
        %v1664 = vpop.f32.mrf.mxu0
        %v1665 = vadd.f32 %v1635, %v1664
        %v1666 = vand.u32 %v969, 4294901760
        %v1667 = vsub.f32 %v969, %v1666
        %v1668 = vand.u32 %v1667, 4294901760
        %1669 = vmatmul.f32.gmra.mxu0 %v1668
        %v1670 = vpop.f32.mrf.mxu0
        %v1671 = vadd.f32 %v1640, %v1670
        %1672 = vdwg.mxu0
        %1673 = vmatpush.msra.mxu0 0.0
        %1674 = vmatpush.msra.mxu0 0.0
        %1675 = vmatpush.msra.mxu0 0.0
        %1676 = vmatpush.msra.mxu0 0.0
        %1677 = vmatpush.msra.mxu0 0.0
        %1678 = vmatpush.msra.mxu0 0.0
        %1679 = vmatpush.msra.mxu0 0.0
        %1680 = vmatpush.msra.mxu0 0.0
        %1681 = vmatpush.msra.mxu0 0.0
        %1682 = vmatpush.msra.mxu0 0.0
        %1683 = vmatpush.msra.mxu0 0.0
        %1684 = vmatpush.msra.mxu0 0.0
        %1685 = vmatpush.msra.mxu0 0.0
        %1686 = vmatpush.msra.mxu0 0.0
        %v1687 = vand.u32 %v246, 4294901760
        %v1688 = vsub.f32 %v246, %v1687
        %v1689 = vand.u32 %v1688, 4294901760
        %1690 = vmatpush.msra.mxu0 %v1689
        %v1691 = vand.u32 %v245, 4294901760
        %v1692 = vsub.f32 %v245, %v1691
        %v1693 = vand.u32 %v1692, 4294901760
        %1694 = vmatpush.msra.mxu0 %v1693
        %v1695 = vand.u32 %v966, 4294901760
        %1696 = vmatmul.f32.gmra.mxu0 %v1695
        %v1697 = vpop.f32.mrf.mxu0
        %v1698 = vadd.f32 %v1665, %v1697
        %v1699 = vand.u32 %v969, 4294901760
        %1700 = vmatmul.f32.gmra.mxu0 %v1699
        %v1701 = vpop.f32.mrf.mxu0
        %v1702 = vadd.f32 %v1671, %v1701
        %1703 = vdwg.mxu0
        %1704 = vmatpush.msra.mxu0 0.0
        %1705 = vmatpush.msra.mxu0 0.0
        %1706 = vmatpush.msra.mxu0 0.0
        %1707 = vmatpush.msra.mxu0 0.0
        %1708 = vmatpush.msra.mxu0 0.0
        %1709 = vmatpush.msra.mxu0 0.0
        %1710 = vmatpush.msra.mxu0 0.0
        %1711 = vmatpush.msra.mxu0 0.0
        %1712 = vmatpush.msra.mxu0 0.0
        %1713 = vmatpush.msra.mxu0 0.0
        %1714 = vmatpush.msra.mxu0 0.0
        %1715 = vmatpush.msra.mxu0 0.0
        %1716 = vmatpush.msra.mxu0 0.0
        %1717 = vmatpush.msra.mxu0 0.0
        %v1718 = vand.u32 %v246, 4294901760
        %1719 = vmatpush.msra.mxu0 %v1718
        %v1720 = vand.u32 %v245, 4294901760
        %1721 = vmatpush.msra.mxu0 %v1720
        %v1722 = vand.u32 %v966, 4294901760
        %1723 = vmatmul.f32.gmra.mxu0 %v1722
        %v1724 = vpop.f32.mrf.mxu0
        %v1725 = vadd.f32 %v1698, %v1724
        %v1726 = vand.u32 %v969, 4294901760
        %1727 = vmatmul.f32.gmra.mxu0 %v1726
        %v1728 = vpop.f32.mrf.mxu0
        %v1729 = vadd.f32 %v1702, %v1728
        %1730 = vdwg.mxu0
        %1731 = vmatpush.msra.mxu0 0.0
        %1732 = vmatpush.msra.mxu0 0.0
        %1733 = vmatpush.msra.mxu0 0.0
        %1734 = vmatpush.msra.mxu0 0.0
        %1735 = vmatpush.msra.mxu0 0.0
        %1736 = vmatpush.msra.mxu0 0.0
        %1737 = vmatpush.msra.mxu0 0.0
        %1738 = vmatpush.msra.mxu0 0.0
        %1739 = vmatpush.msra.mxu0 0.0
        %1740 = vmatpush.msra.mxu0 0.0
        %1741 = vmatpush.msra.mxu0 0.0
        %1742 = vmatpush.msra.mxu0 0.0
        %1743 = vmatpush.msra.mxu0 0.0
        %1744 = vmatpush.msra.mxu0 0.0
        %v1745 = vand.u32 %v248, 4294901760
        %1746 = vmatpush.msra.mxu0 %v1745
        %v1747 = vand.u32 %v247, 4294901760
        %1748 = vmatpush.msra.mxu0 %v1747
        %v1749 = vand.u32 %v966, 4294901760
        %v1750 = vsub.f32 %v966, %v1749
        %v1751 = vand.u32 %v1750, 4294901760
        %v1752 = vsub.f32 %v1750, %v1751
        %v1753 = vand.u32 %v1752, 4294901760
        %1754 = vmatmul.f32.gmra.mxu0 %v1753
        %v1755 = vpop.f32.mrf.mxu0
        %v1756 = vadd.f32 0.0, %v1755
        %v1757 = vand.u32 %v969, 4294901760
        %v1758 = vsub.f32 %v969, %v1757
        %v1759 = vand.u32 %v1758, 4294901760
        %v1760 = vsub.f32 %v1758, %v1759
        %v1761 = vand.u32 %v1760, 4294901760
        %1762 = vmatmul.f32.gmra.mxu0 %v1761
        %v1763 = vpop.f32.mrf.mxu0
        %v1764 = vadd.f32 0.0, %v1763
        %1765 = vdwg.mxu0
        %1766 = vmatpush.msra.mxu0 0.0
        %1767 = vmatpush.msra.mxu0 0.0
        %1768 = vmatpush.msra.mxu0 0.0
        %1769 = vmatpush.msra.mxu0 0.0
        %1770 = vmatpush.msra.mxu0 0.0
        %1771 = vmatpush.msra.mxu0 0.0
        %1772 = vmatpush.msra.mxu0 0.0
        %1773 = vmatpush.msra.mxu0 0.0
        %1774 = vmatpush.msra.mxu0 0.0
        %1775 = vmatpush.msra.mxu0 0.0
        %1776 = vmatpush.msra.mxu0 0.0
        %1777 = vmatpush.msra.mxu0 0.0
        %1778 = vmatpush.msra.mxu0 0.0
        %1779 = vmatpush.msra.mxu0 0.0
        %v1780 = vand.u32 %v248, 4294901760
        %v1781 = vsub.f32 %v248, %v1780
        %v1782 = vand.u32 %v1781, 4294901760
        %v1783 = vsub.f32 %v1781, %v1782
        %v1784 = vand.u32 %v1783, 4294901760
        %1785 = vmatpush.msra.mxu0 %v1784
        %v1786 = vand.u32 %v247, 4294901760
        %v1787 = vsub.f32 %v247, %v1786
        %v1788 = vand.u32 %v1787, 4294901760
        %v1789 = vsub.f32 %v1787, %v1788
        %v1790 = vand.u32 %v1789, 4294901760
        %1791 = vmatpush.msra.mxu0 %v1790
        %v1792 = vand.u32 %v966, 4294901760
        %1793 = vmatmul.f32.gmra.mxu0 %v1792
        %v1794 = vpop.f32.mrf.mxu0
        %v1795 = vadd.f32 %v1756, %v1794
        %v1796 = vand.u32 %v969, 4294901760
        %1797 = vmatmul.f32.gmra.mxu0 %v1796
        %v1798 = vpop.f32.mrf.mxu0
        %v1799 = vadd.f32 %v1764, %v1798
        %1800 = vdwg.mxu0
        %1801 = vmatpush.msra.mxu0 0.0
        %1802 = vmatpush.msra.mxu0 0.0
        %1803 = vmatpush.msra.mxu0 0.0
        %1804 = vmatpush.msra.mxu0 0.0
        %1805 = vmatpush.msra.mxu0 0.0
        %1806 = vmatpush.msra.mxu0 0.0
        %1807 = vmatpush.msra.mxu0 0.0
        %1808 = vmatpush.msra.mxu0 0.0
        %1809 = vmatpush.msra.mxu0 0.0
        %1810 = vmatpush.msra.mxu0 0.0
        %1811 = vmatpush.msra.mxu0 0.0
        %1812 = vmatpush.msra.mxu0 0.0
        %1813 = vmatpush.msra.mxu0 0.0
        %1814 = vmatpush.msra.mxu0 0.0
        %v1815 = vand.u32 %v248, 4294901760
        %v1816 = vsub.f32 %v248, %v1815
        %1817 = vmatpush.msra.mxu0 %v1816
        %v1818 = vand.u32 %v247, 4294901760
        %v1819 = vsub.f32 %v247, %v1818
        %1820 = vmatpush.msra.mxu0 %v1819
        %v1821 = vand.u32 %v966, 4294901760
        %v1822 = vsub.f32 %v966, %v1821
        %1823 = vmatmul.f32.gmra.mxu0 %v1822
        %v1824 = vpop.f32.mrf.mxu0
        %v1825 = vadd.f32 %v1795, %v1824
        %v1826 = vand.u32 %v969, 4294901760
        %v1827 = vsub.f32 %v969, %v1826
        %1828 = vmatmul.f32.gmra.mxu0 %v1827
        %v1829 = vpop.f32.mrf.mxu0
        %v1830 = vadd.f32 %v1799, %v1829
        %1831 = vdwg.mxu0
        %1832 = vmatpush.msra.mxu0 0.0
        %1833 = vmatpush.msra.mxu0 0.0
        %1834 = vmatpush.msra.mxu0 0.0
        %1835 = vmatpush.msra.mxu0 0.0
        %1836 = vmatpush.msra.mxu0 0.0
        %1837 = vmatpush.msra.mxu0 0.0
        %1838 = vmatpush.msra.mxu0 0.0
        %1839 = vmatpush.msra.mxu0 0.0
        %1840 = vmatpush.msra.mxu0 0.0
        %1841 = vmatpush.msra.mxu0 0.0
        %1842 = vmatpush.msra.mxu0 0.0
        %1843 = vmatpush.msra.mxu0 0.0
        %1844 = vmatpush.msra.mxu0 0.0
        %1845 = vmatpush.msra.mxu0 0.0
        %v1846 = vand.u32 %v248, 4294901760
        %1847 = vmatpush.msra.mxu0 %v1846
        %v1848 = vand.u32 %v247, 4294901760
        %1849 = vmatpush.msra.mxu0 %v1848
        %v1850 = vand.u32 %v966, 4294901760
        %v1851 = vsub.f32 %v966, %v1850
        %v1852 = vand.u32 %v1851, 4294901760
        %1853 = vmatmul.f32.gmra.mxu0 %v1852
        %v1854 = vpop.f32.mrf.mxu0
        %v1855 = vadd.f32 %v1825, %v1854
        %v1856 = vand.u32 %v969, 4294901760
        %v1857 = vsub.f32 %v969, %v1856
        %v1858 = vand.u32 %v1857, 4294901760
        %1859 = vmatmul.f32.gmra.mxu0 %v1858
        %v1860 = vpop.f32.mrf.mxu0
        %v1861 = vadd.f32 %v1830, %v1860
        %1862 = vdwg.mxu0
        %1863 = vmatpush.msra.mxu0 0.0
        %1864 = vmatpush.msra.mxu0 0.0
        %1865 = vmatpush.msra.mxu0 0.0
        %1866 = vmatpush.msra.mxu0 0.0
        %1867 = vmatpush.msra.mxu0 0.0
        %1868 = vmatpush.msra.mxu0 0.0
        %1869 = vmatpush.msra.mxu0 0.0
        %1870 = vmatpush.msra.mxu0 0.0
        %1871 = vmatpush.msra.mxu0 0.0
        %1872 = vmatpush.msra.mxu0 0.0
        %1873 = vmatpush.msra.mxu0 0.0
        %1874 = vmatpush.msra.mxu0 0.0
        %1875 = vmatpush.msra.mxu0 0.0
        %1876 = vmatpush.msra.mxu0 0.0
        %v1877 = vand.u32 %v248, 4294901760
        %v1878 = vsub.f32 %v248, %v1877
        %v1879 = vand.u32 %v1878, 4294901760
        %1880 = vmatpush.msra.mxu0 %v1879
        %v1881 = vand.u32 %v247, 4294901760
        %v1882 = vsub.f32 %v247, %v1881
        %v1883 = vand.u32 %v1882, 4294901760
        %1884 = vmatpush.msra.mxu0 %v1883
        %v1885 = vand.u32 %v966, 4294901760
        %1886 = vmatmul.f32.gmra.mxu0 %v1885
        %v1887 = vpop.f32.mrf.mxu0
        %v1888 = vadd.f32 %v1855, %v1887
        %v1889 = vand.u32 %v969, 4294901760
        %1890 = vmatmul.f32.gmra.mxu0 %v1889
        %v1891 = vpop.f32.mrf.mxu0
        %v1892 = vadd.f32 %v1861, %v1891
        %1893 = vdwg.mxu0
        %1894 = vmatpush.msra.mxu0 0.0
        %1895 = vmatpush.msra.mxu0 0.0
        %1896 = vmatpush.msra.mxu0 0.0
        %1897 = vmatpush.msra.mxu0 0.0
        %1898 = vmatpush.msra.mxu0 0.0
        %1899 = vmatpush.msra.mxu0 0.0
        %1900 = vmatpush.msra.mxu0 0.0
        %1901 = vmatpush.msra.mxu0 0.0
        %1902 = vmatpush.msra.mxu0 0.0
        %1903 = vmatpush.msra.mxu0 0.0
        %1904 = vmatpush.msra.mxu0 0.0
        %1905 = vmatpush.msra.mxu0 0.0
        %1906 = vmatpush.msra.mxu0 0.0
        %1907 = vmatpush.msra.mxu0 0.0
        %v1908 = vand.u32 %v248, 4294901760
        %1909 = vmatpush.msra.mxu0 %v1908
        %v1910 = vand.u32 %v247, 4294901760
        %1911 = vmatpush.msra.mxu0 %v1910
        %v1912 = vand.u32 %v966, 4294901760
        %1913 = vmatmul.f32.gmra.mxu0 %v1912
        %v1914 = vpop.f32.mrf.mxu0
        %v1915 = vadd.f32 %v1888, %v1914
        %v1916 = vand.u32 %v969, 4294901760
        %1917 = vmatmul.f32.gmra.mxu0 %v1916
        %v1918 = vpop.f32.mrf.mxu0
        %v1919 = vadd.f32 %v1892, %v1918
        %1920 = vdwg.mxu0
        %1921 = vmatpush.msra.mxu0 0.0
        %1922 = vmatpush.msra.mxu0 0.0
        %1923 = vmatpush.msra.mxu0 0.0
        %1924 = vmatpush.msra.mxu0 0.0
        %1925 = vmatpush.msra.mxu0 0.0
        %1926 = vmatpush.msra.mxu0 0.0
        %1927 = vmatpush.msra.mxu0 0.0
        %1928 = vmatpush.msra.mxu0 0.0
        %1929 = vmatpush.msra.mxu0 0.0
        %1930 = vmatpush.msra.mxu0 0.0
        %1931 = vmatpush.msra.mxu0 0.0
        %1932 = vmatpush.msra.mxu0 0.0
        %1933 = vmatpush.msra.mxu0 0.0
        %1934 = vmatpush.msra.mxu0 0.0
        %v1935 = vand.u32 %v250, 4294901760
        %1936 = vmatpush.msra.mxu0 %v1935
        %v1937 = vand.u32 %v249, 4294901760
        %1938 = vmatpush.msra.mxu0 %v1937
        %v1939 = vand.u32 %v966, 4294901760
        %v1940 = vsub.f32 %v966, %v1939
        %v1941 = vand.u32 %v1940, 4294901760
        %v1942 = vsub.f32 %v1940, %v1941
        %v1943 = vand.u32 %v1942, 4294901760
        %1944 = vmatmul.f32.gmra.mxu0 %v1943
        %v1945 = vpop.f32.mrf.mxu0
        %v1946 = vadd.f32 0.0, %v1945
        %v1947 = vand.u32 %v969, 4294901760
        %v1948 = vsub.f32 %v969, %v1947
        %v1949 = vand.u32 %v1948, 4294901760
        %v1950 = vsub.f32 %v1948, %v1949
        %v1951 = vand.u32 %v1950, 4294901760
        %1952 = vmatmul.f32.gmra.mxu0 %v1951
        %v1953 = vpop.f32.mrf.mxu0
        %v1954 = vadd.f32 0.0, %v1953
        %1955 = vdwg.mxu0
        %1956 = vmatpush.msra.mxu0 0.0
        %1957 = vmatpush.msra.mxu0 0.0
        %1958 = vmatpush.msra.mxu0 0.0
        %1959 = vmatpush.msra.mxu0 0.0
        %1960 = vmatpush.msra.mxu0 0.0
        %1961 = vmatpush.msra.mxu0 0.0
        %1962 = vmatpush.msra.mxu0 0.0
        %1963 = vmatpush.msra.mxu0 0.0
        %1964 = vmatpush.msra.mxu0 0.0
        %1965 = vmatpush.msra.mxu0 0.0
        %1966 = vmatpush.msra.mxu0 0.0
        %1967 = vmatpush.msra.mxu0 0.0
        %1968 = vmatpush.msra.mxu0 0.0
        %1969 = vmatpush.msra.mxu0 0.0
        %v1970 = vand.u32 %v250, 4294901760
        %v1971 = vsub.f32 %v250, %v1970
        %v1972 = vand.u32 %v1971, 4294901760
        %v1973 = vsub.f32 %v1971, %v1972
        %v1974 = vand.u32 %v1973, 4294901760
        %1975 = vmatpush.msra.mxu0 %v1974
        %v1976 = vand.u32 %v249, 4294901760
        %v1977 = vsub.f32 %v249, %v1976
        %v1978 = vand.u32 %v1977, 4294901760
        %v1979 = vsub.f32 %v1977, %v1978
        %v1980 = vand.u32 %v1979, 4294901760
        %1981 = vmatpush.msra.mxu0 %v1980
        %v1982 = vand.u32 %v966, 4294901760
        %1983 = vmatmul.f32.gmra.mxu0 %v1982
        %v1984 = vpop.f32.mrf.mxu0
        %v1985 = vadd.f32 %v1946, %v1984
        %v1986 = vand.u32 %v969, 4294901760
        %1987 = vmatmul.f32.gmra.mxu0 %v1986
        %v1988 = vpop.f32.mrf.mxu0
        %v1989 = vadd.f32 %v1954, %v1988
        %1990 = vdwg.mxu0
        %1991 = vmatpush.msra.mxu0 0.0
        %1992 = vmatpush.msra.mxu0 0.0
        %1993 = vmatpush.msra.mxu0 0.0
        %1994 = vmatpush.msra.mxu0 0.0
        %1995 = vmatpush.msra.mxu0 0.0
        %1996 = vmatpush.msra.mxu0 0.0
        %1997 = vmatpush.msra.mxu0 0.0
        %1998 = vmatpush.msra.mxu0 0.0
        %1999 = vmatpush.msra.mxu0 0.0
        %2000 = vmatpush.msra.mxu0 0.0
        %2001 = vmatpush.msra.mxu0 0.0
        %2002 = vmatpush.msra.mxu0 0.0
        %2003 = vmatpush.msra.mxu0 0.0
        %2004 = vmatpush.msra.mxu0 0.0
        %v2005 = vand.u32 %v250, 4294901760
        %v2006 = vsub.f32 %v250, %v2005
        %2007 = vmatpush.msra.mxu0 %v2006
        %v2008 = vand.u32 %v249, 4294901760
        %v2009 = vsub.f32 %v249, %v2008
        %2010 = vmatpush.msra.mxu0 %v2009
        %v2011 = vand.u32 %v966, 4294901760
        %v2012 = vsub.f32 %v966, %v2011
        %2013 = vmatmul.f32.gmra.mxu0 %v2012
        %v2014 = vpop.f32.mrf.mxu0
        %v2015 = vadd.f32 %v1985, %v2014
        %v2016 = vand.u32 %v969, 4294901760
        %v2017 = vsub.f32 %v969, %v2016
        %2018 = vmatmul.f32.gmra.mxu0 %v2017
        %v2019 = vpop.f32.mrf.mxu0
        %v2020 = vadd.f32 %v1989, %v2019
        %2021 = vdwg.mxu0
        %2022 = vmatpush.msra.mxu0 0.0
        %2023 = vmatpush.msra.mxu0 0.0
        %2024 = vmatpush.msra.mxu0 0.0
        %2025 = vmatpush.msra.mxu0 0.0
        %2026 = vmatpush.msra.mxu0 0.0
        %2027 = vmatpush.msra.mxu0 0.0
        %2028 = vmatpush.msra.mxu0 0.0
        %2029 = vmatpush.msra.mxu0 0.0
        %2030 = vmatpush.msra.mxu0 0.0
        %2031 = vmatpush.msra.mxu0 0.0
        %2032 = vmatpush.msra.mxu0 0.0
        %2033 = vmatpush.msra.mxu0 0.0
        %2034 = vmatpush.msra.mxu0 0.0
        %2035 = vmatpush.msra.mxu0 0.0
        %v2036 = vand.u32 %v250, 4294901760
        %2037 = vmatpush.msra.mxu0 %v2036
        %v2038 = vand.u32 %v249, 4294901760
        %2039 = vmatpush.msra.mxu0 %v2038
        %v2040 = vand.u32 %v966, 4294901760
        %v2041 = vsub.f32 %v966, %v2040
        %v2042 = vand.u32 %v2041, 4294901760
        %2043 = vmatmul.f32.gmra.mxu0 %v2042
        %v2044 = vpop.f32.mrf.mxu0
        %v2045 = vadd.f32 %v2015, %v2044
        %v2046 = vand.u32 %v969, 4294901760
        %v2047 = vsub.f32 %v969, %v2046
        %v2048 = vand.u32 %v2047, 4294901760
        %2049 = vmatmul.f32.gmra.mxu0 %v2048
        %v2050 = vpop.f32.mrf.mxu0
        %v2051 = vadd.f32 %v2020, %v2050
        %2052 = vdwg.mxu0
        %2053 = vmatpush.msra.mxu0 0.0
        %2054 = vmatpush.msra.mxu0 0.0
        %2055 = vmatpush.msra.mxu0 0.0
        %2056 = vmatpush.msra.mxu0 0.0
        %2057 = vmatpush.msra.mxu0 0.0
        %2058 = vmatpush.msra.mxu0 0.0
        %2059 = vmatpush.msra.mxu0 0.0
        %2060 = vmatpush.msra.mxu0 0.0
        %2061 = vmatpush.msra.mxu0 0.0
        %2062 = vmatpush.msra.mxu0 0.0
        %2063 = vmatpush.msra.mxu0 0.0
        %2064 = vmatpush.msra.mxu0 0.0
        %2065 = vmatpush.msra.mxu0 0.0
        %2066 = vmatpush.msra.mxu0 0.0
        %v2067 = vand.u32 %v250, 4294901760
        %v2068 = vsub.f32 %v250, %v2067
        %v2069 = vand.u32 %v2068, 4294901760
        %2070 = vmatpush.msra.mxu0 %v2069
        %v2071 = vand.u32 %v249, 4294901760
        %v2072 = vsub.f32 %v249, %v2071
        %v2073 = vand.u32 %v2072, 4294901760
        %2074 = vmatpush.msra.mxu0 %v2073
        %v2075 = vand.u32 %v966, 4294901760
        %2076 = vmatmul.f32.gmra.mxu0 %v2075
        %v2077 = vpop.f32.mrf.mxu0
        %v2078 = vadd.f32 %v2045, %v2077
        %v2079 = vand.u32 %v969, 4294901760
        %2080 = vmatmul.f32.gmra.mxu0 %v2079
        %v2081 = vpop.f32.mrf.mxu0
        %v2082 = vadd.f32 %v2051, %v2081
        %2083 = vdwg.mxu0
        %2084 = vmatpush.msra.mxu0 0.0
        %2085 = vmatpush.msra.mxu0 0.0
        %2086 = vmatpush.msra.mxu0 0.0
        %2087 = vmatpush.msra.mxu0 0.0
        %2088 = vmatpush.msra.mxu0 0.0
        %2089 = vmatpush.msra.mxu0 0.0
        %2090 = vmatpush.msra.mxu0 0.0
        %2091 = vmatpush.msra.mxu0 0.0
        %2092 = vmatpush.msra.mxu0 0.0
        %2093 = vmatpush.msra.mxu0 0.0
        %2094 = vmatpush.msra.mxu0 0.0
        %2095 = vmatpush.msra.mxu0 0.0
        %2096 = vmatpush.msra.mxu0 0.0
        %2097 = vmatpush.msra.mxu0 0.0
        %v2098 = vand.u32 %v250, 4294901760
        %2099 = vmatpush.msra.mxu0 %v2098
        %v2100 = vand.u32 %v249, 4294901760
        %2101 = vmatpush.msra.mxu0 %v2100
        %v2102 = vand.u32 %v966, 4294901760
        %2103 = vmatmul.f32.gmra.mxu0 %v2102
        %v2104 = vpop.f32.mrf.mxu0
        %v2105 = vadd.f32 %v2078, %v2104
        %v2106 = vand.u32 %v969, 4294901760
        %2107 = vmatmul.f32.gmra.mxu0 %v2106
        %v2108 = vpop.f32.mrf.mxu0
        %v2109 = vadd.f32 %v2082, %v2108
        %2110 = vdwg.mxu0
        %2111 = vmatpush.msra.mxu0 0.0
        %2112 = vmatpush.msra.mxu0 0.0
        %2113 = vmatpush.msra.mxu0 0.0
        %2114 = vmatpush.msra.mxu0 0.0
        %2115 = vmatpush.msra.mxu0 0.0
        %2116 = vmatpush.msra.mxu0 0.0
        %2117 = vmatpush.msra.mxu0 0.0
        %2118 = vmatpush.msra.mxu0 0.0
        %2119 = vmatpush.msra.mxu0 0.0
        %2120 = vmatpush.msra.mxu0 0.0
        %2121 = vmatpush.msra.mxu0 0.0
        %2122 = vmatpush.msra.mxu0 0.0
        %2123 = vmatpush.msra.mxu0 0.0
        %2124 = vmatpush.msra.mxu0 0.0
        %v2125 = vand.u32 %v252, 4294901760
        %2126 = vmatpush.msra.mxu0 %v2125
        %v2127 = vand.u32 %v251, 4294901760
        %2128 = vmatpush.msra.mxu0 %v2127
        %v2129 = vand.u32 %v966, 4294901760
        %v2130 = vsub.f32 %v966, %v2129
        %v2131 = vand.u32 %v2130, 4294901760
        %v2132 = vsub.f32 %v2130, %v2131
        %v2133 = vand.u32 %v2132, 4294901760
        %2134 = vmatmul.f32.gmra.mxu0 %v2133
        %v2135 = vpop.f32.mrf.mxu0
        %v2136 = vadd.f32 0.0, %v2135
        %v2137 = vand.u32 %v969, 4294901760
        %v2138 = vsub.f32 %v969, %v2137
        %v2139 = vand.u32 %v2138, 4294901760
        %v2140 = vsub.f32 %v2138, %v2139
        %v2141 = vand.u32 %v2140, 4294901760
        %2142 = vmatmul.f32.gmra.mxu0 %v2141
        %v2143 = vpop.f32.mrf.mxu0
        %v2144 = vadd.f32 0.0, %v2143
        %2145 = vdwg.mxu0
        %2146 = vmatpush.msra.mxu0 0.0
        %2147 = vmatpush.msra.mxu0 0.0
        %2148 = vmatpush.msra.mxu0 0.0
        %2149 = vmatpush.msra.mxu0 0.0
        %2150 = vmatpush.msra.mxu0 0.0
        %2151 = vmatpush.msra.mxu0 0.0
        %2152 = vmatpush.msra.mxu0 0.0
        %2153 = vmatpush.msra.mxu0 0.0
        %2154 = vmatpush.msra.mxu0 0.0
        %2155 = vmatpush.msra.mxu0 0.0
        %2156 = vmatpush.msra.mxu0 0.0
        %2157 = vmatpush.msra.mxu0 0.0
        %2158 = vmatpush.msra.mxu0 0.0
        %2159 = vmatpush.msra.mxu0 0.0
        %v2160 = vand.u32 %v252, 4294901760
        %v2161 = vsub.f32 %v252, %v2160
        %v2162 = vand.u32 %v2161, 4294901760
        %v2163 = vsub.f32 %v2161, %v2162
        %v2164 = vand.u32 %v2163, 4294901760
        %2165 = vmatpush.msra.mxu0 %v2164
        %v2166 = vand.u32 %v251, 4294901760
        %v2167 = vsub.f32 %v251, %v2166
        %v2168 = vand.u32 %v2167, 4294901760
        %v2169 = vsub.f32 %v2167, %v2168
        %v2170 = vand.u32 %v2169, 4294901760
        %2171 = vmatpush.msra.mxu0 %v2170
        %v2172 = vand.u32 %v966, 4294901760
        %2173 = vmatmul.f32.gmra.mxu0 %v2172
        %v2174 = vpop.f32.mrf.mxu0
        %v2175 = vadd.f32 %v2136, %v2174
        %v2176 = vand.u32 %v969, 4294901760
        %2177 = vmatmul.f32.gmra.mxu0 %v2176
        %v2178 = vpop.f32.mrf.mxu0
        %v2179 = vadd.f32 %v2144, %v2178
        %2180 = vdwg.mxu0
        %2181 = vmatpush.msra.mxu0 0.0
        %2182 = vmatpush.msra.mxu0 0.0
        %2183 = vmatpush.msra.mxu0 0.0
        %2184 = vmatpush.msra.mxu0 0.0
        %2185 = vmatpush.msra.mxu0 0.0
        %2186 = vmatpush.msra.mxu0 0.0
        %2187 = vmatpush.msra.mxu0 0.0
        %2188 = vmatpush.msra.mxu0 0.0
        %2189 = vmatpush.msra.mxu0 0.0
        %2190 = vmatpush.msra.mxu0 0.0
        %2191 = vmatpush.msra.mxu0 0.0
        %2192 = vmatpush.msra.mxu0 0.0
        %2193 = vmatpush.msra.mxu0 0.0
        %2194 = vmatpush.msra.mxu0 0.0
        %v2195 = vand.u32 %v252, 4294901760
        %v2196 = vsub.f32 %v252, %v2195
        %2197 = vmatpush.msra.mxu0 %v2196
        %v2198 = vand.u32 %v251, 4294901760
        %v2199 = vsub.f32 %v251, %v2198
        %2200 = vmatpush.msra.mxu0 %v2199
        %v2201 = vand.u32 %v966, 4294901760
        %v2202 = vsub.f32 %v966, %v2201
        %2203 = vmatmul.f32.gmra.mxu0 %v2202
        %v2204 = vpop.f32.mrf.mxu0
        %v2205 = vadd.f32 %v2175, %v2204
        %v2206 = vand.u32 %v969, 4294901760
        %v2207 = vsub.f32 %v969, %v2206
        %2208 = vmatmul.f32.gmra.mxu0 %v2207
        %v2209 = vpop.f32.mrf.mxu0
        %v2210 = vadd.f32 %v2179, %v2209
        %2211 = vdwg.mxu0
        %2212 = vmatpush.msra.mxu0 0.0
        %2213 = vmatpush.msra.mxu0 0.0
        %2214 = vmatpush.msra.mxu0 0.0
        %2215 = vmatpush.msra.mxu0 0.0
        %2216 = vmatpush.msra.mxu0 0.0
        %2217 = vmatpush.msra.mxu0 0.0
        %2218 = vmatpush.msra.mxu0 0.0
        %2219 = vmatpush.msra.mxu0 0.0
        %2220 = vmatpush.msra.mxu0 0.0
        %2221 = vmatpush.msra.mxu0 0.0
        %2222 = vmatpush.msra.mxu0 0.0
        %2223 = vmatpush.msra.mxu0 0.0
        %2224 = vmatpush.msra.mxu0 0.0
        %2225 = vmatpush.msra.mxu0 0.0
        %v2226 = vand.u32 %v252, 4294901760
        %2227 = vmatpush.msra.mxu0 %v2226
        %v2228 = vand.u32 %v251, 4294901760
        %2229 = vmatpush.msra.mxu0 %v2228
        %v2230 = vand.u32 %v966, 4294901760
        %v2231 = vsub.f32 %v966, %v2230
        %v2232 = vand.u32 %v2231, 4294901760
        %2233 = vmatmul.f32.gmra.mxu0 %v2232
        %v2234 = vpop.f32.mrf.mxu0
        %v2235 = vadd.f32 %v2205, %v2234
        %v2236 = vand.u32 %v969, 4294901760
        %v2237 = vsub.f32 %v969, %v2236
        %v2238 = vand.u32 %v2237, 4294901760
        %2239 = vmatmul.f32.gmra.mxu0 %v2238
        %v2240 = vpop.f32.mrf.mxu0
        %v2241 = vadd.f32 %v2210, %v2240
        %2242 = vdwg.mxu0
        %2243 = vmatpush.msra.mxu0 0.0
        %2244 = vmatpush.msra.mxu0 0.0
        %2245 = vmatpush.msra.mxu0 0.0
        %2246 = vmatpush.msra.mxu0 0.0
        %2247 = vmatpush.msra.mxu0 0.0
        %2248 = vmatpush.msra.mxu0 0.0
        %2249 = vmatpush.msra.mxu0 0.0
        %2250 = vmatpush.msra.mxu0 0.0
        %2251 = vmatpush.msra.mxu0 0.0
        %2252 = vmatpush.msra.mxu0 0.0
        %2253 = vmatpush.msra.mxu0 0.0
        %2254 = vmatpush.msra.mxu0 0.0
        %2255 = vmatpush.msra.mxu0 0.0
        %2256 = vmatpush.msra.mxu0 0.0
        %v2257 = vand.u32 %v252, 4294901760
        %v2258 = vsub.f32 %v252, %v2257
        %v2259 = vand.u32 %v2258, 4294901760
        %2260 = vmatpush.msra.mxu0 %v2259
        %v2261 = vand.u32 %v251, 4294901760
        %v2262 = vsub.f32 %v251, %v2261
        %v2263 = vand.u32 %v2262, 4294901760
        %2264 = vmatpush.msra.mxu0 %v2263
        %v2265 = vand.u32 %v966, 4294901760
        %2266 = vmatmul.f32.gmra.mxu0 %v2265
        %v2267 = vpop.f32.mrf.mxu0
        %v2268 = vadd.f32 %v2235, %v2267
        %v2269 = vand.u32 %v969, 4294901760
        %2270 = vmatmul.f32.gmra.mxu0 %v2269
        %v2271 = vpop.f32.mrf.mxu0
        %v2272 = vadd.f32 %v2241, %v2271
        %2273 = vdwg.mxu0
        %2274 = vmatpush.msra.mxu0 0.0
        %2275 = vmatpush.msra.mxu0 0.0
        %2276 = vmatpush.msra.mxu0 0.0
        %2277 = vmatpush.msra.mxu0 0.0
        %2278 = vmatpush.msra.mxu0 0.0
        %2279 = vmatpush.msra.mxu0 0.0
        %2280 = vmatpush.msra.mxu0 0.0
        %2281 = vmatpush.msra.mxu0 0.0
        %2282 = vmatpush.msra.mxu0 0.0
        %2283 = vmatpush.msra.mxu0 0.0
        %2284 = vmatpush.msra.mxu0 0.0
        %2285 = vmatpush.msra.mxu0 0.0
        %2286 = vmatpush.msra.mxu0 0.0
        %2287 = vmatpush.msra.mxu0 0.0
        %v2288 = vand.u32 %v252, 4294901760
        %2289 = vmatpush.msra.mxu0 %v2288
        %v2290 = vand.u32 %v251, 4294901760
        %2291 = vmatpush.msra.mxu0 %v2290
        %v2292 = vand.u32 %v966, 4294901760
        %2293 = vmatmul.f32.gmra.mxu0 %v2292
        %v2294 = vpop.f32.mrf.mxu0
        %v2295 = vadd.f32 %v2268, %v2294
        %v2296 = vand.u32 %v969, 4294901760
        %2297 = vmatmul.f32.gmra.mxu0 %v2296
        %v2298 = vpop.f32.mrf.mxu0
        %v2299 = vadd.f32 %v2272, %v2298
        %2300 = vdwg.mxu0
        %2301 = vmatpush.msra.mxu0 0.0
        %2302 = vmatpush.msra.mxu0 0.0
        %2303 = vmatpush.msra.mxu0 0.0
        %2304 = vmatpush.msra.mxu0 0.0
        %2305 = vmatpush.msra.mxu0 0.0
        %2306 = vmatpush.msra.mxu0 0.0
        %2307 = vmatpush.msra.mxu0 0.0
        %2308 = vmatpush.msra.mxu0 0.0
        %2309 = vmatpush.msra.mxu0 0.0
        %2310 = vmatpush.msra.mxu0 0.0
        %2311 = vmatpush.msra.mxu0 0.0
        %2312 = vmatpush.msra.mxu0 0.0
        %2313 = vmatpush.msra.mxu0 0.0
        %2314 = vmatpush.msra.mxu0 0.0
        %v2315 = vand.u32 %v254, 4294901760
        %2316 = vmatpush.msra.mxu0 %v2315
        %v2317 = vand.u32 %v253, 4294901760
        %2318 = vmatpush.msra.mxu0 %v2317
        %v2319 = vand.u32 %v966, 4294901760
        %v2320 = vsub.f32 %v966, %v2319
        %v2321 = vand.u32 %v2320, 4294901760
        %v2322 = vsub.f32 %v2320, %v2321
        %v2323 = vand.u32 %v2322, 4294901760
        %2324 = vmatmul.f32.gmra.mxu0 %v2323
        %v2325 = vpop.f32.mrf.mxu0
        %v2326 = vadd.f32 0.0, %v2325
        %v2327 = vand.u32 %v969, 4294901760
        %v2328 = vsub.f32 %v969, %v2327
        %v2329 = vand.u32 %v2328, 4294901760
        %v2330 = vsub.f32 %v2328, %v2329
        %v2331 = vand.u32 %v2330, 4294901760
        %2332 = vmatmul.f32.gmra.mxu0 %v2331
        %v2333 = vpop.f32.mrf.mxu0
        %v2334 = vadd.f32 0.0, %v2333
        %2335 = vdwg.mxu0
        %2336 = vmatpush.msra.mxu0 0.0
        %2337 = vmatpush.msra.mxu0 0.0
        %2338 = vmatpush.msra.mxu0 0.0
        %2339 = vmatpush.msra.mxu0 0.0
        %2340 = vmatpush.msra.mxu0 0.0
        %2341 = vmatpush.msra.mxu0 0.0
        %2342 = vmatpush.msra.mxu0 0.0
        %2343 = vmatpush.msra.mxu0 0.0
        %2344 = vmatpush.msra.mxu0 0.0
        %2345 = vmatpush.msra.mxu0 0.0
        %2346 = vmatpush.msra.mxu0 0.0
        %2347 = vmatpush.msra.mxu0 0.0
        %2348 = vmatpush.msra.mxu0 0.0
        %2349 = vmatpush.msra.mxu0 0.0
        %v2350 = vand.u32 %v254, 4294901760
        %v2351 = vsub.f32 %v254, %v2350
        %v2352 = vand.u32 %v2351, 4294901760
        %v2353 = vsub.f32 %v2351, %v2352
        %v2354 = vand.u32 %v2353, 4294901760
        %2355 = vmatpush.msra.mxu0 %v2354
        %v2356 = vand.u32 %v253, 4294901760
        %v2357 = vsub.f32 %v253, %v2356
        %v2358 = vand.u32 %v2357, 4294901760
        %v2359 = vsub.f32 %v2357, %v2358
        %v2360 = vand.u32 %v2359, 4294901760
        %2361 = vmatpush.msra.mxu0 %v2360
        %v2362 = vand.u32 %v966, 4294901760
        %2363 = vmatmul.f32.gmra.mxu0 %v2362
        %v2364 = vpop.f32.mrf.mxu0
        %v2365 = vadd.f32 %v2326, %v2364
        %v2366 = vand.u32 %v969, 4294901760
        %2367 = vmatmul.f32.gmra.mxu0 %v2366
        %v2368 = vpop.f32.mrf.mxu0
        %v2369 = vadd.f32 %v2334, %v2368
        %2370 = vdwg.mxu0
        %2371 = vmatpush.msra.mxu0 0.0
        %2372 = vmatpush.msra.mxu0 0.0
        %2373 = vmatpush.msra.mxu0 0.0
        %2374 = vmatpush.msra.mxu0 0.0
        %2375 = vmatpush.msra.mxu0 0.0
        %2376 = vmatpush.msra.mxu0 0.0
        %2377 = vmatpush.msra.mxu0 0.0
        %2378 = vmatpush.msra.mxu0 0.0
        %2379 = vmatpush.msra.mxu0 0.0
        %2380 = vmatpush.msra.mxu0 0.0
        %2381 = vmatpush.msra.mxu0 0.0
        %2382 = vmatpush.msra.mxu0 0.0
        %2383 = vmatpush.msra.mxu0 0.0
        %2384 = vmatpush.msra.mxu0 0.0
        %v2385 = vand.u32 %v254, 4294901760
        %v2386 = vsub.f32 %v254, %v2385
        %2387 = vmatpush.msra.mxu0 %v2386
        %v2388 = vand.u32 %v253, 4294901760
        %v2389 = vsub.f32 %v253, %v2388
        %2390 = vmatpush.msra.mxu0 %v2389
        %v2391 = vand.u32 %v966, 4294901760
        %v2392 = vsub.f32 %v966, %v2391
        %2393 = vmatmul.f32.gmra.mxu0 %v2392
        %v2394 = vpop.f32.mrf.mxu0
        %v2395 = vadd.f32 %v2365, %v2394
        %v2396 = vand.u32 %v969, 4294901760
        %v2397 = vsub.f32 %v969, %v2396
        %2398 = vmatmul.f32.gmra.mxu0 %v2397
        %v2399 = vpop.f32.mrf.mxu0
        %v2400 = vadd.f32 %v2369, %v2399
        %2401 = vdwg.mxu0
        %2402 = vmatpush.msra.mxu0 0.0
        %2403 = vmatpush.msra.mxu0 0.0
        %2404 = vmatpush.msra.mxu0 0.0
        %2405 = vmatpush.msra.mxu0 0.0
        %2406 = vmatpush.msra.mxu0 0.0
        %2407 = vmatpush.msra.mxu0 0.0
        %2408 = vmatpush.msra.mxu0 0.0
        %2409 = vmatpush.msra.mxu0 0.0
        %2410 = vmatpush.msra.mxu0 0.0
        %2411 = vmatpush.msra.mxu0 0.0
        %2412 = vmatpush.msra.mxu0 0.0
        %2413 = vmatpush.msra.mxu0 0.0
        %2414 = vmatpush.msra.mxu0 0.0
        %2415 = vmatpush.msra.mxu0 0.0
        %v2416 = vand.u32 %v254, 4294901760
        %2417 = vmatpush.msra.mxu0 %v2416
        %v2418 = vand.u32 %v253, 4294901760
        %2419 = vmatpush.msra.mxu0 %v2418
        %v2420 = vand.u32 %v966, 4294901760
        %v2421 = vsub.f32 %v966, %v2420
        %v2422 = vand.u32 %v2421, 4294901760
        %2423 = vmatmul.f32.gmra.mxu0 %v2422
        %v2424 = vpop.f32.mrf.mxu0
        %v2425 = vadd.f32 %v2395, %v2424
        %v2426 = vand.u32 %v969, 4294901760
        %v2427 = vsub.f32 %v969, %v2426
        %v2428 = vand.u32 %v2427, 4294901760
        %2429 = vmatmul.f32.gmra.mxu0 %v2428
        %v2430 = vpop.f32.mrf.mxu0
        %v2431 = vadd.f32 %v2400, %v2430
        %2432 = vdwg.mxu0
        %2433 = vmatpush.msra.mxu0 0.0
        %2434 = vmatpush.msra.mxu0 0.0
        %2435 = vmatpush.msra.mxu0 0.0
        %2436 = vmatpush.msra.mxu0 0.0
        %2437 = vmatpush.msra.mxu0 0.0
        %2438 = vmatpush.msra.mxu0 0.0
        %2439 = vmatpush.msra.mxu0 0.0
        %2440 = vmatpush.msra.mxu0 0.0
        %2441 = vmatpush.msra.mxu0 0.0
        %2442 = vmatpush.msra.mxu0 0.0
        %2443 = vmatpush.msra.mxu0 0.0
        %2444 = vmatpush.msra.mxu0 0.0
        %2445 = vmatpush.msra.mxu0 0.0
        %2446 = vmatpush.msra.mxu0 0.0
        %v2447 = vand.u32 %v254, 4294901760
        %v2448 = vsub.f32 %v254, %v2447
        %v2449 = vand.u32 %v2448, 4294901760
        %2450 = vmatpush.msra.mxu0 %v2449
        %v2451 = vand.u32 %v253, 4294901760
        %v2452 = vsub.f32 %v253, %v2451
        %v2453 = vand.u32 %v2452, 4294901760
        %2454 = vmatpush.msra.mxu0 %v2453
        %v2455 = vand.u32 %v966, 4294901760
        %2456 = vmatmul.f32.gmra.mxu0 %v2455
        %v2457 = vpop.f32.mrf.mxu0
        %v2458 = vadd.f32 %v2425, %v2457
        %v2459 = vand.u32 %v969, 4294901760
        %2460 = vmatmul.f32.gmra.mxu0 %v2459
        %v2461 = vpop.f32.mrf.mxu0
        %v2462 = vadd.f32 %v2431, %v2461
        %2463 = vdwg.mxu0
        %2464 = vmatpush.msra.mxu0 0.0
        %2465 = vmatpush.msra.mxu0 0.0
        %2466 = vmatpush.msra.mxu0 0.0
        %2467 = vmatpush.msra.mxu0 0.0
        %2468 = vmatpush.msra.mxu0 0.0
        %2469 = vmatpush.msra.mxu0 0.0
        %2470 = vmatpush.msra.mxu0 0.0
        %2471 = vmatpush.msra.mxu0 0.0
        %2472 = vmatpush.msra.mxu0 0.0
        %2473 = vmatpush.msra.mxu0 0.0
        %2474 = vmatpush.msra.mxu0 0.0
        %2475 = vmatpush.msra.mxu0 0.0
        %2476 = vmatpush.msra.mxu0 0.0
        %2477 = vmatpush.msra.mxu0 0.0
        %v2478 = vand.u32 %v254, 4294901760
        %2479 = vmatpush.msra.mxu0 %v2478
        %v2480 = vand.u32 %v253, 4294901760
        %2481 = vmatpush.msra.mxu0 %v2480
        %v2482 = vand.u32 %v966, 4294901760
        %2483 = vmatmul.f32.gmra.mxu0 %v2482
        %v2484 = vpop.f32.mrf.mxu0
        %v2485 = vadd.f32 %v2458, %v2484
        %v2486 = vand.u32 %v969, 4294901760
        %2487 = vmatmul.f32.gmra.mxu0 %v2486
        %v2488 = vpop.f32.mrf.mxu0
        %v2489 = vadd.f32 %v2462, %v2488
        %2490 = vdwg.mxu0
        %v2491 = vld [vmem:[%s2 + $0x20] sm:$0xff]
        %v2492 = vld [vmem:[%s2 + $0x28] sm:$0xff]
        %v2493 = vld [vmem:[%s2 + $0x30] sm:$0xff]
        %v2494 = vld [vmem:[%s2 + $0x38] sm:$0xff]
        %v2496 = vsel %vm263, %v1155, 0
        %v2499 = vsel %vm263, %v1159, 0
        %v2502 = vsel %vm263, %v1345, 0
        %v2505 = vsel %vm263, %v1349, 0
        %v2508 = vsel %vm263, %v1535, 0
        %v2511 = vsel %vm263, %v1539, 0
        %v2514 = vsel %vm263, %v1725, 0
        %v2517 = vsel %vm263, %v1729, 0
        %v2520 = vsel %vm263, %v1915, 0
        %v2523 = vsel %vm263, %v1919, 0
        %v2526 = vsel %vm263, %v2105, 0
        %v2529 = vsel %vm263, %v2109, 0
        %v2532 = vsel %vm263, %v2295, 0
        %v2535 = vsel %vm263, %v2299, 0
        %v2538 = vsel %vm263, %v2485, 0
        %v2541 = vsel %vm263, %v2489, 0
        %2543 = vmatpush.msra.mxu0 0.0
        %2544 = vmatpush.msra.mxu0 0.0
        %2545 = vmatpush.msra.mxu0 0.0
        %2546 = vmatpush.msra.mxu0 0.0
        %2547 = vmatpush.msra.mxu0 0.0
        %2548 = vmatpush.msra.mxu0 0.0
        %2549 = vmatpush.msra.mxu0 0.0
        %2550 = vmatpush.msra.mxu0 0.0
        %2551 = vmatpush.msra.mxu0 0.0
        %2552 = vmatpush.msra.mxu0 0.0
        %2553 = vmatpush.msra.mxu0 0.0
        %2554 = vmatpush.msra.mxu0 0.0
        %v2555 = vand.u32 %v2494, 4294901760
        %2556 = vmatpush.msra.mxu0 %v2555
        %v2557 = vand.u32 %v2493, 4294901760
        %2558 = vmatpush.msra.mxu0 %v2557
        %v2559 = vand.u32 %v2492, 4294901760
        %2560 = vmatpush.msra.mxu0 %v2559
        %v2561 = vand.u32 %v2491, 4294901760
        %2562 = vmatpush.msra.mxu0 %v2561
        %v2563 = vand.u32 %v2496, 4294901760
        %v2564 = vsub.f32 %v2496, %v2563
        %v2565 = vand.u32 %v2564, 4294901760
        %v2566 = vsub.f32 %v2564, %v2565
        %v2567 = vand.u32 %v2566, 4294901760
        %2568 = vmatmul.f32.gmra.mxu0 %v2567
        %v2569 = vpop.f32.mrf.mxu0
        %v2570 = vadd.f32 0.0, %v2569
        %v2571 = vand.u32 %v2499, 4294901760
        %v2572 = vsub.f32 %v2499, %v2571
        %v2573 = vand.u32 %v2572, 4294901760
        %v2574 = vsub.f32 %v2572, %v2573
        %v2575 = vand.u32 %v2574, 4294901760
        %2576 = vmatmul.f32.gmra.mxu0 %v2575
        %v2577 = vpop.f32.mrf.mxu0
        %v2578 = vadd.f32 0.0, %v2577
        %v2579 = vand.u32 %v2502, 4294901760
        %v2580 = vsub.f32 %v2502, %v2579
        %v2581 = vand.u32 %v2580, 4294901760
        %v2582 = vsub.f32 %v2580, %v2581
        %v2583 = vand.u32 %v2582, 4294901760
        %2584 = vmatmul.f32.gmra.mxu0 %v2583
        %v2585 = vpop.f32.mrf.mxu0
        %v2586 = vadd.f32 0.0, %v2585
        %v2587 = vand.u32 %v2505, 4294901760
        %v2588 = vsub.f32 %v2505, %v2587
        %v2589 = vand.u32 %v2588, 4294901760
        %v2590 = vsub.f32 %v2588, %v2589
        %v2591 = vand.u32 %v2590, 4294901760
        %2592 = vmatmul.f32.gmra.mxu0 %v2591
        %v2593 = vpop.f32.mrf.mxu0
        %v2594 = vadd.f32 0.0, %v2593
        %v2595 = vand.u32 %v2508, 4294901760
        %v2596 = vsub.f32 %v2508, %v2595
        %v2597 = vand.u32 %v2596, 4294901760
        %v2598 = vsub.f32 %v2596, %v2597
        %v2599 = vand.u32 %v2598, 4294901760
        %2600 = vmatmul.f32.gmra.mxu0 %v2599
        %v2601 = vpop.f32.mrf.mxu0
        %v2602 = vadd.f32 0.0, %v2601
        %v2603 = vand.u32 %v2511, 4294901760
        %v2604 = vsub.f32 %v2511, %v2603
        %v2605 = vand.u32 %v2604, 4294901760
        %v2606 = vsub.f32 %v2604, %v2605
        %v2607 = vand.u32 %v2606, 4294901760
        %2608 = vmatmul.f32.gmra.mxu0 %v2607
        %v2609 = vpop.f32.mrf.mxu0
        %v2610 = vadd.f32 0.0, %v2609
        %v2611 = vand.u32 %v2514, 4294901760
        %v2612 = vsub.f32 %v2514, %v2611
        %v2613 = vand.u32 %v2612, 4294901760
        %v2614 = vsub.f32 %v2612, %v2613
        %v2615 = vand.u32 %v2614, 4294901760
        %2616 = vmatmul.f32.gmra.mxu0 %v2615
        %v2617 = vpop.f32.mrf.mxu0
        %v2618 = vadd.f32 0.0, %v2617
        %v2619 = vand.u32 %v2517, 4294901760
        %v2620 = vsub.f32 %v2517, %v2619
        %v2621 = vand.u32 %v2620, 4294901760
        %v2622 = vsub.f32 %v2620, %v2621
        %v2623 = vand.u32 %v2622, 4294901760
        %2624 = vmatmul.f32.gmra.mxu0 %v2623
        %v2625 = vpop.f32.mrf.mxu0
        %v2626 = vadd.f32 0.0, %v2625
        %v2627 = vand.u32 %v2520, 4294901760
        %v2628 = vsub.f32 %v2520, %v2627
        %v2629 = vand.u32 %v2628, 4294901760
        %v2630 = vsub.f32 %v2628, %v2629
        %v2631 = vand.u32 %v2630, 4294901760
        %2632 = vmatmul.f32.gmra.mxu0 %v2631
        %v2633 = vpop.f32.mrf.mxu0
        %v2634 = vadd.f32 0.0, %v2633
        %v2635 = vand.u32 %v2523, 4294901760
        %v2636 = vsub.f32 %v2523, %v2635
        %v2637 = vand.u32 %v2636, 4294901760
        %v2638 = vsub.f32 %v2636, %v2637
        %v2639 = vand.u32 %v2638, 4294901760
        %2640 = vmatmul.f32.gmra.mxu0 %v2639
        %v2641 = vpop.f32.mrf.mxu0
        %v2642 = vadd.f32 0.0, %v2641
        %v2643 = vand.u32 %v2526, 4294901760
        %v2644 = vsub.f32 %v2526, %v2643
        %v2645 = vand.u32 %v2644, 4294901760
        %v2646 = vsub.f32 %v2644, %v2645
        %v2647 = vand.u32 %v2646, 4294901760
        %2648 = vmatmul.f32.gmra.mxu0 %v2647
        %v2649 = vpop.f32.mrf.mxu0
        %v2650 = vadd.f32 0.0, %v2649
        %v2651 = vand.u32 %v2529, 4294901760
        %v2652 = vsub.f32 %v2529, %v2651
        %v2653 = vand.u32 %v2652, 4294901760
        %v2654 = vsub.f32 %v2652, %v2653
        %v2655 = vand.u32 %v2654, 4294901760
        %2656 = vmatmul.f32.gmra.mxu0 %v2655
        %v2657 = vpop.f32.mrf.mxu0
        %v2658 = vadd.f32 0.0, %v2657
        %v2659 = vand.u32 %v2532, 4294901760
        %v2660 = vsub.f32 %v2532, %v2659
        %v2661 = vand.u32 %v2660, 4294901760
        %v2662 = vsub.f32 %v2660, %v2661
        %v2663 = vand.u32 %v2662, 4294901760
        %2664 = vmatmul.f32.gmra.mxu0 %v2663
        %v2665 = vpop.f32.mrf.mxu0
        %v2666 = vadd.f32 0.0, %v2665
        %v2667 = vand.u32 %v2535, 4294901760
        %v2668 = vsub.f32 %v2535, %v2667
        %v2669 = vand.u32 %v2668, 4294901760
        %v2670 = vsub.f32 %v2668, %v2669
        %v2671 = vand.u32 %v2670, 4294901760
        %2672 = vmatmul.f32.gmra.mxu0 %v2671
        %v2673 = vpop.f32.mrf.mxu0
        %v2674 = vadd.f32 0.0, %v2673
        %v2675 = vand.u32 %v2538, 4294901760
        %v2676 = vsub.f32 %v2538, %v2675
        %v2677 = vand.u32 %v2676, 4294901760
        %v2678 = vsub.f32 %v2676, %v2677
        %v2679 = vand.u32 %v2678, 4294901760
        %2680 = vmatmul.f32.gmra.mxu0 %v2679
        %v2681 = vpop.f32.mrf.mxu0
        %v2682 = vadd.f32 0.0, %v2681
        %v2683 = vand.u32 %v2541, 4294901760
        %v2684 = vsub.f32 %v2541, %v2683
        %v2685 = vand.u32 %v2684, 4294901760
        %v2686 = vsub.f32 %v2684, %v2685
        %v2687 = vand.u32 %v2686, 4294901760
        %2688 = vmatmul.f32.gmra.mxu0 %v2687
        %v2689 = vpop.f32.mrf.mxu0
        %v2690 = vadd.f32 0.0, %v2689
        %2691 = vdwg.mxu0
        %2692 = vmatpush.msra.mxu0 0.0
        %2693 = vmatpush.msra.mxu0 0.0
        %2694 = vmatpush.msra.mxu0 0.0
        %2695 = vmatpush.msra.mxu0 0.0
        %2696 = vmatpush.msra.mxu0 0.0
        %2697 = vmatpush.msra.mxu0 0.0
        %2698 = vmatpush.msra.mxu0 0.0
        %2699 = vmatpush.msra.mxu0 0.0
        %2700 = vmatpush.msra.mxu0 0.0
        %2701 = vmatpush.msra.mxu0 0.0
        %2702 = vmatpush.msra.mxu0 0.0
        %2703 = vmatpush.msra.mxu0 0.0
        %v2704 = vand.u32 %v2494, 4294901760
        %v2705 = vsub.f32 %v2494, %v2704
        %v2706 = vand.u32 %v2705, 4294901760
        %v2707 = vsub.f32 %v2705, %v2706
        %v2708 = vand.u32 %v2707, 4294901760
        %2709 = vmatpush.msra.mxu0 %v2708
        %v2710 = vand.u32 %v2493, 4294901760
        %v2711 = vsub.f32 %v2493, %v2710
        %v2712 = vand.u32 %v2711, 4294901760
        %v2713 = vsub.f32 %v2711, %v2712
        %v2714 = vand.u32 %v2713, 4294901760
        %2715 = vmatpush.msra.mxu0 %v2714
        %v2716 = vand.u32 %v2492, 4294901760
        %v2717 = vsub.f32 %v2492, %v2716
        %v2718 = vand.u32 %v2717, 4294901760
        %v2719 = vsub.f32 %v2717, %v2718
        %v2720 = vand.u32 %v2719, 4294901760
        %2721 = vmatpush.msra.mxu0 %v2720
        %v2722 = vand.u32 %v2491, 4294901760
        %v2723 = vsub.f32 %v2491, %v2722
        %v2724 = vand.u32 %v2723, 4294901760
        %v2725 = vsub.f32 %v2723, %v2724
        %v2726 = vand.u32 %v2725, 4294901760
        %2727 = vmatpush.msra.mxu0 %v2726
        %v2728 = vand.u32 %v2496, 4294901760
        %2729 = vmatmul.f32.gmra.mxu0 %v2728
        %v2730 = vpop.f32.mrf.mxu0
        %v2731 = vadd.f32 %v2570, %v2730
        %v2732 = vand.u32 %v2499, 4294901760
        %2733 = vmatmul.f32.gmra.mxu0 %v2732
        %v2734 = vpop.f32.mrf.mxu0
        %v2735 = vadd.f32 %v2578, %v2734
        %v2736 = vand.u32 %v2502, 4294901760
        %2737 = vmatmul.f32.gmra.mxu0 %v2736
        %v2738 = vpop.f32.mrf.mxu0
        %v2739 = vadd.f32 %v2586, %v2738
        %v2740 = vand.u32 %v2505, 4294901760
        %2741 = vmatmul.f32.gmra.mxu0 %v2740
        %v2742 = vpop.f32.mrf.mxu0
        %v2743 = vadd.f32 %v2594, %v2742
        %v2744 = vand.u32 %v2508, 4294901760
        %2745 = vmatmul.f32.gmra.mxu0 %v2744
        %v2746 = vpop.f32.mrf.mxu0
        %v2747 = vadd.f32 %v2602, %v2746
        %v2748 = vand.u32 %v2511, 4294901760
        %2749 = vmatmul.f32.gmra.mxu0 %v2748
        %v2750 = vpop.f32.mrf.mxu0
        %v2751 = vadd.f32 %v2610, %v2750
        %v2752 = vand.u32 %v2514, 4294901760
        %2753 = vmatmul.f32.gmra.mxu0 %v2752
        %v2754 = vpop.f32.mrf.mxu0
        %v2755 = vadd.f32 %v2618, %v2754
        %v2756 = vand.u32 %v2517, 4294901760
        %2757 = vmatmul.f32.gmra.mxu0 %v2756
        %v2758 = vpop.f32.mrf.mxu0
        %v2759 = vadd.f32 %v2626, %v2758
        %v2760 = vand.u32 %v2520, 4294901760
        %2761 = vmatmul.f32.gmra.mxu0 %v2760
        %v2762 = vpop.f32.mrf.mxu0
        %v2763 = vadd.f32 %v2634, %v2762
        %v2764 = vand.u32 %v2523, 4294901760
        %2765 = vmatmul.f32.gmra.mxu0 %v2764
        %v2766 = vpop.f32.mrf.mxu0
        %v2767 = vadd.f32 %v2642, %v2766
        %v2768 = vand.u32 %v2526, 4294901760
        %2769 = vmatmul.f32.gmra.mxu0 %v2768
        %v2770 = vpop.f32.mrf.mxu0
        %v2771 = vadd.f32 %v2650, %v2770
        %v2772 = vand.u32 %v2529, 4294901760
        %2773 = vmatmul.f32.gmra.mxu0 %v2772
        %v2774 = vpop.f32.mrf.mxu0
        %v2775 = vadd.f32 %v2658, %v2774
        %v2776 = vand.u32 %v2532, 4294901760
        %2777 = vmatmul.f32.gmra.mxu0 %v2776
        %v2778 = vpop.f32.mrf.mxu0
        %v2779 = vadd.f32 %v2666, %v2778
        %v2780 = vand.u32 %v2535, 4294901760
        %2781 = vmatmul.f32.gmra.mxu0 %v2780
        %v2782 = vpop.f32.mrf.mxu0
        %v2783 = vadd.f32 %v2674, %v2782
        %v2784 = vand.u32 %v2538, 4294901760
        %2785 = vmatmul.f32.gmra.mxu0 %v2784
        %v2786 = vpop.f32.mrf.mxu0
        %v2787 = vadd.f32 %v2682, %v2786
        %v2788 = vand.u32 %v2541, 4294901760
        %2789 = vmatmul.f32.gmra.mxu0 %v2788
        %v2790 = vpop.f32.mrf.mxu0
        %v2791 = vadd.f32 %v2690, %v2790
        %2792 = vdwg.mxu0
        %2793 = vmatpush.msra.mxu0 0.0
        %2794 = vmatpush.msra.mxu0 0.0
        %2795 = vmatpush.msra.mxu0 0.0
        %2796 = vmatpush.msra.mxu0 0.0
        %2797 = vmatpush.msra.mxu0 0.0
        %2798 = vmatpush.msra.mxu0 0.0
        %2799 = vmatpush.msra.mxu0 0.0
        %2800 = vmatpush.msra.mxu0 0.0
        %2801 = vmatpush.msra.mxu0 0.0
        %2802 = vmatpush.msra.mxu0 0.0
        %2803 = vmatpush.msra.mxu0 0.0
        %2804 = vmatpush.msra.mxu0 0.0
        %v2805 = vand.u32 %v2494, 4294901760
        %v2806 = vsub.f32 %v2494, %v2805
        %2807 = vmatpush.msra.mxu0 %v2806
        %v2808 = vand.u32 %v2493, 4294901760
        %v2809 = vsub.f32 %v2493, %v2808
        %2810 = vmatpush.msra.mxu0 %v2809
        %v2811 = vand.u32 %v2492, 4294901760
        %v2812 = vsub.f32 %v2492, %v2811
        %2813 = vmatpush.msra.mxu0 %v2812
        %v2814 = vand.u32 %v2491, 4294901760
        %v2815 = vsub.f32 %v2491, %v2814
        %2816 = vmatpush.msra.mxu0 %v2815
        %v2817 = vand.u32 %v2496, 4294901760
        %v2818 = vsub.f32 %v2496, %v2817
        %2819 = vmatmul.f32.gmra.mxu0 %v2818
        %v2820 = vpop.f32.mrf.mxu0
        %v2821 = vadd.f32 %v2731, %v2820
        %v2822 = vand.u32 %v2499, 4294901760
        %v2823 = vsub.f32 %v2499, %v2822
        %2824 = vmatmul.f32.gmra.mxu0 %v2823
        %v2825 = vpop.f32.mrf.mxu0
        %v2826 = vadd.f32 %v2735, %v2825
        %v2827 = vand.u32 %v2502, 4294901760
        %v2828 = vsub.f32 %v2502, %v2827
        %2829 = vmatmul.f32.gmra.mxu0 %v2828
        %v2830 = vpop.f32.mrf.mxu0
        %v2831 = vadd.f32 %v2739, %v2830
        %v2832 = vand.u32 %v2505, 4294901760
        %v2833 = vsub.f32 %v2505, %v2832
        %2834 = vmatmul.f32.gmra.mxu0 %v2833
        %v2835 = vpop.f32.mrf.mxu0
        %v2836 = vadd.f32 %v2743, %v2835
        %v2837 = vand.u32 %v2508, 4294901760
        %v2838 = vsub.f32 %v2508, %v2837
        %2839 = vmatmul.f32.gmra.mxu0 %v2838
        %v2840 = vpop.f32.mrf.mxu0
        %v2841 = vadd.f32 %v2747, %v2840
        %v2842 = vand.u32 %v2511, 4294901760
        %v2843 = vsub.f32 %v2511, %v2842
        %2844 = vmatmul.f32.gmra.mxu0 %v2843
        %v2845 = vpop.f32.mrf.mxu0
        %v2846 = vadd.f32 %v2751, %v2845
        %v2847 = vand.u32 %v2514, 4294901760
        %v2848 = vsub.f32 %v2514, %v2847
        %2849 = vmatmul.f32.gmra.mxu0 %v2848
        %v2850 = vpop.f32.mrf.mxu0
        %v2851 = vadd.f32 %v2755, %v2850
        %v2852 = vand.u32 %v2517, 4294901760
        %v2853 = vsub.f32 %v2517, %v2852
        %2854 = vmatmul.f32.gmra.mxu0 %v2853
        %v2855 = vpop.f32.mrf.mxu0
        %v2856 = vadd.f32 %v2759, %v2855
        %v2857 = vand.u32 %v2520, 4294901760
        %v2858 = vsub.f32 %v2520, %v2857
        %2859 = vmatmul.f32.gmra.mxu0 %v2858
        %v2860 = vpop.f32.mrf.mxu0
        %v2861 = vadd.f32 %v2763, %v2860
        %v2862 = vand.u32 %v2523, 4294901760
        %v2863 = vsub.f32 %v2523, %v2862
        %2864 = vmatmul.f32.gmra.mxu0 %v2863
        %v2865 = vpop.f32.mrf.mxu0
        %v2866 = vadd.f32 %v2767, %v2865
        %v2867 = vand.u32 %v2526, 4294901760
        %v2868 = vsub.f32 %v2526, %v2867
        %2869 = vmatmul.f32.gmra.mxu0 %v2868
        %v2870 = vpop.f32.mrf.mxu0
        %v2871 = vadd.f32 %v2771, %v2870
        %v2872 = vand.u32 %v2529, 4294901760
        %v2873 = vsub.f32 %v2529, %v2872
        %2874 = vmatmul.f32.gmra.mxu0 %v2873
        %v2875 = vpop.f32.mrf.mxu0
        %v2876 = vadd.f32 %v2775, %v2875
        %v2877 = vand.u32 %v2532, 4294901760
        %v2878 = vsub.f32 %v2532, %v2877
        %2879 = vmatmul.f32.gmra.mxu0 %v2878
        %v2880 = vpop.f32.mrf.mxu0
        %v2881 = vadd.f32 %v2779, %v2880
        %v2882 = vand.u32 %v2535, 4294901760
        %v2883 = vsub.f32 %v2535, %v2882
        %2884 = vmatmul.f32.gmra.mxu0 %v2883
        %v2885 = vpop.f32.mrf.mxu0
        %v2886 = vadd.f32 %v2783, %v2885
        %v2887 = vand.u32 %v2538, 4294901760
        %v2888 = vsub.f32 %v2538, %v2887
        %2889 = vmatmul.f32.gmra.mxu0 %v2888
        %v2890 = vpop.f32.mrf.mxu0
        %v2891 = vadd.f32 %v2787, %v2890
        %v2892 = vand.u32 %v2541, 4294901760
        %v2893 = vsub.f32 %v2541, %v2892
        %2894 = vmatmul.f32.gmra.mxu0 %v2893
        %v2895 = vpop.f32.mrf.mxu0
        %v2896 = vadd.f32 %v2791, %v2895
        %2897 = vdwg.mxu0
        %2898 = vmatpush.msra.mxu0 0.0
        %2899 = vmatpush.msra.mxu0 0.0
        %2900 = vmatpush.msra.mxu0 0.0
        %2901 = vmatpush.msra.mxu0 0.0
        %2902 = vmatpush.msra.mxu0 0.0
        %2903 = vmatpush.msra.mxu0 0.0
        %2904 = vmatpush.msra.mxu0 0.0
        %2905 = vmatpush.msra.mxu0 0.0
        %2906 = vmatpush.msra.mxu0 0.0
        %2907 = vmatpush.msra.mxu0 0.0
        %2908 = vmatpush.msra.mxu0 0.0
        %2909 = vmatpush.msra.mxu0 0.0
        %v2910 = vand.u32 %v2494, 4294901760
        %2911 = vmatpush.msra.mxu0 %v2910
        %v2912 = vand.u32 %v2493, 4294901760
        %2913 = vmatpush.msra.mxu0 %v2912
        %v2914 = vand.u32 %v2492, 4294901760
        %2915 = vmatpush.msra.mxu0 %v2914
        %v2916 = vand.u32 %v2491, 4294901760
        %2917 = vmatpush.msra.mxu0 %v2916
        %v2918 = vand.u32 %v2496, 4294901760
        %v2919 = vsub.f32 %v2496, %v2918
        %v2920 = vand.u32 %v2919, 4294901760
        %2921 = vmatmul.f32.gmra.mxu0 %v2920
        %v2922 = vpop.f32.mrf.mxu0
        %v2923 = vadd.f32 %v2821, %v2922
        %v2924 = vand.u32 %v2499, 4294901760
        %v2925 = vsub.f32 %v2499, %v2924
        %v2926 = vand.u32 %v2925, 4294901760
        %2927 = vmatmul.f32.gmra.mxu0 %v2926
        %v2928 = vpop.f32.mrf.mxu0
        %v2929 = vadd.f32 %v2826, %v2928
        %v2930 = vand.u32 %v2502, 4294901760
        %v2931 = vsub.f32 %v2502, %v2930
        %v2932 = vand.u32 %v2931, 4294901760
        %2933 = vmatmul.f32.gmra.mxu0 %v2932
        %v2934 = vpop.f32.mrf.mxu0
        %v2935 = vadd.f32 %v2831, %v2934
        %v2936 = vand.u32 %v2505, 4294901760
        %v2937 = vsub.f32 %v2505, %v2936
        %v2938 = vand.u32 %v2937, 4294901760
        %2939 = vmatmul.f32.gmra.mxu0 %v2938
        %v2940 = vpop.f32.mrf.mxu0
        %v2941 = vadd.f32 %v2836, %v2940
        %v2942 = vand.u32 %v2508, 4294901760
        %v2943 = vsub.f32 %v2508, %v2942
        %v2944 = vand.u32 %v2943, 4294901760
        %2945 = vmatmul.f32.gmra.mxu0 %v2944
        %v2946 = vpop.f32.mrf.mxu0
        %v2947 = vadd.f32 %v2841, %v2946
        %v2948 = vand.u32 %v2511, 4294901760
        %v2949 = vsub.f32 %v2511, %v2948
        %v2950 = vand.u32 %v2949, 4294901760
        %2951 = vmatmul.f32.gmra.mxu0 %v2950
        %v2952 = vpop.f32.mrf.mxu0
        %v2953 = vadd.f32 %v2846, %v2952
        %v2954 = vand.u32 %v2514, 4294901760
        %v2955 = vsub.f32 %v2514, %v2954
        %v2956 = vand.u32 %v2955, 4294901760
        %2957 = vmatmul.f32.gmra.mxu0 %v2956
        %v2958 = vpop.f32.mrf.mxu0
        %v2959 = vadd.f32 %v2851, %v2958
        %v2960 = vand.u32 %v2517, 4294901760
        %v2961 = vsub.f32 %v2517, %v2960
        %v2962 = vand.u32 %v2961, 4294901760
        %2963 = vmatmul.f32.gmra.mxu0 %v2962
        %v2964 = vpop.f32.mrf.mxu0
        %v2965 = vadd.f32 %v2856, %v2964
        %v2966 = vand.u32 %v2520, 4294901760
        %v2967 = vsub.f32 %v2520, %v2966
        %v2968 = vand.u32 %v2967, 4294901760
        %2969 = vmatmul.f32.gmra.mxu0 %v2968
        %v2970 = vpop.f32.mrf.mxu0
        %v2971 = vadd.f32 %v2861, %v2970
        %v2972 = vand.u32 %v2523, 4294901760
        %v2973 = vsub.f32 %v2523, %v2972
        %v2974 = vand.u32 %v2973, 4294901760
        %2975 = vmatmul.f32.gmra.mxu0 %v2974
        %v2976 = vpop.f32.mrf.mxu0
        %v2977 = vadd.f32 %v2866, %v2976
        %v2978 = vand.u32 %v2526, 4294901760
        %v2979 = vsub.f32 %v2526, %v2978
        %v2980 = vand.u32 %v2979, 4294901760
        %2981 = vmatmul.f32.gmra.mxu0 %v2980
        %v2982 = vpop.f32.mrf.mxu0
        %v2983 = vadd.f32 %v2871, %v2982
        %v2984 = vand.u32 %v2529, 4294901760
        %v2985 = vsub.f32 %v2529, %v2984
        %v2986 = vand.u32 %v2985, 4294901760
        %2987 = vmatmul.f32.gmra.mxu0 %v2986
        %v2988 = vpop.f32.mrf.mxu0
        %v2989 = vadd.f32 %v2876, %v2988
        %v2990 = vand.u32 %v2532, 4294901760
        %v2991 = vsub.f32 %v2532, %v2990
        %v2992 = vand.u32 %v2991, 4294901760
        %2993 = vmatmul.f32.gmra.mxu0 %v2992
        %v2994 = vpop.f32.mrf.mxu0
        %v2995 = vadd.f32 %v2881, %v2994
        %v2996 = vand.u32 %v2535, 4294901760
        %v2997 = vsub.f32 %v2535, %v2996
        %v2998 = vand.u32 %v2997, 4294901760
        %2999 = vmatmul.f32.gmra.mxu0 %v2998
        %v3000 = vpop.f32.mrf.mxu0
        %v3001 = vadd.f32 %v2886, %v3000
        %v3002 = vand.u32 %v2538, 4294901760
        %v3003 = vsub.f32 %v2538, %v3002
        %v3004 = vand.u32 %v3003, 4294901760
        %3005 = vmatmul.f32.gmra.mxu0 %v3004
        %v3006 = vpop.f32.mrf.mxu0
        %v3007 = vadd.f32 %v2891, %v3006
        %v3008 = vand.u32 %v2541, 4294901760
        %v3009 = vsub.f32 %v2541, %v3008
        %v3010 = vand.u32 %v3009, 4294901760
        %3011 = vmatmul.f32.gmra.mxu0 %v3010
        %v3012 = vpop.f32.mrf.mxu0
        %v3013 = vadd.f32 %v2896, %v3012
        %3014 = vdwg.mxu0
        %3015 = vmatpush.msra.mxu0 0.0
        %3016 = vmatpush.msra.mxu0 0.0
        %3017 = vmatpush.msra.mxu0 0.0
        %3018 = vmatpush.msra.mxu0 0.0
        %3019 = vmatpush.msra.mxu0 0.0
        %3020 = vmatpush.msra.mxu0 0.0
        %3021 = vmatpush.msra.mxu0 0.0
        %3022 = vmatpush.msra.mxu0 0.0
        %3023 = vmatpush.msra.mxu0 0.0
        %3024 = vmatpush.msra.mxu0 0.0
        %3025 = vmatpush.msra.mxu0 0.0
        %3026 = vmatpush.msra.mxu0 0.0
        %v3027 = vand.u32 %v2494, 4294901760
        %v3028 = vsub.f32 %v2494, %v3027
        %v3029 = vand.u32 %v3028, 4294901760
        %3030 = vmatpush.msra.mxu0 %v3029
        %v3031 = vand.u32 %v2493, 4294901760
        %v3032 = vsub.f32 %v2493, %v3031
        %v3033 = vand.u32 %v3032, 4294901760
        %3034 = vmatpush.msra.mxu0 %v3033
        %v3035 = vand.u32 %v2492, 4294901760
        %v3036 = vsub.f32 %v2492, %v3035
        %v3037 = vand.u32 %v3036, 4294901760
        %3038 = vmatpush.msra.mxu0 %v3037
        %v3039 = vand.u32 %v2491, 4294901760
        %v3040 = vsub.f32 %v2491, %v3039
        %v3041 = vand.u32 %v3040, 4294901760
        %3042 = vmatpush.msra.mxu0 %v3041
        %v3043 = vand.u32 %v2496, 4294901760
        %3044 = vmatmul.f32.gmra.mxu0 %v3043
        %v3045 = vpop.f32.mrf.mxu0
        %v3046 = vadd.f32 %v2923, %v3045
        %v3047 = vand.u32 %v2499, 4294901760
        %3048 = vmatmul.f32.gmra.mxu0 %v3047
        %v3049 = vpop.f32.mrf.mxu0
        %v3050 = vadd.f32 %v2929, %v3049
        %v3051 = vand.u32 %v2502, 4294901760
        %3052 = vmatmul.f32.gmra.mxu0 %v3051
        %v3053 = vpop.f32.mrf.mxu0
        %v3054 = vadd.f32 %v2935, %v3053
        %v3055 = vand.u32 %v2505, 4294901760
        %3056 = vmatmul.f32.gmra.mxu0 %v3055
        %v3057 = vpop.f32.mrf.mxu0
        %v3058 = vadd.f32 %v2941, %v3057
        %v3059 = vand.u32 %v2508, 4294901760
        %3060 = vmatmul.f32.gmra.mxu0 %v3059
        %v3061 = vpop.f32.mrf.mxu0
        %v3062 = vadd.f32 %v2947, %v3061
        %v3063 = vand.u32 %v2511, 4294901760
        %3064 = vmatmul.f32.gmra.mxu0 %v3063
        %v3065 = vpop.f32.mrf.mxu0
        %v3066 = vadd.f32 %v2953, %v3065
        %v3067 = vand.u32 %v2514, 4294901760
        %3068 = vmatmul.f32.gmra.mxu0 %v3067
        %v3069 = vpop.f32.mrf.mxu0
        %v3070 = vadd.f32 %v2959, %v3069
        %v3071 = vand.u32 %v2517, 4294901760
        %3072 = vmatmul.f32.gmra.mxu0 %v3071
        %v3073 = vpop.f32.mrf.mxu0
        %v3074 = vadd.f32 %v2965, %v3073
        %v3075 = vand.u32 %v2520, 4294901760
        %3076 = vmatmul.f32.gmra.mxu0 %v3075
        %v3077 = vpop.f32.mrf.mxu0
        %v3078 = vadd.f32 %v2971, %v3077
        %v3079 = vand.u32 %v2523, 4294901760
        %3080 = vmatmul.f32.gmra.mxu0 %v3079
        %v3081 = vpop.f32.mrf.mxu0
        %v3082 = vadd.f32 %v2977, %v3081
        %v3083 = vand.u32 %v2526, 4294901760
        %3084 = vmatmul.f32.gmra.mxu0 %v3083
        %v3085 = vpop.f32.mrf.mxu0
        %v3086 = vadd.f32 %v2983, %v3085
        %v3087 = vand.u32 %v2529, 4294901760
        %3088 = vmatmul.f32.gmra.mxu0 %v3087
        %v3089 = vpop.f32.mrf.mxu0
        %v3090 = vadd.f32 %v2989, %v3089
        %v3091 = vand.u32 %v2532, 4294901760
        %3092 = vmatmul.f32.gmra.mxu0 %v3091
        %v3093 = vpop.f32.mrf.mxu0
        %v3094 = vadd.f32 %v2995, %v3093
        %v3095 = vand.u32 %v2535, 4294901760
        %3096 = vmatmul.f32.gmra.mxu0 %v3095
        %v3097 = vpop.f32.mrf.mxu0
        %v3098 = vadd.f32 %v3001, %v3097
        %v3099 = vand.u32 %v2538, 4294901760
        %3100 = vmatmul.f32.gmra.mxu0 %v3099
        %v3101 = vpop.f32.mrf.mxu0
        %v3102 = vadd.f32 %v3007, %v3101
        %v3103 = vand.u32 %v2541, 4294901760
        %3104 = vmatmul.f32.gmra.mxu0 %v3103
        %v3105 = vpop.f32.mrf.mxu0
        %v3106 = vadd.f32 %v3013, %v3105
        %3107 = vdwg.mxu0
        %3108 = vmatpush.msra.mxu0 0.0
        %3109 = vmatpush.msra.mxu0 0.0
        %3110 = vmatpush.msra.mxu0 0.0
        %3111 = vmatpush.msra.mxu0 0.0
        %3112 = vmatpush.msra.mxu0 0.0
        %3113 = vmatpush.msra.mxu0 0.0
        %3114 = vmatpush.msra.mxu0 0.0
        %3115 = vmatpush.msra.mxu0 0.0
        %3116 = vmatpush.msra.mxu0 0.0
        %3117 = vmatpush.msra.mxu0 0.0
        %3118 = vmatpush.msra.mxu0 0.0
        %3119 = vmatpush.msra.mxu0 0.0
        %v3120 = vand.u32 %v2494, 4294901760
        %3121 = vmatpush.msra.mxu0 %v3120
        %v3122 = vand.u32 %v2493, 4294901760
        %3123 = vmatpush.msra.mxu0 %v3122
        %v3124 = vand.u32 %v2492, 4294901760
        %3125 = vmatpush.msra.mxu0 %v3124
        %v3126 = vand.u32 %v2491, 4294901760
        %3127 = vmatpush.msra.mxu0 %v3126
        %v3128 = vand.u32 %v2496, 4294901760
        %3129 = vmatmul.f32.gmra.mxu0 %v3128
        %v3130 = vpop.f32.mrf.mxu0
        %v3131 = vadd.f32 %v3046, %v3130
        %v3132 = vand.u32 %v2499, 4294901760
        %3133 = vmatmul.f32.gmra.mxu0 %v3132
        %v3134 = vpop.f32.mrf.mxu0
        %v3135 = vadd.f32 %v3050, %v3134
        %v3136 = vand.u32 %v2502, 4294901760
        %3137 = vmatmul.f32.gmra.mxu0 %v3136
        %v3138 = vpop.f32.mrf.mxu0
        %v3139 = vadd.f32 %v3054, %v3138
        %v3140 = vand.u32 %v2505, 4294901760
        %3141 = vmatmul.f32.gmra.mxu0 %v3140
        %v3142 = vpop.f32.mrf.mxu0
        %v3143 = vadd.f32 %v3058, %v3142
        %v3144 = vand.u32 %v2508, 4294901760
        %3145 = vmatmul.f32.gmra.mxu0 %v3144
        %v3146 = vpop.f32.mrf.mxu0
        %v3147 = vadd.f32 %v3062, %v3146
        %v3148 = vand.u32 %v2511, 4294901760
        %3149 = vmatmul.f32.gmra.mxu0 %v3148
        %v3150 = vpop.f32.mrf.mxu0
        %v3151 = vadd.f32 %v3066, %v3150
        %v3152 = vand.u32 %v2514, 4294901760
        %3153 = vmatmul.f32.gmra.mxu0 %v3152
        %v3154 = vpop.f32.mrf.mxu0
        %v3155 = vadd.f32 %v3070, %v3154
        %v3156 = vand.u32 %v2517, 4294901760
        %3157 = vmatmul.f32.gmra.mxu0 %v3156
        %v3158 = vpop.f32.mrf.mxu0
        %v3159 = vadd.f32 %v3074, %v3158
        %v3160 = vand.u32 %v2520, 4294901760
        %3161 = vmatmul.f32.gmra.mxu0 %v3160
        %v3162 = vpop.f32.mrf.mxu0
        %v3163 = vadd.f32 %v3078, %v3162
        %v3164 = vand.u32 %v2523, 4294901760
        %3165 = vmatmul.f32.gmra.mxu0 %v3164
        %v3166 = vpop.f32.mrf.mxu0
        %v3167 = vadd.f32 %v3082, %v3166
        %v3168 = vand.u32 %v2526, 4294901760
        %3169 = vmatmul.f32.gmra.mxu0 %v3168
        %v3170 = vpop.f32.mrf.mxu0
        %v3171 = vadd.f32 %v3086, %v3170
        %v3172 = vand.u32 %v2529, 4294901760
        %3173 = vmatmul.f32.gmra.mxu0 %v3172
        %v3174 = vpop.f32.mrf.mxu0
        %v3175 = vadd.f32 %v3090, %v3174
        %v3176 = vand.u32 %v2532, 4294901760
        %3177 = vmatmul.f32.gmra.mxu0 %v3176
        %v3178 = vpop.f32.mrf.mxu0
        %v3179 = vadd.f32 %v3094, %v3178
        %v3180 = vand.u32 %v2535, 4294901760
        %3181 = vmatmul.f32.gmra.mxu0 %v3180
        %v3182 = vpop.f32.mrf.mxu0
        %v3183 = vadd.f32 %v3098, %v3182
        %v3184 = vand.u32 %v2538, 4294901760
        %3185 = vmatmul.f32.gmra.mxu0 %v3184
        %v3186 = vpop.f32.mrf.mxu0
        %v3187 = vadd.f32 %v3102, %v3186
        %v3188 = vand.u32 %v2541, 4294901760
        %3189 = vmatmul.f32.gmra.mxu0 %v3188
        %v3190 = vpop.f32.mrf.mxu0
        %v3191 = vadd.f32 %v3106, %v3190
        %3192 = vdwg.mxu0
        %v3193 = vadd.f32 %v900, %v3131
        %v3194 = vadd.f32 %v904, %v3135
        %v3195 = vadd.f32 %v908, %v3139
        %v3196 = vadd.f32 %v912, %v3143
        %v3197 = vadd.f32 %v916, %v3147
        %v3198 = vadd.f32 %v920, %v3151
        %v3199 = vadd.f32 %v924, %v3155
        %v3200 = vadd.f32 %v928, %v3159
        %v3201 = vadd.f32 %v932, %v3163
        %v3202 = vadd.f32 %v936, %v3167
        %v3203 = vadd.f32 %v940, %v3171
        %v3204 = vadd.f32 %v944, %v3175
        %v3205 = vadd.f32 %v948, %v3179
        %v3206 = vadd.f32 %v952, %v3183
        %v3207 = vadd.f32 %v956, %v3187
        %v3208 = vadd.f32 %v960, %v3191
        %3209 = vmatpush.msra.mxu0 0.0
        %3210 = vmatpush.msra.mxu0 0.0
        %3211 = vmatpush.msra.mxu0 0.0
        %3212 = vmatpush.msra.mxu0 0.0
        %3213 = vmatpush.msra.mxu0 0.0
        %3214 = vmatpush.msra.mxu0 0.0
        %3215 = vmatpush.msra.mxu0 0.0
        %3216 = vmatpush.msra.mxu0 0.0
        %3217 = vmatpush.msra.mxu0 0.0
        %3218 = vmatpush.msra.mxu0 0.0
        %3219 = vmatpush.msra.mxu0 0.0
        %3220 = vmatpush.msra.mxu0 0.0
        %3221 = vmatpush.msra.mxu0 0.0
        %3222 = vmatpush.msra.mxu0 0.0
        %v3223 = vand.u32 %v1159, 4294901760
        %3224 = vmatpush.msra.mxu0 %v3223
        %v3225 = vand.u32 %v1155, 4294901760
        %3226 = vmatpush.msra.mxu0 %v3225
        %v3227 = vand.u32 %v966, 4294901760
        %v3228 = vsub.f32 %v966, %v3227
        %v3229 = vand.u32 %v3228, 4294901760
        %v3230 = vsub.f32 %v3228, %v3229
        %v3231 = vand.u32 %v3230, 4294901760
        %3232 = vmatmul.f32.gmra.mxu0 %v3231
        %v3233 = vpop.f32.mrf.mxu0
        %v3234 = vadd.f32 0.0, %v3233
        %v3235 = vand.u32 %v969, 4294901760
        %v3236 = vsub.f32 %v969, %v3235
        %v3237 = vand.u32 %v3236, 4294901760
        %v3238 = vsub.f32 %v3236, %v3237
        %v3239 = vand.u32 %v3238, 4294901760
        %3240 = vmatmul.f32.gmra.mxu0 %v3239
        %v3241 = vpop.f32.mrf.mxu0
        %v3242 = vadd.f32 0.0, %v3241
        %3243 = vdwg.mxu0
        %3244 = vmatpush.msra.mxu0 0.0
        %3245 = vmatpush.msra.mxu0 0.0
        %3246 = vmatpush.msra.mxu0 0.0
        %3247 = vmatpush.msra.mxu0 0.0
        %3248 = vmatpush.msra.mxu0 0.0
        %3249 = vmatpush.msra.mxu0 0.0
        %3250 = vmatpush.msra.mxu0 0.0
        %3251 = vmatpush.msra.mxu0 0.0
        %3252 = vmatpush.msra.mxu0 0.0
        %3253 = vmatpush.msra.mxu0 0.0
        %3254 = vmatpush.msra.mxu0 0.0
        %3255 = vmatpush.msra.mxu0 0.0
        %3256 = vmatpush.msra.mxu0 0.0
        %3257 = vmatpush.msra.mxu0 0.0
        %v3258 = vand.u32 %v1159, 4294901760
        %v3259 = vsub.f32 %v1159, %v3258
        %v3260 = vand.u32 %v3259, 4294901760
        %v3261 = vsub.f32 %v3259, %v3260
        %v3262 = vand.u32 %v3261, 4294901760
        %3263 = vmatpush.msra.mxu0 %v3262
        %v3264 = vand.u32 %v1155, 4294901760
        %v3265 = vsub.f32 %v1155, %v3264
        %v3266 = vand.u32 %v3265, 4294901760
        %v3267 = vsub.f32 %v3265, %v3266
        %v3268 = vand.u32 %v3267, 4294901760
        %3269 = vmatpush.msra.mxu0 %v3268
        %v3270 = vand.u32 %v966, 4294901760
        %3271 = vmatmul.f32.gmra.mxu0 %v3270
        %v3272 = vpop.f32.mrf.mxu0
        %v3273 = vadd.f32 %v3234, %v3272
        %v3274 = vand.u32 %v969, 4294901760
        %3275 = vmatmul.f32.gmra.mxu0 %v3274
        %v3276 = vpop.f32.mrf.mxu0
        %v3277 = vadd.f32 %v3242, %v3276
        %3278 = vdwg.mxu0
        %3279 = vmatpush.msra.mxu0 0.0
        %3280 = vmatpush.msra.mxu0 0.0
        %3281 = vmatpush.msra.mxu0 0.0
        %3282 = vmatpush.msra.mxu0 0.0
        %3283 = vmatpush.msra.mxu0 0.0
        %3284 = vmatpush.msra.mxu0 0.0
        %3285 = vmatpush.msra.mxu0 0.0
        %3286 = vmatpush.msra.mxu0 0.0
        %3287 = vmatpush.msra.mxu0 0.0
        %3288 = vmatpush.msra.mxu0 0.0
        %3289 = vmatpush.msra.mxu0 0.0
        %3290 = vmatpush.msra.mxu0 0.0
        %3291 = vmatpush.msra.mxu0 0.0
        %3292 = vmatpush.msra.mxu0 0.0
        %v3293 = vand.u32 %v1159, 4294901760
        %v3294 = vsub.f32 %v1159, %v3293
        %3295 = vmatpush.msra.mxu0 %v3294
        %v3296 = vand.u32 %v1155, 4294901760
        %v3297 = vsub.f32 %v1155, %v3296
        %3298 = vmatpush.msra.mxu0 %v3297
        %v3299 = vand.u32 %v966, 4294901760
        %v3300 = vsub.f32 %v966, %v3299
        %3301 = vmatmul.f32.gmra.mxu0 %v3300
        %v3302 = vpop.f32.mrf.mxu0
        %v3303 = vadd.f32 %v3273, %v3302
        %v3304 = vand.u32 %v969, 4294901760
        %v3305 = vsub.f32 %v969, %v3304
        %3306 = vmatmul.f32.gmra.mxu0 %v3305
        %v3307 = vpop.f32.mrf.mxu0
        %v3308 = vadd.f32 %v3277, %v3307
        %3309 = vdwg.mxu0
        %3310 = vmatpush.msra.mxu0 0.0
        %3311 = vmatpush.msra.mxu0 0.0
        %3312 = vmatpush.msra.mxu0 0.0
        %3313 = vmatpush.msra.mxu0 0.0
        %3314 = vmatpush.msra.mxu0 0.0
        %3315 = vmatpush.msra.mxu0 0.0
        %3316 = vmatpush.msra.mxu0 0.0
        %3317 = vmatpush.msra.mxu0 0.0
        %3318 = vmatpush.msra.mxu0 0.0
        %3319 = vmatpush.msra.mxu0 0.0
        %3320 = vmatpush.msra.mxu0 0.0
        %3321 = vmatpush.msra.mxu0 0.0
        %3322 = vmatpush.msra.mxu0 0.0
        %3323 = vmatpush.msra.mxu0 0.0
        %v3324 = vand.u32 %v1159, 4294901760
        %3325 = vmatpush.msra.mxu0 %v3324
        %v3326 = vand.u32 %v1155, 4294901760
        %3327 = vmatpush.msra.mxu0 %v3326
        %v3328 = vand.u32 %v966, 4294901760
        %v3329 = vsub.f32 %v966, %v3328
        %v3330 = vand.u32 %v3329, 4294901760
        %3331 = vmatmul.f32.gmra.mxu0 %v3330
        %v3332 = vpop.f32.mrf.mxu0
        %v3333 = vadd.f32 %v3303, %v3332
        %v3334 = vand.u32 %v969, 4294901760
        %v3335 = vsub.f32 %v969, %v3334
        %v3336 = vand.u32 %v3335, 4294901760
        %3337 = vmatmul.f32.gmra.mxu0 %v3336
        %v3338 = vpop.f32.mrf.mxu0
        %v3339 = vadd.f32 %v3308, %v3338
        %3340 = vdwg.mxu0
        %3341 = vmatpush.msra.mxu0 0.0
        %3342 = vmatpush.msra.mxu0 0.0
        %3343 = vmatpush.msra.mxu0 0.0
        %3344 = vmatpush.msra.mxu0 0.0
        %3345 = vmatpush.msra.mxu0 0.0
        %3346 = vmatpush.msra.mxu0 0.0
        %3347 = vmatpush.msra.mxu0 0.0
        %3348 = vmatpush.msra.mxu0 0.0
        %3349 = vmatpush.msra.mxu0 0.0
        %3350 = vmatpush.msra.mxu0 0.0
        %3351 = vmatpush.msra.mxu0 0.0
        %3352 = vmatpush.msra.mxu0 0.0
        %3353 = vmatpush.msra.mxu0 0.0
        %3354 = vmatpush.msra.mxu0 0.0
        %v3355 = vand.u32 %v1159, 4294901760
        %v3356 = vsub.f32 %v1159, %v3355
        %v3357 = vand.u32 %v3356, 4294901760
        %3358 = vmatpush.msra.mxu0 %v3357
        %v3359 = vand.u32 %v1155, 4294901760
        %v3360 = vsub.f32 %v1155, %v3359
        %v3361 = vand.u32 %v3360, 4294901760
        %3362 = vmatpush.msra.mxu0 %v3361
        %v3363 = vand.u32 %v966, 4294901760
        %3364 = vmatmul.f32.gmra.mxu0 %v3363
        %v3365 = vpop.f32.mrf.mxu0
        %v3366 = vadd.f32 %v3333, %v3365
        %v3367 = vand.u32 %v969, 4294901760
        %3368 = vmatmul.f32.gmra.mxu0 %v3367
        %v3369 = vpop.f32.mrf.mxu0
        %v3370 = vadd.f32 %v3339, %v3369
        %3371 = vdwg.mxu0
        %3372 = vmatpush.msra.mxu0 0.0
        %3373 = vmatpush.msra.mxu0 0.0
        %3374 = vmatpush.msra.mxu0 0.0
        %3375 = vmatpush.msra.mxu0 0.0
        %3376 = vmatpush.msra.mxu0 0.0
        %3377 = vmatpush.msra.mxu0 0.0
        %3378 = vmatpush.msra.mxu0 0.0
        %3379 = vmatpush.msra.mxu0 0.0
        %3380 = vmatpush.msra.mxu0 0.0
        %3381 = vmatpush.msra.mxu0 0.0
        %3382 = vmatpush.msra.mxu0 0.0
        %3383 = vmatpush.msra.mxu0 0.0
        %3384 = vmatpush.msra.mxu0 0.0
        %3385 = vmatpush.msra.mxu0 0.0
        %v3386 = vand.u32 %v1159, 4294901760
        %3387 = vmatpush.msra.mxu0 %v3386
        %v3388 = vand.u32 %v1155, 4294901760
        %3389 = vmatpush.msra.mxu0 %v3388
        %v3390 = vand.u32 %v966, 4294901760
        %3391 = vmatmul.f32.gmra.mxu0 %v3390
        %v3392 = vpop.f32.mrf.mxu0
        %v3393 = vadd.f32 %v3366, %v3392
        %v3394 = vand.u32 %v969, 4294901760
        %3395 = vmatmul.f32.gmra.mxu0 %v3394
        %v3396 = vpop.f32.mrf.mxu0
        %v3397 = vadd.f32 %v3370, %v3396
        %3398 = vdwg.mxu0
        %3399 = vmatpush.msra.mxu0 0.0
        %3400 = vmatpush.msra.mxu0 0.0
        %3401 = vmatpush.msra.mxu0 0.0
        %3402 = vmatpush.msra.mxu0 0.0
        %3403 = vmatpush.msra.mxu0 0.0
        %3404 = vmatpush.msra.mxu0 0.0
        %3405 = vmatpush.msra.mxu0 0.0
        %3406 = vmatpush.msra.mxu0 0.0
        %3407 = vmatpush.msra.mxu0 0.0
        %3408 = vmatpush.msra.mxu0 0.0
        %3409 = vmatpush.msra.mxu0 0.0
        %3410 = vmatpush.msra.mxu0 0.0
        %3411 = vmatpush.msra.mxu0 0.0
        %3412 = vmatpush.msra.mxu0 0.0
        %v3413 = vand.u32 %v1349, 4294901760
        %3414 = vmatpush.msra.mxu0 %v3413
        %v3415 = vand.u32 %v1345, 4294901760
        %3416 = vmatpush.msra.mxu0 %v3415
        %v3417 = vand.u32 %v966, 4294901760
        %v3418 = vsub.f32 %v966, %v3417
        %v3419 = vand.u32 %v3418, 4294901760
        %v3420 = vsub.f32 %v3418, %v3419
        %v3421 = vand.u32 %v3420, 4294901760
        %3422 = vmatmul.f32.gmra.mxu0 %v3421
        %v3423 = vpop.f32.mrf.mxu0
        %v3424 = vadd.f32 0.0, %v3423
        %v3425 = vand.u32 %v969, 4294901760
        %v3426 = vsub.f32 %v969, %v3425
        %v3427 = vand.u32 %v3426, 4294901760
        %v3428 = vsub.f32 %v3426, %v3427
        %v3429 = vand.u32 %v3428, 4294901760
        %3430 = vmatmul.f32.gmra.mxu0 %v3429
        %v3431 = vpop.f32.mrf.mxu0
        %v3432 = vadd.f32 0.0, %v3431
        %3433 = vdwg.mxu0
        %3434 = vmatpush.msra.mxu0 0.0
        %3435 = vmatpush.msra.mxu0 0.0
        %3436 = vmatpush.msra.mxu0 0.0
        %3437 = vmatpush.msra.mxu0 0.0
        %3438 = vmatpush.msra.mxu0 0.0
        %3439 = vmatpush.msra.mxu0 0.0
        %3440 = vmatpush.msra.mxu0 0.0
        %3441 = vmatpush.msra.mxu0 0.0
        %3442 = vmatpush.msra.mxu0 0.0
        %3443 = vmatpush.msra.mxu0 0.0
        %3444 = vmatpush.msra.mxu0 0.0
        %3445 = vmatpush.msra.mxu0 0.0
        %3446 = vmatpush.msra.mxu0 0.0
        %3447 = vmatpush.msra.mxu0 0.0
        %v3448 = vand.u32 %v1349, 4294901760
        %v3449 = vsub.f32 %v1349, %v3448
        %v3450 = vand.u32 %v3449, 4294901760
        %v3451 = vsub.f32 %v3449, %v3450
        %v3452 = vand.u32 %v3451, 4294901760
        %3453 = vmatpush.msra.mxu0 %v3452
        %v3454 = vand.u32 %v1345, 4294901760
        %v3455 = vsub.f32 %v1345, %v3454
        %v3456 = vand.u32 %v3455, 4294901760
        %v3457 = vsub.f32 %v3455, %v3456
        %v3458 = vand.u32 %v3457, 4294901760
        %3459 = vmatpush.msra.mxu0 %v3458
        %v3460 = vand.u32 %v966, 4294901760
        %3461 = vmatmul.f32.gmra.mxu0 %v3460
        %v3462 = vpop.f32.mrf.mxu0
        %v3463 = vadd.f32 %v3424, %v3462
        %v3464 = vand.u32 %v969, 4294901760
        %3465 = vmatmul.f32.gmra.mxu0 %v3464
        %v3466 = vpop.f32.mrf.mxu0
        %v3467 = vadd.f32 %v3432, %v3466
        %3468 = vdwg.mxu0
        %3469 = vmatpush.msra.mxu0 0.0
        %3470 = vmatpush.msra.mxu0 0.0
        %3471 = vmatpush.msra.mxu0 0.0
        %3472 = vmatpush.msra.mxu0 0.0
        %3473 = vmatpush.msra.mxu0 0.0
        %3474 = vmatpush.msra.mxu0 0.0
        %3475 = vmatpush.msra.mxu0 0.0
        %3476 = vmatpush.msra.mxu0 0.0
        %3477 = vmatpush.msra.mxu0 0.0
        %3478 = vmatpush.msra.mxu0 0.0
        %3479 = vmatpush.msra.mxu0 0.0
        %3480 = vmatpush.msra.mxu0 0.0
        %3481 = vmatpush.msra.mxu0 0.0
        %3482 = vmatpush.msra.mxu0 0.0
        %v3483 = vand.u32 %v1349, 4294901760
        %v3484 = vsub.f32 %v1349, %v3483
        %3485 = vmatpush.msra.mxu0 %v3484
        %v3486 = vand.u32 %v1345, 4294901760
        %v3487 = vsub.f32 %v1345, %v3486
        %3488 = vmatpush.msra.mxu0 %v3487
        %v3489 = vand.u32 %v966, 4294901760
        %v3490 = vsub.f32 %v966, %v3489
        %3491 = vmatmul.f32.gmra.mxu0 %v3490
        %v3492 = vpop.f32.mrf.mxu0
        %v3493 = vadd.f32 %v3463, %v3492
        %v3494 = vand.u32 %v969, 4294901760
        %v3495 = vsub.f32 %v969, %v3494
        %3496 = vmatmul.f32.gmra.mxu0 %v3495
        %v3497 = vpop.f32.mrf.mxu0
        %v3498 = vadd.f32 %v3467, %v3497
        %3499 = vdwg.mxu0
        %3500 = vmatpush.msra.mxu0 0.0
        %3501 = vmatpush.msra.mxu0 0.0
        %3502 = vmatpush.msra.mxu0 0.0
        %3503 = vmatpush.msra.mxu0 0.0
        %3504 = vmatpush.msra.mxu0 0.0
        %3505 = vmatpush.msra.mxu0 0.0
        %3506 = vmatpush.msra.mxu0 0.0
        %3507 = vmatpush.msra.mxu0 0.0
        %3508 = vmatpush.msra.mxu0 0.0
        %3509 = vmatpush.msra.mxu0 0.0
        %3510 = vmatpush.msra.mxu0 0.0
        %3511 = vmatpush.msra.mxu0 0.0
        %3512 = vmatpush.msra.mxu0 0.0
        %3513 = vmatpush.msra.mxu0 0.0
        %v3514 = vand.u32 %v1349, 4294901760
        %3515 = vmatpush.msra.mxu0 %v3514
        %v3516 = vand.u32 %v1345, 4294901760
        %3517 = vmatpush.msra.mxu0 %v3516
        %v3518 = vand.u32 %v966, 4294901760
        %v3519 = vsub.f32 %v966, %v3518
        %v3520 = vand.u32 %v3519, 4294901760
        %3521 = vmatmul.f32.gmra.mxu0 %v3520
        %v3522 = vpop.f32.mrf.mxu0
        %v3523 = vadd.f32 %v3493, %v3522
        %v3524 = vand.u32 %v969, 4294901760
        %v3525 = vsub.f32 %v969, %v3524
        %v3526 = vand.u32 %v3525, 4294901760
        %3527 = vmatmul.f32.gmra.mxu0 %v3526
        %v3528 = vpop.f32.mrf.mxu0
        %v3529 = vadd.f32 %v3498, %v3528
        %3530 = vdwg.mxu0
        %3531 = vmatpush.msra.mxu0 0.0
        %3532 = vmatpush.msra.mxu0 0.0
        %3533 = vmatpush.msra.mxu0 0.0
        %3534 = vmatpush.msra.mxu0 0.0
        %3535 = vmatpush.msra.mxu0 0.0
        %3536 = vmatpush.msra.mxu0 0.0
        %3537 = vmatpush.msra.mxu0 0.0
        %3538 = vmatpush.msra.mxu0 0.0
        %3539 = vmatpush.msra.mxu0 0.0
        %3540 = vmatpush.msra.mxu0 0.0
        %3541 = vmatpush.msra.mxu0 0.0
        %3542 = vmatpush.msra.mxu0 0.0
        %3543 = vmatpush.msra.mxu0 0.0
        %3544 = vmatpush.msra.mxu0 0.0
        %v3545 = vand.u32 %v1349, 4294901760
        %v3546 = vsub.f32 %v1349, %v3545
        %v3547 = vand.u32 %v3546, 4294901760
        %3548 = vmatpush.msra.mxu0 %v3547
        %v3549 = vand.u32 %v1345, 4294901760
        %v3550 = vsub.f32 %v1345, %v3549
        %v3551 = vand.u32 %v3550, 4294901760
        %3552 = vmatpush.msra.mxu0 %v3551
        %v3553 = vand.u32 %v966, 4294901760
        %3554 = vmatmul.f32.gmra.mxu0 %v3553
        %v3555 = vpop.f32.mrf.mxu0
        %v3556 = vadd.f32 %v3523, %v3555
        %v3557 = vand.u32 %v969, 4294901760
        %3558 = vmatmul.f32.gmra.mxu0 %v3557
        %v3559 = vpop.f32.mrf.mxu0
        %v3560 = vadd.f32 %v3529, %v3559
        %3561 = vdwg.mxu0
        %3562 = vmatpush.msra.mxu0 0.0
        %3563 = vmatpush.msra.mxu0 0.0
        %3564 = vmatpush.msra.mxu0 0.0
        %3565 = vmatpush.msra.mxu0 0.0
        %3566 = vmatpush.msra.mxu0 0.0
        %3567 = vmatpush.msra.mxu0 0.0
        %3568 = vmatpush.msra.mxu0 0.0
        %3569 = vmatpush.msra.mxu0 0.0
        %3570 = vmatpush.msra.mxu0 0.0
        %3571 = vmatpush.msra.mxu0 0.0
        %3572 = vmatpush.msra.mxu0 0.0
        %3573 = vmatpush.msra.mxu0 0.0
        %3574 = vmatpush.msra.mxu0 0.0
        %3575 = vmatpush.msra.mxu0 0.0
        %v3576 = vand.u32 %v1349, 4294901760
        %3577 = vmatpush.msra.mxu0 %v3576
        %v3578 = vand.u32 %v1345, 4294901760
        %3579 = vmatpush.msra.mxu0 %v3578
        %v3580 = vand.u32 %v966, 4294901760
        %3581 = vmatmul.f32.gmra.mxu0 %v3580
        %v3582 = vpop.f32.mrf.mxu0
        %v3583 = vadd.f32 %v3556, %v3582
        %v3584 = vand.u32 %v969, 4294901760
        %3585 = vmatmul.f32.gmra.mxu0 %v3584
        %v3586 = vpop.f32.mrf.mxu0
        %v3587 = vadd.f32 %v3560, %v3586
        %3588 = vdwg.mxu0
        %3589 = vmatpush.msra.mxu0 0.0
        %3590 = vmatpush.msra.mxu0 0.0
        %3591 = vmatpush.msra.mxu0 0.0
        %3592 = vmatpush.msra.mxu0 0.0
        %3593 = vmatpush.msra.mxu0 0.0
        %3594 = vmatpush.msra.mxu0 0.0
        %3595 = vmatpush.msra.mxu0 0.0
        %3596 = vmatpush.msra.mxu0 0.0
        %3597 = vmatpush.msra.mxu0 0.0
        %3598 = vmatpush.msra.mxu0 0.0
        %3599 = vmatpush.msra.mxu0 0.0
        %3600 = vmatpush.msra.mxu0 0.0
        %3601 = vmatpush.msra.mxu0 0.0
        %3602 = vmatpush.msra.mxu0 0.0
        %v3603 = vand.u32 %v1539, 4294901760
        %3604 = vmatpush.msra.mxu0 %v3603
        %v3605 = vand.u32 %v1535, 4294901760
        %3606 = vmatpush.msra.mxu0 %v3605
        %v3607 = vand.u32 %v966, 4294901760
        %v3608 = vsub.f32 %v966, %v3607
        %v3609 = vand.u32 %v3608, 4294901760
        %v3610 = vsub.f32 %v3608, %v3609
        %v3611 = vand.u32 %v3610, 4294901760
        %3612 = vmatmul.f32.gmra.mxu0 %v3611
        %v3613 = vpop.f32.mrf.mxu0
        %v3614 = vadd.f32 0.0, %v3613
        %v3615 = vand.u32 %v969, 4294901760
        %v3616 = vsub.f32 %v969, %v3615
        %v3617 = vand.u32 %v3616, 4294901760
        %v3618 = vsub.f32 %v3616, %v3617
        %v3619 = vand.u32 %v3618, 4294901760
        %3620 = vmatmul.f32.gmra.mxu0 %v3619
        %v3621 = vpop.f32.mrf.mxu0
        %v3622 = vadd.f32 0.0, %v3621
        %3623 = vdwg.mxu0
        %3624 = vmatpush.msra.mxu0 0.0
        %3625 = vmatpush.msra.mxu0 0.0
        %3626 = vmatpush.msra.mxu0 0.0
        %3627 = vmatpush.msra.mxu0 0.0
        %3628 = vmatpush.msra.mxu0 0.0
        %3629 = vmatpush.msra.mxu0 0.0
        %3630 = vmatpush.msra.mxu0 0.0
        %3631 = vmatpush.msra.mxu0 0.0
        %3632 = vmatpush.msra.mxu0 0.0
        %3633 = vmatpush.msra.mxu0 0.0
        %3634 = vmatpush.msra.mxu0 0.0
        %3635 = vmatpush.msra.mxu0 0.0
        %3636 = vmatpush.msra.mxu0 0.0
        %3637 = vmatpush.msra.mxu0 0.0
        %v3638 = vand.u32 %v1539, 4294901760
        %v3639 = vsub.f32 %v1539, %v3638
        %v3640 = vand.u32 %v3639, 4294901760
        %v3641 = vsub.f32 %v3639, %v3640
        %v3642 = vand.u32 %v3641, 4294901760
        %3643 = vmatpush.msra.mxu0 %v3642
        %v3644 = vand.u32 %v1535, 4294901760
        %v3645 = vsub.f32 %v1535, %v3644
        %v3646 = vand.u32 %v3645, 4294901760
        %v3647 = vsub.f32 %v3645, %v3646
        %v3648 = vand.u32 %v3647, 4294901760
        %3649 = vmatpush.msra.mxu0 %v3648
        %v3650 = vand.u32 %v966, 4294901760
        %3651 = vmatmul.f32.gmra.mxu0 %v3650
        %v3652 = vpop.f32.mrf.mxu0
        %v3653 = vadd.f32 %v3614, %v3652
        %v3654 = vand.u32 %v969, 4294901760
        %3655 = vmatmul.f32.gmra.mxu0 %v3654
        %v3656 = vpop.f32.mrf.mxu0
        %v3657 = vadd.f32 %v3622, %v3656
        %3658 = vdwg.mxu0
        %3659 = vmatpush.msra.mxu0 0.0
        %3660 = vmatpush.msra.mxu0 0.0
        %3661 = vmatpush.msra.mxu0 0.0
        %3662 = vmatpush.msra.mxu0 0.0
        %3663 = vmatpush.msra.mxu0 0.0
        %3664 = vmatpush.msra.mxu0 0.0
        %3665 = vmatpush.msra.mxu0 0.0
        %3666 = vmatpush.msra.mxu0 0.0
        %3667 = vmatpush.msra.mxu0 0.0
        %3668 = vmatpush.msra.mxu0 0.0
        %3669 = vmatpush.msra.mxu0 0.0
        %3670 = vmatpush.msra.mxu0 0.0
        %3671 = vmatpush.msra.mxu0 0.0
        %3672 = vmatpush.msra.mxu0 0.0
        %v3673 = vand.u32 %v1539, 4294901760
        %v3674 = vsub.f32 %v1539, %v3673
        %3675 = vmatpush.msra.mxu0 %v3674
        %v3676 = vand.u32 %v1535, 4294901760
        %v3677 = vsub.f32 %v1535, %v3676
        %3678 = vmatpush.msra.mxu0 %v3677
        %v3679 = vand.u32 %v966, 4294901760
        %v3680 = vsub.f32 %v966, %v3679
        %3681 = vmatmul.f32.gmra.mxu0 %v3680
        %v3682 = vpop.f32.mrf.mxu0
        %v3683 = vadd.f32 %v3653, %v3682
        %v3684 = vand.u32 %v969, 4294901760
        %v3685 = vsub.f32 %v969, %v3684
        %3686 = vmatmul.f32.gmra.mxu0 %v3685
        %v3687 = vpop.f32.mrf.mxu0
        %v3688 = vadd.f32 %v3657, %v3687
        %3689 = vdwg.mxu0
        %3690 = vmatpush.msra.mxu0 0.0
        %3691 = vmatpush.msra.mxu0 0.0
        %3692 = vmatpush.msra.mxu0 0.0
        %3693 = vmatpush.msra.mxu0 0.0
        %3694 = vmatpush.msra.mxu0 0.0
        %3695 = vmatpush.msra.mxu0 0.0
        %3696 = vmatpush.msra.mxu0 0.0
        %3697 = vmatpush.msra.mxu0 0.0
        %3698 = vmatpush.msra.mxu0 0.0
        %3699 = vmatpush.msra.mxu0 0.0
        %3700 = vmatpush.msra.mxu0 0.0
        %3701 = vmatpush.msra.mxu0 0.0
        %3702 = vmatpush.msra.mxu0 0.0
        %3703 = vmatpush.msra.mxu0 0.0
        %v3704 = vand.u32 %v1539, 4294901760
        %3705 = vmatpush.msra.mxu0 %v3704
        %v3706 = vand.u32 %v1535, 4294901760
        %3707 = vmatpush.msra.mxu0 %v3706
        %v3708 = vand.u32 %v966, 4294901760
        %v3709 = vsub.f32 %v966, %v3708
        %v3710 = vand.u32 %v3709, 4294901760
        %3711 = vmatmul.f32.gmra.mxu0 %v3710
        %v3712 = vpop.f32.mrf.mxu0
        %v3713 = vadd.f32 %v3683, %v3712
        %v3714 = vand.u32 %v969, 4294901760
        %v3715 = vsub.f32 %v969, %v3714
        %v3716 = vand.u32 %v3715, 4294901760
        %3717 = vmatmul.f32.gmra.mxu0 %v3716
        %v3718 = vpop.f32.mrf.mxu0
        %v3719 = vadd.f32 %v3688, %v3718
        %3720 = vdwg.mxu0
        %3721 = vmatpush.msra.mxu0 0.0
        %3722 = vmatpush.msra.mxu0 0.0
        %3723 = vmatpush.msra.mxu0 0.0
        %3724 = vmatpush.msra.mxu0 0.0
        %3725 = vmatpush.msra.mxu0 0.0
        %3726 = vmatpush.msra.mxu0 0.0
        %3727 = vmatpush.msra.mxu0 0.0
        %3728 = vmatpush.msra.mxu0 0.0
        %3729 = vmatpush.msra.mxu0 0.0
        %3730 = vmatpush.msra.mxu0 0.0
        %3731 = vmatpush.msra.mxu0 0.0
        %3732 = vmatpush.msra.mxu0 0.0
        %3733 = vmatpush.msra.mxu0 0.0
        %3734 = vmatpush.msra.mxu0 0.0
        %v3735 = vand.u32 %v1539, 4294901760
        %v3736 = vsub.f32 %v1539, %v3735
        %v3737 = vand.u32 %v3736, 4294901760
        %3738 = vmatpush.msra.mxu0 %v3737
        %v3739 = vand.u32 %v1535, 4294901760
        %v3740 = vsub.f32 %v1535, %v3739
        %v3741 = vand.u32 %v3740, 4294901760
        %3742 = vmatpush.msra.mxu0 %v3741
        %v3743 = vand.u32 %v966, 4294901760
        %3744 = vmatmul.f32.gmra.mxu0 %v3743
        %v3745 = vpop.f32.mrf.mxu0
        %v3746 = vadd.f32 %v3713, %v3745
        %v3747 = vand.u32 %v969, 4294901760
        %3748 = vmatmul.f32.gmra.mxu0 %v3747
        %v3749 = vpop.f32.mrf.mxu0
        %v3750 = vadd.f32 %v3719, %v3749
        %3751 = vdwg.mxu0
        %3752 = vmatpush.msra.mxu0 0.0
        %3753 = vmatpush.msra.mxu0 0.0
        %3754 = vmatpush.msra.mxu0 0.0
        %3755 = vmatpush.msra.mxu0 0.0
        %3756 = vmatpush.msra.mxu0 0.0
        %3757 = vmatpush.msra.mxu0 0.0
        %3758 = vmatpush.msra.mxu0 0.0
        %3759 = vmatpush.msra.mxu0 0.0
        %3760 = vmatpush.msra.mxu0 0.0
        %3761 = vmatpush.msra.mxu0 0.0
        %3762 = vmatpush.msra.mxu0 0.0
        %3763 = vmatpush.msra.mxu0 0.0
        %3764 = vmatpush.msra.mxu0 0.0
        %3765 = vmatpush.msra.mxu0 0.0
        %v3766 = vand.u32 %v1539, 4294901760
        %3767 = vmatpush.msra.mxu0 %v3766
        %v3768 = vand.u32 %v1535, 4294901760
        %3769 = vmatpush.msra.mxu0 %v3768
        %v3770 = vand.u32 %v966, 4294901760
        %3771 = vmatmul.f32.gmra.mxu0 %v3770
        %v3772 = vpop.f32.mrf.mxu0
        %v3773 = vadd.f32 %v3746, %v3772
        %v3774 = vand.u32 %v969, 4294901760
        %3775 = vmatmul.f32.gmra.mxu0 %v3774
        %v3776 = vpop.f32.mrf.mxu0
        %v3777 = vadd.f32 %v3750, %v3776
        %3778 = vdwg.mxu0
        %3779 = vmatpush.msra.mxu0 0.0
        %3780 = vmatpush.msra.mxu0 0.0
        %3781 = vmatpush.msra.mxu0 0.0
        %3782 = vmatpush.msra.mxu0 0.0
        %3783 = vmatpush.msra.mxu0 0.0
        %3784 = vmatpush.msra.mxu0 0.0
        %3785 = vmatpush.msra.mxu0 0.0
        %3786 = vmatpush.msra.mxu0 0.0
        %3787 = vmatpush.msra.mxu0 0.0
        %3788 = vmatpush.msra.mxu0 0.0
        %3789 = vmatpush.msra.mxu0 0.0
        %3790 = vmatpush.msra.mxu0 0.0
        %3791 = vmatpush.msra.mxu0 0.0
        %3792 = vmatpush.msra.mxu0 0.0
        %v3793 = vand.u32 %v1729, 4294901760
        %3794 = vmatpush.msra.mxu0 %v3793
        %v3795 = vand.u32 %v1725, 4294901760
        %3796 = vmatpush.msra.mxu0 %v3795
        %v3797 = vand.u32 %v966, 4294901760
        %v3798 = vsub.f32 %v966, %v3797
        %v3799 = vand.u32 %v3798, 4294901760
        %v3800 = vsub.f32 %v3798, %v3799
        %v3801 = vand.u32 %v3800, 4294901760
        %3802 = vmatmul.f32.gmra.mxu0 %v3801
        %v3803 = vpop.f32.mrf.mxu0
        %v3804 = vadd.f32 0.0, %v3803
        %v3805 = vand.u32 %v969, 4294901760
        %v3806 = vsub.f32 %v969, %v3805
        %v3807 = vand.u32 %v3806, 4294901760
        %v3808 = vsub.f32 %v3806, %v3807
        %v3809 = vand.u32 %v3808, 4294901760
        %3810 = vmatmul.f32.gmra.mxu0 %v3809
        %v3811 = vpop.f32.mrf.mxu0
        %v3812 = vadd.f32 0.0, %v3811
        %3813 = vdwg.mxu0
        %3814 = vmatpush.msra.mxu0 0.0
        %3815 = vmatpush.msra.mxu0 0.0
        %3816 = vmatpush.msra.mxu0 0.0
        %3817 = vmatpush.msra.mxu0 0.0
        %3818 = vmatpush.msra.mxu0 0.0
        %3819 = vmatpush.msra.mxu0 0.0
        %3820 = vmatpush.msra.mxu0 0.0
        %3821 = vmatpush.msra.mxu0 0.0
        %3822 = vmatpush.msra.mxu0 0.0
        %3823 = vmatpush.msra.mxu0 0.0
        %3824 = vmatpush.msra.mxu0 0.0
        %3825 = vmatpush.msra.mxu0 0.0
        %3826 = vmatpush.msra.mxu0 0.0
        %3827 = vmatpush.msra.mxu0 0.0
        %v3828 = vand.u32 %v1729, 4294901760
        %v3829 = vsub.f32 %v1729, %v3828
        %v3830 = vand.u32 %v3829, 4294901760
        %v3831 = vsub.f32 %v3829, %v3830
        %v3832 = vand.u32 %v3831, 4294901760
        %3833 = vmatpush.msra.mxu0 %v3832
        %v3834 = vand.u32 %v1725, 4294901760
        %v3835 = vsub.f32 %v1725, %v3834
        %v3836 = vand.u32 %v3835, 4294901760
        %v3837 = vsub.f32 %v3835, %v3836
        %v3838 = vand.u32 %v3837, 4294901760
        %3839 = vmatpush.msra.mxu0 %v3838
        %v3840 = vand.u32 %v966, 4294901760
        %3841 = vmatmul.f32.gmra.mxu0 %v3840
        %v3842 = vpop.f32.mrf.mxu0
        %v3843 = vadd.f32 %v3804, %v3842
        %v3844 = vand.u32 %v969, 4294901760
        %3845 = vmatmul.f32.gmra.mxu0 %v3844
        %v3846 = vpop.f32.mrf.mxu0
        %v3847 = vadd.f32 %v3812, %v3846
        %3848 = vdwg.mxu0
        %3849 = vmatpush.msra.mxu0 0.0
        %3850 = vmatpush.msra.mxu0 0.0
        %3851 = vmatpush.msra.mxu0 0.0
        %3852 = vmatpush.msra.mxu0 0.0
        %3853 = vmatpush.msra.mxu0 0.0
        %3854 = vmatpush.msra.mxu0 0.0
        %3855 = vmatpush.msra.mxu0 0.0
        %3856 = vmatpush.msra.mxu0 0.0
        %3857 = vmatpush.msra.mxu0 0.0
        %3858 = vmatpush.msra.mxu0 0.0
        %3859 = vmatpush.msra.mxu0 0.0
        %3860 = vmatpush.msra.mxu0 0.0
        %3861 = vmatpush.msra.mxu0 0.0
        %3862 = vmatpush.msra.mxu0 0.0
        %v3863 = vand.u32 %v1729, 4294901760
        %v3864 = vsub.f32 %v1729, %v3863
        %3865 = vmatpush.msra.mxu0 %v3864
        %v3866 = vand.u32 %v1725, 4294901760
        %v3867 = vsub.f32 %v1725, %v3866
        %3868 = vmatpush.msra.mxu0 %v3867
        %v3869 = vand.u32 %v966, 4294901760
        %v3870 = vsub.f32 %v966, %v3869
        %3871 = vmatmul.f32.gmra.mxu0 %v3870
        %v3872 = vpop.f32.mrf.mxu0
        %v3873 = vadd.f32 %v3843, %v3872
        %v3874 = vand.u32 %v969, 4294901760
        %v3875 = vsub.f32 %v969, %v3874
        %3876 = vmatmul.f32.gmra.mxu0 %v3875
        %v3877 = vpop.f32.mrf.mxu0
        %v3878 = vadd.f32 %v3847, %v3877
        %3879 = vdwg.mxu0
        %3880 = vmatpush.msra.mxu0 0.0
        %3881 = vmatpush.msra.mxu0 0.0
        %3882 = vmatpush.msra.mxu0 0.0
        %3883 = vmatpush.msra.mxu0 0.0
        %3884 = vmatpush.msra.mxu0 0.0
        %3885 = vmatpush.msra.mxu0 0.0
        %3886 = vmatpush.msra.mxu0 0.0
        %3887 = vmatpush.msra.mxu0 0.0
        %3888 = vmatpush.msra.mxu0 0.0
        %3889 = vmatpush.msra.mxu0 0.0
        %3890 = vmatpush.msra.mxu0 0.0
        %3891 = vmatpush.msra.mxu0 0.0
        %3892 = vmatpush.msra.mxu0 0.0
        %3893 = vmatpush.msra.mxu0 0.0
        %v3894 = vand.u32 %v1729, 4294901760
        %3895 = vmatpush.msra.mxu0 %v3894
        %v3896 = vand.u32 %v1725, 4294901760
        %3897 = vmatpush.msra.mxu0 %v3896
        %v3898 = vand.u32 %v966, 4294901760
        %v3899 = vsub.f32 %v966, %v3898
        %v3900 = vand.u32 %v3899, 4294901760
        %3901 = vmatmul.f32.gmra.mxu0 %v3900
        %v3902 = vpop.f32.mrf.mxu0
        %v3903 = vadd.f32 %v3873, %v3902
        %v3904 = vand.u32 %v969, 4294901760
        %v3905 = vsub.f32 %v969, %v3904
        %v3906 = vand.u32 %v3905, 4294901760
        %3907 = vmatmul.f32.gmra.mxu0 %v3906
        %v3908 = vpop.f32.mrf.mxu0
        %v3909 = vadd.f32 %v3878, %v3908
        %3910 = vdwg.mxu0
        %3911 = vmatpush.msra.mxu0 0.0
        %3912 = vmatpush.msra.mxu0 0.0
        %3913 = vmatpush.msra.mxu0 0.0
        %3914 = vmatpush.msra.mxu0 0.0
        %3915 = vmatpush.msra.mxu0 0.0
        %3916 = vmatpush.msra.mxu0 0.0
        %3917 = vmatpush.msra.mxu0 0.0
        %3918 = vmatpush.msra.mxu0 0.0
        %3919 = vmatpush.msra.mxu0 0.0
        %3920 = vmatpush.msra.mxu0 0.0
        %3921 = vmatpush.msra.mxu0 0.0
        %3922 = vmatpush.msra.mxu0 0.0
        %3923 = vmatpush.msra.mxu0 0.0
        %3924 = vmatpush.msra.mxu0 0.0
        %v3925 = vand.u32 %v1729, 4294901760
        %v3926 = vsub.f32 %v1729, %v3925
        %v3927 = vand.u32 %v3926, 4294901760
        %3928 = vmatpush.msra.mxu0 %v3927
        %v3929 = vand.u32 %v1725, 4294901760
        %v3930 = vsub.f32 %v1725, %v3929
        %v3931 = vand.u32 %v3930, 4294901760
        %3932 = vmatpush.msra.mxu0 %v3931
        %v3933 = vand.u32 %v966, 4294901760
        %3934 = vmatmul.f32.gmra.mxu0 %v3933
        %v3935 = vpop.f32.mrf.mxu0
        %v3936 = vadd.f32 %v3903, %v3935
        %v3937 = vand.u32 %v969, 4294901760
        %3938 = vmatmul.f32.gmra.mxu0 %v3937
        %v3939 = vpop.f32.mrf.mxu0
        %v3940 = vadd.f32 %v3909, %v3939
        %3941 = vdwg.mxu0
        %3942 = vmatpush.msra.mxu0 0.0
        %3943 = vmatpush.msra.mxu0 0.0
        %3944 = vmatpush.msra.mxu0 0.0
        %3945 = vmatpush.msra.mxu0 0.0
        %3946 = vmatpush.msra.mxu0 0.0
        %3947 = vmatpush.msra.mxu0 0.0
        %3948 = vmatpush.msra.mxu0 0.0
        %3949 = vmatpush.msra.mxu0 0.0
        %3950 = vmatpush.msra.mxu0 0.0
        %3951 = vmatpush.msra.mxu0 0.0
        %3952 = vmatpush.msra.mxu0 0.0
        %3953 = vmatpush.msra.mxu0 0.0
        %3954 = vmatpush.msra.mxu0 0.0
        %3955 = vmatpush.msra.mxu0 0.0
        %v3956 = vand.u32 %v1729, 4294901760
        %3957 = vmatpush.msra.mxu0 %v3956
        %v3958 = vand.u32 %v1725, 4294901760
        %3959 = vmatpush.msra.mxu0 %v3958
        %v3960 = vand.u32 %v966, 4294901760
        %3961 = vmatmul.f32.gmra.mxu0 %v3960
        %v3962 = vpop.f32.mrf.mxu0
        %v3963 = vadd.f32 %v3936, %v3962
        %v3964 = vand.u32 %v969, 4294901760
        %3965 = vmatmul.f32.gmra.mxu0 %v3964
        %v3966 = vpop.f32.mrf.mxu0
        %v3967 = vadd.f32 %v3940, %v3966
        %3968 = vdwg.mxu0
        %3969 = vmatpush.msra.mxu0 0.0
        %3970 = vmatpush.msra.mxu0 0.0
        %3971 = vmatpush.msra.mxu0 0.0
        %3972 = vmatpush.msra.mxu0 0.0
        %3973 = vmatpush.msra.mxu0 0.0
        %3974 = vmatpush.msra.mxu0 0.0
        %3975 = vmatpush.msra.mxu0 0.0
        %3976 = vmatpush.msra.mxu0 0.0
        %3977 = vmatpush.msra.mxu0 0.0
        %3978 = vmatpush.msra.mxu0 0.0
        %3979 = vmatpush.msra.mxu0 0.0
        %3980 = vmatpush.msra.mxu0 0.0
        %3981 = vmatpush.msra.mxu0 0.0
        %3982 = vmatpush.msra.mxu0 0.0
        %v3983 = vand.u32 %v1919, 4294901760
        %3984 = vmatpush.msra.mxu0 %v3983
        %v3985 = vand.u32 %v1915, 4294901760
        %3986 = vmatpush.msra.mxu0 %v3985
        %v3987 = vand.u32 %v966, 4294901760
        %v3988 = vsub.f32 %v966, %v3987
        %v3989 = vand.u32 %v3988, 4294901760
        %v3990 = vsub.f32 %v3988, %v3989
        %v3991 = vand.u32 %v3990, 4294901760
        %3992 = vmatmul.f32.gmra.mxu0 %v3991
        %v3993 = vpop.f32.mrf.mxu0
        %v3994 = vadd.f32 0.0, %v3993
        %v3995 = vand.u32 %v969, 4294901760
        %v3996 = vsub.f32 %v969, %v3995
        %v3997 = vand.u32 %v3996, 4294901760
        %v3998 = vsub.f32 %v3996, %v3997
        %v3999 = vand.u32 %v3998, 4294901760
        %4000 = vmatmul.f32.gmra.mxu0 %v3999
        %v4001 = vpop.f32.mrf.mxu0
        %v4002 = vadd.f32 0.0, %v4001
        %4003 = vdwg.mxu0
        %4004 = vmatpush.msra.mxu0 0.0
        %4005 = vmatpush.msra.mxu0 0.0
        %4006 = vmatpush.msra.mxu0 0.0
        %4007 = vmatpush.msra.mxu0 0.0
        %4008 = vmatpush.msra.mxu0 0.0
        %4009 = vmatpush.msra.mxu0 0.0
        %4010 = vmatpush.msra.mxu0 0.0
        %4011 = vmatpush.msra.mxu0 0.0
        %4012 = vmatpush.msra.mxu0 0.0
        %4013 = vmatpush.msra.mxu0 0.0
        %4014 = vmatpush.msra.mxu0 0.0
        %4015 = vmatpush.msra.mxu0 0.0
        %4016 = vmatpush.msra.mxu0 0.0
        %4017 = vmatpush.msra.mxu0 0.0
        %v4018 = vand.u32 %v1919, 4294901760
        %v4019 = vsub.f32 %v1919, %v4018
        %v4020 = vand.u32 %v4019, 4294901760
        %v4021 = vsub.f32 %v4019, %v4020
        %v4022 = vand.u32 %v4021, 4294901760
        %4023 = vmatpush.msra.mxu0 %v4022
        %v4024 = vand.u32 %v1915, 4294901760
        %v4025 = vsub.f32 %v1915, %v4024
        %v4026 = vand.u32 %v4025, 4294901760
        %v4027 = vsub.f32 %v4025, %v4026
        %v4028 = vand.u32 %v4027, 4294901760
        %4029 = vmatpush.msra.mxu0 %v4028
        %v4030 = vand.u32 %v966, 4294901760
        %4031 = vmatmul.f32.gmra.mxu0 %v4030
        %v4032 = vpop.f32.mrf.mxu0
        %v4033 = vadd.f32 %v3994, %v4032
        %v4034 = vand.u32 %v969, 4294901760
        %4035 = vmatmul.f32.gmra.mxu0 %v4034
        %v4036 = vpop.f32.mrf.mxu0
        %v4037 = vadd.f32 %v4002, %v4036
        %4038 = vdwg.mxu0
        %4039 = vmatpush.msra.mxu0 0.0
        %4040 = vmatpush.msra.mxu0 0.0
        %4041 = vmatpush.msra.mxu0 0.0
        %4042 = vmatpush.msra.mxu0 0.0
        %4043 = vmatpush.msra.mxu0 0.0
        %4044 = vmatpush.msra.mxu0 0.0
        %4045 = vmatpush.msra.mxu0 0.0
        %4046 = vmatpush.msra.mxu0 0.0
        %4047 = vmatpush.msra.mxu0 0.0
        %4048 = vmatpush.msra.mxu0 0.0
        %4049 = vmatpush.msra.mxu0 0.0
        %4050 = vmatpush.msra.mxu0 0.0
        %4051 = vmatpush.msra.mxu0 0.0
        %4052 = vmatpush.msra.mxu0 0.0
        %v4053 = vand.u32 %v1919, 4294901760
        %v4054 = vsub.f32 %v1919, %v4053
        %4055 = vmatpush.msra.mxu0 %v4054
        %v4056 = vand.u32 %v1915, 4294901760
        %v4057 = vsub.f32 %v1915, %v4056
        %4058 = vmatpush.msra.mxu0 %v4057
        %v4059 = vand.u32 %v966, 4294901760
        %v4060 = vsub.f32 %v966, %v4059
        %4061 = vmatmul.f32.gmra.mxu0 %v4060
        %v4062 = vpop.f32.mrf.mxu0
        %v4063 = vadd.f32 %v4033, %v4062
        %v4064 = vand.u32 %v969, 4294901760
        %v4065 = vsub.f32 %v969, %v4064
        %4066 = vmatmul.f32.gmra.mxu0 %v4065
        %v4067 = vpop.f32.mrf.mxu0
        %v4068 = vadd.f32 %v4037, %v4067
        %4069 = vdwg.mxu0
        %4070 = vmatpush.msra.mxu0 0.0
        %4071 = vmatpush.msra.mxu0 0.0
        %4072 = vmatpush.msra.mxu0 0.0
        %4073 = vmatpush.msra.mxu0 0.0
        %4074 = vmatpush.msra.mxu0 0.0
        %4075 = vmatpush.msra.mxu0 0.0
        %4076 = vmatpush.msra.mxu0 0.0
        %4077 = vmatpush.msra.mxu0 0.0
        %4078 = vmatpush.msra.mxu0 0.0
        %4079 = vmatpush.msra.mxu0 0.0
        %4080 = vmatpush.msra.mxu0 0.0
        %4081 = vmatpush.msra.mxu0 0.0
        %4082 = vmatpush.msra.mxu0 0.0
        %4083 = vmatpush.msra.mxu0 0.0
        %v4084 = vand.u32 %v1919, 4294901760
        %4085 = vmatpush.msra.mxu0 %v4084
        %v4086 = vand.u32 %v1915, 4294901760
        %4087 = vmatpush.msra.mxu0 %v4086
        %v4088 = vand.u32 %v966, 4294901760
        %v4089 = vsub.f32 %v966, %v4088
        %v4090 = vand.u32 %v4089, 4294901760
        %4091 = vmatmul.f32.gmra.mxu0 %v4090
        %v4092 = vpop.f32.mrf.mxu0
        %v4093 = vadd.f32 %v4063, %v4092
        %v4094 = vand.u32 %v969, 4294901760
        %v4095 = vsub.f32 %v969, %v4094
        %v4096 = vand.u32 %v4095, 4294901760
        %4097 = vmatmul.f32.gmra.mxu0 %v4096
        %v4098 = vpop.f32.mrf.mxu0
        %v4099 = vadd.f32 %v4068, %v4098
        %4100 = vdwg.mxu0
        %4101 = vmatpush.msra.mxu0 0.0
        %4102 = vmatpush.msra.mxu0 0.0
        %4103 = vmatpush.msra.mxu0 0.0
        %4104 = vmatpush.msra.mxu0 0.0
        %4105 = vmatpush.msra.mxu0 0.0
        %4106 = vmatpush.msra.mxu0 0.0
        %4107 = vmatpush.msra.mxu0 0.0
        %4108 = vmatpush.msra.mxu0 0.0
        %4109 = vmatpush.msra.mxu0 0.0
        %4110 = vmatpush.msra.mxu0 0.0
        %4111 = vmatpush.msra.mxu0 0.0
        %4112 = vmatpush.msra.mxu0 0.0
        %4113 = vmatpush.msra.mxu0 0.0
        %4114 = vmatpush.msra.mxu0 0.0
        %v4115 = vand.u32 %v1919, 4294901760
        %v4116 = vsub.f32 %v1919, %v4115
        %v4117 = vand.u32 %v4116, 4294901760
        %4118 = vmatpush.msra.mxu0 %v4117
        %v4119 = vand.u32 %v1915, 4294901760
        %v4120 = vsub.f32 %v1915, %v4119
        %v4121 = vand.u32 %v4120, 4294901760
        %4122 = vmatpush.msra.mxu0 %v4121
        %v4123 = vand.u32 %v966, 4294901760
        %4124 = vmatmul.f32.gmra.mxu0 %v4123
        %v4125 = vpop.f32.mrf.mxu0
        %v4126 = vadd.f32 %v4093, %v4125
        %v4127 = vand.u32 %v969, 4294901760
        %4128 = vmatmul.f32.gmra.mxu0 %v4127
        %v4129 = vpop.f32.mrf.mxu0
        %v4130 = vadd.f32 %v4099, %v4129
        %4131 = vdwg.mxu0
        %4132 = vmatpush.msra.mxu0 0.0
        %4133 = vmatpush.msra.mxu0 0.0
        %4134 = vmatpush.msra.mxu0 0.0
        %4135 = vmatpush.msra.mxu0 0.0
        %4136 = vmatpush.msra.mxu0 0.0
        %4137 = vmatpush.msra.mxu0 0.0
        %4138 = vmatpush.msra.mxu0 0.0
        %4139 = vmatpush.msra.mxu0 0.0
        %4140 = vmatpush.msra.mxu0 0.0
        %4141 = vmatpush.msra.mxu0 0.0
        %4142 = vmatpush.msra.mxu0 0.0
        %4143 = vmatpush.msra.mxu0 0.0
        %4144 = vmatpush.msra.mxu0 0.0
        %4145 = vmatpush.msra.mxu0 0.0
        %v4146 = vand.u32 %v1919, 4294901760
        %4147 = vmatpush.msra.mxu0 %v4146
        %v4148 = vand.u32 %v1915, 4294901760
        %4149 = vmatpush.msra.mxu0 %v4148
        %v4150 = vand.u32 %v966, 4294901760
        %4151 = vmatmul.f32.gmra.mxu0 %v4150
        %v4152 = vpop.f32.mrf.mxu0
        %v4153 = vadd.f32 %v4126, %v4152
        %v4154 = vand.u32 %v969, 4294901760
        %4155 = vmatmul.f32.gmra.mxu0 %v4154
        %v4156 = vpop.f32.mrf.mxu0
        %v4157 = vadd.f32 %v4130, %v4156
        %4158 = vdwg.mxu0
        %4159 = vmatpush.msra.mxu0 0.0
        %4160 = vmatpush.msra.mxu0 0.0
        %4161 = vmatpush.msra.mxu0 0.0
        %4162 = vmatpush.msra.mxu0 0.0
        %4163 = vmatpush.msra.mxu0 0.0
        %4164 = vmatpush.msra.mxu0 0.0
        %4165 = vmatpush.msra.mxu0 0.0
        %4166 = vmatpush.msra.mxu0 0.0
        %4167 = vmatpush.msra.mxu0 0.0
        %4168 = vmatpush.msra.mxu0 0.0
        %4169 = vmatpush.msra.mxu0 0.0
        %4170 = vmatpush.msra.mxu0 0.0
        %4171 = vmatpush.msra.mxu0 0.0
        %4172 = vmatpush.msra.mxu0 0.0
        %v4173 = vand.u32 %v2109, 4294901760
        %4174 = vmatpush.msra.mxu0 %v4173
        %v4175 = vand.u32 %v2105, 4294901760
        %4176 = vmatpush.msra.mxu0 %v4175
        %v4177 = vand.u32 %v966, 4294901760
        %v4178 = vsub.f32 %v966, %v4177
        %v4179 = vand.u32 %v4178, 4294901760
        %v4180 = vsub.f32 %v4178, %v4179
        %v4181 = vand.u32 %v4180, 4294901760
        %4182 = vmatmul.f32.gmra.mxu0 %v4181
        %v4183 = vpop.f32.mrf.mxu0
        %v4184 = vadd.f32 0.0, %v4183
        %v4185 = vand.u32 %v969, 4294901760
        %v4186 = vsub.f32 %v969, %v4185
        %v4187 = vand.u32 %v4186, 4294901760
        %v4188 = vsub.f32 %v4186, %v4187
        %v4189 = vand.u32 %v4188, 4294901760
        %4190 = vmatmul.f32.gmra.mxu0 %v4189
        %v4191 = vpop.f32.mrf.mxu0
        %v4192 = vadd.f32 0.0, %v4191
        %4193 = vdwg.mxu0
        %4194 = vmatpush.msra.mxu0 0.0
        %4195 = vmatpush.msra.mxu0 0.0
        %4196 = vmatpush.msra.mxu0 0.0
        %4197 = vmatpush.msra.mxu0 0.0
        %4198 = vmatpush.msra.mxu0 0.0
        %4199 = vmatpush.msra.mxu0 0.0
        %4200 = vmatpush.msra.mxu0 0.0
        %4201 = vmatpush.msra.mxu0 0.0
        %4202 = vmatpush.msra.mxu0 0.0
        %4203 = vmatpush.msra.mxu0 0.0
        %4204 = vmatpush.msra.mxu0 0.0
        %4205 = vmatpush.msra.mxu0 0.0
        %4206 = vmatpush.msra.mxu0 0.0
        %4207 = vmatpush.msra.mxu0 0.0
        %v4208 = vand.u32 %v2109, 4294901760
        %v4209 = vsub.f32 %v2109, %v4208
        %v4210 = vand.u32 %v4209, 4294901760
        %v4211 = vsub.f32 %v4209, %v4210
        %v4212 = vand.u32 %v4211, 4294901760
        %4213 = vmatpush.msra.mxu0 %v4212
        %v4214 = vand.u32 %v2105, 4294901760
        %v4215 = vsub.f32 %v2105, %v4214
        %v4216 = vand.u32 %v4215, 4294901760
        %v4217 = vsub.f32 %v4215, %v4216
        %v4218 = vand.u32 %v4217, 4294901760
        %4219 = vmatpush.msra.mxu0 %v4218
        %v4220 = vand.u32 %v966, 4294901760
        %4221 = vmatmul.f32.gmra.mxu0 %v4220
        %v4222 = vpop.f32.mrf.mxu0
        %v4223 = vadd.f32 %v4184, %v4222
        %v4224 = vand.u32 %v969, 4294901760
        %4225 = vmatmul.f32.gmra.mxu0 %v4224
        %v4226 = vpop.f32.mrf.mxu0
        %v4227 = vadd.f32 %v4192, %v4226
        %4228 = vdwg.mxu0
        %4229 = vmatpush.msra.mxu0 0.0
        %4230 = vmatpush.msra.mxu0 0.0
        %4231 = vmatpush.msra.mxu0 0.0
        %4232 = vmatpush.msra.mxu0 0.0
        %4233 = vmatpush.msra.mxu0 0.0
        %4234 = vmatpush.msra.mxu0 0.0
        %4235 = vmatpush.msra.mxu0 0.0
        %4236 = vmatpush.msra.mxu0 0.0
        %4237 = vmatpush.msra.mxu0 0.0
        %4238 = vmatpush.msra.mxu0 0.0
        %4239 = vmatpush.msra.mxu0 0.0
        %4240 = vmatpush.msra.mxu0 0.0
        %4241 = vmatpush.msra.mxu0 0.0
        %4242 = vmatpush.msra.mxu0 0.0
        %v4243 = vand.u32 %v2109, 4294901760
        %v4244 = vsub.f32 %v2109, %v4243
        %4245 = vmatpush.msra.mxu0 %v4244
        %v4246 = vand.u32 %v2105, 4294901760
        %v4247 = vsub.f32 %v2105, %v4246
        %4248 = vmatpush.msra.mxu0 %v4247
        %v4249 = vand.u32 %v966, 4294901760
        %v4250 = vsub.f32 %v966, %v4249
        %4251 = vmatmul.f32.gmra.mxu0 %v4250
        %v4252 = vpop.f32.mrf.mxu0
        %v4253 = vadd.f32 %v4223, %v4252
        %v4254 = vand.u32 %v969, 4294901760
        %v4255 = vsub.f32 %v969, %v4254
        %4256 = vmatmul.f32.gmra.mxu0 %v4255
        %v4257 = vpop.f32.mrf.mxu0
        %v4258 = vadd.f32 %v4227, %v4257
        %4259 = vdwg.mxu0
        %4260 = vmatpush.msra.mxu0 0.0
        %4261 = vmatpush.msra.mxu0 0.0
        %4262 = vmatpush.msra.mxu0 0.0
        %4263 = vmatpush.msra.mxu0 0.0
        %4264 = vmatpush.msra.mxu0 0.0
        %4265 = vmatpush.msra.mxu0 0.0
        %4266 = vmatpush.msra.mxu0 0.0
        %4267 = vmatpush.msra.mxu0 0.0
        %4268 = vmatpush.msra.mxu0 0.0
        %4269 = vmatpush.msra.mxu0 0.0
        %4270 = vmatpush.msra.mxu0 0.0
        %4271 = vmatpush.msra.mxu0 0.0
        %4272 = vmatpush.msra.mxu0 0.0
        %4273 = vmatpush.msra.mxu0 0.0
        %v4274 = vand.u32 %v2109, 4294901760
        %4275 = vmatpush.msra.mxu0 %v4274
        %v4276 = vand.u32 %v2105, 4294901760
        %4277 = vmatpush.msra.mxu0 %v4276
        %v4278 = vand.u32 %v966, 4294901760
        %v4279 = vsub.f32 %v966, %v4278
        %v4280 = vand.u32 %v4279, 4294901760
        %4281 = vmatmul.f32.gmra.mxu0 %v4280
        %v4282 = vpop.f32.mrf.mxu0
        %v4283 = vadd.f32 %v4253, %v4282
        %v4284 = vand.u32 %v969, 4294901760
        %v4285 = vsub.f32 %v969, %v4284
        %v4286 = vand.u32 %v4285, 4294901760
        %4287 = vmatmul.f32.gmra.mxu0 %v4286
        %v4288 = vpop.f32.mrf.mxu0
        %v4289 = vadd.f32 %v4258, %v4288
        %4290 = vdwg.mxu0
        %4291 = vmatpush.msra.mxu0 0.0
        %4292 = vmatpush.msra.mxu0 0.0
        %4293 = vmatpush.msra.mxu0 0.0
        %4294 = vmatpush.msra.mxu0 0.0
        %4295 = vmatpush.msra.mxu0 0.0
        %4296 = vmatpush.msra.mxu0 0.0
        %4297 = vmatpush.msra.mxu0 0.0
        %4298 = vmatpush.msra.mxu0 0.0
        %4299 = vmatpush.msra.mxu0 0.0
        %4300 = vmatpush.msra.mxu0 0.0
        %4301 = vmatpush.msra.mxu0 0.0
        %4302 = vmatpush.msra.mxu0 0.0
        %4303 = vmatpush.msra.mxu0 0.0
        %4304 = vmatpush.msra.mxu0 0.0
        %v4305 = vand.u32 %v2109, 4294901760
        %v4306 = vsub.f32 %v2109, %v4305
        %v4307 = vand.u32 %v4306, 4294901760
        %4308 = vmatpush.msra.mxu0 %v4307
        %v4309 = vand.u32 %v2105, 4294901760
        %v4310 = vsub.f32 %v2105, %v4309
        %v4311 = vand.u32 %v4310, 4294901760
        %4312 = vmatpush.msra.mxu0 %v4311
        %v4313 = vand.u32 %v966, 4294901760
        %4314 = vmatmul.f32.gmra.mxu0 %v4313
        %v4315 = vpop.f32.mrf.mxu0
        %v4316 = vadd.f32 %v4283, %v4315
        %v4317 = vand.u32 %v969, 4294901760
        %4318 = vmatmul.f32.gmra.mxu0 %v4317
        %v4319 = vpop.f32.mrf.mxu0
        %v4320 = vadd.f32 %v4289, %v4319
        %4321 = vdwg.mxu0
        %4322 = vmatpush.msra.mxu0 0.0
        %4323 = vmatpush.msra.mxu0 0.0
        %4324 = vmatpush.msra.mxu0 0.0
        %4325 = vmatpush.msra.mxu0 0.0
        %4326 = vmatpush.msra.mxu0 0.0
        %4327 = vmatpush.msra.mxu0 0.0
        %4328 = vmatpush.msra.mxu0 0.0
        %4329 = vmatpush.msra.mxu0 0.0
        %4330 = vmatpush.msra.mxu0 0.0
        %4331 = vmatpush.msra.mxu0 0.0
        %4332 = vmatpush.msra.mxu0 0.0
        %4333 = vmatpush.msra.mxu0 0.0
        %4334 = vmatpush.msra.mxu0 0.0
        %4335 = vmatpush.msra.mxu0 0.0
        %v4336 = vand.u32 %v2109, 4294901760
        %4337 = vmatpush.msra.mxu0 %v4336
        %v4338 = vand.u32 %v2105, 4294901760
        %4339 = vmatpush.msra.mxu0 %v4338
        %v4340 = vand.u32 %v966, 4294901760
        %4341 = vmatmul.f32.gmra.mxu0 %v4340
        %v4342 = vpop.f32.mrf.mxu0
        %v4343 = vadd.f32 %v4316, %v4342
        %v4344 = vand.u32 %v969, 4294901760
        %4345 = vmatmul.f32.gmra.mxu0 %v4344
        %v4346 = vpop.f32.mrf.mxu0
        %v4347 = vadd.f32 %v4320, %v4346
        %4348 = vdwg.mxu0
        %4349 = vmatpush.msra.mxu0 0.0
        %4350 = vmatpush.msra.mxu0 0.0
        %4351 = vmatpush.msra.mxu0 0.0
        %4352 = vmatpush.msra.mxu0 0.0
        %4353 = vmatpush.msra.mxu0 0.0
        %4354 = vmatpush.msra.mxu0 0.0
        %4355 = vmatpush.msra.mxu0 0.0
        %4356 = vmatpush.msra.mxu0 0.0
        %4357 = vmatpush.msra.mxu0 0.0
        %4358 = vmatpush.msra.mxu0 0.0
        %4359 = vmatpush.msra.mxu0 0.0
        %4360 = vmatpush.msra.mxu0 0.0
        %4361 = vmatpush.msra.mxu0 0.0
        %4362 = vmatpush.msra.mxu0 0.0
        %v4363 = vand.u32 %v2299, 4294901760
        %4364 = vmatpush.msra.mxu0 %v4363
        %v4365 = vand.u32 %v2295, 4294901760
        %4366 = vmatpush.msra.mxu0 %v4365
        %v4367 = vand.u32 %v966, 4294901760
        %v4368 = vsub.f32 %v966, %v4367
        %v4369 = vand.u32 %v4368, 4294901760
        %v4370 = vsub.f32 %v4368, %v4369
        %v4371 = vand.u32 %v4370, 4294901760
        %4372 = vmatmul.f32.gmra.mxu0 %v4371
        %v4373 = vpop.f32.mrf.mxu0
        %v4374 = vadd.f32 0.0, %v4373
        %v4375 = vand.u32 %v969, 4294901760
        %v4376 = vsub.f32 %v969, %v4375
        %v4377 = vand.u32 %v4376, 4294901760
        %v4378 = vsub.f32 %v4376, %v4377
        %v4379 = vand.u32 %v4378, 4294901760
        %4380 = vmatmul.f32.gmra.mxu0 %v4379
        %v4381 = vpop.f32.mrf.mxu0
        %v4382 = vadd.f32 0.0, %v4381
        %4383 = vdwg.mxu0
        %4384 = vmatpush.msra.mxu0 0.0
        %4385 = vmatpush.msra.mxu0 0.0
        %4386 = vmatpush.msra.mxu0 0.0
        %4387 = vmatpush.msra.mxu0 0.0
        %4388 = vmatpush.msra.mxu0 0.0
        %4389 = vmatpush.msra.mxu0 0.0
        %4390 = vmatpush.msra.mxu0 0.0
        %4391 = vmatpush.msra.mxu0 0.0
        %4392 = vmatpush.msra.mxu0 0.0
        %4393 = vmatpush.msra.mxu0 0.0
        %4394 = vmatpush.msra.mxu0 0.0
        %4395 = vmatpush.msra.mxu0 0.0
        %4396 = vmatpush.msra.mxu0 0.0
        %4397 = vmatpush.msra.mxu0 0.0
        %v4398 = vand.u32 %v2299, 4294901760
        %v4399 = vsub.f32 %v2299, %v4398
        %v4400 = vand.u32 %v4399, 4294901760
        %v4401 = vsub.f32 %v4399, %v4400
        %v4402 = vand.u32 %v4401, 4294901760
        %4403 = vmatpush.msra.mxu0 %v4402
        %v4404 = vand.u32 %v2295, 4294901760
        %v4405 = vsub.f32 %v2295, %v4404
        %v4406 = vand.u32 %v4405, 4294901760
        %v4407 = vsub.f32 %v4405, %v4406
        %v4408 = vand.u32 %v4407, 4294901760
        %4409 = vmatpush.msra.mxu0 %v4408
        %v4410 = vand.u32 %v966, 4294901760
        %4411 = vmatmul.f32.gmra.mxu0 %v4410
        %v4412 = vpop.f32.mrf.mxu0
        %v4413 = vadd.f32 %v4374, %v4412
        %v4414 = vand.u32 %v969, 4294901760
        %4415 = vmatmul.f32.gmra.mxu0 %v4414
        %v4416 = vpop.f32.mrf.mxu0
        %v4417 = vadd.f32 %v4382, %v4416
        %4418 = vdwg.mxu0
        %4419 = vmatpush.msra.mxu0 0.0
        %4420 = vmatpush.msra.mxu0 0.0
        %4421 = vmatpush.msra.mxu0 0.0
        %4422 = vmatpush.msra.mxu0 0.0
        %4423 = vmatpush.msra.mxu0 0.0
        %4424 = vmatpush.msra.mxu0 0.0
        %4425 = vmatpush.msra.mxu0 0.0
        %4426 = vmatpush.msra.mxu0 0.0
        %4427 = vmatpush.msra.mxu0 0.0
        %4428 = vmatpush.msra.mxu0 0.0
        %4429 = vmatpush.msra.mxu0 0.0
        %4430 = vmatpush.msra.mxu0 0.0
        %4431 = vmatpush.msra.mxu0 0.0
        %4432 = vmatpush.msra.mxu0 0.0
        %v4433 = vand.u32 %v2299, 4294901760
        %v4434 = vsub.f32 %v2299, %v4433
        %4435 = vmatpush.msra.mxu0 %v4434
        %v4436 = vand.u32 %v2295, 4294901760
        %v4437 = vsub.f32 %v2295, %v4436
        %4438 = vmatpush.msra.mxu0 %v4437
        %v4439 = vand.u32 %v966, 4294901760
        %v4440 = vsub.f32 %v966, %v4439
        %4441 = vmatmul.f32.gmra.mxu0 %v4440
        %v4442 = vpop.f32.mrf.mxu0
        %v4443 = vadd.f32 %v4413, %v4442
        %v4444 = vand.u32 %v969, 4294901760
        %v4445 = vsub.f32 %v969, %v4444
        %4446 = vmatmul.f32.gmra.mxu0 %v4445
        %v4447 = vpop.f32.mrf.mxu0
        %v4448 = vadd.f32 %v4417, %v4447
        %4449 = vdwg.mxu0
        %4450 = vmatpush.msra.mxu0 0.0
        %4451 = vmatpush.msra.mxu0 0.0
        %4452 = vmatpush.msra.mxu0 0.0
        %4453 = vmatpush.msra.mxu0 0.0
        %4454 = vmatpush.msra.mxu0 0.0
        %4455 = vmatpush.msra.mxu0 0.0
        %4456 = vmatpush.msra.mxu0 0.0
        %4457 = vmatpush.msra.mxu0 0.0
        %4458 = vmatpush.msra.mxu0 0.0
        %4459 = vmatpush.msra.mxu0 0.0
        %4460 = vmatpush.msra.mxu0 0.0
        %4461 = vmatpush.msra.mxu0 0.0
        %4462 = vmatpush.msra.mxu0 0.0
        %4463 = vmatpush.msra.mxu0 0.0
        %v4464 = vand.u32 %v2299, 4294901760
        %4465 = vmatpush.msra.mxu0 %v4464
        %v4466 = vand.u32 %v2295, 4294901760
        %4467 = vmatpush.msra.mxu0 %v4466
        %v4468 = vand.u32 %v966, 4294901760
        %v4469 = vsub.f32 %v966, %v4468
        %v4470 = vand.u32 %v4469, 4294901760
        %4471 = vmatmul.f32.gmra.mxu0 %v4470
        %v4472 = vpop.f32.mrf.mxu0
        %v4473 = vadd.f32 %v4443, %v4472
        %v4474 = vand.u32 %v969, 4294901760
        %v4475 = vsub.f32 %v969, %v4474
        %v4476 = vand.u32 %v4475, 4294901760
        %4477 = vmatmul.f32.gmra.mxu0 %v4476
        %v4478 = vpop.f32.mrf.mxu0
        %v4479 = vadd.f32 %v4448, %v4478
        %4480 = vdwg.mxu0
        %4481 = vmatpush.msra.mxu0 0.0
        %4482 = vmatpush.msra.mxu0 0.0
        %4483 = vmatpush.msra.mxu0 0.0
        %4484 = vmatpush.msra.mxu0 0.0
        %4485 = vmatpush.msra.mxu0 0.0
        %4486 = vmatpush.msra.mxu0 0.0
        %4487 = vmatpush.msra.mxu0 0.0
        %4488 = vmatpush.msra.mxu0 0.0
        %4489 = vmatpush.msra.mxu0 0.0
        %4490 = vmatpush.msra.mxu0 0.0
        %4491 = vmatpush.msra.mxu0 0.0
        %4492 = vmatpush.msra.mxu0 0.0
        %4493 = vmatpush.msra.mxu0 0.0
        %4494 = vmatpush.msra.mxu0 0.0
        %v4495 = vand.u32 %v2299, 4294901760
        %v4496 = vsub.f32 %v2299, %v4495
        %v4497 = vand.u32 %v4496, 4294901760
        %4498 = vmatpush.msra.mxu0 %v4497
        %v4499 = vand.u32 %v2295, 4294901760
        %v4500 = vsub.f32 %v2295, %v4499
        %v4501 = vand.u32 %v4500, 4294901760
        %4502 = vmatpush.msra.mxu0 %v4501
        %v4503 = vand.u32 %v966, 4294901760
        %4504 = vmatmul.f32.gmra.mxu0 %v4503
        %v4505 = vpop.f32.mrf.mxu0
        %v4506 = vadd.f32 %v4473, %v4505
        %v4507 = vand.u32 %v969, 4294901760
        %4508 = vmatmul.f32.gmra.mxu0 %v4507
        %v4509 = vpop.f32.mrf.mxu0
        %v4510 = vadd.f32 %v4479, %v4509
        %4511 = vdwg.mxu0
        %4512 = vmatpush.msra.mxu0 0.0
        %4513 = vmatpush.msra.mxu0 0.0
        %4514 = vmatpush.msra.mxu0 0.0
        %4515 = vmatpush.msra.mxu0 0.0
        %4516 = vmatpush.msra.mxu0 0.0
        %4517 = vmatpush.msra.mxu0 0.0
        %4518 = vmatpush.msra.mxu0 0.0
        %4519 = vmatpush.msra.mxu0 0.0
        %4520 = vmatpush.msra.mxu0 0.0
        %4521 = vmatpush.msra.mxu0 0.0
        %4522 = vmatpush.msra.mxu0 0.0
        %4523 = vmatpush.msra.mxu0 0.0
        %4524 = vmatpush.msra.mxu0 0.0
        %4525 = vmatpush.msra.mxu0 0.0
        %v4526 = vand.u32 %v2299, 4294901760
        %4527 = vmatpush.msra.mxu0 %v4526
        %v4528 = vand.u32 %v2295, 4294901760
        %4529 = vmatpush.msra.mxu0 %v4528
        %v4530 = vand.u32 %v966, 4294901760
        %4531 = vmatmul.f32.gmra.mxu0 %v4530
        %v4532 = vpop.f32.mrf.mxu0
        %v4533 = vadd.f32 %v4506, %v4532
        %v4534 = vand.u32 %v969, 4294901760
        %4535 = vmatmul.f32.gmra.mxu0 %v4534
        %v4536 = vpop.f32.mrf.mxu0
        %v4537 = vadd.f32 %v4510, %v4536
        %4538 = vdwg.mxu0
        %4539 = vmatpush.msra.mxu0 0.0
        %4540 = vmatpush.msra.mxu0 0.0
        %4541 = vmatpush.msra.mxu0 0.0
        %4542 = vmatpush.msra.mxu0 0.0
        %4543 = vmatpush.msra.mxu0 0.0
        %4544 = vmatpush.msra.mxu0 0.0
        %4545 = vmatpush.msra.mxu0 0.0
        %4546 = vmatpush.msra.mxu0 0.0
        %4547 = vmatpush.msra.mxu0 0.0
        %4548 = vmatpush.msra.mxu0 0.0
        %4549 = vmatpush.msra.mxu0 0.0
        %4550 = vmatpush.msra.mxu0 0.0
        %4551 = vmatpush.msra.mxu0 0.0
        %4552 = vmatpush.msra.mxu0 0.0
        %v4553 = vand.u32 %v2489, 4294901760
        %4554 = vmatpush.msra.mxu0 %v4553
        %v4555 = vand.u32 %v2485, 4294901760
        %4556 = vmatpush.msra.mxu0 %v4555
        %v4557 = vand.u32 %v966, 4294901760
        %v4558 = vsub.f32 %v966, %v4557
        %v4559 = vand.u32 %v4558, 4294901760
        %v4560 = vsub.f32 %v4558, %v4559
        %v4561 = vand.u32 %v4560, 4294901760
        %4562 = vmatmul.f32.gmra.mxu0 %v4561
        %v4563 = vpop.f32.mrf.mxu0
        %v4564 = vadd.f32 0.0, %v4563
        %v4565 = vand.u32 %v969, 4294901760
        %v4566 = vsub.f32 %v969, %v4565
        %v4567 = vand.u32 %v4566, 4294901760
        %v4568 = vsub.f32 %v4566, %v4567
        %v4569 = vand.u32 %v4568, 4294901760
        %4570 = vmatmul.f32.gmra.mxu0 %v4569
        %v4571 = vpop.f32.mrf.mxu0
        %v4572 = vadd.f32 0.0, %v4571
        %4573 = vdwg.mxu0
        %4574 = vmatpush.msra.mxu0 0.0
        %4575 = vmatpush.msra.mxu0 0.0
        %4576 = vmatpush.msra.mxu0 0.0
        %4577 = vmatpush.msra.mxu0 0.0
        %4578 = vmatpush.msra.mxu0 0.0
        %4579 = vmatpush.msra.mxu0 0.0
        %4580 = vmatpush.msra.mxu0 0.0
        %4581 = vmatpush.msra.mxu0 0.0
        %4582 = vmatpush.msra.mxu0 0.0
        %4583 = vmatpush.msra.mxu0 0.0
        %4584 = vmatpush.msra.mxu0 0.0
        %4585 = vmatpush.msra.mxu0 0.0
        %4586 = vmatpush.msra.mxu0 0.0
        %4587 = vmatpush.msra.mxu0 0.0
        %v4588 = vand.u32 %v2489, 4294901760
        %v4589 = vsub.f32 %v2489, %v4588
        %v4590 = vand.u32 %v4589, 4294901760
        %v4591 = vsub.f32 %v4589, %v4590
        %v4592 = vand.u32 %v4591, 4294901760
        %4593 = vmatpush.msra.mxu0 %v4592
        %v4594 = vand.u32 %v2485, 4294901760
        %v4595 = vsub.f32 %v2485, %v4594
        %v4596 = vand.u32 %v4595, 4294901760
        %v4597 = vsub.f32 %v4595, %v4596
        %v4598 = vand.u32 %v4597, 4294901760
        %4599 = vmatpush.msra.mxu0 %v4598
        %v4600 = vand.u32 %v966, 4294901760
        %4601 = vmatmul.f32.gmra.mxu0 %v4600
        %v4602 = vpop.f32.mrf.mxu0
        %v4603 = vadd.f32 %v4564, %v4602
        %v4604 = vand.u32 %v969, 4294901760
        %4605 = vmatmul.f32.gmra.mxu0 %v4604
        %v4606 = vpop.f32.mrf.mxu0
        %v4607 = vadd.f32 %v4572, %v4606
        %4608 = vdwg.mxu0
        %4609 = vmatpush.msra.mxu0 0.0
        %4610 = vmatpush.msra.mxu0 0.0
        %4611 = vmatpush.msra.mxu0 0.0
        %4612 = vmatpush.msra.mxu0 0.0
        %4613 = vmatpush.msra.mxu0 0.0
        %4614 = vmatpush.msra.mxu0 0.0
        %4615 = vmatpush.msra.mxu0 0.0
        %4616 = vmatpush.msra.mxu0 0.0
        %4617 = vmatpush.msra.mxu0 0.0
        %4618 = vmatpush.msra.mxu0 0.0
        %4619 = vmatpush.msra.mxu0 0.0
        %4620 = vmatpush.msra.mxu0 0.0
        %4621 = vmatpush.msra.mxu0 0.0
        %4622 = vmatpush.msra.mxu0 0.0
        %v4623 = vand.u32 %v2489, 4294901760
        %v4624 = vsub.f32 %v2489, %v4623
        %4625 = vmatpush.msra.mxu0 %v4624
        %v4626 = vand.u32 %v2485, 4294901760
        %v4627 = vsub.f32 %v2485, %v4626
        %4628 = vmatpush.msra.mxu0 %v4627
        %v4629 = vand.u32 %v966, 4294901760
        %v4630 = vsub.f32 %v966, %v4629
        %4631 = vmatmul.f32.gmra.mxu0 %v4630
        %v4632 = vpop.f32.mrf.mxu0
        %v4633 = vadd.f32 %v4603, %v4632
        %v4634 = vand.u32 %v969, 4294901760
        %v4635 = vsub.f32 %v969, %v4634
        %4636 = vmatmul.f32.gmra.mxu0 %v4635
        %v4637 = vpop.f32.mrf.mxu0
        %v4638 = vadd.f32 %v4607, %v4637
        %4639 = vdwg.mxu0
        %4640 = vmatpush.msra.mxu0 0.0
        %4641 = vmatpush.msra.mxu0 0.0
        %4642 = vmatpush.msra.mxu0 0.0
        %4643 = vmatpush.msra.mxu0 0.0
        %4644 = vmatpush.msra.mxu0 0.0
        %4645 = vmatpush.msra.mxu0 0.0
        %4646 = vmatpush.msra.mxu0 0.0
        %4647 = vmatpush.msra.mxu0 0.0
        %4648 = vmatpush.msra.mxu0 0.0
        %4649 = vmatpush.msra.mxu0 0.0
        %4650 = vmatpush.msra.mxu0 0.0
        %4651 = vmatpush.msra.mxu0 0.0
        %4652 = vmatpush.msra.mxu0 0.0
        %4653 = vmatpush.msra.mxu0 0.0
        %v4654 = vand.u32 %v2489, 4294901760
        %4655 = vmatpush.msra.mxu0 %v4654
        %v4656 = vand.u32 %v2485, 4294901760
        %4657 = vmatpush.msra.mxu0 %v4656
        %v4658 = vand.u32 %v966, 4294901760
        %v4659 = vsub.f32 %v966, %v4658
        %v4660 = vand.u32 %v4659, 4294901760
        %4661 = vmatmul.f32.gmra.mxu0 %v4660
        %v4662 = vpop.f32.mrf.mxu0
        %v4663 = vadd.f32 %v4633, %v4662
        %v4664 = vand.u32 %v969, 4294901760
        %v4665 = vsub.f32 %v969, %v4664
        %v4666 = vand.u32 %v4665, 4294901760
        %4667 = vmatmul.f32.gmra.mxu0 %v4666
        %v4668 = vpop.f32.mrf.mxu0
        %v4669 = vadd.f32 %v4638, %v4668
        %4670 = vdwg.mxu0
        %4671 = vmatpush.msra.mxu0 0.0
        %4672 = vmatpush.msra.mxu0 0.0
        %4673 = vmatpush.msra.mxu0 0.0
        %4674 = vmatpush.msra.mxu0 0.0
        %4675 = vmatpush.msra.mxu0 0.0
        %4676 = vmatpush.msra.mxu0 0.0
        %4677 = vmatpush.msra.mxu0 0.0
        %4678 = vmatpush.msra.mxu0 0.0
        %4679 = vmatpush.msra.mxu0 0.0
        %4680 = vmatpush.msra.mxu0 0.0
        %4681 = vmatpush.msra.mxu0 0.0
        %4682 = vmatpush.msra.mxu0 0.0
        %4683 = vmatpush.msra.mxu0 0.0
        %4684 = vmatpush.msra.mxu0 0.0
        %v4685 = vand.u32 %v2489, 4294901760
        %v4686 = vsub.f32 %v2489, %v4685
        %v4687 = vand.u32 %v4686, 4294901760
        %4688 = vmatpush.msra.mxu0 %v4687
        %v4689 = vand.u32 %v2485, 4294901760
        %v4690 = vsub.f32 %v2485, %v4689
        %v4691 = vand.u32 %v4690, 4294901760
        %4692 = vmatpush.msra.mxu0 %v4691
        %v4693 = vand.u32 %v966, 4294901760
        %4694 = vmatmul.f32.gmra.mxu0 %v4693
        %v4695 = vpop.f32.mrf.mxu0
        %v4696 = vadd.f32 %v4663, %v4695
        %v4697 = vand.u32 %v969, 4294901760
        %4698 = vmatmul.f32.gmra.mxu0 %v4697
        %v4699 = vpop.f32.mrf.mxu0
        %v4700 = vadd.f32 %v4669, %v4699
        %4701 = vdwg.mxu0
        %4702 = vmatpush.msra.mxu0 0.0
        %4703 = vmatpush.msra.mxu0 0.0
        %4704 = vmatpush.msra.mxu0 0.0
        %4705 = vmatpush.msra.mxu0 0.0
        %4706 = vmatpush.msra.mxu0 0.0
        %4707 = vmatpush.msra.mxu0 0.0
        %4708 = vmatpush.msra.mxu0 0.0
        %4709 = vmatpush.msra.mxu0 0.0
        %4710 = vmatpush.msra.mxu0 0.0
        %4711 = vmatpush.msra.mxu0 0.0
        %4712 = vmatpush.msra.mxu0 0.0
        %4713 = vmatpush.msra.mxu0 0.0
        %4714 = vmatpush.msra.mxu0 0.0
        %4715 = vmatpush.msra.mxu0 0.0
        %v4716 = vand.u32 %v2489, 4294901760
        %4717 = vmatpush.msra.mxu0 %v4716
        %v4718 = vand.u32 %v2485, 4294901760
        %4719 = vmatpush.msra.mxu0 %v4718
        %v4720 = vand.u32 %v966, 4294901760
        %4721 = vmatmul.f32.gmra.mxu0 %v4720
        %v4722 = vpop.f32.mrf.mxu0
        %v4723 = vadd.f32 %v4696, %v4722
        %v4724 = vand.u32 %v969, 4294901760
        %4725 = vmatmul.f32.gmra.mxu0 %v4724
        %v4726 = vpop.f32.mrf.mxu0
        %v4727 = vadd.f32 %v4700, %v4726
        %4728 = vdwg.mxu0
        %v4729 = vld [vmem:[%s2 + $0x40] sm:$0xff]
        %v4730 = vld [vmem:[%s2 + $0x48] sm:$0xff]
        %v4731 = vld [vmem:[%s2 + $0x50] sm:$0xff]
        %v4732 = vld [vmem:[%s2 + $0x58] sm:$0xff]
        %v4734 = vsel %vm263, %v3393, 0
        %v4737 = vsel %vm263, %v3397, 0
        %v4740 = vsel %vm263, %v3583, 0
        %v4743 = vsel %vm263, %v3587, 0
        %v4746 = vsel %vm263, %v3773, 0
        %v4749 = vsel %vm263, %v3777, 0
        %v4752 = vsel %vm263, %v3963, 0
        %v4755 = vsel %vm263, %v3967, 0
        %v4758 = vsel %vm263, %v4153, 0
        %v4761 = vsel %vm263, %v4157, 0
        %v4764 = vsel %vm263, %v4343, 0
        %v4767 = vsel %vm263, %v4347, 0
        %v4770 = vsel %vm263, %v4533, 0
        %v4773 = vsel %vm263, %v4537, 0
        %v4776 = vsel %vm263, %v4723, 0
        %v4779 = vsel %vm263, %v4727, 0
        %4781 = vmatpush.msra.mxu0 0.0
        %4782 = vmatpush.msra.mxu0 0.0
        %4783 = vmatpush.msra.mxu0 0.0
        %4784 = vmatpush.msra.mxu0 0.0
        %4785 = vmatpush.msra.mxu0 0.0
        %4786 = vmatpush.msra.mxu0 0.0
        %4787 = vmatpush.msra.mxu0 0.0
        %4788 = vmatpush.msra.mxu0 0.0
        %4789 = vmatpush.msra.mxu0 0.0
        %4790 = vmatpush.msra.mxu0 0.0
        %4791 = vmatpush.msra.mxu0 0.0
        %4792 = vmatpush.msra.mxu0 0.0
        %v4793 = vand.u32 %v4732, 4294901760
        %4794 = vmatpush.msra.mxu0 %v4793
        %v4795 = vand.u32 %v4731, 4294901760
        %4796 = vmatpush.msra.mxu0 %v4795
        %v4797 = vand.u32 %v4730, 4294901760
        %4798 = vmatpush.msra.mxu0 %v4797
        %v4799 = vand.u32 %v4729, 4294901760
        %4800 = vmatpush.msra.mxu0 %v4799
        %v4801 = vand.u32 %v4734, 4294901760
        %v4802 = vsub.f32 %v4734, %v4801
        %v4803 = vand.u32 %v4802, 4294901760
        %v4804 = vsub.f32 %v4802, %v4803
        %v4805 = vand.u32 %v4804, 4294901760
        %4806 = vmatmul.f32.gmra.mxu0 %v4805
        %v4807 = vpop.f32.mrf.mxu0
        %v4808 = vadd.f32 0.0, %v4807
        %v4809 = vand.u32 %v4737, 4294901760
        %v4810 = vsub.f32 %v4737, %v4809
        %v4811 = vand.u32 %v4810, 4294901760
        %v4812 = vsub.f32 %v4810, %v4811
        %v4813 = vand.u32 %v4812, 4294901760
        %4814 = vmatmul.f32.gmra.mxu0 %v4813
        %v4815 = vpop.f32.mrf.mxu0
        %v4816 = vadd.f32 0.0, %v4815
        %v4817 = vand.u32 %v4740, 4294901760
        %v4818 = vsub.f32 %v4740, %v4817
        %v4819 = vand.u32 %v4818, 4294901760
        %v4820 = vsub.f32 %v4818, %v4819
        %v4821 = vand.u32 %v4820, 4294901760
        %4822 = vmatmul.f32.gmra.mxu0 %v4821
        %v4823 = vpop.f32.mrf.mxu0
        %v4824 = vadd.f32 0.0, %v4823
        %v4825 = vand.u32 %v4743, 4294901760
        %v4826 = vsub.f32 %v4743, %v4825
        %v4827 = vand.u32 %v4826, 4294901760
        %v4828 = vsub.f32 %v4826, %v4827
        %v4829 = vand.u32 %v4828, 4294901760
        %4830 = vmatmul.f32.gmra.mxu0 %v4829
        %v4831 = vpop.f32.mrf.mxu0
        %v4832 = vadd.f32 0.0, %v4831
        %v4833 = vand.u32 %v4746, 4294901760
        %v4834 = vsub.f32 %v4746, %v4833
        %v4835 = vand.u32 %v4834, 4294901760
        %v4836 = vsub.f32 %v4834, %v4835
        %v4837 = vand.u32 %v4836, 4294901760
        %4838 = vmatmul.f32.gmra.mxu0 %v4837
        %v4839 = vpop.f32.mrf.mxu0
        %v4840 = vadd.f32 0.0, %v4839
        %v4841 = vand.u32 %v4749, 4294901760
        %v4842 = vsub.f32 %v4749, %v4841
        %v4843 = vand.u32 %v4842, 4294901760
        %v4844 = vsub.f32 %v4842, %v4843
        %v4845 = vand.u32 %v4844, 4294901760
        %4846 = vmatmul.f32.gmra.mxu0 %v4845
        %v4847 = vpop.f32.mrf.mxu0
        %v4848 = vadd.f32 0.0, %v4847
        %v4849 = vand.u32 %v4752, 4294901760
        %v4850 = vsub.f32 %v4752, %v4849
        %v4851 = vand.u32 %v4850, 4294901760
        %v4852 = vsub.f32 %v4850, %v4851
        %v4853 = vand.u32 %v4852, 4294901760
        %4854 = vmatmul.f32.gmra.mxu0 %v4853
        %v4855 = vpop.f32.mrf.mxu0
        %v4856 = vadd.f32 0.0, %v4855
        %v4857 = vand.u32 %v4755, 4294901760
        %v4858 = vsub.f32 %v4755, %v4857
        %v4859 = vand.u32 %v4858, 4294901760
        %v4860 = vsub.f32 %v4858, %v4859
        %v4861 = vand.u32 %v4860, 4294901760
        %4862 = vmatmul.f32.gmra.mxu0 %v4861
        %v4863 = vpop.f32.mrf.mxu0
        %v4864 = vadd.f32 0.0, %v4863
        %v4865 = vand.u32 %v4758, 4294901760
        %v4866 = vsub.f32 %v4758, %v4865
        %v4867 = vand.u32 %v4866, 4294901760
        %v4868 = vsub.f32 %v4866, %v4867
        %v4869 = vand.u32 %v4868, 4294901760
        %4870 = vmatmul.f32.gmra.mxu0 %v4869
        %v4871 = vpop.f32.mrf.mxu0
        %v4872 = vadd.f32 0.0, %v4871
        %v4873 = vand.u32 %v4761, 4294901760
        %v4874 = vsub.f32 %v4761, %v4873
        %v4875 = vand.u32 %v4874, 4294901760
        %v4876 = vsub.f32 %v4874, %v4875
        %v4877 = vand.u32 %v4876, 4294901760
        %4878 = vmatmul.f32.gmra.mxu0 %v4877
        %v4879 = vpop.f32.mrf.mxu0
        %v4880 = vadd.f32 0.0, %v4879
        %v4881 = vand.u32 %v4764, 4294901760
        %v4882 = vsub.f32 %v4764, %v4881
        %v4883 = vand.u32 %v4882, 4294901760
        %v4884 = vsub.f32 %v4882, %v4883
        %v4885 = vand.u32 %v4884, 4294901760
        %4886 = vmatmul.f32.gmra.mxu0 %v4885
        %v4887 = vpop.f32.mrf.mxu0
        %v4888 = vadd.f32 0.0, %v4887
        %v4889 = vand.u32 %v4767, 4294901760
        %v4890 = vsub.f32 %v4767, %v4889
        %v4891 = vand.u32 %v4890, 4294901760
        %v4892 = vsub.f32 %v4890, %v4891
        %v4893 = vand.u32 %v4892, 4294901760
        %4894 = vmatmul.f32.gmra.mxu0 %v4893
        %v4895 = vpop.f32.mrf.mxu0
        %v4896 = vadd.f32 0.0, %v4895
        %v4897 = vand.u32 %v4770, 4294901760
        %v4898 = vsub.f32 %v4770, %v4897
        %v4899 = vand.u32 %v4898, 4294901760
        %v4900 = vsub.f32 %v4898, %v4899
        %v4901 = vand.u32 %v4900, 4294901760
        %4902 = vmatmul.f32.gmra.mxu0 %v4901
        %v4903 = vpop.f32.mrf.mxu0
        %v4904 = vadd.f32 0.0, %v4903
        %v4905 = vand.u32 %v4773, 4294901760
        %v4906 = vsub.f32 %v4773, %v4905
        %v4907 = vand.u32 %v4906, 4294901760
        %v4908 = vsub.f32 %v4906, %v4907
        %v4909 = vand.u32 %v4908, 4294901760
        %4910 = vmatmul.f32.gmra.mxu0 %v4909
        %v4911 = vpop.f32.mrf.mxu0
        %v4912 = vadd.f32 0.0, %v4911
        %v4913 = vand.u32 %v4776, 4294901760
        %v4914 = vsub.f32 %v4776, %v4913
        %v4915 = vand.u32 %v4914, 4294901760
        %v4916 = vsub.f32 %v4914, %v4915
        %v4917 = vand.u32 %v4916, 4294901760
        %4918 = vmatmul.f32.gmra.mxu0 %v4917
        %v4919 = vpop.f32.mrf.mxu0
        %v4920 = vadd.f32 0.0, %v4919
        %v4921 = vand.u32 %v4779, 4294901760
        %v4922 = vsub.f32 %v4779, %v4921
        %v4923 = vand.u32 %v4922, 4294901760
        %v4924 = vsub.f32 %v4922, %v4923
        %v4925 = vand.u32 %v4924, 4294901760
        %4926 = vmatmul.f32.gmra.mxu0 %v4925
        %v4927 = vpop.f32.mrf.mxu0
        %v4928 = vadd.f32 0.0, %v4927
        %4929 = vdwg.mxu0
        %4930 = vmatpush.msra.mxu0 0.0
        %4931 = vmatpush.msra.mxu0 0.0
        %4932 = vmatpush.msra.mxu0 0.0
        %4933 = vmatpush.msra.mxu0 0.0
        %4934 = vmatpush.msra.mxu0 0.0
        %4935 = vmatpush.msra.mxu0 0.0
        %4936 = vmatpush.msra.mxu0 0.0
        %4937 = vmatpush.msra.mxu0 0.0
        %4938 = vmatpush.msra.mxu0 0.0
        %4939 = vmatpush.msra.mxu0 0.0
        %4940 = vmatpush.msra.mxu0 0.0
        %4941 = vmatpush.msra.mxu0 0.0
        %v4942 = vand.u32 %v4732, 4294901760
        %v4943 = vsub.f32 %v4732, %v4942
        %v4944 = vand.u32 %v4943, 4294901760
        %v4945 = vsub.f32 %v4943, %v4944
        %v4946 = vand.u32 %v4945, 4294901760
        %4947 = vmatpush.msra.mxu0 %v4946
        %v4948 = vand.u32 %v4731, 4294901760
        %v4949 = vsub.f32 %v4731, %v4948
        %v4950 = vand.u32 %v4949, 4294901760
        %v4951 = vsub.f32 %v4949, %v4950
        %v4952 = vand.u32 %v4951, 4294901760
        %4953 = vmatpush.msra.mxu0 %v4952
        %v4954 = vand.u32 %v4730, 4294901760
        %v4955 = vsub.f32 %v4730, %v4954
        %v4956 = vand.u32 %v4955, 4294901760
        %v4957 = vsub.f32 %v4955, %v4956
        %v4958 = vand.u32 %v4957, 4294901760
        %4959 = vmatpush.msra.mxu0 %v4958
        %v4960 = vand.u32 %v4729, 4294901760
        %v4961 = vsub.f32 %v4729, %v4960
        %v4962 = vand.u32 %v4961, 4294901760
        %v4963 = vsub.f32 %v4961, %v4962
        %v4964 = vand.u32 %v4963, 4294901760
        %4965 = vmatpush.msra.mxu0 %v4964
        %v4966 = vand.u32 %v4734, 4294901760
        %4967 = vmatmul.f32.gmra.mxu0 %v4966
        %v4968 = vpop.f32.mrf.mxu0
        %v4969 = vadd.f32 %v4808, %v4968
        %v4970 = vand.u32 %v4737, 4294901760
        %4971 = vmatmul.f32.gmra.mxu0 %v4970
        %v4972 = vpop.f32.mrf.mxu0
        %v4973 = vadd.f32 %v4816, %v4972
        %v4974 = vand.u32 %v4740, 4294901760
        %4975 = vmatmul.f32.gmra.mxu0 %v4974
        %v4976 = vpop.f32.mrf.mxu0
        %v4977 = vadd.f32 %v4824, %v4976
        %v4978 = vand.u32 %v4743, 4294901760
        %4979 = vmatmul.f32.gmra.mxu0 %v4978
        %v4980 = vpop.f32.mrf.mxu0
        %v4981 = vadd.f32 %v4832, %v4980
        %v4982 = vand.u32 %v4746, 4294901760
        %4983 = vmatmul.f32.gmra.mxu0 %v4982
        %v4984 = vpop.f32.mrf.mxu0
        %v4985 = vadd.f32 %v4840, %v4984
        %v4986 = vand.u32 %v4749, 4294901760
        %4987 = vmatmul.f32.gmra.mxu0 %v4986
        %v4988 = vpop.f32.mrf.mxu0
        %v4989 = vadd.f32 %v4848, %v4988
        %v4990 = vand.u32 %v4752, 4294901760
        %4991 = vmatmul.f32.gmra.mxu0 %v4990
        %v4992 = vpop.f32.mrf.mxu0
        %v4993 = vadd.f32 %v4856, %v4992
        %v4994 = vand.u32 %v4755, 4294901760
        %4995 = vmatmul.f32.gmra.mxu0 %v4994
        %v4996 = vpop.f32.mrf.mxu0
        %v4997 = vadd.f32 %v4864, %v4996
        %v4998 = vand.u32 %v4758, 4294901760
        %4999 = vmatmul.f32.gmra.mxu0 %v4998
        %v5000 = vpop.f32.mrf.mxu0
        %v5001 = vadd.f32 %v4872, %v5000
        %v5002 = vand.u32 %v4761, 4294901760
        %5003 = vmatmul.f32.gmra.mxu0 %v5002
        %v5004 = vpop.f32.mrf.mxu0
        %v5005 = vadd.f32 %v4880, %v5004
        %v5006 = vand.u32 %v4764, 4294901760
        %5007 = vmatmul.f32.gmra.mxu0 %v5006
        %v5008 = vpop.f32.mrf.mxu0
        %v5009 = vadd.f32 %v4888, %v5008
        %v5010 = vand.u32 %v4767, 4294901760
        %5011 = vmatmul.f32.gmra.mxu0 %v5010
        %v5012 = vpop.f32.mrf.mxu0
        %v5013 = vadd.f32 %v4896, %v5012
        %v5014 = vand.u32 %v4770, 4294901760
        %5015 = vmatmul.f32.gmra.mxu0 %v5014
        %v5016 = vpop.f32.mrf.mxu0
        %v5017 = vadd.f32 %v4904, %v5016
        %v5018 = vand.u32 %v4773, 4294901760
        %5019 = vmatmul.f32.gmra.mxu0 %v5018
        %v5020 = vpop.f32.mrf.mxu0
        %v5021 = vadd.f32 %v4912, %v5020
        %v5022 = vand.u32 %v4776, 4294901760
        %5023 = vmatmul.f32.gmra.mxu0 %v5022
        %v5024 = vpop.f32.mrf.mxu0
        %v5025 = vadd.f32 %v4920, %v5024
        %v5026 = vand.u32 %v4779, 4294901760
        %5027 = vmatmul.f32.gmra.mxu0 %v5026
        %v5028 = vpop.f32.mrf.mxu0
        %v5029 = vadd.f32 %v4928, %v5028
        %5030 = vdwg.mxu0
        %5031 = vmatpush.msra.mxu0 0.0
        %5032 = vmatpush.msra.mxu0 0.0
        %5033 = vmatpush.msra.mxu0 0.0
        %5034 = vmatpush.msra.mxu0 0.0
        %5035 = vmatpush.msra.mxu0 0.0
        %5036 = vmatpush.msra.mxu0 0.0
        %5037 = vmatpush.msra.mxu0 0.0
        %5038 = vmatpush.msra.mxu0 0.0
        %5039 = vmatpush.msra.mxu0 0.0
        %5040 = vmatpush.msra.mxu0 0.0
        %5041 = vmatpush.msra.mxu0 0.0
        %5042 = vmatpush.msra.mxu0 0.0
        %v5043 = vand.u32 %v4732, 4294901760
        %v5044 = vsub.f32 %v4732, %v5043
        %5045 = vmatpush.msra.mxu0 %v5044
        %v5046 = vand.u32 %v4731, 4294901760
        %v5047 = vsub.f32 %v4731, %v5046
        %5048 = vmatpush.msra.mxu0 %v5047
        %v5049 = vand.u32 %v4730, 4294901760
        %v5050 = vsub.f32 %v4730, %v5049
        %5051 = vmatpush.msra.mxu0 %v5050
        %v5052 = vand.u32 %v4729, 4294901760
        %v5053 = vsub.f32 %v4729, %v5052
        %5054 = vmatpush.msra.mxu0 %v5053
        %v5055 = vand.u32 %v4734, 4294901760
        %v5056 = vsub.f32 %v4734, %v5055
        %5057 = vmatmul.f32.gmra.mxu0 %v5056
        %v5058 = vpop.f32.mrf.mxu0
        %v5059 = vadd.f32 %v4969, %v5058
        %v5060 = vand.u32 %v4737, 4294901760
        %v5061 = vsub.f32 %v4737, %v5060
        %5062 = vmatmul.f32.gmra.mxu0 %v5061
        %v5063 = vpop.f32.mrf.mxu0
        %v5064 = vadd.f32 %v4973, %v5063
        %v5065 = vand.u32 %v4740, 4294901760
        %v5066 = vsub.f32 %v4740, %v5065
        %5067 = vmatmul.f32.gmra.mxu0 %v5066
        %v5068 = vpop.f32.mrf.mxu0
        %v5069 = vadd.f32 %v4977, %v5068
        %v5070 = vand.u32 %v4743, 4294901760
        %v5071 = vsub.f32 %v4743, %v5070
        %5072 = vmatmul.f32.gmra.mxu0 %v5071
        %v5073 = vpop.f32.mrf.mxu0
        %v5074 = vadd.f32 %v4981, %v5073
        %v5075 = vand.u32 %v4746, 4294901760
        %v5076 = vsub.f32 %v4746, %v5075
        %5077 = vmatmul.f32.gmra.mxu0 %v5076
        %v5078 = vpop.f32.mrf.mxu0
        %v5079 = vadd.f32 %v4985, %v5078
        %v5080 = vand.u32 %v4749, 4294901760
        %v5081 = vsub.f32 %v4749, %v5080
        %5082 = vmatmul.f32.gmra.mxu0 %v5081
        %v5083 = vpop.f32.mrf.mxu0
        %v5084 = vadd.f32 %v4989, %v5083
        %v5085 = vand.u32 %v4752, 4294901760
        %v5086 = vsub.f32 %v4752, %v5085
        %5087 = vmatmul.f32.gmra.mxu0 %v5086
        %v5088 = vpop.f32.mrf.mxu0
        %v5089 = vadd.f32 %v4993, %v5088
        %v5090 = vand.u32 %v4755, 4294901760
        %v5091 = vsub.f32 %v4755, %v5090
        %5092 = vmatmul.f32.gmra.mxu0 %v5091
        %v5093 = vpop.f32.mrf.mxu0
        %v5094 = vadd.f32 %v4997, %v5093
        %v5095 = vand.u32 %v4758, 4294901760
        %v5096 = vsub.f32 %v4758, %v5095
        %5097 = vmatmul.f32.gmra.mxu0 %v5096
        %v5098 = vpop.f32.mrf.mxu0
        %v5099 = vadd.f32 %v5001, %v5098
        %v5100 = vand.u32 %v4761, 4294901760
        %v5101 = vsub.f32 %v4761, %v5100
        %5102 = vmatmul.f32.gmra.mxu0 %v5101
        %v5103 = vpop.f32.mrf.mxu0
        %v5104 = vadd.f32 %v5005, %v5103
        %v5105 = vand.u32 %v4764, 4294901760
        %v5106 = vsub.f32 %v4764, %v5105
        %5107 = vmatmul.f32.gmra.mxu0 %v5106
        %v5108 = vpop.f32.mrf.mxu0
        %v5109 = vadd.f32 %v5009, %v5108
        %v5110 = vand.u32 %v4767, 4294901760
        %v5111 = vsub.f32 %v4767, %v5110
        %5112 = vmatmul.f32.gmra.mxu0 %v5111
        %v5113 = vpop.f32.mrf.mxu0
        %v5114 = vadd.f32 %v5013, %v5113
        %v5115 = vand.u32 %v4770, 4294901760
        %v5116 = vsub.f32 %v4770, %v5115
        %5117 = vmatmul.f32.gmra.mxu0 %v5116
        %v5118 = vpop.f32.mrf.mxu0
        %v5119 = vadd.f32 %v5017, %v5118
        %v5120 = vand.u32 %v4773, 4294901760
        %v5121 = vsub.f32 %v4773, %v5120
        %5122 = vmatmul.f32.gmra.mxu0 %v5121
        %v5123 = vpop.f32.mrf.mxu0
        %v5124 = vadd.f32 %v5021, %v5123
        %v5125 = vand.u32 %v4776, 4294901760
        %v5126 = vsub.f32 %v4776, %v5125
        %5127 = vmatmul.f32.gmra.mxu0 %v5126
        %v5128 = vpop.f32.mrf.mxu0
        %v5129 = vadd.f32 %v5025, %v5128
        %v5130 = vand.u32 %v4779, 4294901760
        %v5131 = vsub.f32 %v4779, %v5130
        %5132 = vmatmul.f32.gmra.mxu0 %v5131
        %v5133 = vpop.f32.mrf.mxu0
        %v5134 = vadd.f32 %v5029, %v5133
        %5135 = vdwg.mxu0
        %5136 = vmatpush.msra.mxu0 0.0
        %5137 = vmatpush.msra.mxu0 0.0
        %5138 = vmatpush.msra.mxu0 0.0
        %5139 = vmatpush.msra.mxu0 0.0
        %5140 = vmatpush.msra.mxu0 0.0
        %5141 = vmatpush.msra.mxu0 0.0
        %5142 = vmatpush.msra.mxu0 0.0
        %5143 = vmatpush.msra.mxu0 0.0
        %5144 = vmatpush.msra.mxu0 0.0
        %5145 = vmatpush.msra.mxu0 0.0
        %5146 = vmatpush.msra.mxu0 0.0
        %5147 = vmatpush.msra.mxu0 0.0
        %v5148 = vand.u32 %v4732, 4294901760
        %5149 = vmatpush.msra.mxu0 %v5148
        %v5150 = vand.u32 %v4731, 4294901760
        %5151 = vmatpush.msra.mxu0 %v5150
        %v5152 = vand.u32 %v4730, 4294901760
        %5153 = vmatpush.msra.mxu0 %v5152
        %v5154 = vand.u32 %v4729, 4294901760
        %5155 = vmatpush.msra.mxu0 %v5154
        %v5156 = vand.u32 %v4734, 4294901760
        %v5157 = vsub.f32 %v4734, %v5156
        %v5158 = vand.u32 %v5157, 4294901760
        %5159 = vmatmul.f32.gmra.mxu0 %v5158
        %v5160 = vpop.f32.mrf.mxu0
        %v5161 = vadd.f32 %v5059, %v5160
        %v5162 = vand.u32 %v4737, 4294901760
        %v5163 = vsub.f32 %v4737, %v5162
        %v5164 = vand.u32 %v5163, 4294901760
        %5165 = vmatmul.f32.gmra.mxu0 %v5164
        %v5166 = vpop.f32.mrf.mxu0
        %v5167 = vadd.f32 %v5064, %v5166
        %v5168 = vand.u32 %v4740, 4294901760
        %v5169 = vsub.f32 %v4740, %v5168
        %v5170 = vand.u32 %v5169, 4294901760
        %5171 = vmatmul.f32.gmra.mxu0 %v5170
        %v5172 = vpop.f32.mrf.mxu0
        %v5173 = vadd.f32 %v5069, %v5172
        %v5174 = vand.u32 %v4743, 4294901760
        %v5175 = vsub.f32 %v4743, %v5174
        %v5176 = vand.u32 %v5175, 4294901760
        %5177 = vmatmul.f32.gmra.mxu0 %v5176
        %v5178 = vpop.f32.mrf.mxu0
        %v5179 = vadd.f32 %v5074, %v5178
        %v5180 = vand.u32 %v4746, 4294901760
        %v5181 = vsub.f32 %v4746, %v5180
        %v5182 = vand.u32 %v5181, 4294901760
        %5183 = vmatmul.f32.gmra.mxu0 %v5182
        %v5184 = vpop.f32.mrf.mxu0
        %v5185 = vadd.f32 %v5079, %v5184
        %v5186 = vand.u32 %v4749, 4294901760
        %v5187 = vsub.f32 %v4749, %v5186
        %v5188 = vand.u32 %v5187, 4294901760
        %5189 = vmatmul.f32.gmra.mxu0 %v5188
        %v5190 = vpop.f32.mrf.mxu0
        %v5191 = vadd.f32 %v5084, %v5190
        %v5192 = vand.u32 %v4752, 4294901760
        %v5193 = vsub.f32 %v4752, %v5192
        %v5194 = vand.u32 %v5193, 4294901760
        %5195 = vmatmul.f32.gmra.mxu0 %v5194
        %v5196 = vpop.f32.mrf.mxu0
        %v5197 = vadd.f32 %v5089, %v5196
        %v5198 = vand.u32 %v4755, 4294901760
        %v5199 = vsub.f32 %v4755, %v5198
        %v5200 = vand.u32 %v5199, 4294901760
        %5201 = vmatmul.f32.gmra.mxu0 %v5200
        %v5202 = vpop.f32.mrf.mxu0
        %v5203 = vadd.f32 %v5094, %v5202
        %v5204 = vand.u32 %v4758, 4294901760
        %v5205 = vsub.f32 %v4758, %v5204
        %v5206 = vand.u32 %v5205, 4294901760
        %5207 = vmatmul.f32.gmra.mxu0 %v5206
        %v5208 = vpop.f32.mrf.mxu0
        %v5209 = vadd.f32 %v5099, %v5208
        %v5210 = vand.u32 %v4761, 4294901760
        %v5211 = vsub.f32 %v4761, %v5210
        %v5212 = vand.u32 %v5211, 4294901760
        %5213 = vmatmul.f32.gmra.mxu0 %v5212
        %v5214 = vpop.f32.mrf.mxu0
        %v5215 = vadd.f32 %v5104, %v5214
        %v5216 = vand.u32 %v4764, 4294901760
        %v5217 = vsub.f32 %v4764, %v5216
        %v5218 = vand.u32 %v5217, 4294901760
        %5219 = vmatmul.f32.gmra.mxu0 %v5218
        %v5220 = vpop.f32.mrf.mxu0
        %v5221 = vadd.f32 %v5109, %v5220
        %v5222 = vand.u32 %v4767, 4294901760
        %v5223 = vsub.f32 %v4767, %v5222
        %v5224 = vand.u32 %v5223, 4294901760
        %5225 = vmatmul.f32.gmra.mxu0 %v5224
        %v5226 = vpop.f32.mrf.mxu0
        %v5227 = vadd.f32 %v5114, %v5226
        %v5228 = vand.u32 %v4770, 4294901760
        %v5229 = vsub.f32 %v4770, %v5228
        %v5230 = vand.u32 %v5229, 4294901760
        %5231 = vmatmul.f32.gmra.mxu0 %v5230
        %v5232 = vpop.f32.mrf.mxu0
        %v5233 = vadd.f32 %v5119, %v5232
        %v5234 = vand.u32 %v4773, 4294901760
        %v5235 = vsub.f32 %v4773, %v5234
        %v5236 = vand.u32 %v5235, 4294901760
        %5237 = vmatmul.f32.gmra.mxu0 %v5236
        %v5238 = vpop.f32.mrf.mxu0
        %v5239 = vadd.f32 %v5124, %v5238
        %v5240 = vand.u32 %v4776, 4294901760
        %v5241 = vsub.f32 %v4776, %v5240
        %v5242 = vand.u32 %v5241, 4294901760
        %5243 = vmatmul.f32.gmra.mxu0 %v5242
        %v5244 = vpop.f32.mrf.mxu0
        %v5245 = vadd.f32 %v5129, %v5244
        %v5246 = vand.u32 %v4779, 4294901760
        %v5247 = vsub.f32 %v4779, %v5246
        %v5248 = vand.u32 %v5247, 4294901760
        %5249 = vmatmul.f32.gmra.mxu0 %v5248
        %v5250 = vpop.f32.mrf.mxu0
        %v5251 = vadd.f32 %v5134, %v5250
        %5252 = vdwg.mxu0
        %5253 = vmatpush.msra.mxu0 0.0
        %5254 = vmatpush.msra.mxu0 0.0
        %5255 = vmatpush.msra.mxu0 0.0
        %5256 = vmatpush.msra.mxu0 0.0
        %5257 = vmatpush.msra.mxu0 0.0
        %5258 = vmatpush.msra.mxu0 0.0
        %5259 = vmatpush.msra.mxu0 0.0
        %5260 = vmatpush.msra.mxu0 0.0
        %5261 = vmatpush.msra.mxu0 0.0
        %5262 = vmatpush.msra.mxu0 0.0
        %5263 = vmatpush.msra.mxu0 0.0
        %5264 = vmatpush.msra.mxu0 0.0
        %v5265 = vand.u32 %v4732, 4294901760
        %v5266 = vsub.f32 %v4732, %v5265
        %v5267 = vand.u32 %v5266, 4294901760
        %5268 = vmatpush.msra.mxu0 %v5267
        %v5269 = vand.u32 %v4731, 4294901760
        %v5270 = vsub.f32 %v4731, %v5269
        %v5271 = vand.u32 %v5270, 4294901760
        %5272 = vmatpush.msra.mxu0 %v5271
        %v5273 = vand.u32 %v4730, 4294901760
        %v5274 = vsub.f32 %v4730, %v5273
        %v5275 = vand.u32 %v5274, 4294901760
        %5276 = vmatpush.msra.mxu0 %v5275
        %v5277 = vand.u32 %v4729, 4294901760
        %v5278 = vsub.f32 %v4729, %v5277
        %v5279 = vand.u32 %v5278, 4294901760
        %5280 = vmatpush.msra.mxu0 %v5279
        %v5281 = vand.u32 %v4734, 4294901760
        %5282 = vmatmul.f32.gmra.mxu0 %v5281
        %v5283 = vpop.f32.mrf.mxu0
        %v5284 = vadd.f32 %v5161, %v5283
        %v5285 = vand.u32 %v4737, 4294901760
        %5286 = vmatmul.f32.gmra.mxu0 %v5285
        %v5287 = vpop.f32.mrf.mxu0
        %v5288 = vadd.f32 %v5167, %v5287
        %v5289 = vand.u32 %v4740, 4294901760
        %5290 = vmatmul.f32.gmra.mxu0 %v5289
        %v5291 = vpop.f32.mrf.mxu0
        %v5292 = vadd.f32 %v5173, %v5291
        %v5293 = vand.u32 %v4743, 4294901760
        %5294 = vmatmul.f32.gmra.mxu0 %v5293
        %v5295 = vpop.f32.mrf.mxu0
        %v5296 = vadd.f32 %v5179, %v5295
        %v5297 = vand.u32 %v4746, 4294901760
        %5298 = vmatmul.f32.gmra.mxu0 %v5297
        %v5299 = vpop.f32.mrf.mxu0
        %v5300 = vadd.f32 %v5185, %v5299
        %v5301 = vand.u32 %v4749, 4294901760
        %5302 = vmatmul.f32.gmra.mxu0 %v5301
        %v5303 = vpop.f32.mrf.mxu0
        %v5304 = vadd.f32 %v5191, %v5303
        %v5305 = vand.u32 %v4752, 4294901760
        %5306 = vmatmul.f32.gmra.mxu0 %v5305
        %v5307 = vpop.f32.mrf.mxu0
        %v5308 = vadd.f32 %v5197, %v5307
        %v5309 = vand.u32 %v4755, 4294901760
        %5310 = vmatmul.f32.gmra.mxu0 %v5309
        %v5311 = vpop.f32.mrf.mxu0
        %v5312 = vadd.f32 %v5203, %v5311
        %v5313 = vand.u32 %v4758, 4294901760
        %5314 = vmatmul.f32.gmra.mxu0 %v5313
        %v5315 = vpop.f32.mrf.mxu0
        %v5316 = vadd.f32 %v5209, %v5315
        %v5317 = vand.u32 %v4761, 4294901760
        %5318 = vmatmul.f32.gmra.mxu0 %v5317
        %v5319 = vpop.f32.mrf.mxu0
        %v5320 = vadd.f32 %v5215, %v5319
        %v5321 = vand.u32 %v4764, 4294901760
        %5322 = vmatmul.f32.gmra.mxu0 %v5321
        %v5323 = vpop.f32.mrf.mxu0
        %v5324 = vadd.f32 %v5221, %v5323
        %v5325 = vand.u32 %v4767, 4294901760
        %5326 = vmatmul.f32.gmra.mxu0 %v5325
        %v5327 = vpop.f32.mrf.mxu0
        %v5328 = vadd.f32 %v5227, %v5327
        %v5329 = vand.u32 %v4770, 4294901760
        %5330 = vmatmul.f32.gmra.mxu0 %v5329
        %v5331 = vpop.f32.mrf.mxu0
        %v5332 = vadd.f32 %v5233, %v5331
        %v5333 = vand.u32 %v4773, 4294901760
        %5334 = vmatmul.f32.gmra.mxu0 %v5333
        %v5335 = vpop.f32.mrf.mxu0
        %v5336 = vadd.f32 %v5239, %v5335
        %v5337 = vand.u32 %v4776, 4294901760
        %5338 = vmatmul.f32.gmra.mxu0 %v5337
        %v5339 = vpop.f32.mrf.mxu0
        %v5340 = vadd.f32 %v5245, %v5339
        %v5341 = vand.u32 %v4779, 4294901760
        %5342 = vmatmul.f32.gmra.mxu0 %v5341
        %v5343 = vpop.f32.mrf.mxu0
        %v5344 = vadd.f32 %v5251, %v5343
        %5345 = vdwg.mxu0
        %5346 = vmatpush.msra.mxu0 0.0
        %5347 = vmatpush.msra.mxu0 0.0
        %5348 = vmatpush.msra.mxu0 0.0
        %5349 = vmatpush.msra.mxu0 0.0
        %5350 = vmatpush.msra.mxu0 0.0
        %5351 = vmatpush.msra.mxu0 0.0
        %5352 = vmatpush.msra.mxu0 0.0
        %5353 = vmatpush.msra.mxu0 0.0
        %5354 = vmatpush.msra.mxu0 0.0
        %5355 = vmatpush.msra.mxu0 0.0
        %5356 = vmatpush.msra.mxu0 0.0
        %5357 = vmatpush.msra.mxu0 0.0
        %v5358 = vand.u32 %v4732, 4294901760
        %5359 = vmatpush.msra.mxu0 %v5358
        %v5360 = vand.u32 %v4731, 4294901760
        %5361 = vmatpush.msra.mxu0 %v5360
        %v5362 = vand.u32 %v4730, 4294901760
        %5363 = vmatpush.msra.mxu0 %v5362
        %v5364 = vand.u32 %v4729, 4294901760
        %5365 = vmatpush.msra.mxu0 %v5364
        %v5366 = vand.u32 %v4734, 4294901760
        %5367 = vmatmul.f32.gmra.mxu0 %v5366
        %v5368 = vpop.f32.mrf.mxu0
        %v5369 = vadd.f32 %v5284, %v5368
        %v5370 = vand.u32 %v4737, 4294901760
        %5371 = vmatmul.f32.gmra.mxu0 %v5370
        %v5372 = vpop.f32.mrf.mxu0
        %v5373 = vadd.f32 %v5288, %v5372
        %v5374 = vand.u32 %v4740, 4294901760
        %5375 = vmatmul.f32.gmra.mxu0 %v5374
        %v5376 = vpop.f32.mrf.mxu0
        %v5377 = vadd.f32 %v5292, %v5376
        %v5378 = vand.u32 %v4743, 4294901760
        %5379 = vmatmul.f32.gmra.mxu0 %v5378
        %v5380 = vpop.f32.mrf.mxu0
        %v5381 = vadd.f32 %v5296, %v5380
        %v5382 = vand.u32 %v4746, 4294901760
        %5383 = vmatmul.f32.gmra.mxu0 %v5382
        %v5384 = vpop.f32.mrf.mxu0
        %v5385 = vadd.f32 %v5300, %v5384
        %v5386 = vand.u32 %v4749, 4294901760
        %5387 = vmatmul.f32.gmra.mxu0 %v5386
        %v5388 = vpop.f32.mrf.mxu0
        %v5389 = vadd.f32 %v5304, %v5388
        %v5390 = vand.u32 %v4752, 4294901760
        %5391 = vmatmul.f32.gmra.mxu0 %v5390
        %v5392 = vpop.f32.mrf.mxu0
        %v5393 = vadd.f32 %v5308, %v5392
        %v5394 = vand.u32 %v4755, 4294901760
        %5395 = vmatmul.f32.gmra.mxu0 %v5394
        %v5396 = vpop.f32.mrf.mxu0
        %v5397 = vadd.f32 %v5312, %v5396
        %v5398 = vand.u32 %v4758, 4294901760
        %5399 = vmatmul.f32.gmra.mxu0 %v5398
        %v5400 = vpop.f32.mrf.mxu0
        %v5401 = vadd.f32 %v5316, %v5400
        %v5402 = vand.u32 %v4761, 4294901760
        %5403 = vmatmul.f32.gmra.mxu0 %v5402
        %v5404 = vpop.f32.mrf.mxu0
        %v5405 = vadd.f32 %v5320, %v5404
        %v5406 = vand.u32 %v4764, 4294901760
        %5407 = vmatmul.f32.gmra.mxu0 %v5406
        %v5408 = vpop.f32.mrf.mxu0
        %v5409 = vadd.f32 %v5324, %v5408
        %v5410 = vand.u32 %v4767, 4294901760
        %5411 = vmatmul.f32.gmra.mxu0 %v5410
        %v5412 = vpop.f32.mrf.mxu0
        %v5413 = vadd.f32 %v5328, %v5412
        %v5414 = vand.u32 %v4770, 4294901760
        %5415 = vmatmul.f32.gmra.mxu0 %v5414
        %v5416 = vpop.f32.mrf.mxu0
        %v5417 = vadd.f32 %v5332, %v5416
        %v5418 = vand.u32 %v4773, 4294901760
        %5419 = vmatmul.f32.gmra.mxu0 %v5418
        %v5420 = vpop.f32.mrf.mxu0
        %v5421 = vadd.f32 %v5336, %v5420
        %v5422 = vand.u32 %v4776, 4294901760
        %5423 = vmatmul.f32.gmra.mxu0 %v5422
        %v5424 = vpop.f32.mrf.mxu0
        %v5425 = vadd.f32 %v5340, %v5424
        %v5426 = vand.u32 %v4779, 4294901760
        %5427 = vmatmul.f32.gmra.mxu0 %v5426
        %v5428 = vpop.f32.mrf.mxu0
        %v5429 = vadd.f32 %v5344, %v5428
        %5430 = vdwg.mxu0
        %v5431 = vadd.f32 %v3193, %v5369
        %v5432 = vadd.f32 %v3194, %v5373
        %v5433 = vadd.f32 %v3195, %v5377
        %v5434 = vadd.f32 %v3196, %v5381
        %v5435 = vadd.f32 %v3197, %v5385
        %v5436 = vadd.f32 %v3198, %v5389
        %v5437 = vadd.f32 %v3199, %v5393
        %v5438 = vadd.f32 %v3200, %v5397
        %v5439 = vadd.f32 %v3201, %v5401
        %v5440 = vadd.f32 %v3202, %v5405
        %v5441 = vadd.f32 %v3203, %v5409
        %v5442 = vadd.f32 %v3204, %v5413
        %v5443 = vadd.f32 %v3205, %v5417
        %v5444 = vadd.f32 %v3206, %v5421
        %v5445 = vadd.f32 %v3207, %v5425
        %v5446 = vadd.f32 %v3208, %v5429
        %s5447 = scalar_lea.vmem %s1, 16
        %v5448 = vld [vmem:[%s5447] sm:$0xff]
        %v5449 = vld [vmem:[%s5447 + $0x8] sm:$0xff]
        %v5451 = vsel %vm964, %v5448, 0
        %v5454 = vsel %vm964, %v5449, 0
        %5456 = vmatpush.msra.mxu0 0.0
        %5457 = vmatpush.msra.mxu0 0.0
        %5458 = vmatpush.msra.mxu0 0.0
        %5459 = vmatpush.msra.mxu0 0.0
        %5460 = vmatpush.msra.mxu0 0.0
        %5461 = vmatpush.msra.mxu0 0.0
        %5462 = vmatpush.msra.mxu0 0.0
        %5463 = vmatpush.msra.mxu0 0.0
        %5464 = vmatpush.msra.mxu0 0.0
        %5465 = vmatpush.msra.mxu0 0.0
        %5466 = vmatpush.msra.mxu0 0.0
        %5467 = vmatpush.msra.mxu0 0.0
        %5468 = vmatpush.msra.mxu0 0.0
        %5469 = vmatpush.msra.mxu0 0.0
        %v5470 = vand.u32 %v240, 4294901760
        %5471 = vmatpush.msra.mxu0 %v5470
        %v5472 = vand.u32 %v239, 4294901760
        %5473 = vmatpush.msra.mxu0 %v5472
        %v5474 = vand.u32 %v5451, 4294901760
        %v5475 = vsub.f32 %v5451, %v5474
        %v5476 = vand.u32 %v5475, 4294901760
        %v5477 = vsub.f32 %v5475, %v5476
        %v5478 = vand.u32 %v5477, 4294901760
        %5479 = vmatmul.f32.gmra.mxu0 %v5478
        %v5480 = vpop.f32.mrf.mxu0
        %v5481 = vadd.f32 0.0, %v5480
        %v5482 = vand.u32 %v5454, 4294901760
        %v5483 = vsub.f32 %v5454, %v5482
        %v5484 = vand.u32 %v5483, 4294901760
        %v5485 = vsub.f32 %v5483, %v5484
        %v5486 = vand.u32 %v5485, 4294901760
        %5487 = vmatmul.f32.gmra.mxu0 %v5486
        %v5488 = vpop.f32.mrf.mxu0
        %v5489 = vadd.f32 0.0, %v5488
        %5490 = vdwg.mxu0
        %5491 = vmatpush.msra.mxu0 0.0
        %5492 = vmatpush.msra.mxu0 0.0
        %5493 = vmatpush.msra.mxu0 0.0
        %5494 = vmatpush.msra.mxu0 0.0
        %5495 = vmatpush.msra.mxu0 0.0
        %5496 = vmatpush.msra.mxu0 0.0
        %5497 = vmatpush.msra.mxu0 0.0
        %5498 = vmatpush.msra.mxu0 0.0
        %5499 = vmatpush.msra.mxu0 0.0
        %5500 = vmatpush.msra.mxu0 0.0
        %5501 = vmatpush.msra.mxu0 0.0
        %5502 = vmatpush.msra.mxu0 0.0
        %5503 = vmatpush.msra.mxu0 0.0
        %5504 = vmatpush.msra.mxu0 0.0
        %v5505 = vand.u32 %v240, 4294901760
        %v5506 = vsub.f32 %v240, %v5505
        %v5507 = vand.u32 %v5506, 4294901760
        %v5508 = vsub.f32 %v5506, %v5507
        %v5509 = vand.u32 %v5508, 4294901760
        %5510 = vmatpush.msra.mxu0 %v5509
        %v5511 = vand.u32 %v239, 4294901760
        %v5512 = vsub.f32 %v239, %v5511
        %v5513 = vand.u32 %v5512, 4294901760
        %v5514 = vsub.f32 %v5512, %v5513
        %v5515 = vand.u32 %v5514, 4294901760
        %5516 = vmatpush.msra.mxu0 %v5515
        %v5517 = vand.u32 %v5451, 4294901760
        %5518 = vmatmul.f32.gmra.mxu0 %v5517
        %v5519 = vpop.f32.mrf.mxu0
        %v5520 = vadd.f32 %v5481, %v5519
        %v5521 = vand.u32 %v5454, 4294901760
        %5522 = vmatmul.f32.gmra.mxu0 %v5521
        %v5523 = vpop.f32.mrf.mxu0
        %v5524 = vadd.f32 %v5489, %v5523
        %5525 = vdwg.mxu0
        %5526 = vmatpush.msra.mxu0 0.0
        %5527 = vmatpush.msra.mxu0 0.0
        %5528 = vmatpush.msra.mxu0 0.0
        %5529 = vmatpush.msra.mxu0 0.0
        %5530 = vmatpush.msra.mxu0 0.0
        %5531 = vmatpush.msra.mxu0 0.0
        %5532 = vmatpush.msra.mxu0 0.0
        %5533 = vmatpush.msra.mxu0 0.0
        %5534 = vmatpush.msra.mxu0 0.0
        %5535 = vmatpush.msra.mxu0 0.0
        %5536 = vmatpush.msra.mxu0 0.0
        %5537 = vmatpush.msra.mxu0 0.0
        %5538 = vmatpush.msra.mxu0 0.0
        %5539 = vmatpush.msra.mxu0 0.0
        %v5540 = vand.u32 %v240, 4294901760
        %v5541 = vsub.f32 %v240, %v5540
        %5542 = vmatpush.msra.mxu0 %v5541
        %v5543 = vand.u32 %v239, 4294901760
        %v5544 = vsub.f32 %v239, %v5543
        %5545 = vmatpush.msra.mxu0 %v5544
        %v5546 = vand.u32 %v5451, 4294901760
        %v5547 = vsub.f32 %v5451, %v5546
        %5548 = vmatmul.f32.gmra.mxu0 %v5547
        %v5549 = vpop.f32.mrf.mxu0
        %v5550 = vadd.f32 %v5520, %v5549
        %v5551 = vand.u32 %v5454, 4294901760
        %v5552 = vsub.f32 %v5454, %v5551
        %5553 = vmatmul.f32.gmra.mxu0 %v5552
        %v5554 = vpop.f32.mrf.mxu0
        %v5555 = vadd.f32 %v5524, %v5554
        %5556 = vdwg.mxu0
        %5557 = vmatpush.msra.mxu0 0.0
        %5558 = vmatpush.msra.mxu0 0.0
        %5559 = vmatpush.msra.mxu0 0.0
        %5560 = vmatpush.msra.mxu0 0.0
        %5561 = vmatpush.msra.mxu0 0.0
        %5562 = vmatpush.msra.mxu0 0.0
        %5563 = vmatpush.msra.mxu0 0.0
        %5564 = vmatpush.msra.mxu0 0.0
        %5565 = vmatpush.msra.mxu0 0.0
        %5566 = vmatpush.msra.mxu0 0.0
        %5567 = vmatpush.msra.mxu0 0.0
        %5568 = vmatpush.msra.mxu0 0.0
        %5569 = vmatpush.msra.mxu0 0.0
        %5570 = vmatpush.msra.mxu0 0.0
        %v5571 = vand.u32 %v240, 4294901760
        %5572 = vmatpush.msra.mxu0 %v5571
        %v5573 = vand.u32 %v239, 4294901760
        %5574 = vmatpush.msra.mxu0 %v5573
        %v5575 = vand.u32 %v5451, 4294901760
        %v5576 = vsub.f32 %v5451, %v5575
        %v5577 = vand.u32 %v5576, 4294901760
        %5578 = vmatmul.f32.gmra.mxu0 %v5577
        %v5579 = vpop.f32.mrf.mxu0
        %v5580 = vadd.f32 %v5550, %v5579
        %v5581 = vand.u32 %v5454, 4294901760
        %v5582 = vsub.f32 %v5454, %v5581
        %v5583 = vand.u32 %v5582, 4294901760
        %5584 = vmatmul.f32.gmra.mxu0 %v5583
        %v5585 = vpop.f32.mrf.mxu0
        %v5586 = vadd.f32 %v5555, %v5585
        %5587 = vdwg.mxu0
        %5588 = vmatpush.msra.mxu0 0.0
        %5589 = vmatpush.msra.mxu0 0.0
        %5590 = vmatpush.msra.mxu0 0.0
        %5591 = vmatpush.msra.mxu0 0.0
        %5592 = vmatpush.msra.mxu0 0.0
        %5593 = vmatpush.msra.mxu0 0.0
        %5594 = vmatpush.msra.mxu0 0.0
        %5595 = vmatpush.msra.mxu0 0.0
        %5596 = vmatpush.msra.mxu0 0.0
        %5597 = vmatpush.msra.mxu0 0.0
        %5598 = vmatpush.msra.mxu0 0.0
        %5599 = vmatpush.msra.mxu0 0.0
        %5600 = vmatpush.msra.mxu0 0.0
        %5601 = vmatpush.msra.mxu0 0.0
        %v5602 = vand.u32 %v240, 4294901760
        %v5603 = vsub.f32 %v240, %v5602
        %v5604 = vand.u32 %v5603, 4294901760
        %5605 = vmatpush.msra.mxu0 %v5604
        %v5606 = vand.u32 %v239, 4294901760
        %v5607 = vsub.f32 %v239, %v5606
        %v5608 = vand.u32 %v5607, 4294901760
        %5609 = vmatpush.msra.mxu0 %v5608
        %v5610 = vand.u32 %v5451, 4294901760
        %5611 = vmatmul.f32.gmra.mxu0 %v5610
        %v5612 = vpop.f32.mrf.mxu0
        %v5613 = vadd.f32 %v5580, %v5612
        %v5614 = vand.u32 %v5454, 4294901760
        %5615 = vmatmul.f32.gmra.mxu0 %v5614
        %v5616 = vpop.f32.mrf.mxu0
        %v5617 = vadd.f32 %v5586, %v5616
        %5618 = vdwg.mxu0
        %5619 = vmatpush.msra.mxu0 0.0
        %5620 = vmatpush.msra.mxu0 0.0
        %5621 = vmatpush.msra.mxu0 0.0
        %5622 = vmatpush.msra.mxu0 0.0
        %5623 = vmatpush.msra.mxu0 0.0
        %5624 = vmatpush.msra.mxu0 0.0
        %5625 = vmatpush.msra.mxu0 0.0
        %5626 = vmatpush.msra.mxu0 0.0
        %5627 = vmatpush.msra.mxu0 0.0
        %5628 = vmatpush.msra.mxu0 0.0
        %5629 = vmatpush.msra.mxu0 0.0
        %5630 = vmatpush.msra.mxu0 0.0
        %5631 = vmatpush.msra.mxu0 0.0
        %5632 = vmatpush.msra.mxu0 0.0
        %v5633 = vand.u32 %v240, 4294901760
        %5634 = vmatpush.msra.mxu0 %v5633
        %v5635 = vand.u32 %v239, 4294901760
        %5636 = vmatpush.msra.mxu0 %v5635
        %v5637 = vand.u32 %v5451, 4294901760
        %5638 = vmatmul.f32.gmra.mxu0 %v5637
        %v5639 = vpop.f32.mrf.mxu0
        %v5640 = vadd.f32 %v5613, %v5639
        %v5641 = vand.u32 %v5454, 4294901760
        %5642 = vmatmul.f32.gmra.mxu0 %v5641
        %v5643 = vpop.f32.mrf.mxu0
        %v5644 = vadd.f32 %v5617, %v5643
        %5645 = vdwg.mxu0
        %5646 = vmatpush.msra.mxu0 0.0
        %5647 = vmatpush.msra.mxu0 0.0
        %5648 = vmatpush.msra.mxu0 0.0
        %5649 = vmatpush.msra.mxu0 0.0
        %5650 = vmatpush.msra.mxu0 0.0
        %5651 = vmatpush.msra.mxu0 0.0
        %5652 = vmatpush.msra.mxu0 0.0
        %5653 = vmatpush.msra.mxu0 0.0
        %5654 = vmatpush.msra.mxu0 0.0
        %5655 = vmatpush.msra.mxu0 0.0
        %5656 = vmatpush.msra.mxu0 0.0
        %5657 = vmatpush.msra.mxu0 0.0
        %5658 = vmatpush.msra.mxu0 0.0
        %5659 = vmatpush.msra.mxu0 0.0
        %v5660 = vand.u32 %v242, 4294901760
        %5661 = vmatpush.msra.mxu0 %v5660
        %v5662 = vand.u32 %v241, 4294901760
        %5663 = vmatpush.msra.mxu0 %v5662
        %v5664 = vand.u32 %v5451, 4294901760
        %v5665 = vsub.f32 %v5451, %v5664
        %v5666 = vand.u32 %v5665, 4294901760
        %v5667 = vsub.f32 %v5665, %v5666
        %v5668 = vand.u32 %v5667, 4294901760
        %5669 = vmatmul.f32.gmra.mxu0 %v5668
        %v5670 = vpop.f32.mrf.mxu0
        %v5671 = vadd.f32 0.0, %v5670
        %v5672 = vand.u32 %v5454, 4294901760
        %v5673 = vsub.f32 %v5454, %v5672
        %v5674 = vand.u32 %v5673, 4294901760
        %v5675 = vsub.f32 %v5673, %v5674
        %v5676 = vand.u32 %v5675, 4294901760
        %5677 = vmatmul.f32.gmra.mxu0 %v5676
        %v5678 = vpop.f32.mrf.mxu0
        %v5679 = vadd.f32 0.0, %v5678
        %5680 = vdwg.mxu0
        %5681 = vmatpush.msra.mxu0 0.0
        %5682 = vmatpush.msra.mxu0 0.0
        %5683 = vmatpush.msra.mxu0 0.0
        %5684 = vmatpush.msra.mxu0 0.0
        %5685 = vmatpush.msra.mxu0 0.0
        %5686 = vmatpush.msra.mxu0 0.0
        %5687 = vmatpush.msra.mxu0 0.0
        %5688 = vmatpush.msra.mxu0 0.0
        %5689 = vmatpush.msra.mxu0 0.0
        %5690 = vmatpush.msra.mxu0 0.0
        %5691 = vmatpush.msra.mxu0 0.0
        %5692 = vmatpush.msra.mxu0 0.0
        %5693 = vmatpush.msra.mxu0 0.0
        %5694 = vmatpush.msra.mxu0 0.0
        %v5695 = vand.u32 %v242, 4294901760
        %v5696 = vsub.f32 %v242, %v5695
        %v5697 = vand.u32 %v5696, 4294901760
        %v5698 = vsub.f32 %v5696, %v5697
        %v5699 = vand.u32 %v5698, 4294901760
        %5700 = vmatpush.msra.mxu0 %v5699
        %v5701 = vand.u32 %v241, 4294901760
        %v5702 = vsub.f32 %v241, %v5701
        %v5703 = vand.u32 %v5702, 4294901760
        %v5704 = vsub.f32 %v5702, %v5703
        %v5705 = vand.u32 %v5704, 4294901760
        %5706 = vmatpush.msra.mxu0 %v5705
        %v5707 = vand.u32 %v5451, 4294901760
        %5708 = vmatmul.f32.gmra.mxu0 %v5707
        %v5709 = vpop.f32.mrf.mxu0
        %v5710 = vadd.f32 %v5671, %v5709
        %v5711 = vand.u32 %v5454, 4294901760
        %5712 = vmatmul.f32.gmra.mxu0 %v5711
        %v5713 = vpop.f32.mrf.mxu0
        %v5714 = vadd.f32 %v5679, %v5713
        %5715 = vdwg.mxu0
        %5716 = vmatpush.msra.mxu0 0.0
        %5717 = vmatpush.msra.mxu0 0.0
        %5718 = vmatpush.msra.mxu0 0.0
        %5719 = vmatpush.msra.mxu0 0.0
        %5720 = vmatpush.msra.mxu0 0.0
        %5721 = vmatpush.msra.mxu0 0.0
        %5722 = vmatpush.msra.mxu0 0.0
        %5723 = vmatpush.msra.mxu0 0.0
        %5724 = vmatpush.msra.mxu0 0.0
        %5725 = vmatpush.msra.mxu0 0.0
        %5726 = vmatpush.msra.mxu0 0.0
        %5727 = vmatpush.msra.mxu0 0.0
        %5728 = vmatpush.msra.mxu0 0.0
        %5729 = vmatpush.msra.mxu0 0.0
        %v5730 = vand.u32 %v242, 4294901760
        %v5731 = vsub.f32 %v242, %v5730
        %5732 = vmatpush.msra.mxu0 %v5731
        %v5733 = vand.u32 %v241, 4294901760
        %v5734 = vsub.f32 %v241, %v5733
        %5735 = vmatpush.msra.mxu0 %v5734
        %v5736 = vand.u32 %v5451, 4294901760
        %v5737 = vsub.f32 %v5451, %v5736
        %5738 = vmatmul.f32.gmra.mxu0 %v5737
        %v5739 = vpop.f32.mrf.mxu0
        %v5740 = vadd.f32 %v5710, %v5739
        %v5741 = vand.u32 %v5454, 4294901760
        %v5742 = vsub.f32 %v5454, %v5741
        %5743 = vmatmul.f32.gmra.mxu0 %v5742
        %v5744 = vpop.f32.mrf.mxu0
        %v5745 = vadd.f32 %v5714, %v5744
        %5746 = vdwg.mxu0
        %5747 = vmatpush.msra.mxu0 0.0
        %5748 = vmatpush.msra.mxu0 0.0
        %5749 = vmatpush.msra.mxu0 0.0
        %5750 = vmatpush.msra.mxu0 0.0
        %5751 = vmatpush.msra.mxu0 0.0
        %5752 = vmatpush.msra.mxu0 0.0
        %5753 = vmatpush.msra.mxu0 0.0
        %5754 = vmatpush.msra.mxu0 0.0
        %5755 = vmatpush.msra.mxu0 0.0
        %5756 = vmatpush.msra.mxu0 0.0
        %5757 = vmatpush.msra.mxu0 0.0
        %5758 = vmatpush.msra.mxu0 0.0
        %5759 = vmatpush.msra.mxu0 0.0
        %5760 = vmatpush.msra.mxu0 0.0
        %v5761 = vand.u32 %v242, 4294901760
        %5762 = vmatpush.msra.mxu0 %v5761
        %v5763 = vand.u32 %v241, 4294901760
        %5764 = vmatpush.msra.mxu0 %v5763
        %v5765 = vand.u32 %v5451, 4294901760
        %v5766 = vsub.f32 %v5451, %v5765
        %v5767 = vand.u32 %v5766, 4294901760
        %5768 = vmatmul.f32.gmra.mxu0 %v5767
        %v5769 = vpop.f32.mrf.mxu0
        %v5770 = vadd.f32 %v5740, %v5769
        %v5771 = vand.u32 %v5454, 4294901760
        %v5772 = vsub.f32 %v5454, %v5771
        %v5773 = vand.u32 %v5772, 4294901760
        %5774 = vmatmul.f32.gmra.mxu0 %v5773
        %v5775 = vpop.f32.mrf.mxu0
        %v5776 = vadd.f32 %v5745, %v5775
        %5777 = vdwg.mxu0
        %5778 = vmatpush.msra.mxu0 0.0
        %5779 = vmatpush.msra.mxu0 0.0
        %5780 = vmatpush.msra.mxu0 0.0
        %5781 = vmatpush.msra.mxu0 0.0
        %5782 = vmatpush.msra.mxu0 0.0
        %5783 = vmatpush.msra.mxu0 0.0
        %5784 = vmatpush.msra.mxu0 0.0
        %5785 = vmatpush.msra.mxu0 0.0
        %5786 = vmatpush.msra.mxu0 0.0
        %5787 = vmatpush.msra.mxu0 0.0
        %5788 = vmatpush.msra.mxu0 0.0
        %5789 = vmatpush.msra.mxu0 0.0
        %5790 = vmatpush.msra.mxu0 0.0
        %5791 = vmatpush.msra.mxu0 0.0
        %v5792 = vand.u32 %v242, 4294901760
        %v5793 = vsub.f32 %v242, %v5792
        %v5794 = vand.u32 %v5793, 4294901760
        %5795 = vmatpush.msra.mxu0 %v5794
        %v5796 = vand.u32 %v241, 4294901760
        %v5797 = vsub.f32 %v241, %v5796
        %v5798 = vand.u32 %v5797, 4294901760
        %5799 = vmatpush.msra.mxu0 %v5798
        %v5800 = vand.u32 %v5451, 4294901760
        %5801 = vmatmul.f32.gmra.mxu0 %v5800
        %v5802 = vpop.f32.mrf.mxu0
        %v5803 = vadd.f32 %v5770, %v5802
        %v5804 = vand.u32 %v5454, 4294901760
        %5805 = vmatmul.f32.gmra.mxu0 %v5804
        %v5806 = vpop.f32.mrf.mxu0
        %v5807 = vadd.f32 %v5776, %v5806
        %5808 = vdwg.mxu0
        %5809 = vmatpush.msra.mxu0 0.0
        %5810 = vmatpush.msra.mxu0 0.0
        %5811 = vmatpush.msra.mxu0 0.0
        %5812 = vmatpush.msra.mxu0 0.0
        %5813 = vmatpush.msra.mxu0 0.0
        %5814 = vmatpush.msra.mxu0 0.0
        %5815 = vmatpush.msra.mxu0 0.0
        %5816 = vmatpush.msra.mxu0 0.0
        %5817 = vmatpush.msra.mxu0 0.0
        %5818 = vmatpush.msra.mxu0 0.0
        %5819 = vmatpush.msra.mxu0 0.0
        %5820 = vmatpush.msra.mxu0 0.0
        %5821 = vmatpush.msra.mxu0 0.0
        %5822 = vmatpush.msra.mxu0 0.0
        %v5823 = vand.u32 %v242, 4294901760
        %5824 = vmatpush.msra.mxu0 %v5823
        %v5825 = vand.u32 %v241, 4294901760
        %5826 = vmatpush.msra.mxu0 %v5825
        %v5827 = vand.u32 %v5451, 4294901760
        %5828 = vmatmul.f32.gmra.mxu0 %v5827
        %v5829 = vpop.f32.mrf.mxu0
        %v5830 = vadd.f32 %v5803, %v5829
        %v5831 = vand.u32 %v5454, 4294901760
        %5832 = vmatmul.f32.gmra.mxu0 %v5831
        %v5833 = vpop.f32.mrf.mxu0
        %v5834 = vadd.f32 %v5807, %v5833
        %5835 = vdwg.mxu0
        %5836 = vmatpush.msra.mxu0 0.0
        %5837 = vmatpush.msra.mxu0 0.0
        %5838 = vmatpush.msra.mxu0 0.0
        %5839 = vmatpush.msra.mxu0 0.0
        %5840 = vmatpush.msra.mxu0 0.0
        %5841 = vmatpush.msra.mxu0 0.0
        %5842 = vmatpush.msra.mxu0 0.0
        %5843 = vmatpush.msra.mxu0 0.0
        %5844 = vmatpush.msra.mxu0 0.0
        %5845 = vmatpush.msra.mxu0 0.0
        %5846 = vmatpush.msra.mxu0 0.0
        %5847 = vmatpush.msra.mxu0 0.0
        %5848 = vmatpush.msra.mxu0 0.0
        %5849 = vmatpush.msra.mxu0 0.0
        %v5850 = vand.u32 %v244, 4294901760
        %5851 = vmatpush.msra.mxu0 %v5850
        %v5852 = vand.u32 %v243, 4294901760
        %5853 = vmatpush.msra.mxu0 %v5852
        %v5854 = vand.u32 %v5451, 4294901760
        %v5855 = vsub.f32 %v5451, %v5854
        %v5856 = vand.u32 %v5855, 4294901760
        %v5857 = vsub.f32 %v5855, %v5856
        %v5858 = vand.u32 %v5857, 4294901760
        %5859 = vmatmul.f32.gmra.mxu0 %v5858
        %v5860 = vpop.f32.mrf.mxu0
        %v5861 = vadd.f32 0.0, %v5860
        %v5862 = vand.u32 %v5454, 4294901760
        %v5863 = vsub.f32 %v5454, %v5862
        %v5864 = vand.u32 %v5863, 4294901760
        %v5865 = vsub.f32 %v5863, %v5864
        %v5866 = vand.u32 %v5865, 4294901760
        %5867 = vmatmul.f32.gmra.mxu0 %v5866
        %v5868 = vpop.f32.mrf.mxu0
        %v5869 = vadd.f32 0.0, %v5868
        %5870 = vdwg.mxu0
        %5871 = vmatpush.msra.mxu0 0.0
        %5872 = vmatpush.msra.mxu0 0.0
        %5873 = vmatpush.msra.mxu0 0.0
        %5874 = vmatpush.msra.mxu0 0.0
        %5875 = vmatpush.msra.mxu0 0.0
        %5876 = vmatpush.msra.mxu0 0.0
        %5877 = vmatpush.msra.mxu0 0.0
        %5878 = vmatpush.msra.mxu0 0.0
        %5879 = vmatpush.msra.mxu0 0.0
        %5880 = vmatpush.msra.mxu0 0.0
        %5881 = vmatpush.msra.mxu0 0.0
        %5882 = vmatpush.msra.mxu0 0.0
        %5883 = vmatpush.msra.mxu0 0.0
        %5884 = vmatpush.msra.mxu0 0.0
        %v5885 = vand.u32 %v244, 4294901760
        %v5886 = vsub.f32 %v244, %v5885
        %v5887 = vand.u32 %v5886, 4294901760
        %v5888 = vsub.f32 %v5886, %v5887
        %v5889 = vand.u32 %v5888, 4294901760
        %5890 = vmatpush.msra.mxu0 %v5889
        %v5891 = vand.u32 %v243, 4294901760
        %v5892 = vsub.f32 %v243, %v5891
        %v5893 = vand.u32 %v5892, 4294901760
        %v5894 = vsub.f32 %v5892, %v5893
        %v5895 = vand.u32 %v5894, 4294901760
        %5896 = vmatpush.msra.mxu0 %v5895
        %v5897 = vand.u32 %v5451, 4294901760
        %5898 = vmatmul.f32.gmra.mxu0 %v5897
        %v5899 = vpop.f32.mrf.mxu0
        %v5900 = vadd.f32 %v5861, %v5899
        %v5901 = vand.u32 %v5454, 4294901760
        %5902 = vmatmul.f32.gmra.mxu0 %v5901
        %v5903 = vpop.f32.mrf.mxu0
        %v5904 = vadd.f32 %v5869, %v5903
        %5905 = vdwg.mxu0
        %5906 = vmatpush.msra.mxu0 0.0
        %5907 = vmatpush.msra.mxu0 0.0
        %5908 = vmatpush.msra.mxu0 0.0
        %5909 = vmatpush.msra.mxu0 0.0
        %5910 = vmatpush.msra.mxu0 0.0
        %5911 = vmatpush.msra.mxu0 0.0
        %5912 = vmatpush.msra.mxu0 0.0
        %5913 = vmatpush.msra.mxu0 0.0
        %5914 = vmatpush.msra.mxu0 0.0
        %5915 = vmatpush.msra.mxu0 0.0
        %5916 = vmatpush.msra.mxu0 0.0
        %5917 = vmatpush.msra.mxu0 0.0
        %5918 = vmatpush.msra.mxu0 0.0
        %5919 = vmatpush.msra.mxu0 0.0
        %v5920 = vand.u32 %v244, 4294901760
        %v5921 = vsub.f32 %v244, %v5920
        %5922 = vmatpush.msra.mxu0 %v5921
        %v5923 = vand.u32 %v243, 4294901760
        %v5924 = vsub.f32 %v243, %v5923
        %5925 = vmatpush.msra.mxu0 %v5924
        %v5926 = vand.u32 %v5451, 4294901760
        %v5927 = vsub.f32 %v5451, %v5926
        %5928 = vmatmul.f32.gmra.mxu0 %v5927
        %v5929 = vpop.f32.mrf.mxu0
        %v5930 = vadd.f32 %v5900, %v5929
        %v5931 = vand.u32 %v5454, 4294901760
        %v5932 = vsub.f32 %v5454, %v5931
        %5933 = vmatmul.f32.gmra.mxu0 %v5932
        %v5934 = vpop.f32.mrf.mxu0
        %v5935 = vadd.f32 %v5904, %v5934
        %5936 = vdwg.mxu0
        %5937 = vmatpush.msra.mxu0 0.0
        %5938 = vmatpush.msra.mxu0 0.0
        %5939 = vmatpush.msra.mxu0 0.0
        %5940 = vmatpush.msra.mxu0 0.0
        %5941 = vmatpush.msra.mxu0 0.0
        %5942 = vmatpush.msra.mxu0 0.0
        %5943 = vmatpush.msra.mxu0 0.0
        %5944 = vmatpush.msra.mxu0 0.0
        %5945 = vmatpush.msra.mxu0 0.0
        %5946 = vmatpush.msra.mxu0 0.0
        %5947 = vmatpush.msra.mxu0 0.0
        %5948 = vmatpush.msra.mxu0 0.0
        %5949 = vmatpush.msra.mxu0 0.0
        %5950 = vmatpush.msra.mxu0 0.0
        %v5951 = vand.u32 %v244, 4294901760
        %5952 = vmatpush.msra.mxu0 %v5951
        %v5953 = vand.u32 %v243, 4294901760
        %5954 = vmatpush.msra.mxu0 %v5953
        %v5955 = vand.u32 %v5451, 4294901760
        %v5956 = vsub.f32 %v5451, %v5955
        %v5957 = vand.u32 %v5956, 4294901760
        %5958 = vmatmul.f32.gmra.mxu0 %v5957
        %v5959 = vpop.f32.mrf.mxu0
        %v5960 = vadd.f32 %v5930, %v5959
        %v5961 = vand.u32 %v5454, 4294901760
        %v5962 = vsub.f32 %v5454, %v5961
        %v5963 = vand.u32 %v5962, 4294901760
        %5964 = vmatmul.f32.gmra.mxu0 %v5963
        %v5965 = vpop.f32.mrf.mxu0
        %v5966 = vadd.f32 %v5935, %v5965
        %5967 = vdwg.mxu0
        %5968 = vmatpush.msra.mxu0 0.0
        %5969 = vmatpush.msra.mxu0 0.0
        %5970 = vmatpush.msra.mxu0 0.0
        %5971 = vmatpush.msra.mxu0 0.0
        %5972 = vmatpush.msra.mxu0 0.0
        %5973 = vmatpush.msra.mxu0 0.0
        %5974 = vmatpush.msra.mxu0 0.0
        %5975 = vmatpush.msra.mxu0 0.0
        %5976 = vmatpush.msra.mxu0 0.0
        %5977 = vmatpush.msra.mxu0 0.0
        %5978 = vmatpush.msra.mxu0 0.0
        %5979 = vmatpush.msra.mxu0 0.0
        %5980 = vmatpush.msra.mxu0 0.0
        %5981 = vmatpush.msra.mxu0 0.0
        %v5982 = vand.u32 %v244, 4294901760
        %v5983 = vsub.f32 %v244, %v5982
        %v5984 = vand.u32 %v5983, 4294901760
        %5985 = vmatpush.msra.mxu0 %v5984
        %v5986 = vand.u32 %v243, 4294901760
        %v5987 = vsub.f32 %v243, %v5986
        %v5988 = vand.u32 %v5987, 4294901760
        %5989 = vmatpush.msra.mxu0 %v5988
        %v5990 = vand.u32 %v5451, 4294901760
        %5991 = vmatmul.f32.gmra.mxu0 %v5990
        %v5992 = vpop.f32.mrf.mxu0
        %v5993 = vadd.f32 %v5960, %v5992
        %v5994 = vand.u32 %v5454, 4294901760
        %5995 = vmatmul.f32.gmra.mxu0 %v5994
        %v5996 = vpop.f32.mrf.mxu0
        %v5997 = vadd.f32 %v5966, %v5996
        %5998 = vdwg.mxu0
        %5999 = vmatpush.msra.mxu0 0.0
        %6000 = vmatpush.msra.mxu0 0.0
        %6001 = vmatpush.msra.mxu0 0.0
        %6002 = vmatpush.msra.mxu0 0.0
        %6003 = vmatpush.msra.mxu0 0.0
        %6004 = vmatpush.msra.mxu0 0.0
        %6005 = vmatpush.msra.mxu0 0.0
        %6006 = vmatpush.msra.mxu0 0.0
        %6007 = vmatpush.msra.mxu0 0.0
        %6008 = vmatpush.msra.mxu0 0.0
        %6009 = vmatpush.msra.mxu0 0.0
        %6010 = vmatpush.msra.mxu0 0.0
        %6011 = vmatpush.msra.mxu0 0.0
        %6012 = vmatpush.msra.mxu0 0.0
        %v6013 = vand.u32 %v244, 4294901760
        %6014 = vmatpush.msra.mxu0 %v6013
        %v6015 = vand.u32 %v243, 4294901760
        %6016 = vmatpush.msra.mxu0 %v6015
        %v6017 = vand.u32 %v5451, 4294901760
        %6018 = vmatmul.f32.gmra.mxu0 %v6017
        %v6019 = vpop.f32.mrf.mxu0
        %v6020 = vadd.f32 %v5993, %v6019
        %v6021 = vand.u32 %v5454, 4294901760
        %6022 = vmatmul.f32.gmra.mxu0 %v6021
        %v6023 = vpop.f32.mrf.mxu0
        %v6024 = vadd.f32 %v5997, %v6023
        %6025 = vdwg.mxu0
        %6026 = vmatpush.msra.mxu0 0.0
        %6027 = vmatpush.msra.mxu0 0.0
        %6028 = vmatpush.msra.mxu0 0.0
        %6029 = vmatpush.msra.mxu0 0.0
        %6030 = vmatpush.msra.mxu0 0.0
        %6031 = vmatpush.msra.mxu0 0.0
        %6032 = vmatpush.msra.mxu0 0.0
        %6033 = vmatpush.msra.mxu0 0.0
        %6034 = vmatpush.msra.mxu0 0.0
        %6035 = vmatpush.msra.mxu0 0.0
        %6036 = vmatpush.msra.mxu0 0.0
        %6037 = vmatpush.msra.mxu0 0.0
        %6038 = vmatpush.msra.mxu0 0.0
        %6039 = vmatpush.msra.mxu0 0.0
        %v6040 = vand.u32 %v246, 4294901760
        %6041 = vmatpush.msra.mxu0 %v6040
        %v6042 = vand.u32 %v245, 4294901760
        %6043 = vmatpush.msra.mxu0 %v6042
        %v6044 = vand.u32 %v5451, 4294901760
        %v6045 = vsub.f32 %v5451, %v6044
        %v6046 = vand.u32 %v6045, 4294901760
        %v6047 = vsub.f32 %v6045, %v6046
        %v6048 = vand.u32 %v6047, 4294901760
        %6049 = vmatmul.f32.gmra.mxu0 %v6048
        %v6050 = vpop.f32.mrf.mxu0
        %v6051 = vadd.f32 0.0, %v6050
        %v6052 = vand.u32 %v5454, 4294901760
        %v6053 = vsub.f32 %v5454, %v6052
        %v6054 = vand.u32 %v6053, 4294901760
        %v6055 = vsub.f32 %v6053, %v6054
        %v6056 = vand.u32 %v6055, 4294901760
        %6057 = vmatmul.f32.gmra.mxu0 %v6056
        %v6058 = vpop.f32.mrf.mxu0
        %v6059 = vadd.f32 0.0, %v6058
        %6060 = vdwg.mxu0
        %6061 = vmatpush.msra.mxu0 0.0
        %6062 = vmatpush.msra.mxu0 0.0
        %6063 = vmatpush.msra.mxu0 0.0
        %6064 = vmatpush.msra.mxu0 0.0
        %6065 = vmatpush.msra.mxu0 0.0
        %6066 = vmatpush.msra.mxu0 0.0
        %6067 = vmatpush.msra.mxu0 0.0
        %6068 = vmatpush.msra.mxu0 0.0
        %6069 = vmatpush.msra.mxu0 0.0
        %6070 = vmatpush.msra.mxu0 0.0
        %6071 = vmatpush.msra.mxu0 0.0
        %6072 = vmatpush.msra.mxu0 0.0
        %6073 = vmatpush.msra.mxu0 0.0
        %6074 = vmatpush.msra.mxu0 0.0
        %v6075 = vand.u32 %v246, 4294901760
        %v6076 = vsub.f32 %v246, %v6075
        %v6077 = vand.u32 %v6076, 4294901760
        %v6078 = vsub.f32 %v6076, %v6077
        %v6079 = vand.u32 %v6078, 4294901760
        %6080 = vmatpush.msra.mxu0 %v6079
        %v6081 = vand.u32 %v245, 4294901760
        %v6082 = vsub.f32 %v245, %v6081
        %v6083 = vand.u32 %v6082, 4294901760
        %v6084 = vsub.f32 %v6082, %v6083
        %v6085 = vand.u32 %v6084, 4294901760
        %6086 = vmatpush.msra.mxu0 %v6085
        %v6087 = vand.u32 %v5451, 4294901760
        %6088 = vmatmul.f32.gmra.mxu0 %v6087
        %v6089 = vpop.f32.mrf.mxu0
        %v6090 = vadd.f32 %v6051, %v6089
        %v6091 = vand.u32 %v5454, 4294901760
        %6092 = vmatmul.f32.gmra.mxu0 %v6091
        %v6093 = vpop.f32.mrf.mxu0
        %v6094 = vadd.f32 %v6059, %v6093
        %6095 = vdwg.mxu0
        %6096 = vmatpush.msra.mxu0 0.0
        %6097 = vmatpush.msra.mxu0 0.0
        %6098 = vmatpush.msra.mxu0 0.0
        %6099 = vmatpush.msra.mxu0 0.0
        %6100 = vmatpush.msra.mxu0 0.0
        %6101 = vmatpush.msra.mxu0 0.0
        %6102 = vmatpush.msra.mxu0 0.0
        %6103 = vmatpush.msra.mxu0 0.0
        %6104 = vmatpush.msra.mxu0 0.0
        %6105 = vmatpush.msra.mxu0 0.0
        %6106 = vmatpush.msra.mxu0 0.0
        %6107 = vmatpush.msra.mxu0 0.0
        %6108 = vmatpush.msra.mxu0 0.0
        %6109 = vmatpush.msra.mxu0 0.0
        %v6110 = vand.u32 %v246, 4294901760
        %v6111 = vsub.f32 %v246, %v6110
        %6112 = vmatpush.msra.mxu0 %v6111
        %v6113 = vand.u32 %v245, 4294901760
        %v6114 = vsub.f32 %v245, %v6113
        %6115 = vmatpush.msra.mxu0 %v6114
        %v6116 = vand.u32 %v5451, 4294901760
        %v6117 = vsub.f32 %v5451, %v6116
        %6118 = vmatmul.f32.gmra.mxu0 %v6117
        %v6119 = vpop.f32.mrf.mxu0
        %v6120 = vadd.f32 %v6090, %v6119
        %v6121 = vand.u32 %v5454, 4294901760
        %v6122 = vsub.f32 %v5454, %v6121
        %6123 = vmatmul.f32.gmra.mxu0 %v6122
        %v6124 = vpop.f32.mrf.mxu0
        %v6125 = vadd.f32 %v6094, %v6124
        %6126 = vdwg.mxu0
        %6127 = vmatpush.msra.mxu0 0.0
        %6128 = vmatpush.msra.mxu0 0.0
        %6129 = vmatpush.msra.mxu0 0.0
        %6130 = vmatpush.msra.mxu0 0.0
        %6131 = vmatpush.msra.mxu0 0.0
        %6132 = vmatpush.msra.mxu0 0.0
        %6133 = vmatpush.msra.mxu0 0.0
        %6134 = vmatpush.msra.mxu0 0.0
        %6135 = vmatpush.msra.mxu0 0.0
        %6136 = vmatpush.msra.mxu0 0.0
        %6137 = vmatpush.msra.mxu0 0.0
        %6138 = vmatpush.msra.mxu0 0.0
        %6139 = vmatpush.msra.mxu0 0.0
        %6140 = vmatpush.msra.mxu0 0.0
        %v6141 = vand.u32 %v246, 4294901760
        %6142 = vmatpush.msra.mxu0 %v6141
        %v6143 = vand.u32 %v245, 4294901760
        %6144 = vmatpush.msra.mxu0 %v6143
        %v6145 = vand.u32 %v5451, 4294901760
        %v6146 = vsub.f32 %v5451, %v6145
        %v6147 = vand.u32 %v6146, 4294901760
        %6148 = vmatmul.f32.gmra.mxu0 %v6147
        %v6149 = vpop.f32.mrf.mxu0
        %v6150 = vadd.f32 %v6120, %v6149
        %v6151 = vand.u32 %v5454, 4294901760
        %v6152 = vsub.f32 %v5454, %v6151
        %v6153 = vand.u32 %v6152, 4294901760
        %6154 = vmatmul.f32.gmra.mxu0 %v6153
        %v6155 = vpop.f32.mrf.mxu0
        %v6156 = vadd.f32 %v6125, %v6155
        %6157 = vdwg.mxu0
        %6158 = vmatpush.msra.mxu0 0.0
        %6159 = vmatpush.msra.mxu0 0.0
        %6160 = vmatpush.msra.mxu0 0.0
        %6161 = vmatpush.msra.mxu0 0.0
        %6162 = vmatpush.msra.mxu0 0.0
        %6163 = vmatpush.msra.mxu0 0.0
        %6164 = vmatpush.msra.mxu0 0.0
        %6165 = vmatpush.msra.mxu0 0.0
        %6166 = vmatpush.msra.mxu0 0.0
        %6167 = vmatpush.msra.mxu0 0.0
        %6168 = vmatpush.msra.mxu0 0.0
        %6169 = vmatpush.msra.mxu0 0.0
        %6170 = vmatpush.msra.mxu0 0.0
        %6171 = vmatpush.msra.mxu0 0.0
        %v6172 = vand.u32 %v246, 4294901760
        %v6173 = vsub.f32 %v246, %v6172
        %v6174 = vand.u32 %v6173, 4294901760
        %6175 = vmatpush.msra.mxu0 %v6174
        %v6176 = vand.u32 %v245, 4294901760
        %v6177 = vsub.f32 %v245, %v6176
        %v6178 = vand.u32 %v6177, 4294901760
        %6179 = vmatpush.msra.mxu0 %v6178
        %v6180 = vand.u32 %v5451, 4294901760
        %6181 = vmatmul.f32.gmra.mxu0 %v6180
        %v6182 = vpop.f32.mrf.mxu0
        %v6183 = vadd.f32 %v6150, %v6182
        %v6184 = vand.u32 %v5454, 4294901760
        %6185 = vmatmul.f32.gmra.mxu0 %v6184
        %v6186 = vpop.f32.mrf.mxu0
        %v6187 = vadd.f32 %v6156, %v6186
        %6188 = vdwg.mxu0
        %6189 = vmatpush.msra.mxu0 0.0
        %6190 = vmatpush.msra.mxu0 0.0
        %6191 = vmatpush.msra.mxu0 0.0
        %6192 = vmatpush.msra.mxu0 0.0
        %6193 = vmatpush.msra.mxu0 0.0
        %6194 = vmatpush.msra.mxu0 0.0
        %6195 = vmatpush.msra.mxu0 0.0
        %6196 = vmatpush.msra.mxu0 0.0
        %6197 = vmatpush.msra.mxu0 0.0
        %6198 = vmatpush.msra.mxu0 0.0
        %6199 = vmatpush.msra.mxu0 0.0
        %6200 = vmatpush.msra.mxu0 0.0
        %6201 = vmatpush.msra.mxu0 0.0
        %6202 = vmatpush.msra.mxu0 0.0
        %v6203 = vand.u32 %v246, 4294901760
        %6204 = vmatpush.msra.mxu0 %v6203
        %v6205 = vand.u32 %v245, 4294901760
        %6206 = vmatpush.msra.mxu0 %v6205
        %v6207 = vand.u32 %v5451, 4294901760
        %6208 = vmatmul.f32.gmra.mxu0 %v6207
        %v6209 = vpop.f32.mrf.mxu0
        %v6210 = vadd.f32 %v6183, %v6209
        %v6211 = vand.u32 %v5454, 4294901760
        %6212 = vmatmul.f32.gmra.mxu0 %v6211
        %v6213 = vpop.f32.mrf.mxu0
        %v6214 = vadd.f32 %v6187, %v6213
        %6215 = vdwg.mxu0
        %6216 = vmatpush.msra.mxu0 0.0
        %6217 = vmatpush.msra.mxu0 0.0
        %6218 = vmatpush.msra.mxu0 0.0
        %6219 = vmatpush.msra.mxu0 0.0
        %6220 = vmatpush.msra.mxu0 0.0
        %6221 = vmatpush.msra.mxu0 0.0
        %6222 = vmatpush.msra.mxu0 0.0
        %6223 = vmatpush.msra.mxu0 0.0
        %6224 = vmatpush.msra.mxu0 0.0
        %6225 = vmatpush.msra.mxu0 0.0
        %6226 = vmatpush.msra.mxu0 0.0
        %6227 = vmatpush.msra.mxu0 0.0
        %6228 = vmatpush.msra.mxu0 0.0
        %6229 = vmatpush.msra.mxu0 0.0
        %v6230 = vand.u32 %v248, 4294901760
        %6231 = vmatpush.msra.mxu0 %v6230
        %v6232 = vand.u32 %v247, 4294901760
        %6233 = vmatpush.msra.mxu0 %v6232
        %v6234 = vand.u32 %v5451, 4294901760
        %v6235 = vsub.f32 %v5451, %v6234
        %v6236 = vand.u32 %v6235, 4294901760
        %v6237 = vsub.f32 %v6235, %v6236
        %v6238 = vand.u32 %v6237, 4294901760
        %6239 = vmatmul.f32.gmra.mxu0 %v6238
        %v6240 = vpop.f32.mrf.mxu0
        %v6241 = vadd.f32 0.0, %v6240
        %v6242 = vand.u32 %v5454, 4294901760
        %v6243 = vsub.f32 %v5454, %v6242
        %v6244 = vand.u32 %v6243, 4294901760
        %v6245 = vsub.f32 %v6243, %v6244
        %v6246 = vand.u32 %v6245, 4294901760
        %6247 = vmatmul.f32.gmra.mxu0 %v6246
        %v6248 = vpop.f32.mrf.mxu0
        %v6249 = vadd.f32 0.0, %v6248
        %6250 = vdwg.mxu0
        %6251 = vmatpush.msra.mxu0 0.0
        %6252 = vmatpush.msra.mxu0 0.0
        %6253 = vmatpush.msra.mxu0 0.0
        %6254 = vmatpush.msra.mxu0 0.0
        %6255 = vmatpush.msra.mxu0 0.0
        %6256 = vmatpush.msra.mxu0 0.0
        %6257 = vmatpush.msra.mxu0 0.0
        %6258 = vmatpush.msra.mxu0 0.0
        %6259 = vmatpush.msra.mxu0 0.0
        %6260 = vmatpush.msra.mxu0 0.0
        %6261 = vmatpush.msra.mxu0 0.0
        %6262 = vmatpush.msra.mxu0 0.0
        %6263 = vmatpush.msra.mxu0 0.0
        %6264 = vmatpush.msra.mxu0 0.0
        %v6265 = vand.u32 %v248, 4294901760
        %v6266 = vsub.f32 %v248, %v6265
        %v6267 = vand.u32 %v6266, 4294901760
        %v6268 = vsub.f32 %v6266, %v6267
        %v6269 = vand.u32 %v6268, 4294901760
        %6270 = vmatpush.msra.mxu0 %v6269
        %v6271 = vand.u32 %v247, 4294901760
        %v6272 = vsub.f32 %v247, %v6271
        %v6273 = vand.u32 %v6272, 4294901760
        %v6274 = vsub.f32 %v6272, %v6273
        %v6275 = vand.u32 %v6274, 4294901760
        %6276 = vmatpush.msra.mxu0 %v6275
        %v6277 = vand.u32 %v5451, 4294901760
        %6278 = vmatmul.f32.gmra.mxu0 %v6277
        %v6279 = vpop.f32.mrf.mxu0
        %v6280 = vadd.f32 %v6241, %v6279
        %v6281 = vand.u32 %v5454, 4294901760
        %6282 = vmatmul.f32.gmra.mxu0 %v6281
        %v6283 = vpop.f32.mrf.mxu0
        %v6284 = vadd.f32 %v6249, %v6283
        %6285 = vdwg.mxu0
        %6286 = vmatpush.msra.mxu0 0.0
        %6287 = vmatpush.msra.mxu0 0.0
        %6288 = vmatpush.msra.mxu0 0.0
        %6289 = vmatpush.msra.mxu0 0.0
        %6290 = vmatpush.msra.mxu0 0.0
        %6291 = vmatpush.msra.mxu0 0.0
        %6292 = vmatpush.msra.mxu0 0.0
        %6293 = vmatpush.msra.mxu0 0.0
        %6294 = vmatpush.msra.mxu0 0.0
        %6295 = vmatpush.msra.mxu0 0.0
        %6296 = vmatpush.msra.mxu0 0.0
        %6297 = vmatpush.msra.mxu0 0.0
        %6298 = vmatpush.msra.mxu0 0.0
        %6299 = vmatpush.msra.mxu0 0.0
        %v6300 = vand.u32 %v248, 4294901760
        %v6301 = vsub.f32 %v248, %v6300
        %6302 = vmatpush.msra.mxu0 %v6301
        %v6303 = vand.u32 %v247, 4294901760
        %v6304 = vsub.f32 %v247, %v6303
        %6305 = vmatpush.msra.mxu0 %v6304
        %v6306 = vand.u32 %v5451, 4294901760
        %v6307 = vsub.f32 %v5451, %v6306
        %6308 = vmatmul.f32.gmra.mxu0 %v6307
        %v6309 = vpop.f32.mrf.mxu0
        %v6310 = vadd.f32 %v6280, %v6309
        %v6311 = vand.u32 %v5454, 4294901760
        %v6312 = vsub.f32 %v5454, %v6311
        %6313 = vmatmul.f32.gmra.mxu0 %v6312
        %v6314 = vpop.f32.mrf.mxu0
        %v6315 = vadd.f32 %v6284, %v6314
        %6316 = vdwg.mxu0
        %6317 = vmatpush.msra.mxu0 0.0
        %6318 = vmatpush.msra.mxu0 0.0
        %6319 = vmatpush.msra.mxu0 0.0
        %6320 = vmatpush.msra.mxu0 0.0
        %6321 = vmatpush.msra.mxu0 0.0
        %6322 = vmatpush.msra.mxu0 0.0
        %6323 = vmatpush.msra.mxu0 0.0
        %6324 = vmatpush.msra.mxu0 0.0
        %6325 = vmatpush.msra.mxu0 0.0
        %6326 = vmatpush.msra.mxu0 0.0
        %6327 = vmatpush.msra.mxu0 0.0
        %6328 = vmatpush.msra.mxu0 0.0
        %6329 = vmatpush.msra.mxu0 0.0
        %6330 = vmatpush.msra.mxu0 0.0
        %v6331 = vand.u32 %v248, 4294901760
        %6332 = vmatpush.msra.mxu0 %v6331
        %v6333 = vand.u32 %v247, 4294901760
        %6334 = vmatpush.msra.mxu0 %v6333
        %v6335 = vand.u32 %v5451, 4294901760
        %v6336 = vsub.f32 %v5451, %v6335
        %v6337 = vand.u32 %v6336, 4294901760
        %6338 = vmatmul.f32.gmra.mxu0 %v6337
        %v6339 = vpop.f32.mrf.mxu0
        %v6340 = vadd.f32 %v6310, %v6339
        %v6341 = vand.u32 %v5454, 4294901760
        %v6342 = vsub.f32 %v5454, %v6341
        %v6343 = vand.u32 %v6342, 4294901760
        %6344 = vmatmul.f32.gmra.mxu0 %v6343
        %v6345 = vpop.f32.mrf.mxu0
        %v6346 = vadd.f32 %v6315, %v6345
        %6347 = vdwg.mxu0
        %6348 = vmatpush.msra.mxu0 0.0
        %6349 = vmatpush.msra.mxu0 0.0
        %6350 = vmatpush.msra.mxu0 0.0
        %6351 = vmatpush.msra.mxu0 0.0
        %6352 = vmatpush.msra.mxu0 0.0
        %6353 = vmatpush.msra.mxu0 0.0
        %6354 = vmatpush.msra.mxu0 0.0
        %6355 = vmatpush.msra.mxu0 0.0
        %6356 = vmatpush.msra.mxu0 0.0
        %6357 = vmatpush.msra.mxu0 0.0
        %6358 = vmatpush.msra.mxu0 0.0
        %6359 = vmatpush.msra.mxu0 0.0
        %6360 = vmatpush.msra.mxu0 0.0
        %6361 = vmatpush.msra.mxu0 0.0
        %v6362 = vand.u32 %v248, 4294901760
        %v6363 = vsub.f32 %v248, %v6362
        %v6364 = vand.u32 %v6363, 4294901760
        %6365 = vmatpush.msra.mxu0 %v6364
        %v6366 = vand.u32 %v247, 4294901760
        %v6367 = vsub.f32 %v247, %v6366
        %v6368 = vand.u32 %v6367, 4294901760
        %6369 = vmatpush.msra.mxu0 %v6368
        %v6370 = vand.u32 %v5451, 4294901760
        %6371 = vmatmul.f32.gmra.mxu0 %v6370
        %v6372 = vpop.f32.mrf.mxu0
        %v6373 = vadd.f32 %v6340, %v6372
        %v6374 = vand.u32 %v5454, 4294901760
        %6375 = vmatmul.f32.gmra.mxu0 %v6374
        %v6376 = vpop.f32.mrf.mxu0
        %v6377 = vadd.f32 %v6346, %v6376
        %6378 = vdwg.mxu0
        %6379 = vmatpush.msra.mxu0 0.0
        %6380 = vmatpush.msra.mxu0 0.0
        %6381 = vmatpush.msra.mxu0 0.0
        %6382 = vmatpush.msra.mxu0 0.0
        %6383 = vmatpush.msra.mxu0 0.0
        %6384 = vmatpush.msra.mxu0 0.0
        %6385 = vmatpush.msra.mxu0 0.0
        %6386 = vmatpush.msra.mxu0 0.0
        %6387 = vmatpush.msra.mxu0 0.0
        %6388 = vmatpush.msra.mxu0 0.0
        %6389 = vmatpush.msra.mxu0 0.0
        %6390 = vmatpush.msra.mxu0 0.0
        %6391 = vmatpush.msra.mxu0 0.0
        %6392 = vmatpush.msra.mxu0 0.0
        %v6393 = vand.u32 %v248, 4294901760
        %6394 = vmatpush.msra.mxu0 %v6393
        %v6395 = vand.u32 %v247, 4294901760
        %6396 = vmatpush.msra.mxu0 %v6395
        %v6397 = vand.u32 %v5451, 4294901760
        %6398 = vmatmul.f32.gmra.mxu0 %v6397
        %v6399 = vpop.f32.mrf.mxu0
        %v6400 = vadd.f32 %v6373, %v6399
        %v6401 = vand.u32 %v5454, 4294901760
        %6402 = vmatmul.f32.gmra.mxu0 %v6401
        %v6403 = vpop.f32.mrf.mxu0
        %v6404 = vadd.f32 %v6377, %v6403
        %6405 = vdwg.mxu0
        %6406 = vmatpush.msra.mxu0 0.0
        %6407 = vmatpush.msra.mxu0 0.0
        %6408 = vmatpush.msra.mxu0 0.0
        %6409 = vmatpush.msra.mxu0 0.0
        %6410 = vmatpush.msra.mxu0 0.0
        %6411 = vmatpush.msra.mxu0 0.0
        %6412 = vmatpush.msra.mxu0 0.0
        %6413 = vmatpush.msra.mxu0 0.0
        %6414 = vmatpush.msra.mxu0 0.0
        %6415 = vmatpush.msra.mxu0 0.0
        %6416 = vmatpush.msra.mxu0 0.0
        %6417 = vmatpush.msra.mxu0 0.0
        %6418 = vmatpush.msra.mxu0 0.0
        %6419 = vmatpush.msra.mxu0 0.0
        %v6420 = vand.u32 %v250, 4294901760
        %6421 = vmatpush.msra.mxu0 %v6420
        %v6422 = vand.u32 %v249, 4294901760
        %6423 = vmatpush.msra.mxu0 %v6422
        %v6424 = vand.u32 %v5451, 4294901760
        %v6425 = vsub.f32 %v5451, %v6424
        %v6426 = vand.u32 %v6425, 4294901760
        %v6427 = vsub.f32 %v6425, %v6426
        %v6428 = vand.u32 %v6427, 4294901760
        %6429 = vmatmul.f32.gmra.mxu0 %v6428
        %v6430 = vpop.f32.mrf.mxu0
        %v6431 = vadd.f32 0.0, %v6430
        %v6432 = vand.u32 %v5454, 4294901760
        %v6433 = vsub.f32 %v5454, %v6432
        %v6434 = vand.u32 %v6433, 4294901760
        %v6435 = vsub.f32 %v6433, %v6434
        %v6436 = vand.u32 %v6435, 4294901760
        %6437 = vmatmul.f32.gmra.mxu0 %v6436
        %v6438 = vpop.f32.mrf.mxu0
        %v6439 = vadd.f32 0.0, %v6438
        %6440 = vdwg.mxu0
        %6441 = vmatpush.msra.mxu0 0.0
        %6442 = vmatpush.msra.mxu0 0.0
        %6443 = vmatpush.msra.mxu0 0.0
        %6444 = vmatpush.msra.mxu0 0.0
        %6445 = vmatpush.msra.mxu0 0.0
        %6446 = vmatpush.msra.mxu0 0.0
        %6447 = vmatpush.msra.mxu0 0.0
        %6448 = vmatpush.msra.mxu0 0.0
        %6449 = vmatpush.msra.mxu0 0.0
        %6450 = vmatpush.msra.mxu0 0.0
        %6451 = vmatpush.msra.mxu0 0.0
        %6452 = vmatpush.msra.mxu0 0.0
        %6453 = vmatpush.msra.mxu0 0.0
        %6454 = vmatpush.msra.mxu0 0.0
        %v6455 = vand.u32 %v250, 4294901760
        %v6456 = vsub.f32 %v250, %v6455
        %v6457 = vand.u32 %v6456, 4294901760
        %v6458 = vsub.f32 %v6456, %v6457
        %v6459 = vand.u32 %v6458, 4294901760
        %6460 = vmatpush.msra.mxu0 %v6459
        %v6461 = vand.u32 %v249, 4294901760
        %v6462 = vsub.f32 %v249, %v6461
        %v6463 = vand.u32 %v6462, 4294901760
        %v6464 = vsub.f32 %v6462, %v6463
        %v6465 = vand.u32 %v6464, 4294901760
        %6466 = vmatpush.msra.mxu0 %v6465
        %v6467 = vand.u32 %v5451, 4294901760
        %6468 = vmatmul.f32.gmra.mxu0 %v6467
        %v6469 = vpop.f32.mrf.mxu0
        %v6470 = vadd.f32 %v6431, %v6469
        %v6471 = vand.u32 %v5454, 4294901760
        %6472 = vmatmul.f32.gmra.mxu0 %v6471
        %v6473 = vpop.f32.mrf.mxu0
        %v6474 = vadd.f32 %v6439, %v6473
        %6475 = vdwg.mxu0
        %6476 = vmatpush.msra.mxu0 0.0
        %6477 = vmatpush.msra.mxu0 0.0
        %6478 = vmatpush.msra.mxu0 0.0
        %6479 = vmatpush.msra.mxu0 0.0
        %6480 = vmatpush.msra.mxu0 0.0
        %6481 = vmatpush.msra.mxu0 0.0
        %6482 = vmatpush.msra.mxu0 0.0
        %6483 = vmatpush.msra.mxu0 0.0
        %6484 = vmatpush.msra.mxu0 0.0
        %6485 = vmatpush.msra.mxu0 0.0
        %6486 = vmatpush.msra.mxu0 0.0
        %6487 = vmatpush.msra.mxu0 0.0
        %6488 = vmatpush.msra.mxu0 0.0
        %6489 = vmatpush.msra.mxu0 0.0
        %v6490 = vand.u32 %v250, 4294901760
        %v6491 = vsub.f32 %v250, %v6490
        %6492 = vmatpush.msra.mxu0 %v6491
        %v6493 = vand.u32 %v249, 4294901760
        %v6494 = vsub.f32 %v249, %v6493
        %6495 = vmatpush.msra.mxu0 %v6494
        %v6496 = vand.u32 %v5451, 4294901760
        %v6497 = vsub.f32 %v5451, %v6496
        %6498 = vmatmul.f32.gmra.mxu0 %v6497
        %v6499 = vpop.f32.mrf.mxu0
        %v6500 = vadd.f32 %v6470, %v6499
        %v6501 = vand.u32 %v5454, 4294901760
        %v6502 = vsub.f32 %v5454, %v6501
        %6503 = vmatmul.f32.gmra.mxu0 %v6502
        %v6504 = vpop.f32.mrf.mxu0
        %v6505 = vadd.f32 %v6474, %v6504
        %6506 = vdwg.mxu0
        %6507 = vmatpush.msra.mxu0 0.0
        %6508 = vmatpush.msra.mxu0 0.0
        %6509 = vmatpush.msra.mxu0 0.0
        %6510 = vmatpush.msra.mxu0 0.0
        %6511 = vmatpush.msra.mxu0 0.0
        %6512 = vmatpush.msra.mxu0 0.0
        %6513 = vmatpush.msra.mxu0 0.0
        %6514 = vmatpush.msra.mxu0 0.0
        %6515 = vmatpush.msra.mxu0 0.0
        %6516 = vmatpush.msra.mxu0 0.0
        %6517 = vmatpush.msra.mxu0 0.0
        %6518 = vmatpush.msra.mxu0 0.0
        %6519 = vmatpush.msra.mxu0 0.0
        %6520 = vmatpush.msra.mxu0 0.0
        %v6521 = vand.u32 %v250, 4294901760
        %6522 = vmatpush.msra.mxu0 %v6521
        %v6523 = vand.u32 %v249, 4294901760
        %6524 = vmatpush.msra.mxu0 %v6523
        %v6525 = vand.u32 %v5451, 4294901760
        %v6526 = vsub.f32 %v5451, %v6525
        %v6527 = vand.u32 %v6526, 4294901760
        %6528 = vmatmul.f32.gmra.mxu0 %v6527
        %v6529 = vpop.f32.mrf.mxu0
        %v6530 = vadd.f32 %v6500, %v6529
        %v6531 = vand.u32 %v5454, 4294901760
        %v6532 = vsub.f32 %v5454, %v6531
        %v6533 = vand.u32 %v6532, 4294901760
        %6534 = vmatmul.f32.gmra.mxu0 %v6533
        %v6535 = vpop.f32.mrf.mxu0
        %v6536 = vadd.f32 %v6505, %v6535
        %6537 = vdwg.mxu0
        %6538 = vmatpush.msra.mxu0 0.0
        %6539 = vmatpush.msra.mxu0 0.0
        %6540 = vmatpush.msra.mxu0 0.0
        %6541 = vmatpush.msra.mxu0 0.0
        %6542 = vmatpush.msra.mxu0 0.0
        %6543 = vmatpush.msra.mxu0 0.0
        %6544 = vmatpush.msra.mxu0 0.0
        %6545 = vmatpush.msra.mxu0 0.0
        %6546 = vmatpush.msra.mxu0 0.0
        %6547 = vmatpush.msra.mxu0 0.0
        %6548 = vmatpush.msra.mxu0 0.0
        %6549 = vmatpush.msra.mxu0 0.0
        %6550 = vmatpush.msra.mxu0 0.0
        %6551 = vmatpush.msra.mxu0 0.0
        %v6552 = vand.u32 %v250, 4294901760
        %v6553 = vsub.f32 %v250, %v6552
        %v6554 = vand.u32 %v6553, 4294901760
        %6555 = vmatpush.msra.mxu0 %v6554
        %v6556 = vand.u32 %v249, 4294901760
        %v6557 = vsub.f32 %v249, %v6556
        %v6558 = vand.u32 %v6557, 4294901760
        %6559 = vmatpush.msra.mxu0 %v6558
        %v6560 = vand.u32 %v5451, 4294901760
        %6561 = vmatmul.f32.gmra.mxu0 %v6560
        %v6562 = vpop.f32.mrf.mxu0
        %v6563 = vadd.f32 %v6530, %v6562
        %v6564 = vand.u32 %v5454, 4294901760
        %6565 = vmatmul.f32.gmra.mxu0 %v6564
        %v6566 = vpop.f32.mrf.mxu0
        %v6567 = vadd.f32 %v6536, %v6566
        %6568 = vdwg.mxu0
        %6569 = vmatpush.msra.mxu0 0.0
        %6570 = vmatpush.msra.mxu0 0.0
        %6571 = vmatpush.msra.mxu0 0.0
        %6572 = vmatpush.msra.mxu0 0.0
        %6573 = vmatpush.msra.mxu0 0.0
        %6574 = vmatpush.msra.mxu0 0.0
        %6575 = vmatpush.msra.mxu0 0.0
        %6576 = vmatpush.msra.mxu0 0.0
        %6577 = vmatpush.msra.mxu0 0.0
        %6578 = vmatpush.msra.mxu0 0.0
        %6579 = vmatpush.msra.mxu0 0.0
        %6580 = vmatpush.msra.mxu0 0.0
        %6581 = vmatpush.msra.mxu0 0.0
        %6582 = vmatpush.msra.mxu0 0.0
        %v6583 = vand.u32 %v250, 4294901760
        %6584 = vmatpush.msra.mxu0 %v6583
        %v6585 = vand.u32 %v249, 4294901760
        %6586 = vmatpush.msra.mxu0 %v6585
        %v6587 = vand.u32 %v5451, 4294901760
        %6588 = vmatmul.f32.gmra.mxu0 %v6587
        %v6589 = vpop.f32.mrf.mxu0
        %v6590 = vadd.f32 %v6563, %v6589
        %v6591 = vand.u32 %v5454, 4294901760
        %6592 = vmatmul.f32.gmra.mxu0 %v6591
        %v6593 = vpop.f32.mrf.mxu0
        %v6594 = vadd.f32 %v6567, %v6593
        %6595 = vdwg.mxu0
        %6596 = vmatpush.msra.mxu0 0.0
        %6597 = vmatpush.msra.mxu0 0.0
        %6598 = vmatpush.msra.mxu0 0.0
        %6599 = vmatpush.msra.mxu0 0.0
        %6600 = vmatpush.msra.mxu0 0.0
        %6601 = vmatpush.msra.mxu0 0.0
        %6602 = vmatpush.msra.mxu0 0.0
        %6603 = vmatpush.msra.mxu0 0.0
        %6604 = vmatpush.msra.mxu0 0.0
        %6605 = vmatpush.msra.mxu0 0.0
        %6606 = vmatpush.msra.mxu0 0.0
        %6607 = vmatpush.msra.mxu0 0.0
        %6608 = vmatpush.msra.mxu0 0.0
        %6609 = vmatpush.msra.mxu0 0.0
        %v6610 = vand.u32 %v252, 4294901760
        %6611 = vmatpush.msra.mxu0 %v6610
        %v6612 = vand.u32 %v251, 4294901760
        %6613 = vmatpush.msra.mxu0 %v6612
        %v6614 = vand.u32 %v5451, 4294901760
        %v6615 = vsub.f32 %v5451, %v6614
        %v6616 = vand.u32 %v6615, 4294901760
        %v6617 = vsub.f32 %v6615, %v6616
        %v6618 = vand.u32 %v6617, 4294901760
        %6619 = vmatmul.f32.gmra.mxu0 %v6618
        %v6620 = vpop.f32.mrf.mxu0
        %v6621 = vadd.f32 0.0, %v6620
        %v6622 = vand.u32 %v5454, 4294901760
        %v6623 = vsub.f32 %v5454, %v6622
        %v6624 = vand.u32 %v6623, 4294901760
        %v6625 = vsub.f32 %v6623, %v6624
        %v6626 = vand.u32 %v6625, 4294901760
        %6627 = vmatmul.f32.gmra.mxu0 %v6626
        %v6628 = vpop.f32.mrf.mxu0
        %v6629 = vadd.f32 0.0, %v6628
        %6630 = vdwg.mxu0
        %6631 = vmatpush.msra.mxu0 0.0
        %6632 = vmatpush.msra.mxu0 0.0
        %6633 = vmatpush.msra.mxu0 0.0
        %6634 = vmatpush.msra.mxu0 0.0
        %6635 = vmatpush.msra.mxu0 0.0
        %6636 = vmatpush.msra.mxu0 0.0
        %6637 = vmatpush.msra.mxu0 0.0
        %6638 = vmatpush.msra.mxu0 0.0
        %6639 = vmatpush.msra.mxu0 0.0
        %6640 = vmatpush.msra.mxu0 0.0
        %6641 = vmatpush.msra.mxu0 0.0
        %6642 = vmatpush.msra.mxu0 0.0
        %6643 = vmatpush.msra.mxu0 0.0
        %6644 = vmatpush.msra.mxu0 0.0
        %v6645 = vand.u32 %v252, 4294901760
        %v6646 = vsub.f32 %v252, %v6645
        %v6647 = vand.u32 %v6646, 4294901760
        %v6648 = vsub.f32 %v6646, %v6647
        %v6649 = vand.u32 %v6648, 4294901760
        %6650 = vmatpush.msra.mxu0 %v6649
        %v6651 = vand.u32 %v251, 4294901760
        %v6652 = vsub.f32 %v251, %v6651
        %v6653 = vand.u32 %v6652, 4294901760
        %v6654 = vsub.f32 %v6652, %v6653
        %v6655 = vand.u32 %v6654, 4294901760
        %6656 = vmatpush.msra.mxu0 %v6655
        %v6657 = vand.u32 %v5451, 4294901760
        %6658 = vmatmul.f32.gmra.mxu0 %v6657
        %v6659 = vpop.f32.mrf.mxu0
        %v6660 = vadd.f32 %v6621, %v6659
        %v6661 = vand.u32 %v5454, 4294901760
        %6662 = vmatmul.f32.gmra.mxu0 %v6661
        %v6663 = vpop.f32.mrf.mxu0
        %v6664 = vadd.f32 %v6629, %v6663
        %6665 = vdwg.mxu0
        %6666 = vmatpush.msra.mxu0 0.0
        %6667 = vmatpush.msra.mxu0 0.0
        %6668 = vmatpush.msra.mxu0 0.0
        %6669 = vmatpush.msra.mxu0 0.0
        %6670 = vmatpush.msra.mxu0 0.0
        %6671 = vmatpush.msra.mxu0 0.0
        %6672 = vmatpush.msra.mxu0 0.0
        %6673 = vmatpush.msra.mxu0 0.0
        %6674 = vmatpush.msra.mxu0 0.0
        %6675 = vmatpush.msra.mxu0 0.0
        %6676 = vmatpush.msra.mxu0 0.0
        %6677 = vmatpush.msra.mxu0 0.0
        %6678 = vmatpush.msra.mxu0 0.0
        %6679 = vmatpush.msra.mxu0 0.0
        %v6680 = vand.u32 %v252, 4294901760
        %v6681 = vsub.f32 %v252, %v6680
        %6682 = vmatpush.msra.mxu0 %v6681
        %v6683 = vand.u32 %v251, 4294901760
        %v6684 = vsub.f32 %v251, %v6683
        %6685 = vmatpush.msra.mxu0 %v6684
        %v6686 = vand.u32 %v5451, 4294901760
        %v6687 = vsub.f32 %v5451, %v6686
        %6688 = vmatmul.f32.gmra.mxu0 %v6687
        %v6689 = vpop.f32.mrf.mxu0
        %v6690 = vadd.f32 %v6660, %v6689
        %v6691 = vand.u32 %v5454, 4294901760
        %v6692 = vsub.f32 %v5454, %v6691
        %6693 = vmatmul.f32.gmra.mxu0 %v6692
        %v6694 = vpop.f32.mrf.mxu0
        %v6695 = vadd.f32 %v6664, %v6694
        %6696 = vdwg.mxu0
        %6697 = vmatpush.msra.mxu0 0.0
        %6698 = vmatpush.msra.mxu0 0.0
        %6699 = vmatpush.msra.mxu0 0.0
        %6700 = vmatpush.msra.mxu0 0.0
        %6701 = vmatpush.msra.mxu0 0.0
        %6702 = vmatpush.msra.mxu0 0.0
        %6703 = vmatpush.msra.mxu0 0.0
        %6704 = vmatpush.msra.mxu0 0.0
        %6705 = vmatpush.msra.mxu0 0.0
        %6706 = vmatpush.msra.mxu0 0.0
        %6707 = vmatpush.msra.mxu0 0.0
        %6708 = vmatpush.msra.mxu0 0.0
        %6709 = vmatpush.msra.mxu0 0.0
        %6710 = vmatpush.msra.mxu0 0.0
        %v6711 = vand.u32 %v252, 4294901760
        %6712 = vmatpush.msra.mxu0 %v6711
        %v6713 = vand.u32 %v251, 4294901760
        %6714 = vmatpush.msra.mxu0 %v6713
        %v6715 = vand.u32 %v5451, 4294901760
        %v6716 = vsub.f32 %v5451, %v6715
        %v6717 = vand.u32 %v6716, 4294901760
        %6718 = vmatmul.f32.gmra.mxu0 %v6717
        %v6719 = vpop.f32.mrf.mxu0
        %v6720 = vadd.f32 %v6690, %v6719
        %v6721 = vand.u32 %v5454, 4294901760
        %v6722 = vsub.f32 %v5454, %v6721
        %v6723 = vand.u32 %v6722, 4294901760
        %6724 = vmatmul.f32.gmra.mxu0 %v6723
        %v6725 = vpop.f32.mrf.mxu0
        %v6726 = vadd.f32 %v6695, %v6725
        %6727 = vdwg.mxu0
        %6728 = vmatpush.msra.mxu0 0.0
        %6729 = vmatpush.msra.mxu0 0.0
        %6730 = vmatpush.msra.mxu0 0.0
        %6731 = vmatpush.msra.mxu0 0.0
        %6732 = vmatpush.msra.mxu0 0.0
        %6733 = vmatpush.msra.mxu0 0.0
        %6734 = vmatpush.msra.mxu0 0.0
        %6735 = vmatpush.msra.mxu0 0.0
        %6736 = vmatpush.msra.mxu0 0.0
        %6737 = vmatpush.msra.mxu0 0.0
        %6738 = vmatpush.msra.mxu0 0.0
        %6739 = vmatpush.msra.mxu0 0.0
        %6740 = vmatpush.msra.mxu0 0.0
        %6741 = vmatpush.msra.mxu0 0.0
        %v6742 = vand.u32 %v252, 4294901760
        %v6743 = vsub.f32 %v252, %v6742
        %v6744 = vand.u32 %v6743, 4294901760
        %6745 = vmatpush.msra.mxu0 %v6744
        %v6746 = vand.u32 %v251, 4294901760
        %v6747 = vsub.f32 %v251, %v6746
        %v6748 = vand.u32 %v6747, 4294901760
        %6749 = vmatpush.msra.mxu0 %v6748
        %v6750 = vand.u32 %v5451, 4294901760
        %6751 = vmatmul.f32.gmra.mxu0 %v6750
        %v6752 = vpop.f32.mrf.mxu0
        %v6753 = vadd.f32 %v6720, %v6752
        %v6754 = vand.u32 %v5454, 4294901760
        %6755 = vmatmul.f32.gmra.mxu0 %v6754
        %v6756 = vpop.f32.mrf.mxu0
        %v6757 = vadd.f32 %v6726, %v6756
        %6758 = vdwg.mxu0
        %6759 = vmatpush.msra.mxu0 0.0
        %6760 = vmatpush.msra.mxu0 0.0
        %6761 = vmatpush.msra.mxu0 0.0
        %6762 = vmatpush.msra.mxu0 0.0
        %6763 = vmatpush.msra.mxu0 0.0
        %6764 = vmatpush.msra.mxu0 0.0
        %6765 = vmatpush.msra.mxu0 0.0
        %6766 = vmatpush.msra.mxu0 0.0
        %6767 = vmatpush.msra.mxu0 0.0
        %6768 = vmatpush.msra.mxu0 0.0
        %6769 = vmatpush.msra.mxu0 0.0
        %6770 = vmatpush.msra.mxu0 0.0
        %6771 = vmatpush.msra.mxu0 0.0
        %6772 = vmatpush.msra.mxu0 0.0
        %v6773 = vand.u32 %v252, 4294901760
        %6774 = vmatpush.msra.mxu0 %v6773
        %v6775 = vand.u32 %v251, 4294901760
        %6776 = vmatpush.msra.mxu0 %v6775
        %v6777 = vand.u32 %v5451, 4294901760
        %6778 = vmatmul.f32.gmra.mxu0 %v6777
        %v6779 = vpop.f32.mrf.mxu0
        %v6780 = vadd.f32 %v6753, %v6779
        %v6781 = vand.u32 %v5454, 4294901760
        %6782 = vmatmul.f32.gmra.mxu0 %v6781
        %v6783 = vpop.f32.mrf.mxu0
        %v6784 = vadd.f32 %v6757, %v6783
        %6785 = vdwg.mxu0
        %6786 = vmatpush.msra.mxu0 0.0
        %6787 = vmatpush.msra.mxu0 0.0
        %6788 = vmatpush.msra.mxu0 0.0
        %6789 = vmatpush.msra.mxu0 0.0
        %6790 = vmatpush.msra.mxu0 0.0
        %6791 = vmatpush.msra.mxu0 0.0
        %6792 = vmatpush.msra.mxu0 0.0
        %6793 = vmatpush.msra.mxu0 0.0
        %6794 = vmatpush.msra.mxu0 0.0
        %6795 = vmatpush.msra.mxu0 0.0
        %6796 = vmatpush.msra.mxu0 0.0
        %6797 = vmatpush.msra.mxu0 0.0
        %6798 = vmatpush.msra.mxu0 0.0
        %6799 = vmatpush.msra.mxu0 0.0
        %v6800 = vand.u32 %v254, 4294901760
        %6801 = vmatpush.msra.mxu0 %v6800
        %v6802 = vand.u32 %v253, 4294901760
        %6803 = vmatpush.msra.mxu0 %v6802
        %v6804 = vand.u32 %v5451, 4294901760
        %v6805 = vsub.f32 %v5451, %v6804
        %v6806 = vand.u32 %v6805, 4294901760
        %v6807 = vsub.f32 %v6805, %v6806
        %v6808 = vand.u32 %v6807, 4294901760
        %6809 = vmatmul.f32.gmra.mxu0 %v6808
        %v6810 = vpop.f32.mrf.mxu0
        %v6811 = vadd.f32 0.0, %v6810
        %v6812 = vand.u32 %v5454, 4294901760
        %v6813 = vsub.f32 %v5454, %v6812
        %v6814 = vand.u32 %v6813, 4294901760
        %v6815 = vsub.f32 %v6813, %v6814
        %v6816 = vand.u32 %v6815, 4294901760
        %6817 = vmatmul.f32.gmra.mxu0 %v6816
        %v6818 = vpop.f32.mrf.mxu0
        %v6819 = vadd.f32 0.0, %v6818
        %6820 = vdwg.mxu0
        %6821 = vmatpush.msra.mxu0 0.0
        %6822 = vmatpush.msra.mxu0 0.0
        %6823 = vmatpush.msra.mxu0 0.0
        %6824 = vmatpush.msra.mxu0 0.0
        %6825 = vmatpush.msra.mxu0 0.0
        %6826 = vmatpush.msra.mxu0 0.0
        %6827 = vmatpush.msra.mxu0 0.0
        %6828 = vmatpush.msra.mxu0 0.0
        %6829 = vmatpush.msra.mxu0 0.0
        %6830 = vmatpush.msra.mxu0 0.0
        %6831 = vmatpush.msra.mxu0 0.0
        %6832 = vmatpush.msra.mxu0 0.0
        %6833 = vmatpush.msra.mxu0 0.0
        %6834 = vmatpush.msra.mxu0 0.0
        %v6835 = vand.u32 %v254, 4294901760
        %v6836 = vsub.f32 %v254, %v6835
        %v6837 = vand.u32 %v6836, 4294901760
        %v6838 = vsub.f32 %v6836, %v6837
        %v6839 = vand.u32 %v6838, 4294901760
        %6840 = vmatpush.msra.mxu0 %v6839
        %v6841 = vand.u32 %v253, 4294901760
        %v6842 = vsub.f32 %v253, %v6841
        %v6843 = vand.u32 %v6842, 4294901760
        %v6844 = vsub.f32 %v6842, %v6843
        %v6845 = vand.u32 %v6844, 4294901760
        %6846 = vmatpush.msra.mxu0 %v6845
        %v6847 = vand.u32 %v5451, 4294901760
        %6848 = vmatmul.f32.gmra.mxu0 %v6847
        %v6849 = vpop.f32.mrf.mxu0
        %v6850 = vadd.f32 %v6811, %v6849
        %v6851 = vand.u32 %v5454, 4294901760
        %6852 = vmatmul.f32.gmra.mxu0 %v6851
        %v6853 = vpop.f32.mrf.mxu0
        %v6854 = vadd.f32 %v6819, %v6853
        %6855 = vdwg.mxu0
        %6856 = vmatpush.msra.mxu0 0.0
        %6857 = vmatpush.msra.mxu0 0.0
        %6858 = vmatpush.msra.mxu0 0.0
        %6859 = vmatpush.msra.mxu0 0.0
        %6860 = vmatpush.msra.mxu0 0.0
        %6861 = vmatpush.msra.mxu0 0.0
        %6862 = vmatpush.msra.mxu0 0.0
        %6863 = vmatpush.msra.mxu0 0.0
        %6864 = vmatpush.msra.mxu0 0.0
        %6865 = vmatpush.msra.mxu0 0.0
        %6866 = vmatpush.msra.mxu0 0.0
        %6867 = vmatpush.msra.mxu0 0.0
        %6868 = vmatpush.msra.mxu0 0.0
        %6869 = vmatpush.msra.mxu0 0.0
        %v6870 = vand.u32 %v254, 4294901760
        %v6871 = vsub.f32 %v254, %v6870
        %6872 = vmatpush.msra.mxu0 %v6871
        %v6873 = vand.u32 %v253, 4294901760
        %v6874 = vsub.f32 %v253, %v6873
        %6875 = vmatpush.msra.mxu0 %v6874
        %v6876 = vand.u32 %v5451, 4294901760
        %v6877 = vsub.f32 %v5451, %v6876
        %6878 = vmatmul.f32.gmra.mxu0 %v6877
        %v6879 = vpop.f32.mrf.mxu0
        %v6880 = vadd.f32 %v6850, %v6879
        %v6881 = vand.u32 %v5454, 4294901760
        %v6882 = vsub.f32 %v5454, %v6881
        %6883 = vmatmul.f32.gmra.mxu0 %v6882
        %v6884 = vpop.f32.mrf.mxu0
        %v6885 = vadd.f32 %v6854, %v6884
        %6886 = vdwg.mxu0
        %6887 = vmatpush.msra.mxu0 0.0
        %6888 = vmatpush.msra.mxu0 0.0
        %6889 = vmatpush.msra.mxu0 0.0
        %6890 = vmatpush.msra.mxu0 0.0
        %6891 = vmatpush.msra.mxu0 0.0
        %6892 = vmatpush.msra.mxu0 0.0
        %6893 = vmatpush.msra.mxu0 0.0
        %6894 = vmatpush.msra.mxu0 0.0
        %6895 = vmatpush.msra.mxu0 0.0
        %6896 = vmatpush.msra.mxu0 0.0
        %6897 = vmatpush.msra.mxu0 0.0
        %6898 = vmatpush.msra.mxu0 0.0
        %6899 = vmatpush.msra.mxu0 0.0
        %6900 = vmatpush.msra.mxu0 0.0
        %v6901 = vand.u32 %v254, 4294901760
        %6902 = vmatpush.msra.mxu0 %v6901
        %v6903 = vand.u32 %v253, 4294901760
        %6904 = vmatpush.msra.mxu0 %v6903
        %v6905 = vand.u32 %v5451, 4294901760
        %v6906 = vsub.f32 %v5451, %v6905
        %v6907 = vand.u32 %v6906, 4294901760
        %6908 = vmatmul.f32.gmra.mxu0 %v6907
        %v6909 = vpop.f32.mrf.mxu0
        %v6910 = vadd.f32 %v6880, %v6909
        %v6911 = vand.u32 %v5454, 4294901760
        %v6912 = vsub.f32 %v5454, %v6911
        %v6913 = vand.u32 %v6912, 4294901760
        %6914 = vmatmul.f32.gmra.mxu0 %v6913
        %v6915 = vpop.f32.mrf.mxu0
        %v6916 = vadd.f32 %v6885, %v6915
        %6917 = vdwg.mxu0
        %6918 = vmatpush.msra.mxu0 0.0
        %6919 = vmatpush.msra.mxu0 0.0
        %6920 = vmatpush.msra.mxu0 0.0
        %6921 = vmatpush.msra.mxu0 0.0
        %6922 = vmatpush.msra.mxu0 0.0
        %6923 = vmatpush.msra.mxu0 0.0
        %6924 = vmatpush.msra.mxu0 0.0
        %6925 = vmatpush.msra.mxu0 0.0
        %6926 = vmatpush.msra.mxu0 0.0
        %6927 = vmatpush.msra.mxu0 0.0
        %6928 = vmatpush.msra.mxu0 0.0
        %6929 = vmatpush.msra.mxu0 0.0
        %6930 = vmatpush.msra.mxu0 0.0
        %6931 = vmatpush.msra.mxu0 0.0
        %v6932 = vand.u32 %v254, 4294901760
        %v6933 = vsub.f32 %v254, %v6932
        %v6934 = vand.u32 %v6933, 4294901760
        %6935 = vmatpush.msra.mxu0 %v6934
        %v6936 = vand.u32 %v253, 4294901760
        %v6937 = vsub.f32 %v253, %v6936
        %v6938 = vand.u32 %v6937, 4294901760
        %6939 = vmatpush.msra.mxu0 %v6938
        %v6940 = vand.u32 %v5451, 4294901760
        %6941 = vmatmul.f32.gmra.mxu0 %v6940
        %v6942 = vpop.f32.mrf.mxu0
        %v6943 = vadd.f32 %v6910, %v6942
        %v6944 = vand.u32 %v5454, 4294901760
        %6945 = vmatmul.f32.gmra.mxu0 %v6944
        %v6946 = vpop.f32.mrf.mxu0
        %v6947 = vadd.f32 %v6916, %v6946
        %6948 = vdwg.mxu0
        %6949 = vmatpush.msra.mxu0 0.0
        %6950 = vmatpush.msra.mxu0 0.0
        %6951 = vmatpush.msra.mxu0 0.0
        %6952 = vmatpush.msra.mxu0 0.0
        %6953 = vmatpush.msra.mxu0 0.0
        %6954 = vmatpush.msra.mxu0 0.0
        %6955 = vmatpush.msra.mxu0 0.0
        %6956 = vmatpush.msra.mxu0 0.0
        %6957 = vmatpush.msra.mxu0 0.0
        %6958 = vmatpush.msra.mxu0 0.0
        %6959 = vmatpush.msra.mxu0 0.0
        %6960 = vmatpush.msra.mxu0 0.0
        %6961 = vmatpush.msra.mxu0 0.0
        %6962 = vmatpush.msra.mxu0 0.0
        %v6963 = vand.u32 %v254, 4294901760
        %6964 = vmatpush.msra.mxu0 %v6963
        %v6965 = vand.u32 %v253, 4294901760
        %6966 = vmatpush.msra.mxu0 %v6965
        %v6967 = vand.u32 %v5451, 4294901760
        %6968 = vmatmul.f32.gmra.mxu0 %v6967
        %v6969 = vpop.f32.mrf.mxu0
        %v6970 = vadd.f32 %v6943, %v6969
        %v6971 = vand.u32 %v5454, 4294901760
        %6972 = vmatmul.f32.gmra.mxu0 %v6971
        %v6973 = vpop.f32.mrf.mxu0
        %v6974 = vadd.f32 %v6947, %v6973
        %6975 = vdwg.mxu0
        %v6976 = vld [vmem:[%s2 + $0x60] sm:$0xff]
        %v6977 = vld [vmem:[%s2 + $0x68] sm:$0xff]
        %v6978 = vld [vmem:[%s2 + $0x70] sm:$0xff]
        %v6979 = vld [vmem:[%s2 + $0x78] sm:$0xff]
        %v6981 = vsel %vm263, %v5640, 0
        %v6984 = vsel %vm263, %v5644, 0
        %v6987 = vsel %vm263, %v5830, 0
        %v6990 = vsel %vm263, %v5834, 0
        %v6993 = vsel %vm263, %v6020, 0
        %v6996 = vsel %vm263, %v6024, 0
        %v6999 = vsel %vm263, %v6210, 0
        %v7002 = vsel %vm263, %v6214, 0
        %v7005 = vsel %vm263, %v6400, 0
        %v7008 = vsel %vm263, %v6404, 0
        %v7011 = vsel %vm263, %v6590, 0
        %v7014 = vsel %vm263, %v6594, 0
        %v7017 = vsel %vm263, %v6780, 0
        %v7020 = vsel %vm263, %v6784, 0
        %v7023 = vsel %vm263, %v6970, 0
        %v7026 = vsel %vm263, %v6974, 0
        %7028 = vmatpush.msra.mxu0 0.0
        %7029 = vmatpush.msra.mxu0 0.0
        %7030 = vmatpush.msra.mxu0 0.0
        %7031 = vmatpush.msra.mxu0 0.0
        %7032 = vmatpush.msra.mxu0 0.0
        %7033 = vmatpush.msra.mxu0 0.0
        %7034 = vmatpush.msra.mxu0 0.0
        %7035 = vmatpush.msra.mxu0 0.0
        %7036 = vmatpush.msra.mxu0 0.0
        %7037 = vmatpush.msra.mxu0 0.0
        %7038 = vmatpush.msra.mxu0 0.0
        %7039 = vmatpush.msra.mxu0 0.0
        %v7040 = vand.u32 %v6979, 4294901760
        %7041 = vmatpush.msra.mxu0 %v7040
        %v7042 = vand.u32 %v6978, 4294901760
        %7043 = vmatpush.msra.mxu0 %v7042
        %v7044 = vand.u32 %v6977, 4294901760
        %7045 = vmatpush.msra.mxu0 %v7044
        %v7046 = vand.u32 %v6976, 4294901760
        %7047 = vmatpush.msra.mxu0 %v7046
        %v7048 = vand.u32 %v6981, 4294901760
        %v7049 = vsub.f32 %v6981, %v7048
        %v7050 = vand.u32 %v7049, 4294901760
        %v7051 = vsub.f32 %v7049, %v7050
        %v7052 = vand.u32 %v7051, 4294901760
        %7053 = vmatmul.f32.gmra.mxu0 %v7052
        %v7054 = vpop.f32.mrf.mxu0
        %v7055 = vadd.f32 0.0, %v7054
        %v7056 = vand.u32 %v6984, 4294901760
        %v7057 = vsub.f32 %v6984, %v7056
        %v7058 = vand.u32 %v7057, 4294901760
        %v7059 = vsub.f32 %v7057, %v7058
        %v7060 = vand.u32 %v7059, 4294901760
        %7061 = vmatmul.f32.gmra.mxu0 %v7060
        %v7062 = vpop.f32.mrf.mxu0
        %v7063 = vadd.f32 0.0, %v7062
        %v7064 = vand.u32 %v6987, 4294901760
        %v7065 = vsub.f32 %v6987, %v7064
        %v7066 = vand.u32 %v7065, 4294901760
        %v7067 = vsub.f32 %v7065, %v7066
        %v7068 = vand.u32 %v7067, 4294901760
        %7069 = vmatmul.f32.gmra.mxu0 %v7068
        %v7070 = vpop.f32.mrf.mxu0
        %v7071 = vadd.f32 0.0, %v7070
        %v7072 = vand.u32 %v6990, 4294901760
        %v7073 = vsub.f32 %v6990, %v7072
        %v7074 = vand.u32 %v7073, 4294901760
        %v7075 = vsub.f32 %v7073, %v7074
        %v7076 = vand.u32 %v7075, 4294901760
        %7077 = vmatmul.f32.gmra.mxu0 %v7076
        %v7078 = vpop.f32.mrf.mxu0
        %v7079 = vadd.f32 0.0, %v7078
        %v7080 = vand.u32 %v6993, 4294901760
        %v7081 = vsub.f32 %v6993, %v7080
        %v7082 = vand.u32 %v7081, 4294901760
        %v7083 = vsub.f32 %v7081, %v7082
        %v7084 = vand.u32 %v7083, 4294901760
        %7085 = vmatmul.f32.gmra.mxu0 %v7084
        %v7086 = vpop.f32.mrf.mxu0
        %v7087 = vadd.f32 0.0, %v7086
        %v7088 = vand.u32 %v6996, 4294901760
        %v7089 = vsub.f32 %v6996, %v7088
        %v7090 = vand.u32 %v7089, 4294901760
        %v7091 = vsub.f32 %v7089, %v7090
        %v7092 = vand.u32 %v7091, 4294901760
        %7093 = vmatmul.f32.gmra.mxu0 %v7092
        %v7094 = vpop.f32.mrf.mxu0
        %v7095 = vadd.f32 0.0, %v7094
        %v7096 = vand.u32 %v6999, 4294901760
        %v7097 = vsub.f32 %v6999, %v7096
        %v7098 = vand.u32 %v7097, 4294901760
        %v7099 = vsub.f32 %v7097, %v7098
        %v7100 = vand.u32 %v7099, 4294901760
        %7101 = vmatmul.f32.gmra.mxu0 %v7100
        %v7102 = vpop.f32.mrf.mxu0
        %v7103 = vadd.f32 0.0, %v7102
        %v7104 = vand.u32 %v7002, 4294901760
        %v7105 = vsub.f32 %v7002, %v7104
        %v7106 = vand.u32 %v7105, 4294901760
        %v7107 = vsub.f32 %v7105, %v7106
        %v7108 = vand.u32 %v7107, 4294901760
        %7109 = vmatmul.f32.gmra.mxu0 %v7108
        %v7110 = vpop.f32.mrf.mxu0
        %v7111 = vadd.f32 0.0, %v7110
        %v7112 = vand.u32 %v7005, 4294901760
        %v7113 = vsub.f32 %v7005, %v7112
        %v7114 = vand.u32 %v7113, 4294901760
        %v7115 = vsub.f32 %v7113, %v7114
        %v7116 = vand.u32 %v7115, 4294901760
        %7117 = vmatmul.f32.gmra.mxu0 %v7116
        %v7118 = vpop.f32.mrf.mxu0
        %v7119 = vadd.f32 0.0, %v7118
        %v7120 = vand.u32 %v7008, 4294901760
        %v7121 = vsub.f32 %v7008, %v7120
        %v7122 = vand.u32 %v7121, 4294901760
        %v7123 = vsub.f32 %v7121, %v7122
        %v7124 = vand.u32 %v7123, 4294901760
        %7125 = vmatmul.f32.gmra.mxu0 %v7124
        %v7126 = vpop.f32.mrf.mxu0
        %v7127 = vadd.f32 0.0, %v7126
        %v7128 = vand.u32 %v7011, 4294901760
        %v7129 = vsub.f32 %v7011, %v7128
        %v7130 = vand.u32 %v7129, 4294901760
        %v7131 = vsub.f32 %v7129, %v7130
        %v7132 = vand.u32 %v7131, 4294901760
        %7133 = vmatmul.f32.gmra.mxu0 %v7132
        %v7134 = vpop.f32.mrf.mxu0
        %v7135 = vadd.f32 0.0, %v7134
        %v7136 = vand.u32 %v7014, 4294901760
        %v7137 = vsub.f32 %v7014, %v7136
        %v7138 = vand.u32 %v7137, 4294901760
        %v7139 = vsub.f32 %v7137, %v7138
        %v7140 = vand.u32 %v7139, 4294901760
        %7141 = vmatmul.f32.gmra.mxu0 %v7140
        %v7142 = vpop.f32.mrf.mxu0
        %v7143 = vadd.f32 0.0, %v7142
        %v7144 = vand.u32 %v7017, 4294901760
        %v7145 = vsub.f32 %v7017, %v7144
        %v7146 = vand.u32 %v7145, 4294901760
        %v7147 = vsub.f32 %v7145, %v7146
        %v7148 = vand.u32 %v7147, 4294901760
        %7149 = vmatmul.f32.gmra.mxu0 %v7148
        %v7150 = vpop.f32.mrf.mxu0
        %v7151 = vadd.f32 0.0, %v7150
        %v7152 = vand.u32 %v7020, 4294901760
        %v7153 = vsub.f32 %v7020, %v7152
        %v7154 = vand.u32 %v7153, 4294901760
        %v7155 = vsub.f32 %v7153, %v7154
        %v7156 = vand.u32 %v7155, 4294901760
        %7157 = vmatmul.f32.gmra.mxu0 %v7156
        %v7158 = vpop.f32.mrf.mxu0
        %v7159 = vadd.f32 0.0, %v7158
        %v7160 = vand.u32 %v7023, 4294901760
        %v7161 = vsub.f32 %v7023, %v7160
        %v7162 = vand.u32 %v7161, 4294901760
        %v7163 = vsub.f32 %v7161, %v7162
        %v7164 = vand.u32 %v7163, 4294901760
        %7165 = vmatmul.f32.gmra.mxu0 %v7164
        %v7166 = vpop.f32.mrf.mxu0
        %v7167 = vadd.f32 0.0, %v7166
        %v7168 = vand.u32 %v7026, 4294901760
        %v7169 = vsub.f32 %v7026, %v7168
        %v7170 = vand.u32 %v7169, 4294901760
        %v7171 = vsub.f32 %v7169, %v7170
        %v7172 = vand.u32 %v7171, 4294901760
        %7173 = vmatmul.f32.gmra.mxu0 %v7172
        %v7174 = vpop.f32.mrf.mxu0
        %v7175 = vadd.f32 0.0, %v7174
        %7176 = vdwg.mxu0
        %7177 = vmatpush.msra.mxu0 0.0
        %7178 = vmatpush.msra.mxu0 0.0
        %7179 = vmatpush.msra.mxu0 0.0
        %7180 = vmatpush.msra.mxu0 0.0
        %7181 = vmatpush.msra.mxu0 0.0
        %7182 = vmatpush.msra.mxu0 0.0
        %7183 = vmatpush.msra.mxu0 0.0
        %7184 = vmatpush.msra.mxu0 0.0
        %7185 = vmatpush.msra.mxu0 0.0
        %7186 = vmatpush.msra.mxu0 0.0
        %7187 = vmatpush.msra.mxu0 0.0
        %7188 = vmatpush.msra.mxu0 0.0
        %v7189 = vand.u32 %v6979, 4294901760
        %v7190 = vsub.f32 %v6979, %v7189
        %v7191 = vand.u32 %v7190, 4294901760
        %v7192 = vsub.f32 %v7190, %v7191
        %v7193 = vand.u32 %v7192, 4294901760
        %7194 = vmatpush.msra.mxu0 %v7193
        %v7195 = vand.u32 %v6978, 4294901760
        %v7196 = vsub.f32 %v6978, %v7195
        %v7197 = vand.u32 %v7196, 4294901760
        %v7198 = vsub.f32 %v7196, %v7197
        %v7199 = vand.u32 %v7198, 4294901760
        %7200 = vmatpush.msra.mxu0 %v7199
        %v7201 = vand.u32 %v6977, 4294901760
        %v7202 = vsub.f32 %v6977, %v7201
        %v7203 = vand.u32 %v7202, 4294901760
        %v7204 = vsub.f32 %v7202, %v7203
        %v7205 = vand.u32 %v7204, 4294901760
        %7206 = vmatpush.msra.mxu0 %v7205
        %v7207 = vand.u32 %v6976, 4294901760
        %v7208 = vsub.f32 %v6976, %v7207
        %v7209 = vand.u32 %v7208, 4294901760
        %v7210 = vsub.f32 %v7208, %v7209
        %v7211 = vand.u32 %v7210, 4294901760
        %7212 = vmatpush.msra.mxu0 %v7211
        %v7213 = vand.u32 %v6981, 4294901760
        %7214 = vmatmul.f32.gmra.mxu0 %v7213
        %v7215 = vpop.f32.mrf.mxu0
        %v7216 = vadd.f32 %v7055, %v7215
        %v7217 = vand.u32 %v6984, 4294901760
        %7218 = vmatmul.f32.gmra.mxu0 %v7217
        %v7219 = vpop.f32.mrf.mxu0
        %v7220 = vadd.f32 %v7063, %v7219
        %v7221 = vand.u32 %v6987, 4294901760
        %7222 = vmatmul.f32.gmra.mxu0 %v7221
        %v7223 = vpop.f32.mrf.mxu0
        %v7224 = vadd.f32 %v7071, %v7223
        %v7225 = vand.u32 %v6990, 4294901760
        %7226 = vmatmul.f32.gmra.mxu0 %v7225
        %v7227 = vpop.f32.mrf.mxu0
        %v7228 = vadd.f32 %v7079, %v7227
        %v7229 = vand.u32 %v6993, 4294901760
        %7230 = vmatmul.f32.gmra.mxu0 %v7229
        %v7231 = vpop.f32.mrf.mxu0
        %v7232 = vadd.f32 %v7087, %v7231
        %v7233 = vand.u32 %v6996, 4294901760
        %7234 = vmatmul.f32.gmra.mxu0 %v7233
        %v7235 = vpop.f32.mrf.mxu0
        %v7236 = vadd.f32 %v7095, %v7235
        %v7237 = vand.u32 %v6999, 4294901760
        %7238 = vmatmul.f32.gmra.mxu0 %v7237
        %v7239 = vpop.f32.mrf.mxu0
        %v7240 = vadd.f32 %v7103, %v7239
        %v7241 = vand.u32 %v7002, 4294901760
        %7242 = vmatmul.f32.gmra.mxu0 %v7241
        %v7243 = vpop.f32.mrf.mxu0
        %v7244 = vadd.f32 %v7111, %v7243
        %v7245 = vand.u32 %v7005, 4294901760
        %7246 = vmatmul.f32.gmra.mxu0 %v7245
        %v7247 = vpop.f32.mrf.mxu0
        %v7248 = vadd.f32 %v7119, %v7247
        %v7249 = vand.u32 %v7008, 4294901760
        %7250 = vmatmul.f32.gmra.mxu0 %v7249
        %v7251 = vpop.f32.mrf.mxu0
        %v7252 = vadd.f32 %v7127, %v7251
        %v7253 = vand.u32 %v7011, 4294901760
        %7254 = vmatmul.f32.gmra.mxu0 %v7253
        %v7255 = vpop.f32.mrf.mxu0
        %v7256 = vadd.f32 %v7135, %v7255
        %v7257 = vand.u32 %v7014, 4294901760
        %7258 = vmatmul.f32.gmra.mxu0 %v7257
        %v7259 = vpop.f32.mrf.mxu0
        %v7260 = vadd.f32 %v7143, %v7259
        %v7261 = vand.u32 %v7017, 4294901760
        %7262 = vmatmul.f32.gmra.mxu0 %v7261
        %v7263 = vpop.f32.mrf.mxu0
        %v7264 = vadd.f32 %v7151, %v7263
        %v7265 = vand.u32 %v7020, 4294901760
        %7266 = vmatmul.f32.gmra.mxu0 %v7265
        %v7267 = vpop.f32.mrf.mxu0
        %v7268 = vadd.f32 %v7159, %v7267
        %v7269 = vand.u32 %v7023, 4294901760
        %7270 = vmatmul.f32.gmra.mxu0 %v7269
        %v7271 = vpop.f32.mrf.mxu0
        %v7272 = vadd.f32 %v7167, %v7271
        %v7273 = vand.u32 %v7026, 4294901760
        %7274 = vmatmul.f32.gmra.mxu0 %v7273
        %v7275 = vpop.f32.mrf.mxu0
        %v7276 = vadd.f32 %v7175, %v7275
        %7277 = vdwg.mxu0
        %7278 = vmatpush.msra.mxu0 0.0
        %7279 = vmatpush.msra.mxu0 0.0
        %7280 = vmatpush.msra.mxu0 0.0
        %7281 = vmatpush.msra.mxu0 0.0
        %7282 = vmatpush.msra.mxu0 0.0
        %7283 = vmatpush.msra.mxu0 0.0
        %7284 = vmatpush.msra.mxu0 0.0
        %7285 = vmatpush.msra.mxu0 0.0
        %7286 = vmatpush.msra.mxu0 0.0
        %7287 = vmatpush.msra.mxu0 0.0
        %7288 = vmatpush.msra.mxu0 0.0
        %7289 = vmatpush.msra.mxu0 0.0
        %v7290 = vand.u32 %v6979, 4294901760
        %v7291 = vsub.f32 %v6979, %v7290
        %7292 = vmatpush.msra.mxu0 %v7291
        %v7293 = vand.u32 %v6978, 4294901760
        %v7294 = vsub.f32 %v6978, %v7293
        %7295 = vmatpush.msra.mxu0 %v7294
        %v7296 = vand.u32 %v6977, 4294901760
        %v7297 = vsub.f32 %v6977, %v7296
        %7298 = vmatpush.msra.mxu0 %v7297
        %v7299 = vand.u32 %v6976, 4294901760
        %v7300 = vsub.f32 %v6976, %v7299
        %7301 = vmatpush.msra.mxu0 %v7300
        %v7302 = vand.u32 %v6981, 4294901760
        %v7303 = vsub.f32 %v6981, %v7302
        %7304 = vmatmul.f32.gmra.mxu0 %v7303
        %v7305 = vpop.f32.mrf.mxu0
        %v7306 = vadd.f32 %v7216, %v7305
        %v7307 = vand.u32 %v6984, 4294901760
        %v7308 = vsub.f32 %v6984, %v7307
        %7309 = vmatmul.f32.gmra.mxu0 %v7308
        %v7310 = vpop.f32.mrf.mxu0
        %v7311 = vadd.f32 %v7220, %v7310
        %v7312 = vand.u32 %v6987, 4294901760
        %v7313 = vsub.f32 %v6987, %v7312
        %7314 = vmatmul.f32.gmra.mxu0 %v7313
        %v7315 = vpop.f32.mrf.mxu0
        %v7316 = vadd.f32 %v7224, %v7315
        %v7317 = vand.u32 %v6990, 4294901760
        %v7318 = vsub.f32 %v6990, %v7317
        %7319 = vmatmul.f32.gmra.mxu0 %v7318
        %v7320 = vpop.f32.mrf.mxu0
        %v7321 = vadd.f32 %v7228, %v7320
        %v7322 = vand.u32 %v6993, 4294901760
        %v7323 = vsub.f32 %v6993, %v7322
        %7324 = vmatmul.f32.gmra.mxu0 %v7323
        %v7325 = vpop.f32.mrf.mxu0
        %v7326 = vadd.f32 %v7232, %v7325
        %v7327 = vand.u32 %v6996, 4294901760
        %v7328 = vsub.f32 %v6996, %v7327
        %7329 = vmatmul.f32.gmra.mxu0 %v7328
        %v7330 = vpop.f32.mrf.mxu0
        %v7331 = vadd.f32 %v7236, %v7330
        %v7332 = vand.u32 %v6999, 4294901760
        %v7333 = vsub.f32 %v6999, %v7332
        %7334 = vmatmul.f32.gmra.mxu0 %v7333
        %v7335 = vpop.f32.mrf.mxu0
        %v7336 = vadd.f32 %v7240, %v7335
        %v7337 = vand.u32 %v7002, 4294901760
        %v7338 = vsub.f32 %v7002, %v7337
        %7339 = vmatmul.f32.gmra.mxu0 %v7338
        %v7340 = vpop.f32.mrf.mxu0
        %v7341 = vadd.f32 %v7244, %v7340
        %v7342 = vand.u32 %v7005, 4294901760
        %v7343 = vsub.f32 %v7005, %v7342
        %7344 = vmatmul.f32.gmra.mxu0 %v7343
        %v7345 = vpop.f32.mrf.mxu0
        %v7346 = vadd.f32 %v7248, %v7345
        %v7347 = vand.u32 %v7008, 4294901760
        %v7348 = vsub.f32 %v7008, %v7347
        %7349 = vmatmul.f32.gmra.mxu0 %v7348
        %v7350 = vpop.f32.mrf.mxu0
        %v7351 = vadd.f32 %v7252, %v7350
        %v7352 = vand.u32 %v7011, 4294901760
        %v7353 = vsub.f32 %v7011, %v7352
        %7354 = vmatmul.f32.gmra.mxu0 %v7353
        %v7355 = vpop.f32.mrf.mxu0
        %v7356 = vadd.f32 %v7256, %v7355
        %v7357 = vand.u32 %v7014, 4294901760
        %v7358 = vsub.f32 %v7014, %v7357
        %7359 = vmatmul.f32.gmra.mxu0 %v7358
        %v7360 = vpop.f32.mrf.mxu0
        %v7361 = vadd.f32 %v7260, %v7360
        %v7362 = vand.u32 %v7017, 4294901760
        %v7363 = vsub.f32 %v7017, %v7362
        %7364 = vmatmul.f32.gmra.mxu0 %v7363
        %v7365 = vpop.f32.mrf.mxu0
        %v7366 = vadd.f32 %v7264, %v7365
        %v7367 = vand.u32 %v7020, 4294901760
        %v7368 = vsub.f32 %v7020, %v7367
        %7369 = vmatmul.f32.gmra.mxu0 %v7368
        %v7370 = vpop.f32.mrf.mxu0
        %v7371 = vadd.f32 %v7268, %v7370
        %v7372 = vand.u32 %v7023, 4294901760
        %v7373 = vsub.f32 %v7023, %v7372
        %7374 = vmatmul.f32.gmra.mxu0 %v7373
        %v7375 = vpop.f32.mrf.mxu0
        %v7376 = vadd.f32 %v7272, %v7375
        %v7377 = vand.u32 %v7026, 4294901760
        %v7378 = vsub.f32 %v7026, %v7377
        %7379 = vmatmul.f32.gmra.mxu0 %v7378
        %v7380 = vpop.f32.mrf.mxu0
        %v7381 = vadd.f32 %v7276, %v7380
        %7382 = vdwg.mxu0
        %7383 = vmatpush.msra.mxu0 0.0
        %7384 = vmatpush.msra.mxu0 0.0
        %7385 = vmatpush.msra.mxu0 0.0
        %7386 = vmatpush.msra.mxu0 0.0
        %7387 = vmatpush.msra.mxu0 0.0
        %7388 = vmatpush.msra.mxu0 0.0
        %7389 = vmatpush.msra.mxu0 0.0
        %7390 = vmatpush.msra.mxu0 0.0
        %7391 = vmatpush.msra.mxu0 0.0
        %7392 = vmatpush.msra.mxu0 0.0
        %7393 = vmatpush.msra.mxu0 0.0
        %7394 = vmatpush.msra.mxu0 0.0
        %v7395 = vand.u32 %v6979, 4294901760
        %7396 = vmatpush.msra.mxu0 %v7395
        %v7397 = vand.u32 %v6978, 4294901760
        %7398 = vmatpush.msra.mxu0 %v7397
        %v7399 = vand.u32 %v6977, 4294901760
        %7400 = vmatpush.msra.mxu0 %v7399
        %v7401 = vand.u32 %v6976, 4294901760
        %7402 = vmatpush.msra.mxu0 %v7401
        %v7403 = vand.u32 %v6981, 4294901760
        %v7404 = vsub.f32 %v6981, %v7403
        %v7405 = vand.u32 %v7404, 4294901760
        %7406 = vmatmul.f32.gmra.mxu0 %v7405
        %v7407 = vpop.f32.mrf.mxu0
        %v7408 = vadd.f32 %v7306, %v7407
        %v7409 = vand.u32 %v6984, 4294901760
        %v7410 = vsub.f32 %v6984, %v7409
        %v7411 = vand.u32 %v7410, 4294901760
        %7412 = vmatmul.f32.gmra.mxu0 %v7411
        %v7413 = vpop.f32.mrf.mxu0
        %v7414 = vadd.f32 %v7311, %v7413
        %v7415 = vand.u32 %v6987, 4294901760
        %v7416 = vsub.f32 %v6987, %v7415
        %v7417 = vand.u32 %v7416, 4294901760
        %7418 = vmatmul.f32.gmra.mxu0 %v7417
        %v7419 = vpop.f32.mrf.mxu0
        %v7420 = vadd.f32 %v7316, %v7419
        %v7421 = vand.u32 %v6990, 4294901760
        %v7422 = vsub.f32 %v6990, %v7421
        %v7423 = vand.u32 %v7422, 4294901760
        %7424 = vmatmul.f32.gmra.mxu0 %v7423
        %v7425 = vpop.f32.mrf.mxu0
        %v7426 = vadd.f32 %v7321, %v7425
        %v7427 = vand.u32 %v6993, 4294901760
        %v7428 = vsub.f32 %v6993, %v7427
        %v7429 = vand.u32 %v7428, 4294901760
        %7430 = vmatmul.f32.gmra.mxu0 %v7429
        %v7431 = vpop.f32.mrf.mxu0
        %v7432 = vadd.f32 %v7326, %v7431
        %v7433 = vand.u32 %v6996, 4294901760
        %v7434 = vsub.f32 %v6996, %v7433
        %v7435 = vand.u32 %v7434, 4294901760
        %7436 = vmatmul.f32.gmra.mxu0 %v7435
        %v7437 = vpop.f32.mrf.mxu0
        %v7438 = vadd.f32 %v7331, %v7437
        %v7439 = vand.u32 %v6999, 4294901760
        %v7440 = vsub.f32 %v6999, %v7439
        %v7441 = vand.u32 %v7440, 4294901760
        %7442 = vmatmul.f32.gmra.mxu0 %v7441
        %v7443 = vpop.f32.mrf.mxu0
        %v7444 = vadd.f32 %v7336, %v7443
        %v7445 = vand.u32 %v7002, 4294901760
        %v7446 = vsub.f32 %v7002, %v7445
        %v7447 = vand.u32 %v7446, 4294901760
        %7448 = vmatmul.f32.gmra.mxu0 %v7447
        %v7449 = vpop.f32.mrf.mxu0
        %v7450 = vadd.f32 %v7341, %v7449
        %v7451 = vand.u32 %v7005, 4294901760
        %v7452 = vsub.f32 %v7005, %v7451
        %v7453 = vand.u32 %v7452, 4294901760
        %7454 = vmatmul.f32.gmra.mxu0 %v7453
        %v7455 = vpop.f32.mrf.mxu0
        %v7456 = vadd.f32 %v7346, %v7455
        %v7457 = vand.u32 %v7008, 4294901760
        %v7458 = vsub.f32 %v7008, %v7457
        %v7459 = vand.u32 %v7458, 4294901760
        %7460 = vmatmul.f32.gmra.mxu0 %v7459
        %v7461 = vpop.f32.mrf.mxu0
        %v7462 = vadd.f32 %v7351, %v7461
        %v7463 = vand.u32 %v7011, 4294901760
        %v7464 = vsub.f32 %v7011, %v7463
        %v7465 = vand.u32 %v7464, 4294901760
        %7466 = vmatmul.f32.gmra.mxu0 %v7465
        %v7467 = vpop.f32.mrf.mxu0
        %v7468 = vadd.f32 %v7356, %v7467
        %v7469 = vand.u32 %v7014, 4294901760
        %v7470 = vsub.f32 %v7014, %v7469
        %v7471 = vand.u32 %v7470, 4294901760
        %7472 = vmatmul.f32.gmra.mxu0 %v7471
        %v7473 = vpop.f32.mrf.mxu0
        %v7474 = vadd.f32 %v7361, %v7473
        %v7475 = vand.u32 %v7017, 4294901760
        %v7476 = vsub.f32 %v7017, %v7475
        %v7477 = vand.u32 %v7476, 4294901760
        %7478 = vmatmul.f32.gmra.mxu0 %v7477
        %v7479 = vpop.f32.mrf.mxu0
        %v7480 = vadd.f32 %v7366, %v7479
        %v7481 = vand.u32 %v7020, 4294901760
        %v7482 = vsub.f32 %v7020, %v7481
        %v7483 = vand.u32 %v7482, 4294901760
        %7484 = vmatmul.f32.gmra.mxu0 %v7483
        %v7485 = vpop.f32.mrf.mxu0
        %v7486 = vadd.f32 %v7371, %v7485
        %v7487 = vand.u32 %v7023, 4294901760
        %v7488 = vsub.f32 %v7023, %v7487
        %v7489 = vand.u32 %v7488, 4294901760
        %7490 = vmatmul.f32.gmra.mxu0 %v7489
        %v7491 = vpop.f32.mrf.mxu0
        %v7492 = vadd.f32 %v7376, %v7491
        %v7493 = vand.u32 %v7026, 4294901760
        %v7494 = vsub.f32 %v7026, %v7493
        %v7495 = vand.u32 %v7494, 4294901760
        %7496 = vmatmul.f32.gmra.mxu0 %v7495
        %v7497 = vpop.f32.mrf.mxu0
        %v7498 = vadd.f32 %v7381, %v7497
        %7499 = vdwg.mxu0
        %7500 = vmatpush.msra.mxu0 0.0
        %7501 = vmatpush.msra.mxu0 0.0
        %7502 = vmatpush.msra.mxu0 0.0
        %7503 = vmatpush.msra.mxu0 0.0
        %7504 = vmatpush.msra.mxu0 0.0
        %7505 = vmatpush.msra.mxu0 0.0
        %7506 = vmatpush.msra.mxu0 0.0
        %7507 = vmatpush.msra.mxu0 0.0
        %7508 = vmatpush.msra.mxu0 0.0
        %7509 = vmatpush.msra.mxu0 0.0
        %7510 = vmatpush.msra.mxu0 0.0
        %7511 = vmatpush.msra.mxu0 0.0
        %v7512 = vand.u32 %v6979, 4294901760
        %v7513 = vsub.f32 %v6979, %v7512
        %v7514 = vand.u32 %v7513, 4294901760
        %7515 = vmatpush.msra.mxu0 %v7514
        %v7516 = vand.u32 %v6978, 4294901760
        %v7517 = vsub.f32 %v6978, %v7516
        %v7518 = vand.u32 %v7517, 4294901760
        %7519 = vmatpush.msra.mxu0 %v7518
        %v7520 = vand.u32 %v6977, 4294901760
        %v7521 = vsub.f32 %v6977, %v7520
        %v7522 = vand.u32 %v7521, 4294901760
        %7523 = vmatpush.msra.mxu0 %v7522
        %v7524 = vand.u32 %v6976, 4294901760
        %v7525 = vsub.f32 %v6976, %v7524
        %v7526 = vand.u32 %v7525, 4294901760
        %7527 = vmatpush.msra.mxu0 %v7526
        %v7528 = vand.u32 %v6981, 4294901760
        %7529 = vmatmul.f32.gmra.mxu0 %v7528
        %v7530 = vpop.f32.mrf.mxu0
        %v7531 = vadd.f32 %v7408, %v7530
        %v7532 = vand.u32 %v6984, 4294901760
        %7533 = vmatmul.f32.gmra.mxu0 %v7532
        %v7534 = vpop.f32.mrf.mxu0
        %v7535 = vadd.f32 %v7414, %v7534
        %v7536 = vand.u32 %v6987, 4294901760
        %7537 = vmatmul.f32.gmra.mxu0 %v7536
        %v7538 = vpop.f32.mrf.mxu0
        %v7539 = vadd.f32 %v7420, %v7538
        %v7540 = vand.u32 %v6990, 4294901760
        %7541 = vmatmul.f32.gmra.mxu0 %v7540
        %v7542 = vpop.f32.mrf.mxu0
        %v7543 = vadd.f32 %v7426, %v7542
        %v7544 = vand.u32 %v6993, 4294901760
        %7545 = vmatmul.f32.gmra.mxu0 %v7544
        %v7546 = vpop.f32.mrf.mxu0
        %v7547 = vadd.f32 %v7432, %v7546
        %v7548 = vand.u32 %v6996, 4294901760
        %7549 = vmatmul.f32.gmra.mxu0 %v7548
        %v7550 = vpop.f32.mrf.mxu0
        %v7551 = vadd.f32 %v7438, %v7550
        %v7552 = vand.u32 %v6999, 4294901760
        %7553 = vmatmul.f32.gmra.mxu0 %v7552
        %v7554 = vpop.f32.mrf.mxu0
        %v7555 = vadd.f32 %v7444, %v7554
        %v7556 = vand.u32 %v7002, 4294901760
        %7557 = vmatmul.f32.gmra.mxu0 %v7556
        %v7558 = vpop.f32.mrf.mxu0
        %v7559 = vadd.f32 %v7450, %v7558
        %v7560 = vand.u32 %v7005, 4294901760
        %7561 = vmatmul.f32.gmra.mxu0 %v7560
        %v7562 = vpop.f32.mrf.mxu0
        %v7563 = vadd.f32 %v7456, %v7562
        %v7564 = vand.u32 %v7008, 4294901760
        %7565 = vmatmul.f32.gmra.mxu0 %v7564
        %v7566 = vpop.f32.mrf.mxu0
        %v7567 = vadd.f32 %v7462, %v7566
        %v7568 = vand.u32 %v7011, 4294901760
        %7569 = vmatmul.f32.gmra.mxu0 %v7568
        %v7570 = vpop.f32.mrf.mxu0
        %v7571 = vadd.f32 %v7468, %v7570
        %v7572 = vand.u32 %v7014, 4294901760
        %7573 = vmatmul.f32.gmra.mxu0 %v7572
        %v7574 = vpop.f32.mrf.mxu0
        %v7575 = vadd.f32 %v7474, %v7574
        %v7576 = vand.u32 %v7017, 4294901760
        %7577 = vmatmul.f32.gmra.mxu0 %v7576
        %v7578 = vpop.f32.mrf.mxu0
        %v7579 = vadd.f32 %v7480, %v7578
        %v7580 = vand.u32 %v7020, 4294901760
        %7581 = vmatmul.f32.gmra.mxu0 %v7580
        %v7582 = vpop.f32.mrf.mxu0
        %v7583 = vadd.f32 %v7486, %v7582
        %v7584 = vand.u32 %v7023, 4294901760
        %7585 = vmatmul.f32.gmra.mxu0 %v7584
        %v7586 = vpop.f32.mrf.mxu0
        %v7587 = vadd.f32 %v7492, %v7586
        %v7588 = vand.u32 %v7026, 4294901760
        %7589 = vmatmul.f32.gmra.mxu0 %v7588
        %v7590 = vpop.f32.mrf.mxu0
        %v7591 = vadd.f32 %v7498, %v7590
        %7592 = vdwg.mxu0
        %7593 = vmatpush.msra.mxu0 0.0
        %7594 = vmatpush.msra.mxu0 0.0
        %7595 = vmatpush.msra.mxu0 0.0
        %7596 = vmatpush.msra.mxu0 0.0
        %7597 = vmatpush.msra.mxu0 0.0
        %7598 = vmatpush.msra.mxu0 0.0
        %7599 = vmatpush.msra.mxu0 0.0
        %7600 = vmatpush.msra.mxu0 0.0
        %7601 = vmatpush.msra.mxu0 0.0
        %7602 = vmatpush.msra.mxu0 0.0
        %7603 = vmatpush.msra.mxu0 0.0
        %7604 = vmatpush.msra.mxu0 0.0
        %v7605 = vand.u32 %v6979, 4294901760
        %7606 = vmatpush.msra.mxu0 %v7605
        %v7607 = vand.u32 %v6978, 4294901760
        %7608 = vmatpush.msra.mxu0 %v7607
        %v7609 = vand.u32 %v6977, 4294901760
        %7610 = vmatpush.msra.mxu0 %v7609
        %v7611 = vand.u32 %v6976, 4294901760
        %7612 = vmatpush.msra.mxu0 %v7611
        %v7613 = vand.u32 %v6981, 4294901760
        %7614 = vmatmul.f32.gmra.mxu0 %v7613
        %v7615 = vpop.f32.mrf.mxu0
        %v7616 = vadd.f32 %v7531, %v7615
        %v7617 = vand.u32 %v6984, 4294901760
        %7618 = vmatmul.f32.gmra.mxu0 %v7617
        %v7619 = vpop.f32.mrf.mxu0
        %v7620 = vadd.f32 %v7535, %v7619
        %v7621 = vand.u32 %v6987, 4294901760
        %7622 = vmatmul.f32.gmra.mxu0 %v7621
        %v7623 = vpop.f32.mrf.mxu0
        %v7624 = vadd.f32 %v7539, %v7623
        %v7625 = vand.u32 %v6990, 4294901760
        %7626 = vmatmul.f32.gmra.mxu0 %v7625
        %v7627 = vpop.f32.mrf.mxu0
        %v7628 = vadd.f32 %v7543, %v7627
        %v7629 = vand.u32 %v6993, 4294901760
        %7630 = vmatmul.f32.gmra.mxu0 %v7629
        %v7631 = vpop.f32.mrf.mxu0
        %v7632 = vadd.f32 %v7547, %v7631
        %v7633 = vand.u32 %v6996, 4294901760
        %7634 = vmatmul.f32.gmra.mxu0 %v7633
        %v7635 = vpop.f32.mrf.mxu0
        %v7636 = vadd.f32 %v7551, %v7635
        %v7637 = vand.u32 %v6999, 4294901760
        %7638 = vmatmul.f32.gmra.mxu0 %v7637
        %v7639 = vpop.f32.mrf.mxu0
        %v7640 = vadd.f32 %v7555, %v7639
        %v7641 = vand.u32 %v7002, 4294901760
        %7642 = vmatmul.f32.gmra.mxu0 %v7641
        %v7643 = vpop.f32.mrf.mxu0
        %v7644 = vadd.f32 %v7559, %v7643
        %v7645 = vand.u32 %v7005, 4294901760
        %7646 = vmatmul.f32.gmra.mxu0 %v7645
        %v7647 = vpop.f32.mrf.mxu0
        %v7648 = vadd.f32 %v7563, %v7647
        %v7649 = vand.u32 %v7008, 4294901760
        %7650 = vmatmul.f32.gmra.mxu0 %v7649
        %v7651 = vpop.f32.mrf.mxu0
        %v7652 = vadd.f32 %v7567, %v7651
        %v7653 = vand.u32 %v7011, 4294901760
        %7654 = vmatmul.f32.gmra.mxu0 %v7653
        %v7655 = vpop.f32.mrf.mxu0
        %v7656 = vadd.f32 %v7571, %v7655
        %v7657 = vand.u32 %v7014, 4294901760
        %7658 = vmatmul.f32.gmra.mxu0 %v7657
        %v7659 = vpop.f32.mrf.mxu0
        %v7660 = vadd.f32 %v7575, %v7659
        %v7661 = vand.u32 %v7017, 4294901760
        %7662 = vmatmul.f32.gmra.mxu0 %v7661
        %v7663 = vpop.f32.mrf.mxu0
        %v7664 = vadd.f32 %v7579, %v7663
        %v7665 = vand.u32 %v7020, 4294901760
        %7666 = vmatmul.f32.gmra.mxu0 %v7665
        %v7667 = vpop.f32.mrf.mxu0
        %v7668 = vadd.f32 %v7583, %v7667
        %v7669 = vand.u32 %v7023, 4294901760
        %7670 = vmatmul.f32.gmra.mxu0 %v7669
        %v7671 = vpop.f32.mrf.mxu0
        %v7672 = vadd.f32 %v7587, %v7671
        %v7673 = vand.u32 %v7026, 4294901760
        %7674 = vmatmul.f32.gmra.mxu0 %v7673
        %v7675 = vpop.f32.mrf.mxu0
        %v7676 = vadd.f32 %v7591, %v7675
        %7677 = vdwg.mxu0
        %v7678 = vadd.f32 %v5431, %v7616
        %v7679 = vadd.f32 %v5432, %v7620
        %v7680 = vadd.f32 %v5433, %v7624
        %v7681 = vadd.f32 %v5434, %v7628
        %v7682 = vadd.f32 %v5435, %v7632
        %v7683 = vadd.f32 %v5436, %v7636
        %v7684 = vadd.f32 %v5437, %v7640
        %v7685 = vadd.f32 %v5438, %v7644
        %v7686 = vadd.f32 %v5439, %v7648
        %v7687 = vadd.f32 %v5440, %v7652
        %v7688 = vadd.f32 %v5441, %v7656
        %v7689 = vadd.f32 %v5442, %v7660
        %v7690 = vadd.f32 %v5443, %v7664
        %v7691 = vadd.f32 %v5444, %v7668
        %v7692 = vadd.f32 %v5445, %v7672
        %v7693 = vadd.f32 %v5446, %v7676
        %7694 = vmatpush.msra.mxu0 0.0
        %7695 = vmatpush.msra.mxu0 0.0
        %7696 = vmatpush.msra.mxu0 0.0
        %7697 = vmatpush.msra.mxu0 0.0
        %7698 = vmatpush.msra.mxu0 0.0
        %7699 = vmatpush.msra.mxu0 0.0
        %7700 = vmatpush.msra.mxu0 0.0
        %7701 = vmatpush.msra.mxu0 0.0
        %7702 = vmatpush.msra.mxu0 0.0
        %7703 = vmatpush.msra.mxu0 0.0
        %7704 = vmatpush.msra.mxu0 0.0
        %7705 = vmatpush.msra.mxu0 0.0
        %7706 = vmatpush.msra.mxu0 0.0
        %7707 = vmatpush.msra.mxu0 0.0
        %v7708 = vand.u32 %v5644, 4294901760
        %7709 = vmatpush.msra.mxu0 %v7708
        %v7710 = vand.u32 %v5640, 4294901760
        %7711 = vmatpush.msra.mxu0 %v7710
        %v7712 = vand.u32 %v5451, 4294901760
        %v7713 = vsub.f32 %v5451, %v7712
        %v7714 = vand.u32 %v7713, 4294901760
        %v7715 = vsub.f32 %v7713, %v7714
        %v7716 = vand.u32 %v7715, 4294901760
        %7717 = vmatmul.f32.gmra.mxu0 %v7716
        %v7718 = vpop.f32.mrf.mxu0
        %v7719 = vadd.f32 0.0, %v7718
        %v7720 = vand.u32 %v5454, 4294901760
        %v7721 = vsub.f32 %v5454, %v7720
        %v7722 = vand.u32 %v7721, 4294901760
        %v7723 = vsub.f32 %v7721, %v7722
        %v7724 = vand.u32 %v7723, 4294901760
        %7725 = vmatmul.f32.gmra.mxu0 %v7724
        %v7726 = vpop.f32.mrf.mxu0
        %v7727 = vadd.f32 0.0, %v7726
        %7728 = vdwg.mxu0
        %7729 = vmatpush.msra.mxu0 0.0
        %7730 = vmatpush.msra.mxu0 0.0
        %7731 = vmatpush.msra.mxu0 0.0
        %7732 = vmatpush.msra.mxu0 0.0
        %7733 = vmatpush.msra.mxu0 0.0
        %7734 = vmatpush.msra.mxu0 0.0
        %7735 = vmatpush.msra.mxu0 0.0
        %7736 = vmatpush.msra.mxu0 0.0
        %7737 = vmatpush.msra.mxu0 0.0
        %7738 = vmatpush.msra.mxu0 0.0
        %7739 = vmatpush.msra.mxu0 0.0
        %7740 = vmatpush.msra.mxu0 0.0
        %7741 = vmatpush.msra.mxu0 0.0
        %7742 = vmatpush.msra.mxu0 0.0
        %v7743 = vand.u32 %v5644, 4294901760
        %v7744 = vsub.f32 %v5644, %v7743
        %v7745 = vand.u32 %v7744, 4294901760
        %v7746 = vsub.f32 %v7744, %v7745
        %v7747 = vand.u32 %v7746, 4294901760
        %7748 = vmatpush.msra.mxu0 %v7747
        %v7749 = vand.u32 %v5640, 4294901760
        %v7750 = vsub.f32 %v5640, %v7749
        %v7751 = vand.u32 %v7750, 4294901760
        %v7752 = vsub.f32 %v7750, %v7751
        %v7753 = vand.u32 %v7752, 4294901760
        %7754 = vmatpush.msra.mxu0 %v7753
        %v7755 = vand.u32 %v5451, 4294901760
        %7756 = vmatmul.f32.gmra.mxu0 %v7755
        %v7757 = vpop.f32.mrf.mxu0
        %v7758 = vadd.f32 %v7719, %v7757
        %v7759 = vand.u32 %v5454, 4294901760
        %7760 = vmatmul.f32.gmra.mxu0 %v7759
        %v7761 = vpop.f32.mrf.mxu0
        %v7762 = vadd.f32 %v7727, %v7761
        %7763 = vdwg.mxu0
        %7764 = vmatpush.msra.mxu0 0.0
        %7765 = vmatpush.msra.mxu0 0.0
        %7766 = vmatpush.msra.mxu0 0.0
        %7767 = vmatpush.msra.mxu0 0.0
        %7768 = vmatpush.msra.mxu0 0.0
        %7769 = vmatpush.msra.mxu0 0.0
        %7770 = vmatpush.msra.mxu0 0.0
        %7771 = vmatpush.msra.mxu0 0.0
        %7772 = vmatpush.msra.mxu0 0.0
        %7773 = vmatpush.msra.mxu0 0.0
        %7774 = vmatpush.msra.mxu0 0.0
        %7775 = vmatpush.msra.mxu0 0.0
        %7776 = vmatpush.msra.mxu0 0.0
        %7777 = vmatpush.msra.mxu0 0.0
        %v7778 = vand.u32 %v5644, 4294901760
        %v7779 = vsub.f32 %v5644, %v7778
        %7780 = vmatpush.msra.mxu0 %v7779
        %v7781 = vand.u32 %v5640, 4294901760
        %v7782 = vsub.f32 %v5640, %v7781
        %7783 = vmatpush.msra.mxu0 %v7782
        %v7784 = vand.u32 %v5451, 4294901760
        %v7785 = vsub.f32 %v5451, %v7784
        %7786 = vmatmul.f32.gmra.mxu0 %v7785
        %v7787 = vpop.f32.mrf.mxu0
        %v7788 = vadd.f32 %v7758, %v7787
        %v7789 = vand.u32 %v5454, 4294901760
        %v7790 = vsub.f32 %v5454, %v7789
        %7791 = vmatmul.f32.gmra.mxu0 %v7790
        %v7792 = vpop.f32.mrf.mxu0
        %v7793 = vadd.f32 %v7762, %v7792
        %7794 = vdwg.mxu0
        %7795 = vmatpush.msra.mxu0 0.0
        %7796 = vmatpush.msra.mxu0 0.0
        %7797 = vmatpush.msra.mxu0 0.0
        %7798 = vmatpush.msra.mxu0 0.0
        %7799 = vmatpush.msra.mxu0 0.0
        %7800 = vmatpush.msra.mxu0 0.0
        %7801 = vmatpush.msra.mxu0 0.0
        %7802 = vmatpush.msra.mxu0 0.0
        %7803 = vmatpush.msra.mxu0 0.0
        %7804 = vmatpush.msra.mxu0 0.0
        %7805 = vmatpush.msra.mxu0 0.0
        %7806 = vmatpush.msra.mxu0 0.0
        %7807 = vmatpush.msra.mxu0 0.0
        %7808 = vmatpush.msra.mxu0 0.0
        %v7809 = vand.u32 %v5644, 4294901760
        %7810 = vmatpush.msra.mxu0 %v7809
        %v7811 = vand.u32 %v5640, 4294901760
        %7812 = vmatpush.msra.mxu0 %v7811
        %v7813 = vand.u32 %v5451, 4294901760
        %v7814 = vsub.f32 %v5451, %v7813
        %v7815 = vand.u32 %v7814, 4294901760
        %7816 = vmatmul.f32.gmra.mxu0 %v7815
        %v7817 = vpop.f32.mrf.mxu0
        %v7818 = vadd.f32 %v7788, %v7817
        %v7819 = vand.u32 %v5454, 4294901760
        %v7820 = vsub.f32 %v5454, %v7819
        %v7821 = vand.u32 %v7820, 4294901760
        %7822 = vmatmul.f32.gmra.mxu0 %v7821
        %v7823 = vpop.f32.mrf.mxu0
        %v7824 = vadd.f32 %v7793, %v7823
        %7825 = vdwg.mxu0
        %7826 = vmatpush.msra.mxu0 0.0
        %7827 = vmatpush.msra.mxu0 0.0
        %7828 = vmatpush.msra.mxu0 0.0
        %7829 = vmatpush.msra.mxu0 0.0
        %7830 = vmatpush.msra.mxu0 0.0
        %7831 = vmatpush.msra.mxu0 0.0
        %7832 = vmatpush.msra.mxu0 0.0
        %7833 = vmatpush.msra.mxu0 0.0
        %7834 = vmatpush.msra.mxu0 0.0
        %7835 = vmatpush.msra.mxu0 0.0
        %7836 = vmatpush.msra.mxu0 0.0
        %7837 = vmatpush.msra.mxu0 0.0
        %7838 = vmatpush.msra.mxu0 0.0
        %7839 = vmatpush.msra.mxu0 0.0
        %v7840 = vand.u32 %v5644, 4294901760
        %v7841 = vsub.f32 %v5644, %v7840
        %v7842 = vand.u32 %v7841, 4294901760
        %7843 = vmatpush.msra.mxu0 %v7842
        %v7844 = vand.u32 %v5640, 4294901760
        %v7845 = vsub.f32 %v5640, %v7844
        %v7846 = vand.u32 %v7845, 4294901760
        %7847 = vmatpush.msra.mxu0 %v7846
        %v7848 = vand.u32 %v5451, 4294901760
        %7849 = vmatmul.f32.gmra.mxu0 %v7848
        %v7850 = vpop.f32.mrf.mxu0
        %v7851 = vadd.f32 %v7818, %v7850
        %v7852 = vand.u32 %v5454, 4294901760
        %7853 = vmatmul.f32.gmra.mxu0 %v7852
        %v7854 = vpop.f32.mrf.mxu0
        %v7855 = vadd.f32 %v7824, %v7854
        %7856 = vdwg.mxu0
        %7857 = vmatpush.msra.mxu0 0.0
        %7858 = vmatpush.msra.mxu0 0.0
        %7859 = vmatpush.msra.mxu0 0.0
        %7860 = vmatpush.msra.mxu0 0.0
        %7861 = vmatpush.msra.mxu0 0.0
        %7862 = vmatpush.msra.mxu0 0.0
        %7863 = vmatpush.msra.mxu0 0.0
        %7864 = vmatpush.msra.mxu0 0.0
        %7865 = vmatpush.msra.mxu0 0.0
        %7866 = vmatpush.msra.mxu0 0.0
        %7867 = vmatpush.msra.mxu0 0.0
        %7868 = vmatpush.msra.mxu0 0.0
        %7869 = vmatpush.msra.mxu0 0.0
        %7870 = vmatpush.msra.mxu0 0.0
        %v7871 = vand.u32 %v5644, 4294901760
        %7872 = vmatpush.msra.mxu0 %v7871
        %v7873 = vand.u32 %v5640, 4294901760
        %7874 = vmatpush.msra.mxu0 %v7873
        %v7875 = vand.u32 %v5451, 4294901760
        %7876 = vmatmul.f32.gmra.mxu0 %v7875
        %v7877 = vpop.f32.mrf.mxu0
        %v7878 = vadd.f32 %v7851, %v7877
        %v7879 = vand.u32 %v5454, 4294901760
        %7880 = vmatmul.f32.gmra.mxu0 %v7879
        %v7881 = vpop.f32.mrf.mxu0
        %v7882 = vadd.f32 %v7855, %v7881
        %7883 = vdwg.mxu0
        %7884 = vmatpush.msra.mxu0 0.0
        %7885 = vmatpush.msra.mxu0 0.0
        %7886 = vmatpush.msra.mxu0 0.0
        %7887 = vmatpush.msra.mxu0 0.0
        %7888 = vmatpush.msra.mxu0 0.0
        %7889 = vmatpush.msra.mxu0 0.0
        %7890 = vmatpush.msra.mxu0 0.0
        %7891 = vmatpush.msra.mxu0 0.0
        %7892 = vmatpush.msra.mxu0 0.0
        %7893 = vmatpush.msra.mxu0 0.0
        %7894 = vmatpush.msra.mxu0 0.0
        %7895 = vmatpush.msra.mxu0 0.0
        %7896 = vmatpush.msra.mxu0 0.0
        %7897 = vmatpush.msra.mxu0 0.0
        %v7898 = vand.u32 %v5834, 4294901760
        %7899 = vmatpush.msra.mxu0 %v7898
        %v7900 = vand.u32 %v5830, 4294901760
        %7901 = vmatpush.msra.mxu0 %v7900
        %v7902 = vand.u32 %v5451, 4294901760
        %v7903 = vsub.f32 %v5451, %v7902
        %v7904 = vand.u32 %v7903, 4294901760
        %v7905 = vsub.f32 %v7903, %v7904
        %v7906 = vand.u32 %v7905, 4294901760
        %7907 = vmatmul.f32.gmra.mxu0 %v7906
        %v7908 = vpop.f32.mrf.mxu0
        %v7909 = vadd.f32 0.0, %v7908
        %v7910 = vand.u32 %v5454, 4294901760
        %v7911 = vsub.f32 %v5454, %v7910
        %v7912 = vand.u32 %v7911, 4294901760
        %v7913 = vsub.f32 %v7911, %v7912
        %v7914 = vand.u32 %v7913, 4294901760
        %7915 = vmatmul.f32.gmra.mxu0 %v7914
        %v7916 = vpop.f32.mrf.mxu0
        %v7917 = vadd.f32 0.0, %v7916
        %7918 = vdwg.mxu0
        %7919 = vmatpush.msra.mxu0 0.0
        %7920 = vmatpush.msra.mxu0 0.0
        %7921 = vmatpush.msra.mxu0 0.0
        %7922 = vmatpush.msra.mxu0 0.0
        %7923 = vmatpush.msra.mxu0 0.0
        %7924 = vmatpush.msra.mxu0 0.0
        %7925 = vmatpush.msra.mxu0 0.0
        %7926 = vmatpush.msra.mxu0 0.0
        %7927 = vmatpush.msra.mxu0 0.0
        %7928 = vmatpush.msra.mxu0 0.0
        %7929 = vmatpush.msra.mxu0 0.0
        %7930 = vmatpush.msra.mxu0 0.0
        %7931 = vmatpush.msra.mxu0 0.0
        %7932 = vmatpush.msra.mxu0 0.0
        %v7933 = vand.u32 %v5834, 4294901760
        %v7934 = vsub.f32 %v5834, %v7933
        %v7935 = vand.u32 %v7934, 4294901760
        %v7936 = vsub.f32 %v7934, %v7935
        %v7937 = vand.u32 %v7936, 4294901760
        %7938 = vmatpush.msra.mxu0 %v7937
        %v7939 = vand.u32 %v5830, 4294901760
        %v7940 = vsub.f32 %v5830, %v7939
        %v7941 = vand.u32 %v7940, 4294901760
        %v7942 = vsub.f32 %v7940, %v7941
        %v7943 = vand.u32 %v7942, 4294901760
        %7944 = vmatpush.msra.mxu0 %v7943
        %v7945 = vand.u32 %v5451, 4294901760
        %7946 = vmatmul.f32.gmra.mxu0 %v7945
        %v7947 = vpop.f32.mrf.mxu0
        %v7948 = vadd.f32 %v7909, %v7947
        %v7949 = vand.u32 %v5454, 4294901760
        %7950 = vmatmul.f32.gmra.mxu0 %v7949
        %v7951 = vpop.f32.mrf.mxu0
        %v7952 = vadd.f32 %v7917, %v7951
        %7953 = vdwg.mxu0
        %7954 = vmatpush.msra.mxu0 0.0
        %7955 = vmatpush.msra.mxu0 0.0
        %7956 = vmatpush.msra.mxu0 0.0
        %7957 = vmatpush.msra.mxu0 0.0
        %7958 = vmatpush.msra.mxu0 0.0
        %7959 = vmatpush.msra.mxu0 0.0
        %7960 = vmatpush.msra.mxu0 0.0
        %7961 = vmatpush.msra.mxu0 0.0
        %7962 = vmatpush.msra.mxu0 0.0
        %7963 = vmatpush.msra.mxu0 0.0
        %7964 = vmatpush.msra.mxu0 0.0
        %7965 = vmatpush.msra.mxu0 0.0
        %7966 = vmatpush.msra.mxu0 0.0
        %7967 = vmatpush.msra.mxu0 0.0
        %v7968 = vand.u32 %v5834, 4294901760
        %v7969 = vsub.f32 %v5834, %v7968
        %7970 = vmatpush.msra.mxu0 %v7969
        %v7971 = vand.u32 %v5830, 4294901760
        %v7972 = vsub.f32 %v5830, %v7971
        %7973 = vmatpush.msra.mxu0 %v7972
        %v7974 = vand.u32 %v5451, 4294901760
        %v7975 = vsub.f32 %v5451, %v7974
        %7976 = vmatmul.f32.gmra.mxu0 %v7975
        %v7977 = vpop.f32.mrf.mxu0
        %v7978 = vadd.f32 %v7948, %v7977
        %v7979 = vand.u32 %v5454, 4294901760
        %v7980 = vsub.f32 %v5454, %v7979
        %7981 = vmatmul.f32.gmra.mxu0 %v7980
        %v7982 = vpop.f32.mrf.mxu0
        %v7983 = vadd.f32 %v7952, %v7982
        %7984 = vdwg.mxu0
        %7985 = vmatpush.msra.mxu0 0.0
        %7986 = vmatpush.msra.mxu0 0.0
        %7987 = vmatpush.msra.mxu0 0.0
        %7988 = vmatpush.msra.mxu0 0.0
        %7989 = vmatpush.msra.mxu0 0.0
        %7990 = vmatpush.msra.mxu0 0.0
        %7991 = vmatpush.msra.mxu0 0.0
        %7992 = vmatpush.msra.mxu0 0.0
        %7993 = vmatpush.msra.mxu0 0.0
        %7994 = vmatpush.msra.mxu0 0.0
        %7995 = vmatpush.msra.mxu0 0.0
        %7996 = vmatpush.msra.mxu0 0.0
        %7997 = vmatpush.msra.mxu0 0.0
        %7998 = vmatpush.msra.mxu0 0.0
        %v7999 = vand.u32 %v5834, 4294901760
        %8000 = vmatpush.msra.mxu0 %v7999
        %v8001 = vand.u32 %v5830, 4294901760
        %8002 = vmatpush.msra.mxu0 %v8001
        %v8003 = vand.u32 %v5451, 4294901760
        %v8004 = vsub.f32 %v5451, %v8003
        %v8005 = vand.u32 %v8004, 4294901760
        %8006 = vmatmul.f32.gmra.mxu0 %v8005
        %v8007 = vpop.f32.mrf.mxu0
        %v8008 = vadd.f32 %v7978, %v8007
        %v8009 = vand.u32 %v5454, 4294901760
        %v8010 = vsub.f32 %v5454, %v8009
        %v8011 = vand.u32 %v8010, 4294901760
        %8012 = vmatmul.f32.gmra.mxu0 %v8011
        %v8013 = vpop.f32.mrf.mxu0
        %v8014 = vadd.f32 %v7983, %v8013
        %8015 = vdwg.mxu0
        %8016 = vmatpush.msra.mxu0 0.0
        %8017 = vmatpush.msra.mxu0 0.0
        %8018 = vmatpush.msra.mxu0 0.0
        %8019 = vmatpush.msra.mxu0 0.0
        %8020 = vmatpush.msra.mxu0 0.0
        %8021 = vmatpush.msra.mxu0 0.0
        %8022 = vmatpush.msra.mxu0 0.0
        %8023 = vmatpush.msra.mxu0 0.0
        %8024 = vmatpush.msra.mxu0 0.0
        %8025 = vmatpush.msra.mxu0 0.0
        %8026 = vmatpush.msra.mxu0 0.0
        %8027 = vmatpush.msra.mxu0 0.0
        %8028 = vmatpush.msra.mxu0 0.0
        %8029 = vmatpush.msra.mxu0 0.0
        %v8030 = vand.u32 %v5834, 4294901760
        %v8031 = vsub.f32 %v5834, %v8030
        %v8032 = vand.u32 %v8031, 4294901760
        %8033 = vmatpush.msra.mxu0 %v8032
        %v8034 = vand.u32 %v5830, 4294901760
        %v8035 = vsub.f32 %v5830, %v8034
        %v8036 = vand.u32 %v8035, 4294901760
        %8037 = vmatpush.msra.mxu0 %v8036
        %v8038 = vand.u32 %v5451, 4294901760
        %8039 = vmatmul.f32.gmra.mxu0 %v8038
        %v8040 = vpop.f32.mrf.mxu0
        %v8041 = vadd.f32 %v8008, %v8040
        %v8042 = vand.u32 %v5454, 4294901760
        %8043 = vmatmul.f32.gmra.mxu0 %v8042
        %v8044 = vpop.f32.mrf.mxu0
        %v8045 = vadd.f32 %v8014, %v8044
        %8046 = vdwg.mxu0
        %8047 = vmatpush.msra.mxu0 0.0
        %8048 = vmatpush.msra.mxu0 0.0
        %8049 = vmatpush.msra.mxu0 0.0
        %8050 = vmatpush.msra.mxu0 0.0
        %8051 = vmatpush.msra.mxu0 0.0
        %8052 = vmatpush.msra.mxu0 0.0
        %8053 = vmatpush.msra.mxu0 0.0
        %8054 = vmatpush.msra.mxu0 0.0
        %8055 = vmatpush.msra.mxu0 0.0
        %8056 = vmatpush.msra.mxu0 0.0
        %8057 = vmatpush.msra.mxu0 0.0
        %8058 = vmatpush.msra.mxu0 0.0
        %8059 = vmatpush.msra.mxu0 0.0
        %8060 = vmatpush.msra.mxu0 0.0
        %v8061 = vand.u32 %v5834, 4294901760
        %8062 = vmatpush.msra.mxu0 %v8061
        %v8063 = vand.u32 %v5830, 4294901760
        %8064 = vmatpush.msra.mxu0 %v8063
        %v8065 = vand.u32 %v5451, 4294901760
        %8066 = vmatmul.f32.gmra.mxu0 %v8065
        %v8067 = vpop.f32.mrf.mxu0
        %v8068 = vadd.f32 %v8041, %v8067
        %v8069 = vand.u32 %v5454, 4294901760
        %8070 = vmatmul.f32.gmra.mxu0 %v8069
        %v8071 = vpop.f32.mrf.mxu0
        %v8072 = vadd.f32 %v8045, %v8071
        %8073 = vdwg.mxu0
        %8074 = vmatpush.msra.mxu0 0.0
        %8075 = vmatpush.msra.mxu0 0.0
        %8076 = vmatpush.msra.mxu0 0.0
        %8077 = vmatpush.msra.mxu0 0.0
        %8078 = vmatpush.msra.mxu0 0.0
        %8079 = vmatpush.msra.mxu0 0.0
        %8080 = vmatpush.msra.mxu0 0.0
        %8081 = vmatpush.msra.mxu0 0.0
        %8082 = vmatpush.msra.mxu0 0.0
        %8083 = vmatpush.msra.mxu0 0.0
        %8084 = vmatpush.msra.mxu0 0.0
        %8085 = vmatpush.msra.mxu0 0.0
        %8086 = vmatpush.msra.mxu0 0.0
        %8087 = vmatpush.msra.mxu0 0.0
        %v8088 = vand.u32 %v6024, 4294901760
        %8089 = vmatpush.msra.mxu0 %v8088
        %v8090 = vand.u32 %v6020, 4294901760
        %8091 = vmatpush.msra.mxu0 %v8090
        %v8092 = vand.u32 %v5451, 4294901760
        %v8093 = vsub.f32 %v5451, %v8092
        %v8094 = vand.u32 %v8093, 4294901760
        %v8095 = vsub.f32 %v8093, %v8094
        %v8096 = vand.u32 %v8095, 4294901760
        %8097 = vmatmul.f32.gmra.mxu0 %v8096
        %v8098 = vpop.f32.mrf.mxu0
        %v8099 = vadd.f32 0.0, %v8098
        %v8100 = vand.u32 %v5454, 4294901760
        %v8101 = vsub.f32 %v5454, %v8100
        %v8102 = vand.u32 %v8101, 4294901760
        %v8103 = vsub.f32 %v8101, %v8102
        %v8104 = vand.u32 %v8103, 4294901760
        %8105 = vmatmul.f32.gmra.mxu0 %v8104
        %v8106 = vpop.f32.mrf.mxu0
        %v8107 = vadd.f32 0.0, %v8106
        %8108 = vdwg.mxu0
        %8109 = vmatpush.msra.mxu0 0.0
        %8110 = vmatpush.msra.mxu0 0.0
        %8111 = vmatpush.msra.mxu0 0.0
        %8112 = vmatpush.msra.mxu0 0.0
        %8113 = vmatpush.msra.mxu0 0.0
        %8114 = vmatpush.msra.mxu0 0.0
        %8115 = vmatpush.msra.mxu0 0.0
        %8116 = vmatpush.msra.mxu0 0.0
        %8117 = vmatpush.msra.mxu0 0.0
        %8118 = vmatpush.msra.mxu0 0.0
        %8119 = vmatpush.msra.mxu0 0.0
        %8120 = vmatpush.msra.mxu0 0.0
        %8121 = vmatpush.msra.mxu0 0.0
        %8122 = vmatpush.msra.mxu0 0.0
        %v8123 = vand.u32 %v6024, 4294901760
        %v8124 = vsub.f32 %v6024, %v8123
        %v8125 = vand.u32 %v8124, 4294901760
        %v8126 = vsub.f32 %v8124, %v8125
        %v8127 = vand.u32 %v8126, 4294901760
        %8128 = vmatpush.msra.mxu0 %v8127
        %v8129 = vand.u32 %v6020, 4294901760
        %v8130 = vsub.f32 %v6020, %v8129
        %v8131 = vand.u32 %v8130, 4294901760
        %v8132 = vsub.f32 %v8130, %v8131
        %v8133 = vand.u32 %v8132, 4294901760
        %8134 = vmatpush.msra.mxu0 %v8133
        %v8135 = vand.u32 %v5451, 4294901760
        %8136 = vmatmul.f32.gmra.mxu0 %v8135
        %v8137 = vpop.f32.mrf.mxu0
        %v8138 = vadd.f32 %v8099, %v8137
        %v8139 = vand.u32 %v5454, 4294901760
        %8140 = vmatmul.f32.gmra.mxu0 %v8139
        %v8141 = vpop.f32.mrf.mxu0
        %v8142 = vadd.f32 %v8107, %v8141
        %8143 = vdwg.mxu0
        %8144 = vmatpush.msra.mxu0 0.0
        %8145 = vmatpush.msra.mxu0 0.0
        %8146 = vmatpush.msra.mxu0 0.0
        %8147 = vmatpush.msra.mxu0 0.0
        %8148 = vmatpush.msra.mxu0 0.0
        %8149 = vmatpush.msra.mxu0 0.0
        %8150 = vmatpush.msra.mxu0 0.0
        %8151 = vmatpush.msra.mxu0 0.0
        %8152 = vmatpush.msra.mxu0 0.0
        %8153 = vmatpush.msra.mxu0 0.0
        %8154 = vmatpush.msra.mxu0 0.0
        %8155 = vmatpush.msra.mxu0 0.0
        %8156 = vmatpush.msra.mxu0 0.0
        %8157 = vmatpush.msra.mxu0 0.0
        %v8158 = vand.u32 %v6024, 4294901760
        %v8159 = vsub.f32 %v6024, %v8158
        %8160 = vmatpush.msra.mxu0 %v8159
        %v8161 = vand.u32 %v6020, 4294901760
        %v8162 = vsub.f32 %v6020, %v8161
        %8163 = vmatpush.msra.mxu0 %v8162
        %v8164 = vand.u32 %v5451, 4294901760
        %v8165 = vsub.f32 %v5451, %v8164
        %8166 = vmatmul.f32.gmra.mxu0 %v8165
        %v8167 = vpop.f32.mrf.mxu0
        %v8168 = vadd.f32 %v8138, %v8167
        %v8169 = vand.u32 %v5454, 4294901760
        %v8170 = vsub.f32 %v5454, %v8169
        %8171 = vmatmul.f32.gmra.mxu0 %v8170
        %v8172 = vpop.f32.mrf.mxu0
        %v8173 = vadd.f32 %v8142, %v8172
        %8174 = vdwg.mxu0
        %8175 = vmatpush.msra.mxu0 0.0
        %8176 = vmatpush.msra.mxu0 0.0
        %8177 = vmatpush.msra.mxu0 0.0
        %8178 = vmatpush.msra.mxu0 0.0
        %8179 = vmatpush.msra.mxu0 0.0
        %8180 = vmatpush.msra.mxu0 0.0
        %8181 = vmatpush.msra.mxu0 0.0
        %8182 = vmatpush.msra.mxu0 0.0
        %8183 = vmatpush.msra.mxu0 0.0
        %8184 = vmatpush.msra.mxu0 0.0
        %8185 = vmatpush.msra.mxu0 0.0
        %8186 = vmatpush.msra.mxu0 0.0
        %8187 = vmatpush.msra.mxu0 0.0
        %8188 = vmatpush.msra.mxu0 0.0
        %v8189 = vand.u32 %v6024, 4294901760
        %8190 = vmatpush.msra.mxu0 %v8189
        %v8191 = vand.u32 %v6020, 4294901760
        %8192 = vmatpush.msra.mxu0 %v8191
        %v8193 = vand.u32 %v5451, 4294901760
        %v8194 = vsub.f32 %v5451, %v8193
        %v8195 = vand.u32 %v8194, 4294901760
        %8196 = vmatmul.f32.gmra.mxu0 %v8195
        %v8197 = vpop.f32.mrf.mxu0
        %v8198 = vadd.f32 %v8168, %v8197
        %v8199 = vand.u32 %v5454, 4294901760
        %v8200 = vsub.f32 %v5454, %v8199
        %v8201 = vand.u32 %v8200, 4294901760
        %8202 = vmatmul.f32.gmra.mxu0 %v8201
        %v8203 = vpop.f32.mrf.mxu0
        %v8204 = vadd.f32 %v8173, %v8203
        %8205 = vdwg.mxu0
        %8206 = vmatpush.msra.mxu0 0.0
        %8207 = vmatpush.msra.mxu0 0.0
        %8208 = vmatpush.msra.mxu0 0.0
        %8209 = vmatpush.msra.mxu0 0.0
        %8210 = vmatpush.msra.mxu0 0.0
        %8211 = vmatpush.msra.mxu0 0.0
        %8212 = vmatpush.msra.mxu0 0.0
        %8213 = vmatpush.msra.mxu0 0.0
        %8214 = vmatpush.msra.mxu0 0.0
        %8215 = vmatpush.msra.mxu0 0.0
        %8216 = vmatpush.msra.mxu0 0.0
        %8217 = vmatpush.msra.mxu0 0.0
        %8218 = vmatpush.msra.mxu0 0.0
        %8219 = vmatpush.msra.mxu0 0.0
        %v8220 = vand.u32 %v6024, 4294901760
        %v8221 = vsub.f32 %v6024, %v8220
        %v8222 = vand.u32 %v8221, 4294901760
        %8223 = vmatpush.msra.mxu0 %v8222
        %v8224 = vand.u32 %v6020, 4294901760
        %v8225 = vsub.f32 %v6020, %v8224
        %v8226 = vand.u32 %v8225, 4294901760
        %8227 = vmatpush.msra.mxu0 %v8226
        %v8228 = vand.u32 %v5451, 4294901760
        %8229 = vmatmul.f32.gmra.mxu0 %v8228
        %v8230 = vpop.f32.mrf.mxu0
        %v8231 = vadd.f32 %v8198, %v8230
        %v8232 = vand.u32 %v5454, 4294901760
        %8233 = vmatmul.f32.gmra.mxu0 %v8232
        %v8234 = vpop.f32.mrf.mxu0
        %v8235 = vadd.f32 %v8204, %v8234
        %8236 = vdwg.mxu0
        %8237 = vmatpush.msra.mxu0 0.0
        %8238 = vmatpush.msra.mxu0 0.0
        %8239 = vmatpush.msra.mxu0 0.0
        %8240 = vmatpush.msra.mxu0 0.0
        %8241 = vmatpush.msra.mxu0 0.0
        %8242 = vmatpush.msra.mxu0 0.0
        %8243 = vmatpush.msra.mxu0 0.0
        %8244 = vmatpush.msra.mxu0 0.0
        %8245 = vmatpush.msra.mxu0 0.0
        %8246 = vmatpush.msra.mxu0 0.0
        %8247 = vmatpush.msra.mxu0 0.0
        %8248 = vmatpush.msra.mxu0 0.0
        %8249 = vmatpush.msra.mxu0 0.0
        %8250 = vmatpush.msra.mxu0 0.0
        %v8251 = vand.u32 %v6024, 4294901760
        %8252 = vmatpush.msra.mxu0 %v8251
        %v8253 = vand.u32 %v6020, 4294901760
        %8254 = vmatpush.msra.mxu0 %v8253
        %v8255 = vand.u32 %v5451, 4294901760
        %8256 = vmatmul.f32.gmra.mxu0 %v8255
        %v8257 = vpop.f32.mrf.mxu0
        %v8258 = vadd.f32 %v8231, %v8257
        %v8259 = vand.u32 %v5454, 4294901760
        %8260 = vmatmul.f32.gmra.mxu0 %v8259
        %v8261 = vpop.f32.mrf.mxu0
        %v8262 = vadd.f32 %v8235, %v8261
        %8263 = vdwg.mxu0
        %8264 = vmatpush.msra.mxu0 0.0
        %8265 = vmatpush.msra.mxu0 0.0
        %8266 = vmatpush.msra.mxu0 0.0
        %8267 = vmatpush.msra.mxu0 0.0
        %8268 = vmatpush.msra.mxu0 0.0
        %8269 = vmatpush.msra.mxu0 0.0
        %8270 = vmatpush.msra.mxu0 0.0
        %8271 = vmatpush.msra.mxu0 0.0
        %8272 = vmatpush.msra.mxu0 0.0
        %8273 = vmatpush.msra.mxu0 0.0
        %8274 = vmatpush.msra.mxu0 0.0
        %8275 = vmatpush.msra.mxu0 0.0
        %8276 = vmatpush.msra.mxu0 0.0
        %8277 = vmatpush.msra.mxu0 0.0
        %v8278 = vand.u32 %v6214, 4294901760
        %8279 = vmatpush.msra.mxu0 %v8278
        %v8280 = vand.u32 %v6210, 4294901760
        %8281 = vmatpush.msra.mxu0 %v8280
        %v8282 = vand.u32 %v5451, 4294901760
        %v8283 = vsub.f32 %v5451, %v8282
        %v8284 = vand.u32 %v8283, 4294901760
        %v8285 = vsub.f32 %v8283, %v8284
        %v8286 = vand.u32 %v8285, 4294901760
        %8287 = vmatmul.f32.gmra.mxu0 %v8286
        %v8288 = vpop.f32.mrf.mxu0
        %v8289 = vadd.f32 0.0, %v8288
        %v8290 = vand.u32 %v5454, 4294901760
        %v8291 = vsub.f32 %v5454, %v8290
        %v8292 = vand.u32 %v8291, 4294901760
        %v8293 = vsub.f32 %v8291, %v8292
        %v8294 = vand.u32 %v8293, 4294901760
        %8295 = vmatmul.f32.gmra.mxu0 %v8294
        %v8296 = vpop.f32.mrf.mxu0
        %v8297 = vadd.f32 0.0, %v8296
        %8298 = vdwg.mxu0
        %8299 = vmatpush.msra.mxu0 0.0
        %8300 = vmatpush.msra.mxu0 0.0
        %8301 = vmatpush.msra.mxu0 0.0
        %8302 = vmatpush.msra.mxu0 0.0
        %8303 = vmatpush.msra.mxu0 0.0
        %8304 = vmatpush.msra.mxu0 0.0
        %8305 = vmatpush.msra.mxu0 0.0
        %8306 = vmatpush.msra.mxu0 0.0
        %8307 = vmatpush.msra.mxu0 0.0
        %8308 = vmatpush.msra.mxu0 0.0
        %8309 = vmatpush.msra.mxu0 0.0
        %8310 = vmatpush.msra.mxu0 0.0
        %8311 = vmatpush.msra.mxu0 0.0
        %8312 = vmatpush.msra.mxu0 0.0
        %v8313 = vand.u32 %v6214, 4294901760
        %v8314 = vsub.f32 %v6214, %v8313
        %v8315 = vand.u32 %v8314, 4294901760
        %v8316 = vsub.f32 %v8314, %v8315
        %v8317 = vand.u32 %v8316, 4294901760
        %8318 = vmatpush.msra.mxu0 %v8317
        %v8319 = vand.u32 %v6210, 4294901760
        %v8320 = vsub.f32 %v6210, %v8319
        %v8321 = vand.u32 %v8320, 4294901760
        %v8322 = vsub.f32 %v8320, %v8321
        %v8323 = vand.u32 %v8322, 4294901760
        %8324 = vmatpush.msra.mxu0 %v8323
        %v8325 = vand.u32 %v5451, 4294901760
        %8326 = vmatmul.f32.gmra.mxu0 %v8325
        %v8327 = vpop.f32.mrf.mxu0
        %v8328 = vadd.f32 %v8289, %v8327
        %v8329 = vand.u32 %v5454, 4294901760
        %8330 = vmatmul.f32.gmra.mxu0 %v8329
        %v8331 = vpop.f32.mrf.mxu0
        %v8332 = vadd.f32 %v8297, %v8331
        %8333 = vdwg.mxu0
        %8334 = vmatpush.msra.mxu0 0.0
        %8335 = vmatpush.msra.mxu0 0.0
        %8336 = vmatpush.msra.mxu0 0.0
        %8337 = vmatpush.msra.mxu0 0.0
        %8338 = vmatpush.msra.mxu0 0.0
        %8339 = vmatpush.msra.mxu0 0.0
        %8340 = vmatpush.msra.mxu0 0.0
        %8341 = vmatpush.msra.mxu0 0.0
        %8342 = vmatpush.msra.mxu0 0.0
        %8343 = vmatpush.msra.mxu0 0.0
        %8344 = vmatpush.msra.mxu0 0.0
        %8345 = vmatpush.msra.mxu0 0.0
        %8346 = vmatpush.msra.mxu0 0.0
        %8347 = vmatpush.msra.mxu0 0.0
        %v8348 = vand.u32 %v6214, 4294901760
        %v8349 = vsub.f32 %v6214, %v8348
        %8350 = vmatpush.msra.mxu0 %v8349
        %v8351 = vand.u32 %v6210, 4294901760
        %v8352 = vsub.f32 %v6210, %v8351
        %8353 = vmatpush.msra.mxu0 %v8352
        %v8354 = vand.u32 %v5451, 4294901760
        %v8355 = vsub.f32 %v5451, %v8354
        %8356 = vmatmul.f32.gmra.mxu0 %v8355
        %v8357 = vpop.f32.mrf.mxu0
        %v8358 = vadd.f32 %v8328, %v8357
        %v8359 = vand.u32 %v5454, 4294901760
        %v8360 = vsub.f32 %v5454, %v8359
        %8361 = vmatmul.f32.gmra.mxu0 %v8360
        %v8362 = vpop.f32.mrf.mxu0
        %v8363 = vadd.f32 %v8332, %v8362
        %8364 = vdwg.mxu0
        %8365 = vmatpush.msra.mxu0 0.0
        %8366 = vmatpush.msra.mxu0 0.0
        %8367 = vmatpush.msra.mxu0 0.0
        %8368 = vmatpush.msra.mxu0 0.0
        %8369 = vmatpush.msra.mxu0 0.0
        %8370 = vmatpush.msra.mxu0 0.0
        %8371 = vmatpush.msra.mxu0 0.0
        %8372 = vmatpush.msra.mxu0 0.0
        %8373 = vmatpush.msra.mxu0 0.0
        %8374 = vmatpush.msra.mxu0 0.0
        %8375 = vmatpush.msra.mxu0 0.0
        %8376 = vmatpush.msra.mxu0 0.0
        %8377 = vmatpush.msra.mxu0 0.0
        %8378 = vmatpush.msra.mxu0 0.0
        %v8379 = vand.u32 %v6214, 4294901760
        %8380 = vmatpush.msra.mxu0 %v8379
        %v8381 = vand.u32 %v6210, 4294901760
        %8382 = vmatpush.msra.mxu0 %v8381
        %v8383 = vand.u32 %v5451, 4294901760
        %v8384 = vsub.f32 %v5451, %v8383
        %v8385 = vand.u32 %v8384, 4294901760
        %8386 = vmatmul.f32.gmra.mxu0 %v8385
        %v8387 = vpop.f32.mrf.mxu0
        %v8388 = vadd.f32 %v8358, %v8387
        %v8389 = vand.u32 %v5454, 4294901760
        %v8390 = vsub.f32 %v5454, %v8389
        %v8391 = vand.u32 %v8390, 4294901760
        %8392 = vmatmul.f32.gmra.mxu0 %v8391
        %v8393 = vpop.f32.mrf.mxu0
        %v8394 = vadd.f32 %v8363, %v8393
        %8395 = vdwg.mxu0
        %8396 = vmatpush.msra.mxu0 0.0
        %8397 = vmatpush.msra.mxu0 0.0
        %8398 = vmatpush.msra.mxu0 0.0
        %8399 = vmatpush.msra.mxu0 0.0
        %8400 = vmatpush.msra.mxu0 0.0
        %8401 = vmatpush.msra.mxu0 0.0
        %8402 = vmatpush.msra.mxu0 0.0
        %8403 = vmatpush.msra.mxu0 0.0
        %8404 = vmatpush.msra.mxu0 0.0
        %8405 = vmatpush.msra.mxu0 0.0
        %8406 = vmatpush.msra.mxu0 0.0
        %8407 = vmatpush.msra.mxu0 0.0
        %8408 = vmatpush.msra.mxu0 0.0
        %8409 = vmatpush.msra.mxu0 0.0
        %v8410 = vand.u32 %v6214, 4294901760
        %v8411 = vsub.f32 %v6214, %v8410
        %v8412 = vand.u32 %v8411, 4294901760
        %8413 = vmatpush.msra.mxu0 %v8412
        %v8414 = vand.u32 %v6210, 4294901760
        %v8415 = vsub.f32 %v6210, %v8414
        %v8416 = vand.u32 %v8415, 4294901760
        %8417 = vmatpush.msra.mxu0 %v8416
        %v8418 = vand.u32 %v5451, 4294901760
        %8419 = vmatmul.f32.gmra.mxu0 %v8418
        %v8420 = vpop.f32.mrf.mxu0
        %v8421 = vadd.f32 %v8388, %v8420
        %v8422 = vand.u32 %v5454, 4294901760
        %8423 = vmatmul.f32.gmra.mxu0 %v8422
        %v8424 = vpop.f32.mrf.mxu0
        %v8425 = vadd.f32 %v8394, %v8424
        %8426 = vdwg.mxu0
        %8427 = vmatpush.msra.mxu0 0.0
        %8428 = vmatpush.msra.mxu0 0.0
        %8429 = vmatpush.msra.mxu0 0.0
        %8430 = vmatpush.msra.mxu0 0.0
        %8431 = vmatpush.msra.mxu0 0.0
        %8432 = vmatpush.msra.mxu0 0.0
        %8433 = vmatpush.msra.mxu0 0.0
        %8434 = vmatpush.msra.mxu0 0.0
        %8435 = vmatpush.msra.mxu0 0.0
        %8436 = vmatpush.msra.mxu0 0.0
        %8437 = vmatpush.msra.mxu0 0.0
        %8438 = vmatpush.msra.mxu0 0.0
        %8439 = vmatpush.msra.mxu0 0.0
        %8440 = vmatpush.msra.mxu0 0.0
        %v8441 = vand.u32 %v6214, 4294901760
        %8442 = vmatpush.msra.mxu0 %v8441
        %v8443 = vand.u32 %v6210, 4294901760
        %8444 = vmatpush.msra.mxu0 %v8443
        %v8445 = vand.u32 %v5451, 4294901760
        %8446 = vmatmul.f32.gmra.mxu0 %v8445
        %v8447 = vpop.f32.mrf.mxu0
        %v8448 = vadd.f32 %v8421, %v8447
        %v8449 = vand.u32 %v5454, 4294901760
        %8450 = vmatmul.f32.gmra.mxu0 %v8449
        %v8451 = vpop.f32.mrf.mxu0
        %v8452 = vadd.f32 %v8425, %v8451
        %8453 = vdwg.mxu0
        %8454 = vmatpush.msra.mxu0 0.0
        %8455 = vmatpush.msra.mxu0 0.0
        %8456 = vmatpush.msra.mxu0 0.0
        %8457 = vmatpush.msra.mxu0 0.0
        %8458 = vmatpush.msra.mxu0 0.0
        %8459 = vmatpush.msra.mxu0 0.0
        %8460 = vmatpush.msra.mxu0 0.0
        %8461 = vmatpush.msra.mxu0 0.0
        %8462 = vmatpush.msra.mxu0 0.0
        %8463 = vmatpush.msra.mxu0 0.0
        %8464 = vmatpush.msra.mxu0 0.0
        %8465 = vmatpush.msra.mxu0 0.0
        %8466 = vmatpush.msra.mxu0 0.0
        %8467 = vmatpush.msra.mxu0 0.0
        %v8468 = vand.u32 %v6404, 4294901760
        %8469 = vmatpush.msra.mxu0 %v8468
        %v8470 = vand.u32 %v6400, 4294901760
        %8471 = vmatpush.msra.mxu0 %v8470
        %v8472 = vand.u32 %v5451, 4294901760
        %v8473 = vsub.f32 %v5451, %v8472
        %v8474 = vand.u32 %v8473, 4294901760
        %v8475 = vsub.f32 %v8473, %v8474
        %v8476 = vand.u32 %v8475, 4294901760
        %8477 = vmatmul.f32.gmra.mxu0 %v8476
        %v8478 = vpop.f32.mrf.mxu0
        %v8479 = vadd.f32 0.0, %v8478
        %v8480 = vand.u32 %v5454, 4294901760
        %v8481 = vsub.f32 %v5454, %v8480
        %v8482 = vand.u32 %v8481, 4294901760
        %v8483 = vsub.f32 %v8481, %v8482
        %v8484 = vand.u32 %v8483, 4294901760
        %8485 = vmatmul.f32.gmra.mxu0 %v8484
        %v8486 = vpop.f32.mrf.mxu0
        %v8487 = vadd.f32 0.0, %v8486
        %8488 = vdwg.mxu0
        %8489 = vmatpush.msra.mxu0 0.0
        %8490 = vmatpush.msra.mxu0 0.0
        %8491 = vmatpush.msra.mxu0 0.0
        %8492 = vmatpush.msra.mxu0 0.0
        %8493 = vmatpush.msra.mxu0 0.0
        %8494 = vmatpush.msra.mxu0 0.0
        %8495 = vmatpush.msra.mxu0 0.0
        %8496 = vmatpush.msra.mxu0 0.0
        %8497 = vmatpush.msra.mxu0 0.0
        %8498 = vmatpush.msra.mxu0 0.0
        %8499 = vmatpush.msra.mxu0 0.0
        %8500 = vmatpush.msra.mxu0 0.0
        %8501 = vmatpush.msra.mxu0 0.0
        %8502 = vmatpush.msra.mxu0 0.0
        %v8503 = vand.u32 %v6404, 4294901760
        %v8504 = vsub.f32 %v6404, %v8503
        %v8505 = vand.u32 %v8504, 4294901760
        %v8506 = vsub.f32 %v8504, %v8505
        %v8507 = vand.u32 %v8506, 4294901760
        %8508 = vmatpush.msra.mxu0 %v8507
        %v8509 = vand.u32 %v6400, 4294901760
        %v8510 = vsub.f32 %v6400, %v8509
        %v8511 = vand.u32 %v8510, 4294901760
        %v8512 = vsub.f32 %v8510, %v8511
        %v8513 = vand.u32 %v8512, 4294901760
        %8514 = vmatpush.msra.mxu0 %v8513
        %v8515 = vand.u32 %v5451, 4294901760
        %8516 = vmatmul.f32.gmra.mxu0 %v8515
        %v8517 = vpop.f32.mrf.mxu0
        %v8518 = vadd.f32 %v8479, %v8517
        %v8519 = vand.u32 %v5454, 4294901760
        %8520 = vmatmul.f32.gmra.mxu0 %v8519
        %v8521 = vpop.f32.mrf.mxu0
        %v8522 = vadd.f32 %v8487, %v8521
        %8523 = vdwg.mxu0
        %8524 = vmatpush.msra.mxu0 0.0
        %8525 = vmatpush.msra.mxu0 0.0
        %8526 = vmatpush.msra.mxu0 0.0
        %8527 = vmatpush.msra.mxu0 0.0
        %8528 = vmatpush.msra.mxu0 0.0
        %8529 = vmatpush.msra.mxu0 0.0
        %8530 = vmatpush.msra.mxu0 0.0
        %8531 = vmatpush.msra.mxu0 0.0
        %8532 = vmatpush.msra.mxu0 0.0
        %8533 = vmatpush.msra.mxu0 0.0
        %8534 = vmatpush.msra.mxu0 0.0
        %8535 = vmatpush.msra.mxu0 0.0
        %8536 = vmatpush.msra.mxu0 0.0
        %8537 = vmatpush.msra.mxu0 0.0
        %v8538 = vand.u32 %v6404, 4294901760
        %v8539 = vsub.f32 %v6404, %v8538
        %8540 = vmatpush.msra.mxu0 %v8539
        %v8541 = vand.u32 %v6400, 4294901760
        %v8542 = vsub.f32 %v6400, %v8541
        %8543 = vmatpush.msra.mxu0 %v8542
        %v8544 = vand.u32 %v5451, 4294901760
        %v8545 = vsub.f32 %v5451, %v8544
        %8546 = vmatmul.f32.gmra.mxu0 %v8545
        %v8547 = vpop.f32.mrf.mxu0
        %v8548 = vadd.f32 %v8518, %v8547
        %v8549 = vand.u32 %v5454, 4294901760
        %v8550 = vsub.f32 %v5454, %v8549
        %8551 = vmatmul.f32.gmra.mxu0 %v8550
        %v8552 = vpop.f32.mrf.mxu0
        %v8553 = vadd.f32 %v8522, %v8552
        %8554 = vdwg.mxu0
        %8555 = vmatpush.msra.mxu0 0.0
        %8556 = vmatpush.msra.mxu0 0.0
        %8557 = vmatpush.msra.mxu0 0.0
        %8558 = vmatpush.msra.mxu0 0.0
        %8559 = vmatpush.msra.mxu0 0.0
        %8560 = vmatpush.msra.mxu0 0.0
        %8561 = vmatpush.msra.mxu0 0.0
        %8562 = vmatpush.msra.mxu0 0.0
        %8563 = vmatpush.msra.mxu0 0.0
        %8564 = vmatpush.msra.mxu0 0.0
        %8565 = vmatpush.msra.mxu0 0.0
        %8566 = vmatpush.msra.mxu0 0.0
        %8567 = vmatpush.msra.mxu0 0.0
        %8568 = vmatpush.msra.mxu0 0.0
        %v8569 = vand.u32 %v6404, 4294901760
        %8570 = vmatpush.msra.mxu0 %v8569
        %v8571 = vand.u32 %v6400, 4294901760
        %8572 = vmatpush.msra.mxu0 %v8571
        %v8573 = vand.u32 %v5451, 4294901760
        %v8574 = vsub.f32 %v5451, %v8573
        %v8575 = vand.u32 %v8574, 4294901760
        %8576 = vmatmul.f32.gmra.mxu0 %v8575
        %v8577 = vpop.f32.mrf.mxu0
        %v8578 = vadd.f32 %v8548, %v8577
        %v8579 = vand.u32 %v5454, 4294901760
        %v8580 = vsub.f32 %v5454, %v8579
        %v8581 = vand.u32 %v8580, 4294901760
        %8582 = vmatmul.f32.gmra.mxu0 %v8581
        %v8583 = vpop.f32.mrf.mxu0
        %v8584 = vadd.f32 %v8553, %v8583
        %8585 = vdwg.mxu0
        %8586 = vmatpush.msra.mxu0 0.0
        %8587 = vmatpush.msra.mxu0 0.0
        %8588 = vmatpush.msra.mxu0 0.0
        %8589 = vmatpush.msra.mxu0 0.0
        %8590 = vmatpush.msra.mxu0 0.0
        %8591 = vmatpush.msra.mxu0 0.0
        %8592 = vmatpush.msra.mxu0 0.0
        %8593 = vmatpush.msra.mxu0 0.0
        %8594 = vmatpush.msra.mxu0 0.0
        %8595 = vmatpush.msra.mxu0 0.0
        %8596 = vmatpush.msra.mxu0 0.0
        %8597 = vmatpush.msra.mxu0 0.0
        %8598 = vmatpush.msra.mxu0 0.0
        %8599 = vmatpush.msra.mxu0 0.0
        %v8600 = vand.u32 %v6404, 4294901760
        %v8601 = vsub.f32 %v6404, %v8600
        %v8602 = vand.u32 %v8601, 4294901760
        %8603 = vmatpush.msra.mxu0 %v8602
        %v8604 = vand.u32 %v6400, 4294901760
        %v8605 = vsub.f32 %v6400, %v8604
        %v8606 = vand.u32 %v8605, 4294901760
        %8607 = vmatpush.msra.mxu0 %v8606
        %v8608 = vand.u32 %v5451, 4294901760
        %8609 = vmatmul.f32.gmra.mxu0 %v8608
        %v8610 = vpop.f32.mrf.mxu0
        %v8611 = vadd.f32 %v8578, %v8610
        %v8612 = vand.u32 %v5454, 4294901760
        %8613 = vmatmul.f32.gmra.mxu0 %v8612
        %v8614 = vpop.f32.mrf.mxu0
        %v8615 = vadd.f32 %v8584, %v8614
        %8616 = vdwg.mxu0
        %8617 = vmatpush.msra.mxu0 0.0
        %8618 = vmatpush.msra.mxu0 0.0
        %8619 = vmatpush.msra.mxu0 0.0
        %8620 = vmatpush.msra.mxu0 0.0
        %8621 = vmatpush.msra.mxu0 0.0
        %8622 = vmatpush.msra.mxu0 0.0
        %8623 = vmatpush.msra.mxu0 0.0
        %8624 = vmatpush.msra.mxu0 0.0
        %8625 = vmatpush.msra.mxu0 0.0
        %8626 = vmatpush.msra.mxu0 0.0
        %8627 = vmatpush.msra.mxu0 0.0
        %8628 = vmatpush.msra.mxu0 0.0
        %8629 = vmatpush.msra.mxu0 0.0
        %8630 = vmatpush.msra.mxu0 0.0
        %v8631 = vand.u32 %v6404, 4294901760
        %8632 = vmatpush.msra.mxu0 %v8631
        %v8633 = vand.u32 %v6400, 4294901760
        %8634 = vmatpush.msra.mxu0 %v8633
        %v8635 = vand.u32 %v5451, 4294901760
        %8636 = vmatmul.f32.gmra.mxu0 %v8635
        %v8637 = vpop.f32.mrf.mxu0
        %v8638 = vadd.f32 %v8611, %v8637
        %v8639 = vand.u32 %v5454, 4294901760
        %8640 = vmatmul.f32.gmra.mxu0 %v8639
        %v8641 = vpop.f32.mrf.mxu0
        %v8642 = vadd.f32 %v8615, %v8641
        %8643 = vdwg.mxu0
        %8644 = vmatpush.msra.mxu0 0.0
        %8645 = vmatpush.msra.mxu0 0.0
        %8646 = vmatpush.msra.mxu0 0.0
        %8647 = vmatpush.msra.mxu0 0.0
        %8648 = vmatpush.msra.mxu0 0.0
        %8649 = vmatpush.msra.mxu0 0.0
        %8650 = vmatpush.msra.mxu0 0.0
        %8651 = vmatpush.msra.mxu0 0.0
        %8652 = vmatpush.msra.mxu0 0.0
        %8653 = vmatpush.msra.mxu0 0.0
        %8654 = vmatpush.msra.mxu0 0.0
        %8655 = vmatpush.msra.mxu0 0.0
        %8656 = vmatpush.msra.mxu0 0.0
        %8657 = vmatpush.msra.mxu0 0.0
        %v8658 = vand.u32 %v6594, 4294901760
        %8659 = vmatpush.msra.mxu0 %v8658
        %v8660 = vand.u32 %v6590, 4294901760
        %8661 = vmatpush.msra.mxu0 %v8660
        %v8662 = vand.u32 %v5451, 4294901760
        %v8663 = vsub.f32 %v5451, %v8662
        %v8664 = vand.u32 %v8663, 4294901760
        %v8665 = vsub.f32 %v8663, %v8664
        %v8666 = vand.u32 %v8665, 4294901760
        %8667 = vmatmul.f32.gmra.mxu0 %v8666
        %v8668 = vpop.f32.mrf.mxu0
        %v8669 = vadd.f32 0.0, %v8668
        %v8670 = vand.u32 %v5454, 4294901760
        %v8671 = vsub.f32 %v5454, %v8670
        %v8672 = vand.u32 %v8671, 4294901760
        %v8673 = vsub.f32 %v8671, %v8672
        %v8674 = vand.u32 %v8673, 4294901760
        %8675 = vmatmul.f32.gmra.mxu0 %v8674
        %v8676 = vpop.f32.mrf.mxu0
        %v8677 = vadd.f32 0.0, %v8676
        %8678 = vdwg.mxu0
        %8679 = vmatpush.msra.mxu0 0.0
        %8680 = vmatpush.msra.mxu0 0.0
        %8681 = vmatpush.msra.mxu0 0.0
        %8682 = vmatpush.msra.mxu0 0.0
        %8683 = vmatpush.msra.mxu0 0.0
        %8684 = vmatpush.msra.mxu0 0.0
        %8685 = vmatpush.msra.mxu0 0.0
        %8686 = vmatpush.msra.mxu0 0.0
        %8687 = vmatpush.msra.mxu0 0.0
        %8688 = vmatpush.msra.mxu0 0.0
        %8689 = vmatpush.msra.mxu0 0.0
        %8690 = vmatpush.msra.mxu0 0.0
        %8691 = vmatpush.msra.mxu0 0.0
        %8692 = vmatpush.msra.mxu0 0.0
        %v8693 = vand.u32 %v6594, 4294901760
        %v8694 = vsub.f32 %v6594, %v8693
        %v8695 = vand.u32 %v8694, 4294901760
        %v8696 = vsub.f32 %v8694, %v8695
        %v8697 = vand.u32 %v8696, 4294901760
        %8698 = vmatpush.msra.mxu0 %v8697
        %v8699 = vand.u32 %v6590, 4294901760
        %v8700 = vsub.f32 %v6590, %v8699
        %v8701 = vand.u32 %v8700, 4294901760
        %v8702 = vsub.f32 %v8700, %v8701
        %v8703 = vand.u32 %v8702, 4294901760
        %8704 = vmatpush.msra.mxu0 %v8703
        %v8705 = vand.u32 %v5451, 4294901760
        %8706 = vmatmul.f32.gmra.mxu0 %v8705
        %v8707 = vpop.f32.mrf.mxu0
        %v8708 = vadd.f32 %v8669, %v8707
        %v8709 = vand.u32 %v5454, 4294901760
        %8710 = vmatmul.f32.gmra.mxu0 %v8709
        %v8711 = vpop.f32.mrf.mxu0
        %v8712 = vadd.f32 %v8677, %v8711
        %8713 = vdwg.mxu0
        %8714 = vmatpush.msra.mxu0 0.0
        %8715 = vmatpush.msra.mxu0 0.0
        %8716 = vmatpush.msra.mxu0 0.0
        %8717 = vmatpush.msra.mxu0 0.0
        %8718 = vmatpush.msra.mxu0 0.0
        %8719 = vmatpush.msra.mxu0 0.0
        %8720 = vmatpush.msra.mxu0 0.0
        %8721 = vmatpush.msra.mxu0 0.0
        %8722 = vmatpush.msra.mxu0 0.0
        %8723 = vmatpush.msra.mxu0 0.0
        %8724 = vmatpush.msra.mxu0 0.0
        %8725 = vmatpush.msra.mxu0 0.0
        %8726 = vmatpush.msra.mxu0 0.0
        %8727 = vmatpush.msra.mxu0 0.0
        %v8728 = vand.u32 %v6594, 4294901760
        %v8729 = vsub.f32 %v6594, %v8728
        %8730 = vmatpush.msra.mxu0 %v8729
        %v8731 = vand.u32 %v6590, 4294901760
        %v8732 = vsub.f32 %v6590, %v8731
        %8733 = vmatpush.msra.mxu0 %v8732
        %v8734 = vand.u32 %v5451, 4294901760
        %v8735 = vsub.f32 %v5451, %v8734
        %8736 = vmatmul.f32.gmra.mxu0 %v8735
        %v8737 = vpop.f32.mrf.mxu0
        %v8738 = vadd.f32 %v8708, %v8737
        %v8739 = vand.u32 %v5454, 4294901760
        %v8740 = vsub.f32 %v5454, %v8739
        %8741 = vmatmul.f32.gmra.mxu0 %v8740
        %v8742 = vpop.f32.mrf.mxu0
        %v8743 = vadd.f32 %v8712, %v8742
        %8744 = vdwg.mxu0
        %8745 = vmatpush.msra.mxu0 0.0
        %8746 = vmatpush.msra.mxu0 0.0
        %8747 = vmatpush.msra.mxu0 0.0
        %8748 = vmatpush.msra.mxu0 0.0
        %8749 = vmatpush.msra.mxu0 0.0
        %8750 = vmatpush.msra.mxu0 0.0
        %8751 = vmatpush.msra.mxu0 0.0
        %8752 = vmatpush.msra.mxu0 0.0
        %8753 = vmatpush.msra.mxu0 0.0
        %8754 = vmatpush.msra.mxu0 0.0
        %8755 = vmatpush.msra.mxu0 0.0
        %8756 = vmatpush.msra.mxu0 0.0
        %8757 = vmatpush.msra.mxu0 0.0
        %8758 = vmatpush.msra.mxu0 0.0
        %v8759 = vand.u32 %v6594, 4294901760
        %8760 = vmatpush.msra.mxu0 %v8759
        %v8761 = vand.u32 %v6590, 4294901760
        %8762 = vmatpush.msra.mxu0 %v8761
        %v8763 = vand.u32 %v5451, 4294901760
        %v8764 = vsub.f32 %v5451, %v8763
        %v8765 = vand.u32 %v8764, 4294901760
        %8766 = vmatmul.f32.gmra.mxu0 %v8765
        %v8767 = vpop.f32.mrf.mxu0
        %v8768 = vadd.f32 %v8738, %v8767
        %v8769 = vand.u32 %v5454, 4294901760
        %v8770 = vsub.f32 %v5454, %v8769
        %v8771 = vand.u32 %v8770, 4294901760
        %8772 = vmatmul.f32.gmra.mxu0 %v8771
        %v8773 = vpop.f32.mrf.mxu0
        %v8774 = vadd.f32 %v8743, %v8773
        %8775 = vdwg.mxu0
        %8776 = vmatpush.msra.mxu0 0.0
        %8777 = vmatpush.msra.mxu0 0.0
        %8778 = vmatpush.msra.mxu0 0.0
        %8779 = vmatpush.msra.mxu0 0.0
        %8780 = vmatpush.msra.mxu0 0.0
        %8781 = vmatpush.msra.mxu0 0.0
        %8782 = vmatpush.msra.mxu0 0.0
        %8783 = vmatpush.msra.mxu0 0.0
        %8784 = vmatpush.msra.mxu0 0.0
        %8785 = vmatpush.msra.mxu0 0.0
        %8786 = vmatpush.msra.mxu0 0.0
        %8787 = vmatpush.msra.mxu0 0.0
        %8788 = vmatpush.msra.mxu0 0.0
        %8789 = vmatpush.msra.mxu0 0.0
        %v8790 = vand.u32 %v6594, 4294901760
        %v8791 = vsub.f32 %v6594, %v8790
        %v8792 = vand.u32 %v8791, 4294901760
        %8793 = vmatpush.msra.mxu0 %v8792
        %v8794 = vand.u32 %v6590, 4294901760
        %v8795 = vsub.f32 %v6590, %v8794
        %v8796 = vand.u32 %v8795, 4294901760
        %8797 = vmatpush.msra.mxu0 %v8796
        %v8798 = vand.u32 %v5451, 4294901760
        %8799 = vmatmul.f32.gmra.mxu0 %v8798
        %v8800 = vpop.f32.mrf.mxu0
        %v8801 = vadd.f32 %v8768, %v8800
        %v8802 = vand.u32 %v5454, 4294901760
        %8803 = vmatmul.f32.gmra.mxu0 %v8802
        %v8804 = vpop.f32.mrf.mxu0
        %v8805 = vadd.f32 %v8774, %v8804
        %8806 = vdwg.mxu0
        %8807 = vmatpush.msra.mxu0 0.0
        %8808 = vmatpush.msra.mxu0 0.0
        %8809 = vmatpush.msra.mxu0 0.0
        %8810 = vmatpush.msra.mxu0 0.0
        %8811 = vmatpush.msra.mxu0 0.0
        %8812 = vmatpush.msra.mxu0 0.0
        %8813 = vmatpush.msra.mxu0 0.0
        %8814 = vmatpush.msra.mxu0 0.0
        %8815 = vmatpush.msra.mxu0 0.0
        %8816 = vmatpush.msra.mxu0 0.0
        %8817 = vmatpush.msra.mxu0 0.0
        %8818 = vmatpush.msra.mxu0 0.0
        %8819 = vmatpush.msra.mxu0 0.0
        %8820 = vmatpush.msra.mxu0 0.0
        %v8821 = vand.u32 %v6594, 4294901760
        %8822 = vmatpush.msra.mxu0 %v8821
        %v8823 = vand.u32 %v6590, 4294901760
        %8824 = vmatpush.msra.mxu0 %v8823
        %v8825 = vand.u32 %v5451, 4294901760
        %8826 = vmatmul.f32.gmra.mxu0 %v8825
        %v8827 = vpop.f32.mrf.mxu0
        %v8828 = vadd.f32 %v8801, %v8827
        %v8829 = vand.u32 %v5454, 4294901760
        %8830 = vmatmul.f32.gmra.mxu0 %v8829
        %v8831 = vpop.f32.mrf.mxu0
        %v8832 = vadd.f32 %v8805, %v8831
        %8833 = vdwg.mxu0
        %8834 = vmatpush.msra.mxu0 0.0
        %8835 = vmatpush.msra.mxu0 0.0
        %8836 = vmatpush.msra.mxu0 0.0
        %8837 = vmatpush.msra.mxu0 0.0
        %8838 = vmatpush.msra.mxu0 0.0
        %8839 = vmatpush.msra.mxu0 0.0
        %8840 = vmatpush.msra.mxu0 0.0
        %8841 = vmatpush.msra.mxu0 0.0
        %8842 = vmatpush.msra.mxu0 0.0
        %8843 = vmatpush.msra.mxu0 0.0
        %8844 = vmatpush.msra.mxu0 0.0
        %8845 = vmatpush.msra.mxu0 0.0
        %8846 = vmatpush.msra.mxu0 0.0
        %8847 = vmatpush.msra.mxu0 0.0
        %v8848 = vand.u32 %v6784, 4294901760
        %8849 = vmatpush.msra.mxu0 %v8848
        %v8850 = vand.u32 %v6780, 4294901760
        %8851 = vmatpush.msra.mxu0 %v8850
        %v8852 = vand.u32 %v5451, 4294901760
        %v8853 = vsub.f32 %v5451, %v8852
        %v8854 = vand.u32 %v8853, 4294901760
        %v8855 = vsub.f32 %v8853, %v8854
        %v8856 = vand.u32 %v8855, 4294901760
        %8857 = vmatmul.f32.gmra.mxu0 %v8856
        %v8858 = vpop.f32.mrf.mxu0
        %v8859 = vadd.f32 0.0, %v8858
        %v8860 = vand.u32 %v5454, 4294901760
        %v8861 = vsub.f32 %v5454, %v8860
        %v8862 = vand.u32 %v8861, 4294901760
        %v8863 = vsub.f32 %v8861, %v8862
        %v8864 = vand.u32 %v8863, 4294901760
        %8865 = vmatmul.f32.gmra.mxu0 %v8864
        %v8866 = vpop.f32.mrf.mxu0
        %v8867 = vadd.f32 0.0, %v8866
        %8868 = vdwg.mxu0
        %8869 = vmatpush.msra.mxu0 0.0
        %8870 = vmatpush.msra.mxu0 0.0
        %8871 = vmatpush.msra.mxu0 0.0
        %8872 = vmatpush.msra.mxu0 0.0
        %8873 = vmatpush.msra.mxu0 0.0
        %8874 = vmatpush.msra.mxu0 0.0
        %8875 = vmatpush.msra.mxu0 0.0
        %8876 = vmatpush.msra.mxu0 0.0
        %8877 = vmatpush.msra.mxu0 0.0
        %8878 = vmatpush.msra.mxu0 0.0
        %8879 = vmatpush.msra.mxu0 0.0
        %8880 = vmatpush.msra.mxu0 0.0
        %8881 = vmatpush.msra.mxu0 0.0
        %8882 = vmatpush.msra.mxu0 0.0
        %v8883 = vand.u32 %v6784, 4294901760
        %v8884 = vsub.f32 %v6784, %v8883
        %v8885 = vand.u32 %v8884, 4294901760
        %v8886 = vsub.f32 %v8884, %v8885
        %v8887 = vand.u32 %v8886, 4294901760
        %8888 = vmatpush.msra.mxu0 %v8887
        %v8889 = vand.u32 %v6780, 4294901760
        %v8890 = vsub.f32 %v6780, %v8889
        %v8891 = vand.u32 %v8890, 4294901760
        %v8892 = vsub.f32 %v8890, %v8891
        %v8893 = vand.u32 %v8892, 4294901760
        %8894 = vmatpush.msra.mxu0 %v8893
        %v8895 = vand.u32 %v5451, 4294901760
        %8896 = vmatmul.f32.gmra.mxu0 %v8895
        %v8897 = vpop.f32.mrf.mxu0
        %v8898 = vadd.f32 %v8859, %v8897
        %v8899 = vand.u32 %v5454, 4294901760
        %8900 = vmatmul.f32.gmra.mxu0 %v8899
        %v8901 = vpop.f32.mrf.mxu0
        %v8902 = vadd.f32 %v8867, %v8901
        %8903 = vdwg.mxu0
        %8904 = vmatpush.msra.mxu0 0.0
        %8905 = vmatpush.msra.mxu0 0.0
        %8906 = vmatpush.msra.mxu0 0.0
        %8907 = vmatpush.msra.mxu0 0.0
        %8908 = vmatpush.msra.mxu0 0.0
        %8909 = vmatpush.msra.mxu0 0.0
        %8910 = vmatpush.msra.mxu0 0.0
        %8911 = vmatpush.msra.mxu0 0.0
        %8912 = vmatpush.msra.mxu0 0.0
        %8913 = vmatpush.msra.mxu0 0.0
        %8914 = vmatpush.msra.mxu0 0.0
        %8915 = vmatpush.msra.mxu0 0.0
        %8916 = vmatpush.msra.mxu0 0.0
        %8917 = vmatpush.msra.mxu0 0.0
        %v8918 = vand.u32 %v6784, 4294901760
        %v8919 = vsub.f32 %v6784, %v8918
        %8920 = vmatpush.msra.mxu0 %v8919
        %v8921 = vand.u32 %v6780, 4294901760
        %v8922 = vsub.f32 %v6780, %v8921
        %8923 = vmatpush.msra.mxu0 %v8922
        %v8924 = vand.u32 %v5451, 4294901760
        %v8925 = vsub.f32 %v5451, %v8924
        %8926 = vmatmul.f32.gmra.mxu0 %v8925
        %v8927 = vpop.f32.mrf.mxu0
        %v8928 = vadd.f32 %v8898, %v8927
        %v8929 = vand.u32 %v5454, 4294901760
        %v8930 = vsub.f32 %v5454, %v8929
        %8931 = vmatmul.f32.gmra.mxu0 %v8930
        %v8932 = vpop.f32.mrf.mxu0
        %v8933 = vadd.f32 %v8902, %v8932
        %8934 = vdwg.mxu0
        %8935 = vmatpush.msra.mxu0 0.0
        %8936 = vmatpush.msra.mxu0 0.0
        %8937 = vmatpush.msra.mxu0 0.0
        %8938 = vmatpush.msra.mxu0 0.0
        %8939 = vmatpush.msra.mxu0 0.0
        %8940 = vmatpush.msra.mxu0 0.0
        %8941 = vmatpush.msra.mxu0 0.0
        %8942 = vmatpush.msra.mxu0 0.0
        %8943 = vmatpush.msra.mxu0 0.0
        %8944 = vmatpush.msra.mxu0 0.0
        %8945 = vmatpush.msra.mxu0 0.0
        %8946 = vmatpush.msra.mxu0 0.0
        %8947 = vmatpush.msra.mxu0 0.0
        %8948 = vmatpush.msra.mxu0 0.0
        %v8949 = vand.u32 %v6784, 4294901760
        %8950 = vmatpush.msra.mxu0 %v8949
        %v8951 = vand.u32 %v6780, 4294901760
        %8952 = vmatpush.msra.mxu0 %v8951
        %v8953 = vand.u32 %v5451, 4294901760
        %v8954 = vsub.f32 %v5451, %v8953
        %v8955 = vand.u32 %v8954, 4294901760
        %8956 = vmatmul.f32.gmra.mxu0 %v8955
        %v8957 = vpop.f32.mrf.mxu0
        %v8958 = vadd.f32 %v8928, %v8957
        %v8959 = vand.u32 %v5454, 4294901760
        %v8960 = vsub.f32 %v5454, %v8959
        %v8961 = vand.u32 %v8960, 4294901760
        %8962 = vmatmul.f32.gmra.mxu0 %v8961
        %v8963 = vpop.f32.mrf.mxu0
        %v8964 = vadd.f32 %v8933, %v8963
        %8965 = vdwg.mxu0
        %8966 = vmatpush.msra.mxu0 0.0
        %8967 = vmatpush.msra.mxu0 0.0
        %8968 = vmatpush.msra.mxu0 0.0
        %8969 = vmatpush.msra.mxu0 0.0
        %8970 = vmatpush.msra.mxu0 0.0
        %8971 = vmatpush.msra.mxu0 0.0
        %8972 = vmatpush.msra.mxu0 0.0
        %8973 = vmatpush.msra.mxu0 0.0
        %8974 = vmatpush.msra.mxu0 0.0
        %8975 = vmatpush.msra.mxu0 0.0
        %8976 = vmatpush.msra.mxu0 0.0
        %8977 = vmatpush.msra.mxu0 0.0
        %8978 = vmatpush.msra.mxu0 0.0
        %8979 = vmatpush.msra.mxu0 0.0
        %v8980 = vand.u32 %v6784, 4294901760
        %v8981 = vsub.f32 %v6784, %v8980
        %v8982 = vand.u32 %v8981, 4294901760
        %8983 = vmatpush.msra.mxu0 %v8982
        %v8984 = vand.u32 %v6780, 4294901760
        %v8985 = vsub.f32 %v6780, %v8984
        %v8986 = vand.u32 %v8985, 4294901760
        %8987 = vmatpush.msra.mxu0 %v8986
        %v8988 = vand.u32 %v5451, 4294901760
        %8989 = vmatmul.f32.gmra.mxu0 %v8988
        %v8990 = vpop.f32.mrf.mxu0
        %v8991 = vadd.f32 %v8958, %v8990
        %v8992 = vand.u32 %v5454, 4294901760
        %8993 = vmatmul.f32.gmra.mxu0 %v8992
        %v8994 = vpop.f32.mrf.mxu0
        %v8995 = vadd.f32 %v8964, %v8994
        %8996 = vdwg.mxu0
        %8997 = vmatpush.msra.mxu0 0.0
        %8998 = vmatpush.msra.mxu0 0.0
        %8999 = vmatpush.msra.mxu0 0.0
        %9000 = vmatpush.msra.mxu0 0.0
        %9001 = vmatpush.msra.mxu0 0.0
        %9002 = vmatpush.msra.mxu0 0.0
        %9003 = vmatpush.msra.mxu0 0.0
        %9004 = vmatpush.msra.mxu0 0.0
        %9005 = vmatpush.msra.mxu0 0.0
        %9006 = vmatpush.msra.mxu0 0.0
        %9007 = vmatpush.msra.mxu0 0.0
        %9008 = vmatpush.msra.mxu0 0.0
        %9009 = vmatpush.msra.mxu0 0.0
        %9010 = vmatpush.msra.mxu0 0.0
        %v9011 = vand.u32 %v6784, 4294901760
        %9012 = vmatpush.msra.mxu0 %v9011
        %v9013 = vand.u32 %v6780, 4294901760
        %9014 = vmatpush.msra.mxu0 %v9013
        %v9015 = vand.u32 %v5451, 4294901760
        %9016 = vmatmul.f32.gmra.mxu0 %v9015
        %v9017 = vpop.f32.mrf.mxu0
        %v9018 = vadd.f32 %v8991, %v9017
        %v9019 = vand.u32 %v5454, 4294901760
        %9020 = vmatmul.f32.gmra.mxu0 %v9019
        %v9021 = vpop.f32.mrf.mxu0
        %v9022 = vadd.f32 %v8995, %v9021
        %9023 = vdwg.mxu0
        %9024 = vmatpush.msra.mxu0 0.0
        %9025 = vmatpush.msra.mxu0 0.0
        %9026 = vmatpush.msra.mxu0 0.0
        %9027 = vmatpush.msra.mxu0 0.0
        %9028 = vmatpush.msra.mxu0 0.0
        %9029 = vmatpush.msra.mxu0 0.0
        %9030 = vmatpush.msra.mxu0 0.0
        %9031 = vmatpush.msra.mxu0 0.0
        %9032 = vmatpush.msra.mxu0 0.0
        %9033 = vmatpush.msra.mxu0 0.0
        %9034 = vmatpush.msra.mxu0 0.0
        %9035 = vmatpush.msra.mxu0 0.0
        %9036 = vmatpush.msra.mxu0 0.0
        %9037 = vmatpush.msra.mxu0 0.0
        %v9038 = vand.u32 %v6974, 4294901760
        %9039 = vmatpush.msra.mxu0 %v9038
        %v9040 = vand.u32 %v6970, 4294901760
        %9041 = vmatpush.msra.mxu0 %v9040
        %v9042 = vand.u32 %v5451, 4294901760
        %v9043 = vsub.f32 %v5451, %v9042
        %v9044 = vand.u32 %v9043, 4294901760
        %v9045 = vsub.f32 %v9043, %v9044
        %v9046 = vand.u32 %v9045, 4294901760
        %9047 = vmatmul.f32.gmra.mxu0 %v9046
        %v9048 = vpop.f32.mrf.mxu0
        %v9049 = vadd.f32 0.0, %v9048
        %v9050 = vand.u32 %v5454, 4294901760
        %v9051 = vsub.f32 %v5454, %v9050
        %v9052 = vand.u32 %v9051, 4294901760
        %v9053 = vsub.f32 %v9051, %v9052
        %v9054 = vand.u32 %v9053, 4294901760
        %9055 = vmatmul.f32.gmra.mxu0 %v9054
        %v9056 = vpop.f32.mrf.mxu0
        %v9057 = vadd.f32 0.0, %v9056
        %9058 = vdwg.mxu0
        %9059 = vmatpush.msra.mxu0 0.0
        %9060 = vmatpush.msra.mxu0 0.0
        %9061 = vmatpush.msra.mxu0 0.0
        %9062 = vmatpush.msra.mxu0 0.0
        %9063 = vmatpush.msra.mxu0 0.0
        %9064 = vmatpush.msra.mxu0 0.0
        %9065 = vmatpush.msra.mxu0 0.0
        %9066 = vmatpush.msra.mxu0 0.0
        %9067 = vmatpush.msra.mxu0 0.0
        %9068 = vmatpush.msra.mxu0 0.0
        %9069 = vmatpush.msra.mxu0 0.0
        %9070 = vmatpush.msra.mxu0 0.0
        %9071 = vmatpush.msra.mxu0 0.0
        %9072 = vmatpush.msra.mxu0 0.0
        %v9073 = vand.u32 %v6974, 4294901760
        %v9074 = vsub.f32 %v6974, %v9073
        %v9075 = vand.u32 %v9074, 4294901760
        %v9076 = vsub.f32 %v9074, %v9075
        %v9077 = vand.u32 %v9076, 4294901760
        %9078 = vmatpush.msra.mxu0 %v9077
        %v9079 = vand.u32 %v6970, 4294901760
        %v9080 = vsub.f32 %v6970, %v9079
        %v9081 = vand.u32 %v9080, 4294901760
        %v9082 = vsub.f32 %v9080, %v9081
        %v9083 = vand.u32 %v9082, 4294901760
        %9084 = vmatpush.msra.mxu0 %v9083
        %v9085 = vand.u32 %v5451, 4294901760
        %9086 = vmatmul.f32.gmra.mxu0 %v9085
        %v9087 = vpop.f32.mrf.mxu0
        %v9088 = vadd.f32 %v9049, %v9087
        %v9089 = vand.u32 %v5454, 4294901760
        %9090 = vmatmul.f32.gmra.mxu0 %v9089
        %v9091 = vpop.f32.mrf.mxu0
        %v9092 = vadd.f32 %v9057, %v9091
        %9093 = vdwg.mxu0
        %9094 = vmatpush.msra.mxu0 0.0
        %9095 = vmatpush.msra.mxu0 0.0
        %9096 = vmatpush.msra.mxu0 0.0
        %9097 = vmatpush.msra.mxu0 0.0
        %9098 = vmatpush.msra.mxu0 0.0
        %9099 = vmatpush.msra.mxu0 0.0
        %9100 = vmatpush.msra.mxu0 0.0
        %9101 = vmatpush.msra.mxu0 0.0
        %9102 = vmatpush.msra.mxu0 0.0
        %9103 = vmatpush.msra.mxu0 0.0
        %9104 = vmatpush.msra.mxu0 0.0
        %9105 = vmatpush.msra.mxu0 0.0
        %9106 = vmatpush.msra.mxu0 0.0
        %9107 = vmatpush.msra.mxu0 0.0
        %v9108 = vand.u32 %v6974, 4294901760
        %v9109 = vsub.f32 %v6974, %v9108
        %9110 = vmatpush.msra.mxu0 %v9109
        %v9111 = vand.u32 %v6970, 4294901760
        %v9112 = vsub.f32 %v6970, %v9111
        %9113 = vmatpush.msra.mxu0 %v9112
        %v9114 = vand.u32 %v5451, 4294901760
        %v9115 = vsub.f32 %v5451, %v9114
        %9116 = vmatmul.f32.gmra.mxu0 %v9115
        %v9117 = vpop.f32.mrf.mxu0
        %v9118 = vadd.f32 %v9088, %v9117
        %v9119 = vand.u32 %v5454, 4294901760
        %v9120 = vsub.f32 %v5454, %v9119
        %9121 = vmatmul.f32.gmra.mxu0 %v9120
        %v9122 = vpop.f32.mrf.mxu0
        %v9123 = vadd.f32 %v9092, %v9122
        %9124 = vdwg.mxu0
        %9125 = vmatpush.msra.mxu0 0.0
        %9126 = vmatpush.msra.mxu0 0.0
        %9127 = vmatpush.msra.mxu0 0.0
        %9128 = vmatpush.msra.mxu0 0.0
        %9129 = vmatpush.msra.mxu0 0.0
        %9130 = vmatpush.msra.mxu0 0.0
        %9131 = vmatpush.msra.mxu0 0.0
        %9132 = vmatpush.msra.mxu0 0.0
        %9133 = vmatpush.msra.mxu0 0.0
        %9134 = vmatpush.msra.mxu0 0.0
        %9135 = vmatpush.msra.mxu0 0.0
        %9136 = vmatpush.msra.mxu0 0.0
        %9137 = vmatpush.msra.mxu0 0.0
        %9138 = vmatpush.msra.mxu0 0.0
        %v9139 = vand.u32 %v6974, 4294901760
        %9140 = vmatpush.msra.mxu0 %v9139
        %v9141 = vand.u32 %v6970, 4294901760
        %9142 = vmatpush.msra.mxu0 %v9141
        %v9143 = vand.u32 %v5451, 4294901760
        %v9144 = vsub.f32 %v5451, %v9143
        %v9145 = vand.u32 %v9144, 4294901760
        %9146 = vmatmul.f32.gmra.mxu0 %v9145
        %v9147 = vpop.f32.mrf.mxu0
        %v9148 = vadd.f32 %v9118, %v9147
        %v9149 = vand.u32 %v5454, 4294901760
        %v9150 = vsub.f32 %v5454, %v9149
        %v9151 = vand.u32 %v9150, 4294901760
        %9152 = vmatmul.f32.gmra.mxu0 %v9151
        %v9153 = vpop.f32.mrf.mxu0
        %v9154 = vadd.f32 %v9123, %v9153
        %9155 = vdwg.mxu0
        %9156 = vmatpush.msra.mxu0 0.0
        %9157 = vmatpush.msra.mxu0 0.0
        %9158 = vmatpush.msra.mxu0 0.0
        %9159 = vmatpush.msra.mxu0 0.0
        %9160 = vmatpush.msra.mxu0 0.0
        %9161 = vmatpush.msra.mxu0 0.0
        %9162 = vmatpush.msra.mxu0 0.0
        %9163 = vmatpush.msra.mxu0 0.0
        %9164 = vmatpush.msra.mxu0 0.0
        %9165 = vmatpush.msra.mxu0 0.0
        %9166 = vmatpush.msra.mxu0 0.0
        %9167 = vmatpush.msra.mxu0 0.0
        %9168 = vmatpush.msra.mxu0 0.0
        %9169 = vmatpush.msra.mxu0 0.0
        %v9170 = vand.u32 %v6974, 4294901760
        %v9171 = vsub.f32 %v6974, %v9170
        %v9172 = vand.u32 %v9171, 4294901760
        %9173 = vmatpush.msra.mxu0 %v9172
        %v9174 = vand.u32 %v6970, 4294901760
        %v9175 = vsub.f32 %v6970, %v9174
        %v9176 = vand.u32 %v9175, 4294901760
        %9177 = vmatpush.msra.mxu0 %v9176
        %v9178 = vand.u32 %v5451, 4294901760
        %9179 = vmatmul.f32.gmra.mxu0 %v9178
        %v9180 = vpop.f32.mrf.mxu0
        %v9181 = vadd.f32 %v9148, %v9180
        %v9182 = vand.u32 %v5454, 4294901760
        %9183 = vmatmul.f32.gmra.mxu0 %v9182
        %v9184 = vpop.f32.mrf.mxu0
        %v9185 = vadd.f32 %v9154, %v9184
        %9186 = vdwg.mxu0
        %9187 = vmatpush.msra.mxu0 0.0
        %9188 = vmatpush.msra.mxu0 0.0
        %9189 = vmatpush.msra.mxu0 0.0
        %9190 = vmatpush.msra.mxu0 0.0
        %9191 = vmatpush.msra.mxu0 0.0
        %9192 = vmatpush.msra.mxu0 0.0
        %9193 = vmatpush.msra.mxu0 0.0
        %9194 = vmatpush.msra.mxu0 0.0
        %9195 = vmatpush.msra.mxu0 0.0
        %9196 = vmatpush.msra.mxu0 0.0
        %9197 = vmatpush.msra.mxu0 0.0
        %9198 = vmatpush.msra.mxu0 0.0
        %9199 = vmatpush.msra.mxu0 0.0
        %9200 = vmatpush.msra.mxu0 0.0
        %v9201 = vand.u32 %v6974, 4294901760
        %9202 = vmatpush.msra.mxu0 %v9201
        %v9203 = vand.u32 %v6970, 4294901760
        %9204 = vmatpush.msra.mxu0 %v9203
        %v9205 = vand.u32 %v5451, 4294901760
        %9206 = vmatmul.f32.gmra.mxu0 %v9205
        %v9207 = vpop.f32.mrf.mxu0
        %v9208 = vadd.f32 %v9181, %v9207
        %v9209 = vand.u32 %v5454, 4294901760
        %9210 = vmatmul.f32.gmra.mxu0 %v9209
        %v9211 = vpop.f32.mrf.mxu0
        %v9212 = vadd.f32 %v9185, %v9211
        %9213 = vdwg.mxu0
        %v9214 = vld [vmem:[%s2 + $0x80] sm:$0xff]
        %v9215 = vld [vmem:[%s2 + $0x88] sm:$0xff]
        %v9216 = vld [vmem:[%s2 + $0x90] sm:$0xff]
        %v9217 = vld [vmem:[%s2 + $0x98] sm:$0xff]
        %v9219 = vsel %vm263, %v7878, 0
        %v9222 = vsel %vm263, %v7882, 0
        %v9225 = vsel %vm263, %v8068, 0
        %v9228 = vsel %vm263, %v8072, 0
        %v9231 = vsel %vm263, %v8258, 0
        %v9234 = vsel %vm263, %v8262, 0
        %v9237 = vsel %vm263, %v8448, 0
        %v9240 = vsel %vm263, %v8452, 0
        %v9243 = vsel %vm263, %v8638, 0
        %v9246 = vsel %vm263, %v8642, 0
        %v9249 = vsel %vm263, %v8828, 0
        %v9252 = vsel %vm263, %v8832, 0
        %v9255 = vsel %vm263, %v9018, 0
        %v9258 = vsel %vm263, %v9022, 0
        %v9261 = vsel %vm263, %v9208, 0
        %v9264 = vsel %vm263, %v9212, 0
        %9266 = vmatpush.msra.mxu0 0.0
        %9267 = vmatpush.msra.mxu0 0.0
        %9268 = vmatpush.msra.mxu0 0.0
        %9269 = vmatpush.msra.mxu0 0.0
        %9270 = vmatpush.msra.mxu0 0.0
        %9271 = vmatpush.msra.mxu0 0.0
        %9272 = vmatpush.msra.mxu0 0.0
        %9273 = vmatpush.msra.mxu0 0.0
        %9274 = vmatpush.msra.mxu0 0.0
        %9275 = vmatpush.msra.mxu0 0.0
        %9276 = vmatpush.msra.mxu0 0.0
        %9277 = vmatpush.msra.mxu0 0.0
        %v9278 = vand.u32 %v9217, 4294901760
        %9279 = vmatpush.msra.mxu0 %v9278
        %v9280 = vand.u32 %v9216, 4294901760
        %9281 = vmatpush.msra.mxu0 %v9280
        %v9282 = vand.u32 %v9215, 4294901760
        %9283 = vmatpush.msra.mxu0 %v9282
        %v9284 = vand.u32 %v9214, 4294901760
        %9285 = vmatpush.msra.mxu0 %v9284
        %v9286 = vand.u32 %v9219, 4294901760
        %v9287 = vsub.f32 %v9219, %v9286
        %v9288 = vand.u32 %v9287, 4294901760
        %v9289 = vsub.f32 %v9287, %v9288
        %v9290 = vand.u32 %v9289, 4294901760
        %9291 = vmatmul.f32.gmra.mxu0 %v9290
        %v9292 = vpop.f32.mrf.mxu0
        %v9293 = vadd.f32 0.0, %v9292
        %v9294 = vand.u32 %v9222, 4294901760
        %v9295 = vsub.f32 %v9222, %v9294
        %v9296 = vand.u32 %v9295, 4294901760
        %v9297 = vsub.f32 %v9295, %v9296
        %v9298 = vand.u32 %v9297, 4294901760
        %9299 = vmatmul.f32.gmra.mxu0 %v9298
        %v9300 = vpop.f32.mrf.mxu0
        %v9301 = vadd.f32 0.0, %v9300
        %v9302 = vand.u32 %v9225, 4294901760
        %v9303 = vsub.f32 %v9225, %v9302
        %v9304 = vand.u32 %v9303, 4294901760
        %v9305 = vsub.f32 %v9303, %v9304
        %v9306 = vand.u32 %v9305, 4294901760
        %9307 = vmatmul.f32.gmra.mxu0 %v9306
        %v9308 = vpop.f32.mrf.mxu0
        %v9309 = vadd.f32 0.0, %v9308
        %v9310 = vand.u32 %v9228, 4294901760
        %v9311 = vsub.f32 %v9228, %v9310
        %v9312 = vand.u32 %v9311, 4294901760
        %v9313 = vsub.f32 %v9311, %v9312
        %v9314 = vand.u32 %v9313, 4294901760
        %9315 = vmatmul.f32.gmra.mxu0 %v9314
        %v9316 = vpop.f32.mrf.mxu0
        %v9317 = vadd.f32 0.0, %v9316
        %v9318 = vand.u32 %v9231, 4294901760
        %v9319 = vsub.f32 %v9231, %v9318
        %v9320 = vand.u32 %v9319, 4294901760
        %v9321 = vsub.f32 %v9319, %v9320
        %v9322 = vand.u32 %v9321, 4294901760
        %9323 = vmatmul.f32.gmra.mxu0 %v9322
        %v9324 = vpop.f32.mrf.mxu0
        %v9325 = vadd.f32 0.0, %v9324
        %v9326 = vand.u32 %v9234, 4294901760
        %v9327 = vsub.f32 %v9234, %v9326
        %v9328 = vand.u32 %v9327, 4294901760
        %v9329 = vsub.f32 %v9327, %v9328
        %v9330 = vand.u32 %v9329, 4294901760
        %9331 = vmatmul.f32.gmra.mxu0 %v9330
        %v9332 = vpop.f32.mrf.mxu0
        %v9333 = vadd.f32 0.0, %v9332
        %v9334 = vand.u32 %v9237, 4294901760
        %v9335 = vsub.f32 %v9237, %v9334
        %v9336 = vand.u32 %v9335, 4294901760
        %v9337 = vsub.f32 %v9335, %v9336
        %v9338 = vand.u32 %v9337, 4294901760
        %9339 = vmatmul.f32.gmra.mxu0 %v9338
        %v9340 = vpop.f32.mrf.mxu0
        %v9341 = vadd.f32 0.0, %v9340
        %v9342 = vand.u32 %v9240, 4294901760
        %v9343 = vsub.f32 %v9240, %v9342
        %v9344 = vand.u32 %v9343, 4294901760
        %v9345 = vsub.f32 %v9343, %v9344
        %v9346 = vand.u32 %v9345, 4294901760
        %9347 = vmatmul.f32.gmra.mxu0 %v9346
        %v9348 = vpop.f32.mrf.mxu0
        %v9349 = vadd.f32 0.0, %v9348
        %v9350 = vand.u32 %v9243, 4294901760
        %v9351 = vsub.f32 %v9243, %v9350
        %v9352 = vand.u32 %v9351, 4294901760
        %v9353 = vsub.f32 %v9351, %v9352
        %v9354 = vand.u32 %v9353, 4294901760
        %9355 = vmatmul.f32.gmra.mxu0 %v9354
        %v9356 = vpop.f32.mrf.mxu0
        %v9357 = vadd.f32 0.0, %v9356
        %v9358 = vand.u32 %v9246, 4294901760
        %v9359 = vsub.f32 %v9246, %v9358
        %v9360 = vand.u32 %v9359, 4294901760
        %v9361 = vsub.f32 %v9359, %v9360
        %v9362 = vand.u32 %v9361, 4294901760
        %9363 = vmatmul.f32.gmra.mxu0 %v9362
        %v9364 = vpop.f32.mrf.mxu0
        %v9365 = vadd.f32 0.0, %v9364
        %v9366 = vand.u32 %v9249, 4294901760
        %v9367 = vsub.f32 %v9249, %v9366
        %v9368 = vand.u32 %v9367, 4294901760
        %v9369 = vsub.f32 %v9367, %v9368
        %v9370 = vand.u32 %v9369, 4294901760
        %9371 = vmatmul.f32.gmra.mxu0 %v9370
        %v9372 = vpop.f32.mrf.mxu0
        %v9373 = vadd.f32 0.0, %v9372
        %v9374 = vand.u32 %v9252, 4294901760
        %v9375 = vsub.f32 %v9252, %v9374
        %v9376 = vand.u32 %v9375, 4294901760
        %v9377 = vsub.f32 %v9375, %v9376
        %v9378 = vand.u32 %v9377, 4294901760
        %9379 = vmatmul.f32.gmra.mxu0 %v9378
        %v9380 = vpop.f32.mrf.mxu0
        %v9381 = vadd.f32 0.0, %v9380
        %v9382 = vand.u32 %v9255, 4294901760
        %v9383 = vsub.f32 %v9255, %v9382
        %v9384 = vand.u32 %v9383, 4294901760
        %v9385 = vsub.f32 %v9383, %v9384
        %v9386 = vand.u32 %v9385, 4294901760
        %9387 = vmatmul.f32.gmra.mxu0 %v9386
        %v9388 = vpop.f32.mrf.mxu0
        %v9389 = vadd.f32 0.0, %v9388
        %v9390 = vand.u32 %v9258, 4294901760
        %v9391 = vsub.f32 %v9258, %v9390
        %v9392 = vand.u32 %v9391, 4294901760
        %v9393 = vsub.f32 %v9391, %v9392
        %v9394 = vand.u32 %v9393, 4294901760
        %9395 = vmatmul.f32.gmra.mxu0 %v9394
        %v9396 = vpop.f32.mrf.mxu0
        %v9397 = vadd.f32 0.0, %v9396
        %v9398 = vand.u32 %v9261, 4294901760
        %v9399 = vsub.f32 %v9261, %v9398
        %v9400 = vand.u32 %v9399, 4294901760
        %v9401 = vsub.f32 %v9399, %v9400
        %v9402 = vand.u32 %v9401, 4294901760
        %9403 = vmatmul.f32.gmra.mxu0 %v9402
        %v9404 = vpop.f32.mrf.mxu0
        %v9405 = vadd.f32 0.0, %v9404
        %v9406 = vand.u32 %v9264, 4294901760
        %v9407 = vsub.f32 %v9264, %v9406
        %v9408 = vand.u32 %v9407, 4294901760
        %v9409 = vsub.f32 %v9407, %v9408
        %v9410 = vand.u32 %v9409, 4294901760
        %9411 = vmatmul.f32.gmra.mxu0 %v9410
        %v9412 = vpop.f32.mrf.mxu0
        %v9413 = vadd.f32 0.0, %v9412
        %9414 = vdwg.mxu0
        %9415 = vmatpush.msra.mxu0 0.0
        %9416 = vmatpush.msra.mxu0 0.0
        %9417 = vmatpush.msra.mxu0 0.0
        %9418 = vmatpush.msra.mxu0 0.0
        %9419 = vmatpush.msra.mxu0 0.0
        %9420 = vmatpush.msra.mxu0 0.0
        %9421 = vmatpush.msra.mxu0 0.0
        %9422 = vmatpush.msra.mxu0 0.0
        %9423 = vmatpush.msra.mxu0 0.0
        %9424 = vmatpush.msra.mxu0 0.0
        %9425 = vmatpush.msra.mxu0 0.0
        %9426 = vmatpush.msra.mxu0 0.0
        %v9427 = vand.u32 %v9217, 4294901760
        %v9428 = vsub.f32 %v9217, %v9427
        %v9429 = vand.u32 %v9428, 4294901760
        %v9430 = vsub.f32 %v9428, %v9429
        %v9431 = vand.u32 %v9430, 4294901760
        %9432 = vmatpush.msra.mxu0 %v9431
        %v9433 = vand.u32 %v9216, 4294901760
        %v9434 = vsub.f32 %v9216, %v9433
        %v9435 = vand.u32 %v9434, 4294901760
        %v9436 = vsub.f32 %v9434, %v9435
        %v9437 = vand.u32 %v9436, 4294901760
        %9438 = vmatpush.msra.mxu0 %v9437
        %v9439 = vand.u32 %v9215, 4294901760
        %v9440 = vsub.f32 %v9215, %v9439
        %v9441 = vand.u32 %v9440, 4294901760
        %v9442 = vsub.f32 %v9440, %v9441
        %v9443 = vand.u32 %v9442, 4294901760
        %9444 = vmatpush.msra.mxu0 %v9443
        %v9445 = vand.u32 %v9214, 4294901760
        %v9446 = vsub.f32 %v9214, %v9445
        %v9447 = vand.u32 %v9446, 4294901760
        %v9448 = vsub.f32 %v9446, %v9447
        %v9449 = vand.u32 %v9448, 4294901760
        %9450 = vmatpush.msra.mxu0 %v9449
        %v9451 = vand.u32 %v9219, 4294901760
        %9452 = vmatmul.f32.gmra.mxu0 %v9451
        %v9453 = vpop.f32.mrf.mxu0
        %v9454 = vadd.f32 %v9293, %v9453
        %v9455 = vand.u32 %v9222, 4294901760
        %9456 = vmatmul.f32.gmra.mxu0 %v9455
        %v9457 = vpop.f32.mrf.mxu0
        %v9458 = vadd.f32 %v9301, %v9457
        %v9459 = vand.u32 %v9225, 4294901760
        %9460 = vmatmul.f32.gmra.mxu0 %v9459
        %v9461 = vpop.f32.mrf.mxu0
        %v9462 = vadd.f32 %v9309, %v9461
        %v9463 = vand.u32 %v9228, 4294901760
        %9464 = vmatmul.f32.gmra.mxu0 %v9463
        %v9465 = vpop.f32.mrf.mxu0
        %v9466 = vadd.f32 %v9317, %v9465
        %v9467 = vand.u32 %v9231, 4294901760
        %9468 = vmatmul.f32.gmra.mxu0 %v9467
        %v9469 = vpop.f32.mrf.mxu0
        %v9470 = vadd.f32 %v9325, %v9469
        %v9471 = vand.u32 %v9234, 4294901760
        %9472 = vmatmul.f32.gmra.mxu0 %v9471
        %v9473 = vpop.f32.mrf.mxu0
        %v9474 = vadd.f32 %v9333, %v9473
        %v9475 = vand.u32 %v9237, 4294901760
        %9476 = vmatmul.f32.gmra.mxu0 %v9475
        %v9477 = vpop.f32.mrf.mxu0
        %v9478 = vadd.f32 %v9341, %v9477
        %v9479 = vand.u32 %v9240, 4294901760
        %9480 = vmatmul.f32.gmra.mxu0 %v9479
        %v9481 = vpop.f32.mrf.mxu0
        %v9482 = vadd.f32 %v9349, %v9481
        %v9483 = vand.u32 %v9243, 4294901760
        %9484 = vmatmul.f32.gmra.mxu0 %v9483
        %v9485 = vpop.f32.mrf.mxu0
        %v9486 = vadd.f32 %v9357, %v9485
        %v9487 = vand.u32 %v9246, 4294901760
        %9488 = vmatmul.f32.gmra.mxu0 %v9487
        %v9489 = vpop.f32.mrf.mxu0
        %v9490 = vadd.f32 %v9365, %v9489
        %v9491 = vand.u32 %v9249, 4294901760
        %9492 = vmatmul.f32.gmra.mxu0 %v9491
        %v9493 = vpop.f32.mrf.mxu0
        %v9494 = vadd.f32 %v9373, %v9493
        %v9495 = vand.u32 %v9252, 4294901760
        %9496 = vmatmul.f32.gmra.mxu0 %v9495
        %v9497 = vpop.f32.mrf.mxu0
        %v9498 = vadd.f32 %v9381, %v9497
        %v9499 = vand.u32 %v9255, 4294901760
        %9500 = vmatmul.f32.gmra.mxu0 %v9499
        %v9501 = vpop.f32.mrf.mxu0
        %v9502 = vadd.f32 %v9389, %v9501
        %v9503 = vand.u32 %v9258, 4294901760
        %9504 = vmatmul.f32.gmra.mxu0 %v9503
        %v9505 = vpop.f32.mrf.mxu0
        %v9506 = vadd.f32 %v9397, %v9505
        %v9507 = vand.u32 %v9261, 4294901760
        %9508 = vmatmul.f32.gmra.mxu0 %v9507
        %v9509 = vpop.f32.mrf.mxu0
        %v9510 = vadd.f32 %v9405, %v9509
        %v9511 = vand.u32 %v9264, 4294901760
        %9512 = vmatmul.f32.gmra.mxu0 %v9511
        %v9513 = vpop.f32.mrf.mxu0
        %v9514 = vadd.f32 %v9413, %v9513
        %9515 = vdwg.mxu0
        %9516 = vmatpush.msra.mxu0 0.0
        %9517 = vmatpush.msra.mxu0 0.0
        %9518 = vmatpush.msra.mxu0 0.0
        %9519 = vmatpush.msra.mxu0 0.0
        %9520 = vmatpush.msra.mxu0 0.0
        %9521 = vmatpush.msra.mxu0 0.0
        %9522 = vmatpush.msra.mxu0 0.0
        %9523 = vmatpush.msra.mxu0 0.0
        %9524 = vmatpush.msra.mxu0 0.0
        %9525 = vmatpush.msra.mxu0 0.0
        %9526 = vmatpush.msra.mxu0 0.0
        %9527 = vmatpush.msra.mxu0 0.0
        %v9528 = vand.u32 %v9217, 4294901760
        %v9529 = vsub.f32 %v9217, %v9528
        %9530 = vmatpush.msra.mxu0 %v9529
        %v9531 = vand.u32 %v9216, 4294901760
        %v9532 = vsub.f32 %v9216, %v9531
        %9533 = vmatpush.msra.mxu0 %v9532
        %v9534 = vand.u32 %v9215, 4294901760
        %v9535 = vsub.f32 %v9215, %v9534
        %9536 = vmatpush.msra.mxu0 %v9535
        %v9537 = vand.u32 %v9214, 4294901760
        %v9538 = vsub.f32 %v9214, %v9537
        %9539 = vmatpush.msra.mxu0 %v9538
        %v9540 = vand.u32 %v9219, 4294901760
        %v9541 = vsub.f32 %v9219, %v9540
        %9542 = vmatmul.f32.gmra.mxu0 %v9541
        %v9543 = vpop.f32.mrf.mxu0
        %v9544 = vadd.f32 %v9454, %v9543
        %v9545 = vand.u32 %v9222, 4294901760
        %v9546 = vsub.f32 %v9222, %v9545
        %9547 = vmatmul.f32.gmra.mxu0 %v9546
        %v9548 = vpop.f32.mrf.mxu0
        %v9549 = vadd.f32 %v9458, %v9548
        %v9550 = vand.u32 %v9225, 4294901760
        %v9551 = vsub.f32 %v9225, %v9550
        %9552 = vmatmul.f32.gmra.mxu0 %v9551
        %v9553 = vpop.f32.mrf.mxu0
        %v9554 = vadd.f32 %v9462, %v9553
        %v9555 = vand.u32 %v9228, 4294901760
        %v9556 = vsub.f32 %v9228, %v9555
        %9557 = vmatmul.f32.gmra.mxu0 %v9556
        %v9558 = vpop.f32.mrf.mxu0
        %v9559 = vadd.f32 %v9466, %v9558
        %v9560 = vand.u32 %v9231, 4294901760
        %v9561 = vsub.f32 %v9231, %v9560
        %9562 = vmatmul.f32.gmra.mxu0 %v9561
        %v9563 = vpop.f32.mrf.mxu0
        %v9564 = vadd.f32 %v9470, %v9563
        %v9565 = vand.u32 %v9234, 4294901760
        %v9566 = vsub.f32 %v9234, %v9565
        %9567 = vmatmul.f32.gmra.mxu0 %v9566
        %v9568 = vpop.f32.mrf.mxu0
        %v9569 = vadd.f32 %v9474, %v9568
        %v9570 = vand.u32 %v9237, 4294901760
        %v9571 = vsub.f32 %v9237, %v9570
        %9572 = vmatmul.f32.gmra.mxu0 %v9571
        %v9573 = vpop.f32.mrf.mxu0
        %v9574 = vadd.f32 %v9478, %v9573
        %v9575 = vand.u32 %v9240, 4294901760
        %v9576 = vsub.f32 %v9240, %v9575
        %9577 = vmatmul.f32.gmra.mxu0 %v9576
        %v9578 = vpop.f32.mrf.mxu0
        %v9579 = vadd.f32 %v9482, %v9578
        %v9580 = vand.u32 %v9243, 4294901760
        %v9581 = vsub.f32 %v9243, %v9580
        %9582 = vmatmul.f32.gmra.mxu0 %v9581
        %v9583 = vpop.f32.mrf.mxu0
        %v9584 = vadd.f32 %v9486, %v9583
        %v9585 = vand.u32 %v9246, 4294901760
        %v9586 = vsub.f32 %v9246, %v9585
        %9587 = vmatmul.f32.gmra.mxu0 %v9586
        %v9588 = vpop.f32.mrf.mxu0
        %v9589 = vadd.f32 %v9490, %v9588
        %v9590 = vand.u32 %v9249, 4294901760
        %v9591 = vsub.f32 %v9249, %v9590
        %9592 = vmatmul.f32.gmra.mxu0 %v9591
        %v9593 = vpop.f32.mrf.mxu0
        %v9594 = vadd.f32 %v9494, %v9593
        %v9595 = vand.u32 %v9252, 4294901760
        %v9596 = vsub.f32 %v9252, %v9595
        %9597 = vmatmul.f32.gmra.mxu0 %v9596
        %v9598 = vpop.f32.mrf.mxu0
        %v9599 = vadd.f32 %v9498, %v9598
        %v9600 = vand.u32 %v9255, 4294901760
        %v9601 = vsub.f32 %v9255, %v9600
        %9602 = vmatmul.f32.gmra.mxu0 %v9601
        %v9603 = vpop.f32.mrf.mxu0
        %v9604 = vadd.f32 %v9502, %v9603
        %v9605 = vand.u32 %v9258, 4294901760
        %v9606 = vsub.f32 %v9258, %v9605
        %9607 = vmatmul.f32.gmra.mxu0 %v9606
        %v9608 = vpop.f32.mrf.mxu0
        %v9609 = vadd.f32 %v9506, %v9608
        %v9610 = vand.u32 %v9261, 4294901760
        %v9611 = vsub.f32 %v9261, %v9610
        %9612 = vmatmul.f32.gmra.mxu0 %v9611
        %v9613 = vpop.f32.mrf.mxu0
        %v9614 = vadd.f32 %v9510, %v9613
        %v9615 = vand.u32 %v9264, 4294901760
        %v9616 = vsub.f32 %v9264, %v9615
        %9617 = vmatmul.f32.gmra.mxu0 %v9616
        %v9618 = vpop.f32.mrf.mxu0
        %v9619 = vadd.f32 %v9514, %v9618
        %9620 = vdwg.mxu0
        %9621 = vmatpush.msra.mxu0 0.0
        %9622 = vmatpush.msra.mxu0 0.0
        %9623 = vmatpush.msra.mxu0 0.0
        %9624 = vmatpush.msra.mxu0 0.0
        %9625 = vmatpush.msra.mxu0 0.0
        %9626 = vmatpush.msra.mxu0 0.0
        %9627 = vmatpush.msra.mxu0 0.0
        %9628 = vmatpush.msra.mxu0 0.0
        %9629 = vmatpush.msra.mxu0 0.0
        %9630 = vmatpush.msra.mxu0 0.0
        %9631 = vmatpush.msra.mxu0 0.0
        %9632 = vmatpush.msra.mxu0 0.0
        %v9633 = vand.u32 %v9217, 4294901760
        %9634 = vmatpush.msra.mxu0 %v9633
        %v9635 = vand.u32 %v9216, 4294901760
        %9636 = vmatpush.msra.mxu0 %v9635
        %v9637 = vand.u32 %v9215, 4294901760
        %9638 = vmatpush.msra.mxu0 %v9637
        %v9639 = vand.u32 %v9214, 4294901760
        %9640 = vmatpush.msra.mxu0 %v9639
        %v9641 = vand.u32 %v9219, 4294901760
        %v9642 = vsub.f32 %v9219, %v9641
        %v9643 = vand.u32 %v9642, 4294901760
        %9644 = vmatmul.f32.gmra.mxu0 %v9643
        %v9645 = vpop.f32.mrf.mxu0
        %v9646 = vadd.f32 %v9544, %v9645
        %v9647 = vand.u32 %v9222, 4294901760
        %v9648 = vsub.f32 %v9222, %v9647
        %v9649 = vand.u32 %v9648, 4294901760
        %9650 = vmatmul.f32.gmra.mxu0 %v9649
        %v9651 = vpop.f32.mrf.mxu0
        %v9652 = vadd.f32 %v9549, %v9651
        %v9653 = vand.u32 %v9225, 4294901760
        %v9654 = vsub.f32 %v9225, %v9653
        %v9655 = vand.u32 %v9654, 4294901760
        %9656 = vmatmul.f32.gmra.mxu0 %v9655
        %v9657 = vpop.f32.mrf.mxu0
        %v9658 = vadd.f32 %v9554, %v9657
        %v9659 = vand.u32 %v9228, 4294901760
        %v9660 = vsub.f32 %v9228, %v9659
        %v9661 = vand.u32 %v9660, 4294901760
        %9662 = vmatmul.f32.gmra.mxu0 %v9661
        %v9663 = vpop.f32.mrf.mxu0
        %v9664 = vadd.f32 %v9559, %v9663
        %v9665 = vand.u32 %v9231, 4294901760
        %v9666 = vsub.f32 %v9231, %v9665
        %v9667 = vand.u32 %v9666, 4294901760
        %9668 = vmatmul.f32.gmra.mxu0 %v9667
        %v9669 = vpop.f32.mrf.mxu0
        %v9670 = vadd.f32 %v9564, %v9669
        %v9671 = vand.u32 %v9234, 4294901760
        %v9672 = vsub.f32 %v9234, %v9671
        %v9673 = vand.u32 %v9672, 4294901760
        %9674 = vmatmul.f32.gmra.mxu0 %v9673
        %v9675 = vpop.f32.mrf.mxu0
        %v9676 = vadd.f32 %v9569, %v9675
        %v9677 = vand.u32 %v9237, 4294901760
        %v9678 = vsub.f32 %v9237, %v9677
        %v9679 = vand.u32 %v9678, 4294901760
        %9680 = vmatmul.f32.gmra.mxu0 %v9679
        %v9681 = vpop.f32.mrf.mxu0
        %v9682 = vadd.f32 %v9574, %v9681
        %v9683 = vand.u32 %v9240, 4294901760
        %v9684 = vsub.f32 %v9240, %v9683
        %v9685 = vand.u32 %v9684, 4294901760
        %9686 = vmatmul.f32.gmra.mxu0 %v9685
        %v9687 = vpop.f32.mrf.mxu0
        %v9688 = vadd.f32 %v9579, %v9687
        %v9689 = vand.u32 %v9243, 4294901760
        %v9690 = vsub.f32 %v9243, %v9689
        %v9691 = vand.u32 %v9690, 4294901760
        %9692 = vmatmul.f32.gmra.mxu0 %v9691
        %v9693 = vpop.f32.mrf.mxu0
        %v9694 = vadd.f32 %v9584, %v9693
        %v9695 = vand.u32 %v9246, 4294901760
        %v9696 = vsub.f32 %v9246, %v9695
        %v9697 = vand.u32 %v9696, 4294901760
        %9698 = vmatmul.f32.gmra.mxu0 %v9697
        %v9699 = vpop.f32.mrf.mxu0
        %v9700 = vadd.f32 %v9589, %v9699
        %v9701 = vand.u32 %v9249, 4294901760
        %v9702 = vsub.f32 %v9249, %v9701
        %v9703 = vand.u32 %v9702, 4294901760
        %9704 = vmatmul.f32.gmra.mxu0 %v9703
        %v9705 = vpop.f32.mrf.mxu0
        %v9706 = vadd.f32 %v9594, %v9705
        %v9707 = vand.u32 %v9252, 4294901760
        %v9708 = vsub.f32 %v9252, %v9707
        %v9709 = vand.u32 %v9708, 4294901760
        %9710 = vmatmul.f32.gmra.mxu0 %v9709
        %v9711 = vpop.f32.mrf.mxu0
        %v9712 = vadd.f32 %v9599, %v9711
        %v9713 = vand.u32 %v9255, 4294901760
        %v9714 = vsub.f32 %v9255, %v9713
        %v9715 = vand.u32 %v9714, 4294901760
        %9716 = vmatmul.f32.gmra.mxu0 %v9715
        %v9717 = vpop.f32.mrf.mxu0
        %v9718 = vadd.f32 %v9604, %v9717
        %v9719 = vand.u32 %v9258, 4294901760
        %v9720 = vsub.f32 %v9258, %v9719
        %v9721 = vand.u32 %v9720, 4294901760
        %9722 = vmatmul.f32.gmra.mxu0 %v9721
        %v9723 = vpop.f32.mrf.mxu0
        %v9724 = vadd.f32 %v9609, %v9723
        %v9725 = vand.u32 %v9261, 4294901760
        %v9726 = vsub.f32 %v9261, %v9725
        %v9727 = vand.u32 %v9726, 4294901760
        %9728 = vmatmul.f32.gmra.mxu0 %v9727
        %v9729 = vpop.f32.mrf.mxu0
        %v9730 = vadd.f32 %v9614, %v9729
        %v9731 = vand.u32 %v9264, 4294901760
        %v9732 = vsub.f32 %v9264, %v9731
        %v9733 = vand.u32 %v9732, 4294901760
        %9734 = vmatmul.f32.gmra.mxu0 %v9733
        %v9735 = vpop.f32.mrf.mxu0
        %v9736 = vadd.f32 %v9619, %v9735
        %9737 = vdwg.mxu0
        %9738 = vmatpush.msra.mxu0 0.0
        %9739 = vmatpush.msra.mxu0 0.0
        %9740 = vmatpush.msra.mxu0 0.0
        %9741 = vmatpush.msra.mxu0 0.0
        %9742 = vmatpush.msra.mxu0 0.0
        %9743 = vmatpush.msra.mxu0 0.0
        %9744 = vmatpush.msra.mxu0 0.0
        %9745 = vmatpush.msra.mxu0 0.0
        %9746 = vmatpush.msra.mxu0 0.0
        %9747 = vmatpush.msra.mxu0 0.0
        %9748 = vmatpush.msra.mxu0 0.0
        %9749 = vmatpush.msra.mxu0 0.0
        %v9750 = vand.u32 %v9217, 4294901760
        %v9751 = vsub.f32 %v9217, %v9750
        %v9752 = vand.u32 %v9751, 4294901760
        %9753 = vmatpush.msra.mxu0 %v9752
        %v9754 = vand.u32 %v9216, 4294901760
        %v9755 = vsub.f32 %v9216, %v9754
        %v9756 = vand.u32 %v9755, 4294901760
        %9757 = vmatpush.msra.mxu0 %v9756
        %v9758 = vand.u32 %v9215, 4294901760
        %v9759 = vsub.f32 %v9215, %v9758
        %v9760 = vand.u32 %v9759, 4294901760
        %9761 = vmatpush.msra.mxu0 %v9760
        %v9762 = vand.u32 %v9214, 4294901760
        %v9763 = vsub.f32 %v9214, %v9762
        %v9764 = vand.u32 %v9763, 4294901760
        %9765 = vmatpush.msra.mxu0 %v9764
        %v9766 = vand.u32 %v9219, 4294901760
        %9767 = vmatmul.f32.gmra.mxu0 %v9766
        %v9768 = vpop.f32.mrf.mxu0
        %v9769 = vadd.f32 %v9646, %v9768
        %v9770 = vand.u32 %v9222, 4294901760
        %9771 = vmatmul.f32.gmra.mxu0 %v9770
        %v9772 = vpop.f32.mrf.mxu0
        %v9773 = vadd.f32 %v9652, %v9772
        %v9774 = vand.u32 %v9225, 4294901760
        %9775 = vmatmul.f32.gmra.mxu0 %v9774
        %v9776 = vpop.f32.mrf.mxu0
        %v9777 = vadd.f32 %v9658, %v9776
        %v9778 = vand.u32 %v9228, 4294901760
        %9779 = vmatmul.f32.gmra.mxu0 %v9778
        %v9780 = vpop.f32.mrf.mxu0
        %v9781 = vadd.f32 %v9664, %v9780
        %v9782 = vand.u32 %v9231, 4294901760
        %9783 = vmatmul.f32.gmra.mxu0 %v9782
        %v9784 = vpop.f32.mrf.mxu0
        %v9785 = vadd.f32 %v9670, %v9784
        %v9786 = vand.u32 %v9234, 4294901760
        %9787 = vmatmul.f32.gmra.mxu0 %v9786
        %v9788 = vpop.f32.mrf.mxu0
        %v9789 = vadd.f32 %v9676, %v9788
        %v9790 = vand.u32 %v9237, 4294901760
        %9791 = vmatmul.f32.gmra.mxu0 %v9790
        %v9792 = vpop.f32.mrf.mxu0
        %v9793 = vadd.f32 %v9682, %v9792
        %v9794 = vand.u32 %v9240, 4294901760
        %9795 = vmatmul.f32.gmra.mxu0 %v9794
        %v9796 = vpop.f32.mrf.mxu0
        %v9797 = vadd.f32 %v9688, %v9796
        %v9798 = vand.u32 %v9243, 4294901760
        %9799 = vmatmul.f32.gmra.mxu0 %v9798
        %v9800 = vpop.f32.mrf.mxu0
        %v9801 = vadd.f32 %v9694, %v9800
        %v9802 = vand.u32 %v9246, 4294901760
        %9803 = vmatmul.f32.gmra.mxu0 %v9802
        %v9804 = vpop.f32.mrf.mxu0
        %v9805 = vadd.f32 %v9700, %v9804
        %v9806 = vand.u32 %v9249, 4294901760
        %9807 = vmatmul.f32.gmra.mxu0 %v9806
        %v9808 = vpop.f32.mrf.mxu0
        %v9809 = vadd.f32 %v9706, %v9808
        %v9810 = vand.u32 %v9252, 4294901760
        %9811 = vmatmul.f32.gmra.mxu0 %v9810
        %v9812 = vpop.f32.mrf.mxu0
        %v9813 = vadd.f32 %v9712, %v9812
        %v9814 = vand.u32 %v9255, 4294901760
        %9815 = vmatmul.f32.gmra.mxu0 %v9814
        %v9816 = vpop.f32.mrf.mxu0
        %v9817 = vadd.f32 %v9718, %v9816
        %v9818 = vand.u32 %v9258, 4294901760
        %9819 = vmatmul.f32.gmra.mxu0 %v9818
        %v9820 = vpop.f32.mrf.mxu0
        %v9821 = vadd.f32 %v9724, %v9820
        %v9822 = vand.u32 %v9261, 4294901760
        %9823 = vmatmul.f32.gmra.mxu0 %v9822
        %v9824 = vpop.f32.mrf.mxu0
        %v9825 = vadd.f32 %v9730, %v9824
        %v9826 = vand.u32 %v9264, 4294901760
        %9827 = vmatmul.f32.gmra.mxu0 %v9826
        %v9828 = vpop.f32.mrf.mxu0
        %v9829 = vadd.f32 %v9736, %v9828
        %9830 = vdwg.mxu0
        %9831 = vmatpush.msra.mxu0 0.0
        %9832 = vmatpush.msra.mxu0 0.0
        %9833 = vmatpush.msra.mxu0 0.0
        %9834 = vmatpush.msra.mxu0 0.0
        %9835 = vmatpush.msra.mxu0 0.0
        %9836 = vmatpush.msra.mxu0 0.0
        %9837 = vmatpush.msra.mxu0 0.0
        %9838 = vmatpush.msra.mxu0 0.0
        %9839 = vmatpush.msra.mxu0 0.0
        %9840 = vmatpush.msra.mxu0 0.0
        %9841 = vmatpush.msra.mxu0 0.0
        %9842 = vmatpush.msra.mxu0 0.0
        %v9843 = vand.u32 %v9217, 4294901760
        %9844 = vmatpush.msra.mxu0 %v9843
        %v9845 = vand.u32 %v9216, 4294901760
        %9846 = vmatpush.msra.mxu0 %v9845
        %v9847 = vand.u32 %v9215, 4294901760
        %9848 = vmatpush.msra.mxu0 %v9847
        %v9849 = vand.u32 %v9214, 4294901760
        %9850 = vmatpush.msra.mxu0 %v9849
        %v9851 = vand.u32 %v9219, 4294901760
        %9852 = vmatmul.f32.gmra.mxu0 %v9851
        %v9853 = vpop.f32.mrf.mxu0
        %v9854 = vadd.f32 %v9769, %v9853
        %v9855 = vand.u32 %v9222, 4294901760
        %9856 = vmatmul.f32.gmra.mxu0 %v9855
        %v9857 = vpop.f32.mrf.mxu0
        %v9858 = vadd.f32 %v9773, %v9857
        %v9859 = vand.u32 %v9225, 4294901760
        %9860 = vmatmul.f32.gmra.mxu0 %v9859
        %v9861 = vpop.f32.mrf.mxu0
        %v9862 = vadd.f32 %v9777, %v9861
        %v9863 = vand.u32 %v9228, 4294901760
        %9864 = vmatmul.f32.gmra.mxu0 %v9863
        %v9865 = vpop.f32.mrf.mxu0
        %v9866 = vadd.f32 %v9781, %v9865
        %v9867 = vand.u32 %v9231, 4294901760
        %9868 = vmatmul.f32.gmra.mxu0 %v9867
        %v9869 = vpop.f32.mrf.mxu0
        %v9870 = vadd.f32 %v9785, %v9869
        %v9871 = vand.u32 %v9234, 4294901760
        %9872 = vmatmul.f32.gmra.mxu0 %v9871
        %v9873 = vpop.f32.mrf.mxu0
        %v9874 = vadd.f32 %v9789, %v9873
        %v9875 = vand.u32 %v9237, 4294901760
        %9876 = vmatmul.f32.gmra.mxu0 %v9875
        %v9877 = vpop.f32.mrf.mxu0
        %v9878 = vadd.f32 %v9793, %v9877
        %v9879 = vand.u32 %v9240, 4294901760
        %9880 = vmatmul.f32.gmra.mxu0 %v9879
        %v9881 = vpop.f32.mrf.mxu0
        %v9882 = vadd.f32 %v9797, %v9881
        %v9883 = vand.u32 %v9243, 4294901760
        %9884 = vmatmul.f32.gmra.mxu0 %v9883
        %v9885 = vpop.f32.mrf.mxu0
        %v9886 = vadd.f32 %v9801, %v9885
        %v9887 = vand.u32 %v9246, 4294901760
        %9888 = vmatmul.f32.gmra.mxu0 %v9887
        %v9889 = vpop.f32.mrf.mxu0
        %v9890 = vadd.f32 %v9805, %v9889
        %v9891 = vand.u32 %v9249, 4294901760
        %9892 = vmatmul.f32.gmra.mxu0 %v9891
        %v9893 = vpop.f32.mrf.mxu0
        %v9894 = vadd.f32 %v9809, %v9893
        %v9895 = vand.u32 %v9252, 4294901760
        %9896 = vmatmul.f32.gmra.mxu0 %v9895
        %v9897 = vpop.f32.mrf.mxu0
        %v9898 = vadd.f32 %v9813, %v9897
        %v9899 = vand.u32 %v9255, 4294901760
        %9900 = vmatmul.f32.gmra.mxu0 %v9899
        %v9901 = vpop.f32.mrf.mxu0
        %v9902 = vadd.f32 %v9817, %v9901
        %v9903 = vand.u32 %v9258, 4294901760
        %9904 = vmatmul.f32.gmra.mxu0 %v9903
        %v9905 = vpop.f32.mrf.mxu0
        %v9906 = vadd.f32 %v9821, %v9905
        %v9907 = vand.u32 %v9261, 4294901760
        %9908 = vmatmul.f32.gmra.mxu0 %v9907
        %v9909 = vpop.f32.mrf.mxu0
        %v9910 = vadd.f32 %v9825, %v9909
        %v9911 = vand.u32 %v9264, 4294901760
        %9912 = vmatmul.f32.gmra.mxu0 %v9911
        %v9913 = vpop.f32.mrf.mxu0
        %v9914 = vadd.f32 %v9829, %v9913
        %9915 = vdwg.mxu0
        %v9916 = vadd.f32 %v7678, %v9854
        %v9917 = vadd.f32 %v7679, %v9858
        %v9918 = vadd.f32 %v7680, %v9862
        %v9919 = vadd.f32 %v7681, %v9866
        %v9920 = vadd.f32 %v7682, %v9870
        %v9921 = vadd.f32 %v7683, %v9874
        %v9922 = vadd.f32 %v7684, %v9878
        %v9923 = vadd.f32 %v7685, %v9882
        %v9924 = vadd.f32 %v7686, %v9886
        %v9925 = vadd.f32 %v7687, %v9890
        %v9926 = vadd.f32 %v7688, %v9894
        %v9927 = vadd.f32 %v7689, %v9898
        %v9928 = vadd.f32 %v7690, %v9902
        %v9929 = vadd.f32 %v7691, %v9906
        %v9930 = vadd.f32 %v7692, %v9910
        %v9931 = vadd.f32 %v7693, %v9914
        %9932 = vst.msk [vmem:[%s236] sm:$0xff] %vm263, %v9916
        %9933 = vst.msk [vmem:[%s236 + $0x8] sm:$0xff] %vm263, %v9917
        %9934 = vst.msk [vmem:[%s236 + $0x10] sm:$0xff] %vm263, %v9918
        %9935 = vst.msk [vmem:[%s236 + $0x18] sm:$0xff] %vm263, %v9919
        %9936 = vst.msk [vmem:[%s236 + $0x20] sm:$0xff] %vm263, %v9920
        %9937 = vst.msk [vmem:[%s236 + $0x28] sm:$0xff] %vm263, %v9921
        %9938 = vst.msk [vmem:[%s236 + $0x30] sm:$0xff] %vm263, %v9922
        %9939 = vst.msk [vmem:[%s236 + $0x38] sm:$0xff] %vm263, %v9923
        %9940 = vst.msk [vmem:[%s236 + $0x40] sm:$0xff] %vm263, %v9924
        %9941 = vst.msk [vmem:[%s236 + $0x48] sm:$0xff] %vm263, %v9925
        %9942 = vst.msk [vmem:[%s236 + $0x50] sm:$0xff] %vm263, %v9926
        %9943 = vst.msk [vmem:[%s236 + $0x58] sm:$0xff] %vm263, %v9927
        %9944 = vst.msk [vmem:[%s236 + $0x60] sm:$0xff] %vm263, %v9928
        %9945 = vst.msk [vmem:[%s236 + $0x68] sm:$0xff] %vm263, %v9929
        %9946 = vst.msk [vmem:[%s236 + $0x70] sm:$0xff] %vm263, %v9930
        %9947 = vst.msk [vmem:[%s236 + $0x78] sm:$0xff] %vm263, %v9931
        %s9948 = sand.u32 %s134, 1
        %s9949 = scalar_lea.sflag [#allocation4], %s9948
        %s9950 = sand.u32 %s134, 1
        %s9951 = smul.addr %s9950, 128
        %s9952 = scalar_lea.vmem [#allocation5], %s9951
        // Predicated region
        $region41: #{tpu_custom_call.1} parent=35 // pred_check
          %p9953 = pneg %p144
        $region42: #{tpu_custom_call.1} parent=35 // pred_check_branch
          %9955 = sbr.rel (%p9953) target = $region44
        $region43: #{tpu_custom_call.1} parent=35 // pred_region
          %s9956 = smul.u32 8, %s26
          %9958 = vsyncadd %s9949, 0
          %s9959 = smul.addr %s9956, 2
          %s9960 = smul.addr %s25, 32
          %s9961 = sadd.s32 %s9959, %s9960
          %s9962 = smul.addr %s9961, 8
          %s9963 = scalar_lea.hbm %s4, %s9962
          %s9964 = sshll.u32 %s9952, 4
          %s9965 = int_to_ptr.vmem [resolvable:$true] %s9964
          %s9966 = sshll.u32 %s9963, 4
          %s9967 = int_to_ptr.hbm [resolvable:$true] %s9966
          %9972 = dma.vmem_to_hbm [thread:$0]  %s9965, 2048, %s9967, %s9949, 128, 128, 8
        $region44: #{tpu_custom_call.1} parent=35 // pred_fallthru
          _
      $region36: #{tpu_custom_call.1} parent=5 // pred_fallthru
        _
      %p9973 = scmp.le.s32.totalorder 2, %s16
      // Predicated region
      $region45: #{tpu_custom_call.1} parent=5 // pred_check
        %p9974 = pneg %p9973
      $region46: #{tpu_custom_call.1} parent=5 // pred_check_branch
        %9976 = sbr.rel (%p9974) target = $region48
      $region47: #{tpu_custom_call.1} parent=5 // pred_region
        %s9977 = ssub.s32 %s16, 2
        // Predicated region
        $region49: #{tpu_custom_call.1} parent=47 // pred_check
          %p9978 = pneg %p150
        $region50: #{tpu_custom_call.1} parent=47 // pred_check_branch
          %9980 = sbr.rel (%p9978) target = $region52
        $region51: #{tpu_custom_call.1} parent=47 // pred_region
          %s9981 = sand.u32 %s135, 1
          %s9982 = scalar_lea.sflag [#allocation4], %s9981
          %s9983 = sand.u32 %s135, 1
          %s9984 = smul.addr %s9983, 128
          %s9985 = scalar_lea.vmem [#allocation5], %s9984
          %9987 = dma.done %s9982, 2048
        $region52: #{tpu_custom_call.1} parent=47 // pred_fallthru
          _
      $region48: #{tpu_custom_call.1} parent=5 // pred_fallthru
        _
    $region6: #{tpu_custom_call.1} parent=1 // loop_footer
      %s20 = sadd.s32 1, %s16
    $region7: #{tpu_custom_call.1} parent=1 // loop_footer_branch
      %15 = sbr.rel target = $region3
    $region8: #{tpu_custom_call.1} parent=1 // loop_exit
      _
    %9988 = vsyncpa [#allocation3], 1
    %s9989 = scalar_lea.sflag [#allocation3], 1
    %9990 = vsyncpa %s9989, 1
    %9991 = vsyncpa [#allocation4], 1
    %s9992 = scalar_lea.sflag [#allocation4], 1
    %9993 = vsyncpa %s9992, 1

</llo_original>
